<compile_context>
chip_gen: v7x
topology: tpu7x:2x2x1
jax: 0.10.0
libtpu: 0.0.40
codegen_flags: <defaults>
</compile_context>

<pallas_src>
import jax
import jax.numpy as jnp
import numpy as np
from jax import lax
from jax.experimental import pallas as pl
from jax.experimental.pallas import tpu as pltpu

KSIZE = 5
PAD = 2


# ----------------------------- half-step kernel ------------------------------
def _half_step_kernel(h_ref, xp_ref, wx_ref, wh_zr_ref, wh_q_ref, b_ref,
                      out_ref, hpad_ref):
    """One GRU half-step; the 5-tap conv runs along the leading spatial dim L.

    Per-grid-step block shapes:
      h_ref     : (1, L, Mt, Ch)          f32   hidden state tile
      xp_ref    : (1, L + 2*PAD, Mt, Cx)  bf16  x, zero-padded along L in HBM
      wx_ref    : (K, Cx, 3*Ch)           bf16  x-side weights, z|r|q fused
      wh_zr_ref : (K, Ch, 2*Ch)           f32   h-side weights, z|r fused
      wh_q_ref  : (K, Ch, Ch)             f32   h-side weights for q
      b_ref     : (1, 3*Ch)               f32   biases bz|br|bq
      out_ref   : (1, L, Mt, Ch)          f32
      hpad_ref  : (L + 2*PAD, Mt, Ch)     VMEM scratch reused for padded h and r*h
    """
    _, L, Mt, Ch = h_ref.shape
    Cx = xp_ref.shape[-1]
    Lp = L + 2 * PAD
    N = L * Mt

    h3 = h_ref[0].astype(jnp.float32)                      # (L, Mt, Ch)
    h2 = h3.reshape(N, Ch)

    # ---- x contribution for all three gates: one matmul per tap, biases folded
    # into the accumulator init.  Tap k is a whole-sublane row range of the
    # flattened, pre-padded x slab -> aligned slice, no relayout, no copies.
    xf = xp_ref[0].reshape(Lp * Mt, Cx)
    acc = jnp.broadcast_to(b_ref[...].astype(jnp.float32), (N, 3 * Ch))
    for k in range(KSIZE):
        tap = xf[k * Mt:k * Mt + N]                        # (N, Cx) bf16
        acc = acc + jnp.dot(tap, wx_ref[k], preferred_element_type=jnp.float32)
    xc_zr = acc[:, :2 * Ch]
    xc_q = acc[:, 2 * Ch:]

    # ---- h contribution of the fused z|r gate.  The padded h slab lives in one
    # reusable VMEM scratch; only the 2*PAD halo rows are zeroed (cheap).
    zeros_halo = jnp.zeros((PAD, Mt, Ch), hpad_ref.dtype)
    hpad_ref[pl.ds(0, PAD)] = zeros_halo
    hpad_ref[pl.ds(PAD + L, PAD)] = zeros_halo
    hpad_ref[pl.ds(PAD, L)] = h3.astype(hpad_ref.dtype)
    hp = hpad_ref[...].reshape(Lp * Mt, Ch)
    hc_zr = jnp.zeros((N, 2 * Ch), jnp.float32)
    for k in range(KSIZE):
        hc_zr = hc_zr + jnp.dot(hp[k * Mt:k * Mt + N], wh_zr_ref[k],
                                preferred_element_type=jnp.float32)

    zr = jax.nn.sigmoid(xc_zr + hc_zr)                     # bias already in xc
    z = zr[:, :Ch]
    r = zr[:, Ch:]

    # ---- h contribution of q: overwrite the same scratch with r*h (halos stay 0).
    hpad_ref[pl.ds(PAD, L)] = (r * h2).reshape(L, Mt, Ch).astype(hpad_ref.dtype)
    hp2 = hpad_ref[...].reshape(Lp * Mt, Ch)
    hc_q = jnp.zeros((N, Ch), jnp.float32)
    for k in range(KSIZE):
        hc_q = hc_q + jnp.dot(hp2[k * Mt:k * Mt + N], wh_q_ref[k],
                              preferred_element_type=jnp.float32)
    q = jnp.tanh(xc_q + hc_q)                              # bias already in xc

    h_new = (1.0 - z) * h2 + z * q
    out_ref[0] = h_new.reshape(L, Mt, Ch).astype(out_ref.dtype)


# ------------------------------- pallas wrapper -------------------------------
def _pick_m_tile(M):
    """Largest sublane-aligned tile (<=128) giving >=2 grid steps along the
    non-conv axis (megacore / DMA-compute overlap); falls back to the full axis."""
    if M % 8 != 0:
        return M
    for t in range(min(M - 8, 128), 7, -8):
        if M % t == 0:
            return t
    return M


def _default_vmem_limit():
    cap = 64 * 1024 * 1024                       # conservative fallback (v7x)
    try:
        cap = int(pltpu.get_tpu_info().vmem_capacity_bytes)
    except Exception:
        pass
    return int(cap * 3 // 4)                     # leave compiler headroom


def _half_step_call(hL, xpL, wts, m_tile, vmem_limit_bytes):
    """One GRU half-step as a pallas_call.

    hL  : (B, L, M, Ch) f32, conv runs along L.
    xpL : (B, L + 2*PAD, M, Cx) bf16, zero-padded along L.
    """
    B, L, M, Ch = hL.shape
    Cx = xpL.shape[-1]
    if m_tile is None:
        m_tile = _pick_m_tile(M)
    assert m_tile == M or (M % m_tile == 0 and m_tile % 8 == 0), (M, m_tile)
    grid = (B, M // m_tile)

    kernel = pl.pallas_call(
        _half_step_kernel,
        out_shape=jax.ShapeDtypeStruct((B, L, M, Ch), jnp.float32),
        grid_spec=pltpu.PrefetchScalarGridSpec(
            num_scalar_prefetch=0,
            grid=grid,
            in_specs=[
                pl.BlockSpec((1, L, m_tile, Ch), lambda b, m: (b, 0, m, 0)),
                pl.BlockSpec((1, L + 2 * PAD, m_tile, Cx),
                             lambda b, m: (b, 0, m, 0)),
                # Constant-index weights/biases: fetched once, reused every step.
                pl.BlockSpec((KSIZE, Cx, 3 * Ch), lambda b, m: (0, 0, 0)),
                pl.BlockSpec((KSIZE, Ch, 2 * Ch), lambda b, m: (0, 0, 0)),
                pl.BlockSpec((KSIZE, Ch, Ch), lambda b, m: (0, 0, 0)),
                pl.BlockSpec((1, 3 * Ch), lambda b, m: (0, 0)),
            ],
            out_specs=pl.BlockSpec((1, L, m_tile, Ch), lambda b, m: (b, 0, m, 0)),
            scratch_shapes=[
                pltpu.VMEM((L + 2 * PAD, m_tile, Ch), wts["wh_zr"].dtype)],
        ),
        compiler_params=pltpu.CompilerParams(
            dimension_semantics=("parallel", "parallel"),
            vmem_limit_bytes=vmem_limit_bytes,
        ),
        input_output_aliases={0: 0},   # donates the wrapper-internal h intermediate
    )
    return kernel(hL, xpL, wts["wx_all"], wts["wh_zr"], wts["wh_q"], wts["bias"])


def pack_params(p, Ch, h_dtype=jnp.float32, x_dtype=jnp.bfloat16):
    """Split each (K, Cin, Ch) weight at Cin=Ch into h/x parts, fuse z|r|q along
    Cout on the x side and z|r on the h side, and cast the x side to bf16.
    Returns a list of per-pass dicts (pass 0 = (1,5) conv, pass 1 = (5,1) conv)."""
    def split(w):
        return w[:, :Ch, :], w[:, Ch:, :]

    packed = []
    for s in ("1", "2"):
        wz_h, wz_x = split(p[f"wz{s}"])
        wr_h, wr_x = split(p[f"wr{s}"])
        wq_h, wq_x = split(p[f"wq{s}"])
        packed.append(dict(
            wx_all=jnp.concatenate([wz_x, wr_x, wq_x], axis=-1).astype(x_dtype),  # (K,Cx,3Ch)
            wh_zr=jnp.concatenate([wz_h, wr_h], axis=-1).astype(h_dtype),          # (K,Ch,2Ch)
            wh_q=wq_h.astype(h_dtype),                                             # (K,Ch,Ch)
            bias=jnp.concatenate([p[f"bz{s}"], p[f"br{s}"], p[f"bq{s}"]],
                                 axis=-1).astype(jnp.float32),                     # (1,3Ch)
        ))
    return packed


def sep_conv_gru(h, x, packed, *, m_tile=None, vmem_limit_bytes=None):
    """SepConvGRU forward. h: (B,H,W,Ch), x: (B,H,W,Cx), NHWC. Returns f32 h."""
    if vmem_limit_bytes is None:
        vmem_limit_bytes = _default_vmem_limit()
    h = h.astype(jnp.float32)
    xb = x.astype(packed[0]["wx_all"].dtype)

    # Pass 1: PyTorch (1,5) conv -> conv along W.  Work in W-major layout so taps
    # shift the untiled leading dim; x is transposed + zero-padded once in HBM.
    x1 = jnp.pad(jnp.transpose(xb, (0, 2, 1, 3)),
                 ((0, 0), (PAD, PAD), (0, 0), (0, 0)))            # (B, W+4, H, Cx)
    h1 = jnp.transpose(h, (0, 2, 1, 3))                           # (B, W, H, Ch)
    h1 = _half_step_call(h1, x1, packed[0], m_tile, vmem_limit_bytes)

    # Pass 2: PyTorch (5,1) conv -> conv along H, natural layout.
    x2 = jnp.pad(xb, ((0, 0), (PAD, PAD), (0, 0), (0, 0)))        # (B, H+4, W, Cx)
    h2 = jnp.transpose(h1, (0, 2, 1, 3))                          # (B, H, W, Ch)
    return _half_step_call(h2, x2, packed[1], m_tile, vmem_limit_bytes)


# ------------------------------ pure-JAX reference ----------------------------
def _conv_ref(inp, w, b, axis):
    K, Cin, Cout = w.shape
    if axis == 0:
        kernel = w.reshape(K, 1, Cin, Cout)      # HWIO
        pad = ((PAD, PAD), (0, 0))
    else:
        kernel = w.reshape(1, K, Cin, Cout)
        pad = ((0, 0), (PAD, PAD))
    out = lax.conv_general_dilated(
        inp, kernel, window_strides=(1, 1), padding=pad,
        dimension_numbers=("NHWC", "HWIO", "NHWC"),
        precision=lax.Precision.HIGHEST)
    return out + b.reshape(1, 1, 1, Cout)


def _gru_pass_ref(h, x, wz, bz, wr, br, wq, bq, axis):
    hx = jnp.concatenate([h, x], axis=-1)
    z = jax.nn.sigmoid(_conv_ref(hx, wz, bz, axis))
    r = jax.nn.sigmoid(_conv_ref(hx, wr, br, axis))
    q = jnp.tanh(_conv_ref(jnp.concatenate([r * h, x], axis=-1), wq, bq, axis))
    return (1.0 - z) * h + z * q


def sep_conv_gru_ref(h, x, p):
    h = _gru_pass_ref(h, x, p["wz1"], p["bz1"], p["wr1"], p["br1"],
                      p["wq1"], p["bq1"], axis=1)
    h = _gru_pass_ref(h, x, p["wz2"], p["bz2"], p["wr2"], p["br2"],
                      p["wq2"], p["bq2"], axis=0)
    return h


# ----------------------------------- main -------------------------------------
if __name__ == "__main__":
    B, H, W = 2, 8, 16
    HIDDEN, INPUT = 32, 32           # small analogue of hidden_dim=128, input_dim=320
    CIN = HIDDEN + INPUT

    key = jax.random.PRNGKey(0)
    keys = jax.random.split(key, 14)

    def w_init(k):
        return (0.1 * jax.random.normal(k, (KSIZE, CIN, HIDDEN))).astype(jnp.float32)

    def b_init(k):
        return (0.1 * jax.random.normal(k, (1, HIDDEN))).astype(jnp.float32)

    params = {
        "wz1": w_init(keys[0]), "bz1": b_init(keys[1]),
        "wr1": w_init(keys[2]), "br1": b_init(keys[3]),
        "wq1": w_init(keys[4]), "bq1": b_init(keys[5]),
        "wz2": w_init(keys[6]), "bz2": b_init(keys[7]),
        "wr2": w_init(keys[8]), "br2": b_init(keys[9]),
        "wq2": w_init(keys[10]), "bq2": b_init(keys[11]),
    }

    h0 = jax.random.normal(keys[12], (B, H, W, HIDDEN), dtype=jnp.float32)
    x0 = jax.random.normal(keys[13], (B, H, W, INPUT), dtype=jnp.float32)

    ref = jax.block_until_ready(sep_conv_gru_ref(h0, x0, params))

    packed = pack_params(params, HIDDEN)
    out = jax.block_until_ready(jax.jit(sep_conv_gru)(h0, x0, packed))

    # x-side operands are bf16 (accumulation and the h path stay f32).
    np.testing.assert_allclose(np.asarray(out), np.asarray(ref), rtol=3e-2, atol=3e-2)
    print("KERNEL_OK")
</pallas_src>

<mosaic_0001>
module attributes {stable_mosaic.version = 11 : i64} {
  func.func @_half_step_kernel(%arg0: i32, %arg1: i32, %arg2: memref<1x8x8x32xf32, #tpu.memory_space<vmem>>, %arg3: memref<1x12x8x32xbf16, #tpu.memory_space<vmem>>, %arg4: memref<5x32x96xbf16, #tpu.memory_space<vmem>>, %arg5: memref<5x32x64xf32, #tpu.memory_space<vmem>>, %arg6: memref<5x32x32xf32, #tpu.memory_space<vmem>>, %arg7: memref<1x96xf32, #tpu.memory_space<vmem>>, %arg8: memref<1x8x8x32xf32, #tpu.memory_space<vmem>>, %arg9: memref<12x8x32xf32, #tpu.memory_space<vmem>>) attributes {dimension_semantics = [#tpu.dimension_semantics<parallel>, #tpu.dimension_semantics<parallel>], iteration_bounds = array<i64: 2, 2>, scalar_prefetch = 0 : i64, scratch_operands = 1 : i64, tpu.core_type = #tpu.core_type<tc>, window_params = [{transform_indices = @transform_0, window_bounds = array<i64: 1, 8, 8, 32>}, {transform_indices = @transform_1, window_bounds = array<i64: 1, 12, 8, 32>}, {pipeline_mode = #tpu.pipeline_mode<synchronous>, transform_indices = @transform_2, window_bounds = array<i64: 5, 32, 96>}, {pipeline_mode = #tpu.pipeline_mode<synchronous>, transform_indices = @transform_3, window_bounds = array<i64: 5, 32, 64>}, {pipeline_mode = #tpu.pipeline_mode<synchronous>, transform_indices = @transform_4, window_bounds = array<i64: 5, 32, 32>}, {pipeline_mode = #tpu.pipeline_mode<synchronous>, transform_indices = @transform_5, window_bounds = array<i64: 1, 96>}, {transform_indices = @transform_6, window_bounds = array<i64: 1, 8, 8, 32>}]} {
    %c0 = arith.constant 0 : index
    %c0_0 = arith.constant 0 : index
    %c0_1 = arith.constant 0 : index
    %c0_2 = arith.constant 0 : index
    %0 = vector.load %arg2[%c0, %c0_0, %c0_1, %c0_2] : memref<1x8x8x32xf32, #tpu.memory_space<vmem>>, vector<1x8x8x32xf32>
    %1 = vector.shape_cast %0 : vector<1x8x8x32xf32> to vector<8x8x32xf32>
    %2 = vector.shape_cast %1 : vector<8x8x32xf32> to vector<64x32xf32>
    %c0_3 = arith.constant 0 : index
    %c0_4 = arith.constant 0 : index
    %c0_5 = arith.constant 0 : index
    %c0_6 = arith.constant 0 : index
    %3 = vector.load %arg3[%c0_3, %c0_4, %c0_5, %c0_6] : memref<1x12x8x32xbf16, #tpu.memory_space<vmem>>, vector<1x12x8x32xbf16>
    %4 = vector.shape_cast %3 : vector<1x12x8x32xbf16> to vector<12x8x32xbf16>
    %5 = vector.shape_cast %4 : vector<12x8x32xbf16> to vector<96x32xbf16>
    %c0_7 = arith.constant 0 : index
    %c0_8 = arith.constant 0 : index
    %6 = vector.load %arg7[%c0_7, %c0_8] : memref<1x96xf32, #tpu.memory_space<vmem>>, vector<1x96xf32>
    %7 = vector.shape_cast %6 : vector<1x96xf32> to vector<1x96xf32>
    %8 = vector.broadcast %7 : vector<1x96xf32> to vector<64x96xf32>
    %9 = vector.extract_strided_slice %5 {offsets = [0, 0], sizes = [64, 32], strides = [1, 1]} : vector<96x32xbf16> to vector<64x32xbf16>
    %c0_9 = arith.constant 0 : index
    %c0_10 = arith.constant 0 : index
    %c0_11 = arith.constant 0 : index
    %10 = vector.load %arg4[%c0_9, %c0_10, %c0_11] : memref<5x32x96xbf16, #tpu.memory_space<vmem>>, vector<1x32x96xbf16>
    %11 = vector.shape_cast %10 : vector<1x32x96xbf16> to vector<32x96xbf16>
    %cst = arith.constant dense<0.000000e+00> : vector<64x96xf32>
    %12 = tpu.matmul %9, %11, %cst {dimension_numbers = #tpu.dot_dimension_numbers<[1], [0], [0], [1], [0, 0, 1, 1], [], []>} : vector<64x32xbf16>, vector<32x96xbf16>, vector<64x96xf32> -> vector<64x96xf32>
    %13 = arith.addf %8, %12 : vector<64x96xf32>
    %14 = vector.extract_strided_slice %5 {offsets = [8, 0], sizes = [64, 32], strides = [1, 1]} : vector<96x32xbf16> to vector<64x32xbf16>
    %c1 = arith.constant 1 : index
    %c0_12 = arith.constant 0 : index
    %c0_13 = arith.constant 0 : index
    %15 = vector.load %arg4[%c1, %c0_12, %c0_13] : memref<5x32x96xbf16, #tpu.memory_space<vmem>>, vector<1x32x96xbf16>
    %16 = vector.shape_cast %15 : vector<1x32x96xbf16> to vector<32x96xbf16>
    %cst_14 = arith.constant dense<0.000000e+00> : vector<64x96xf32>
    %17 = tpu.matmul %14, %16, %cst_14 {dimension_numbers = #tpu.dot_dimension_numbers<[1], [0], [0], [1], [0, 0, 1, 1], [], []>} : vector<64x32xbf16>, vector<32x96xbf16>, vector<64x96xf32> -> vector<64x96xf32>
    %18 = arith.addf %13, %17 : vector<64x96xf32>
    %19 = vector.extract_strided_slice %5 {offsets = [16, 0], sizes = [64, 32], strides = [1, 1]} : vector<96x32xbf16> to vector<64x32xbf16>
    %c2 = arith.constant 2 : index
    %c0_15 = arith.constant 0 : index
    %c0_16 = arith.constant 0 : index
    %20 = vector.load %arg4[%c2, %c0_15, %c0_16] : memref<5x32x96xbf16, #tpu.memory_space<vmem>>, vector<1x32x96xbf16>
    %21 = vector.shape_cast %20 : vector<1x32x96xbf16> to vector<32x96xbf16>
    %cst_17 = arith.constant dense<0.000000e+00> : vector<64x96xf32>
    %22 = tpu.matmul %19, %21, %cst_17 {dimension_numbers = #tpu.dot_dimension_numbers<[1], [0], [0], [1], [0, 0, 1, 1], [], []>} : vector<64x32xbf16>, vector<32x96xbf16>, vector<64x96xf32> -> vector<64x96xf32>
    %23 = arith.addf %18, %22 : vector<64x96xf32>
    %24 = vector.extract_strided_slice %5 {offsets = [24, 0], sizes = [64, 32], strides = [1, 1]} : vector<96x32xbf16> to vector<64x32xbf16>
    %c3 = arith.constant 3 : index
    %c0_18 = arith.constant 0 : index
    %c0_19 = arith.constant 0 : index
    %25 = vector.load %arg4[%c3, %c0_18, %c0_19] : memref<5x32x96xbf16, #tpu.memory_space<vmem>>, vector<1x32x96xbf16>
    %26 = vector.shape_cast %25 : vector<1x32x96xbf16> to vector<32x96xbf16>
    %cst_20 = arith.constant dense<0.000000e+00> : vector<64x96xf32>
    %27 = tpu.matmul %24, %26, %cst_20 {dimension_numbers = #tpu.dot_dimension_numbers<[1], [0], [0], [1], [0, 0, 1, 1], [], []>} : vector<64x32xbf16>, vector<32x96xbf16>, vector<64x96xf32> -> vector<64x96xf32>
    %28 = arith.addf %23, %27 : vector<64x96xf32>
    %29 = vector.extract_strided_slice %5 {offsets = [32, 0], sizes = [64, 32], strides = [1, 1]} : vector<96x32xbf16> to vector<64x32xbf16>
    %c4 = arith.constant 4 : index
    %c0_21 = arith.constant 0 : index
    %c0_22 = arith.constant 0 : index
    %30 = vector.load %arg4[%c4, %c0_21, %c0_22] : memref<5x32x96xbf16, #tpu.memory_space<vmem>>, vector<1x32x96xbf16>
    %31 = vector.shape_cast %30 : vector<1x32x96xbf16> to vector<32x96xbf16>
    %cst_23 = arith.constant dense<0.000000e+00> : vector<64x96xf32>
    %32 = tpu.matmul %29, %31, %cst_23 {dimension_numbers = #tpu.dot_dimension_numbers<[1], [0], [0], [1], [0, 0, 1, 1], [], []>} : vector<64x32xbf16>, vector<32x96xbf16>, vector<64x96xf32> -> vector<64x96xf32>
    %33 = arith.addf %28, %32 : vector<64x96xf32>
    %34 = vector.extract_strided_slice %33 {offsets = [0, 0], sizes = [64, 64], strides = [1, 1]} : vector<64x96xf32> to vector<64x64xf32>
    %35 = vector.extract_strided_slice %33 {offsets = [0, 64], sizes = [64, 32], strides = [1, 1]} : vector<64x96xf32> to vector<64x32xf32>
    %cst_24 = arith.constant 0.000000e+00 : f32
    %36 = vector.broadcast %cst_24 : f32 to vector<2x8x32xf32>
    %c0_25 = arith.constant 0 : index
    %c0_26 = arith.constant 0 : index
    %c0_27 = arith.constant 0 : index
    %37 = vector.load %arg9[%c0_25, %c0_26, %c0_27] : memref<12x8x32xf32, #tpu.memory_space<vmem>>, vector<2x8x32xf32>
    tpu.vector_store %arg9[%c0_25, %c0_26, %c0_27], %36 {strides = array<i32>} : memref<12x8x32xf32, #tpu.memory_space<vmem>>, vector<2x8x32xf32>,
    %c10 = arith.constant 10 : index
    %c0_28 = arith.constant 0 : index
    %c0_29 = arith.constant 0 : index
    %38 = vector.load %arg9[%c10, %c0_28, %c0_29] : memref<12x8x32xf32, #tpu.memory_space<vmem>>, vector<2x8x32xf32>
    tpu.vector_store %arg9[%c10, %c0_28, %c0_29], %36 {strides = array<i32>} : memref<12x8x32xf32, #tpu.memory_space<vmem>>, vector<2x8x32xf32>,
    %c2_30 = arith.constant 2 : index
    %c0_31 = arith.constant 0 : index
    %c0_32 = arith.constant 0 : index
    %39 = vector.load %arg9[%c2_30, %c0_31, %c0_32] : memref<12x8x32xf32, #tpu.memory_space<vmem>>, vector<8x8x32xf32>
    tpu.vector_store %arg9[%c2_30, %c0_31, %c0_32], %1 {strides = array<i32>} : memref<12x8x32xf32, #tpu.memory_space<vmem>>, vector<8x8x32xf32>,
    %c0_33 = arith.constant 0 : index
    %c0_34 = arith.constant 0 : index
    %c0_35 = arith.constant 0 : index
    %40 = vector.load %arg9[%c0_33, %c0_34, %c0_35] : memref<12x8x32xf32, #tpu.memory_space<vmem>>, vector<12x8x32xf32>
    %41 = vector.shape_cast %40 : vector<12x8x32xf32> to vector<96x32xf32>
    %cst_36 = arith.constant 0.000000e+00 : f32
    %42 = vector.broadcast %cst_36 : f32 to vector<64x64xf32>
    %43 = vector.extract_strided_slice %41 {offsets = [0, 0], sizes = [64, 32], strides = [1, 1]} : vector<96x32xf32> to vector<64x32xf32>
    %c0_37 = arith.constant 0 : index
    %c0_38 = arith.constant 0 : index
    %c0_39 = arith.constant 0 : index
    %44 = vector.load %arg5[%c0_37, %c0_38, %c0_39] : memref<5x32x64xf32, #tpu.memory_space<vmem>>, vector<1x32x64xf32>
    %45 = vector.shape_cast %44 : vector<1x32x64xf32> to vector<32x64xf32>
    %cst_40 = arith.constant dense<0.000000e+00> : vector<64x64xf32>
    %46 = tpu.matmul %43, %45, %cst_40 {dimension_numbers = #tpu.dot_dimension_numbers<[1], [0], [0], [1], [0, 0, 1, 1], [], []>} : vector<64x32xf32>, vector<32x64xf32>, vector<64x64xf32> -> vector<64x64xf32>
    %47 = arith.addf %42, %46 : vector<64x64xf32>
    %48 = vector.extract_strided_slice %41 {offsets = [8, 0], sizes = [64, 32], strides = [1, 1]} : vector<96x32xf32> to vector<64x32xf32>
    %c1_41 = arith.constant 1 : index
    %c0_42 = arith.constant 0 : index
    %c0_43 = arith.constant 0 : index
    %49 = vector.load %arg5[%c1_41, %c0_42, %c0_43] : memref<5x32x64xf32, #tpu.memory_space<vmem>>, vector<1x32x64xf32>
    %50 = vector.shape_cast %49 : vector<1x32x64xf32> to vector<32x64xf32>
    %cst_44 = arith.constant dense<0.000000e+00> : vector<64x64xf32>
    %51 = tpu.matmul %48, %50, %cst_44 {dimension_numbers = #tpu.dot_dimension_numbers<[1], [0], [0], [1], [0, 0, 1, 1], [], []>} : vector<64x32xf32>, vector<32x64xf32>, vector<64x64xf32> -> vector<64x64xf32>
    %52 = arith.addf %47, %51 : vector<64x64xf32>
    %53 = vector.extract_strided_slice %41 {offsets = [16, 0], sizes = [64, 32], strides = [1, 1]} : vector<96x32xf32> to vector<64x32xf32>
    %c2_45 = arith.constant 2 : index
    %c0_46 = arith.constant 0 : index
    %c0_47 = arith.constant 0 : index
    %54 = vector.load %arg5[%c2_45, %c0_46, %c0_47] : memref<5x32x64xf32, #tpu.memory_space<vmem>>, vector<1x32x64xf32>
    %55 = vector.shape_cast %54 : vector<1x32x64xf32> to vector<32x64xf32>
    %cst_48 = arith.constant dense<0.000000e+00> : vector<64x64xf32>
    %56 = tpu.matmul %53, %55, %cst_48 {dimension_numbers = #tpu.dot_dimension_numbers<[1], [0], [0], [1], [0, 0, 1, 1], [], []>} : vector<64x32xf32>, vector<32x64xf32>, vector<64x64xf32> -> vector<64x64xf32>
    %57 = arith.addf %52, %56 : vector<64x64xf32>
    %58 = vector.extract_strided_slice %41 {offsets = [24, 0], sizes = [64, 32], strides = [1, 1]} : vector<96x32xf32> to vector<64x32xf32>
    %c3_49 = arith.constant 3 : index
    %c0_50 = arith.constant 0 : index
    %c0_51 = arith.constant 0 : index
    %59 = vector.load %arg5[%c3_49, %c0_50, %c0_51] : memref<5x32x64xf32, #tpu.memory_space<vmem>>, vector<1x32x64xf32>
    %60 = vector.shape_cast %59 : vector<1x32x64xf32> to vector<32x64xf32>
    %cst_52 = arith.constant dense<0.000000e+00> : vector<64x64xf32>
    %61 = tpu.matmul %58, %60, %cst_52 {dimension_numbers = #tpu.dot_dimension_numbers<[1], [0], [0], [1], [0, 0, 1, 1], [], []>} : vector<64x32xf32>, vector<32x64xf32>, vector<64x64xf32> -> vector<64x64xf32>
    %62 = arith.addf %57, %61 : vector<64x64xf32>
    %63 = vector.extract_strided_slice %41 {offsets = [32, 0], sizes = [64, 32], strides = [1, 1]} : vector<96x32xf32> to vector<64x32xf32>
    %c4_53 = arith.constant 4 : index
    %c0_54 = arith.constant 0 : index
    %c0_55 = arith.constant 0 : index
    %64 = vector.load %arg5[%c4_53, %c0_54, %c0_55] : memref<5x32x64xf32, #tpu.memory_space<vmem>>, vector<1x32x64xf32>
    %65 = vector.shape_cast %64 : vector<1x32x64xf32> to vector<32x64xf32>
    %cst_56 = arith.constant dense<0.000000e+00> : vector<64x64xf32>
    %66 = tpu.matmul %63, %65, %cst_56 {dimension_numbers = #tpu.dot_dimension_numbers<[1], [0], [0], [1], [0, 0, 1, 1], [], []>} : vector<64x32xf32>, vector<32x64xf32>, vector<64x64xf32> -> vector<64x64xf32>
    %67 = arith.addf %62, %66 : vector<64x64xf32>
    %68 = arith.addf %34, %67 : vector<64x64xf32>
    %69 = arith.negf %68 : vector<64x64xf32>
    %70 = math.exp %69 : vector<64x64xf32>
    %cst_57 = arith.constant 1.000000e+00 : f32
    %71 = vector.broadcast %cst_57 : f32 to vector<64x64xf32>
    %72 = arith.addf %71, %70 : vector<64x64xf32>
    %73 = arith.divf %71, %72 : vector<64x64xf32>
    %74 = vector.extract_strided_slice %73 {offsets = [0, 0], sizes = [64, 32], strides = [1, 1]} : vector<64x64xf32> to vector<64x32xf32>
    %75 = vector.extract_strided_slice %73 {offsets = [0, 32], sizes = [64, 32], strides = [1, 1]} : vector<64x64xf32> to vector<64x32xf32>
    %76 = arith.mulf %75, %2 : vector<64x32xf32>
    %77 = vector.shape_cast %76 : vector<64x32xf32> to vector<8x8x32xf32>
    %c2_58 = arith.constant 2 : index
    %c0_59 = arith.constant 0 : index
    %c0_60 = arith.constant 0 : index
    %78 = vector.load %arg9[%c2_58, %c0_59, %c0_60] : memref<12x8x32xf32, #tpu.memory_space<vmem>>, vector<8x8x32xf32>
    tpu.vector_store %arg9[%c2_58, %c0_59, %c0_60], %77 {strides = array<i32>} : memref<12x8x32xf32, #tpu.memory_space<vmem>>, vector<8x8x32xf32>,
    %c0_61 = arith.constant 0 : index
    %c0_62 = arith.constant 0 : index
    %c0_63 = arith.constant 0 : index
    %79 = vector.load %arg9[%c0_61, %c0_62, %c0_63] : memref<12x8x32xf32, #tpu.memory_space<vmem>>, vector<12x8x32xf32>
    %80 = vector.shape_cast %79 : vector<12x8x32xf32> to vector<96x32xf32>
    %cst_64 = arith.constant 0.000000e+00 : f32
    %81 = vector.broadcast %cst_64 : f32 to vector<64x32xf32>
    %82 = vector.extract_strided_slice %80 {offsets = [0, 0], sizes = [64, 32], strides = [1, 1]} : vector<96x32xf32> to vector<64x32xf32>
    %c0_65 = arith.constant 0 : index
    %c0_66 = arith.constant 0 : index
    %c0_67 = arith.constant 0 : index
    %83 = vector.load %arg6[%c0_65, %c0_66, %c0_67] : memref<5x32x32xf32, #tpu.memory_space<vmem>>, vector<1x32x32xf32>
    %84 = vector.shape_cast %83 : vector<1x32x32xf32> to vector<32x32xf32>
    %cst_68 = arith.constant dense<0.000000e+00> : vector<64x32xf32>
    %85 = tpu.matmul %82, %84, %cst_68 {dimension_numbers = #tpu.dot_dimension_numbers<[1], [0], [0], [1], [0, 0, 1, 1], [], []>} : vector<64x32xf32>, vector<32x32xf32>, vector<64x32xf32> -> vector<64x32xf32>
    %86 = arith.addf %81, %85 : vector<64x32xf32>
    %87 = vector.extract_strided_slice %80 {offsets = [8, 0], sizes = [64, 32], strides = [1, 1]} : vector<96x32xf32> to vector<64x32xf32>
    %c1_69 = arith.constant 1 : index
    %c0_70 = arith.constant 0 : index
    %c0_71 = arith.constant 0 : index
    %88 = vector.load %arg6[%c1_69, %c0_70, %c0_71] : memref<5x32x32xf32, #tpu.memory_space<vmem>>, vector<1x32x32xf32>
    %89 = vector.shape_cast %88 : vector<1x32x32xf32> to vector<32x32xf32>
    %cst_72 = arith.constant dense<0.000000e+00> : vector<64x32xf32>
    %90 = tpu.matmul %87, %89, %cst_72 {dimension_numbers = #tpu.dot_dimension_numbers<[1], [0], [0], [1], [0, 0, 1, 1], [], []>} : vector<64x32xf32>, vector<32x32xf32>, vector<64x32xf32> -> vector<64x32xf32>
    %91 = arith.addf %86, %90 : vector<64x32xf32>
    %92 = vector.extract_strided_slice %80 {offsets = [16, 0], sizes = [64, 32], strides = [1, 1]} : vector<96x32xf32> to vector<64x32xf32>
    %c2_73 = arith.constant 2 : index
    %c0_74 = arith.constant 0 : index
    %c0_75 = arith.constant 0 : index
    %93 = vector.load %arg6[%c2_73, %c0_74, %c0_75] : memref<5x32x32xf32, #tpu.memory_space<vmem>>, vector<1x32x32xf32>
    %94 = vector.shape_cast %93 : vector<1x32x32xf32> to vector<32x32xf32>
    %cst_76 = arith.constant dense<0.000000e+00> : vector<64x32xf32>
    %95 = tpu.matmul %92, %94, %cst_76 {dimension_numbers = #tpu.dot_dimension_numbers<[1], [0], [0], [1], [0, 0, 1, 1], [], []>} : vector<64x32xf32>, vector<32x32xf32>, vector<64x32xf32> -> vector<64x32xf32>
    %96 = arith.addf %91, %95 : vector<64x32xf32>
    %97 = vector.extract_strided_slice %80 {offsets = [24, 0], sizes = [64, 32], strides = [1, 1]} : vector<96x32xf32> to vector<64x32xf32>
    %c3_77 = arith.constant 3 : index
    %c0_78 = arith.constant 0 : index
    %c0_79 = arith.constant 0 : index
    %98 = vector.load %arg6[%c3_77, %c0_78, %c0_79] : memref<5x32x32xf32, #tpu.memory_space<vmem>>, vector<1x32x32xf32>
    %99 = vector.shape_cast %98 : vector<1x32x32xf32> to vector<32x32xf32>
    %cst_80 = arith.constant dense<0.000000e+00> : vector<64x32xf32>
    %100 = tpu.matmul %97, %99, %cst_80 {dimension_numbers = #tpu.dot_dimension_numbers<[1], [0], [0], [1], [0, 0, 1, 1], [], []>} : vector<64x32xf32>, vector<32x32xf32>, vector<64x32xf32> -> vector<64x32xf32>
    %101 = arith.addf %96, %100 : vector<64x32xf32>
    %102 = vector.extract_strided_slice %80 {offsets = [32, 0], sizes = [64, 32], strides = [1, 1]} : vector<96x32xf32> to vector<64x32xf32>
    %c4_81 = arith.constant 4 : index
    %c0_82 = arith.constant 0 : index
    %c0_83 = arith.constant 0 : index
    %103 = vector.load %arg6[%c4_81, %c0_82, %c0_83] : memref<5x32x32xf32, #tpu.memory_space<vmem>>, vector<1x32x32xf32>
    %104 = vector.shape_cast %103 : vector<1x32x32xf32> to vector<32x32xf32>
    %cst_84 = arith.constant dense<0.000000e+00> : vector<64x32xf32>
    %105 = tpu.matmul %102, %104, %cst_84 {dimension_numbers = #tpu.dot_dimension_numbers<[1], [0], [0], [1], [0, 0, 1, 1], [], []>} : vector<64x32xf32>, vector<32x32xf32>, vector<64x32xf32> -> vector<64x32xf32>
    %106 = arith.addf %101, %105 : vector<64x32xf32>
    %107 = arith.addf %35, %106 : vector<64x32xf32>
    %108 = math.tanh %107 : vector<64x32xf32>
    %cst_85 = arith.constant 1.000000e+00 : f32
    %109 = vector.broadcast %cst_85 : f32 to vector<64x32xf32>
    %110 = arith.subf %109, %74 : vector<64x32xf32>
    %111 = arith.mulf %110, %2 : vector<64x32xf32>
    %112 = arith.mulf %74, %108 : vector<64x32xf32>
    %113 = arith.addf %111, %112 : vector<64x32xf32>
    %114 = vector.shape_cast %113 : vector<64x32xf32> to vector<8x8x32xf32>
    %c0_86 = arith.constant 0 : index
    %c0_87 = arith.constant 0 : index
    %c0_88 = arith.constant 0 : index
    %c0_89 = arith.constant 0 : index
    %115 = vector.load %arg8[%c0_86, %c0_87, %c0_88, %c0_89] : memref<1x8x8x32xf32, #tpu.memory_space<vmem>>, vector<1x8x8x32xf32>
    %116 = vector.shape_cast %115 : vector<1x8x8x32xf32> to vector<8x8x32xf32>
    %117 = vector.shape_cast %114 : vector<8x8x32xf32> to vector<1x8x8x32xf32>
    tpu.vector_store %arg8[%c0_86, %c0_87, %c0_88, %c0_89], %117 {strides = array<i32>} : memref<1x8x8x32xf32, #tpu.memory_space<vmem>>, vector<1x8x8x32xf32>,
    return
  }
  func.func @transform_0(%arg0: i32, %arg1: i32) -> (i32, i32, i32, i32) {
    %c0_i32 = arith.constant 0 : i32
    %c0_i32_0 = arith.constant 0 : i32
    %c0_i32_1 = arith.constant 0 : i32
    return %arg0, %c0_i32, %arg1, %c0_i32_0 : i32, i32, i32, i32
  }
  func.func @transform_1(%arg0: i32, %arg1: i32) -> (i32, i32, i32, i32) {
    %c0_i32 = arith.constant 0 : i32
    %c0_i32_0 = arith.constant 0 : i32
    %c0_i32_1 = arith.constant 0 : i32
    return %arg0, %c0_i32, %arg1, %c0_i32_0 : i32, i32, i32, i32
  }
  func.func @transform_2(%arg0: i32, %arg1: i32) -> (i32, i32, i32) {
    %c0_i32 = arith.constant 0 : i32
    %c0_i32_0 = arith.constant 0 : i32
    %c0_i32_1 = arith.constant 0 : i32
    %c0_i32_2 = arith.constant 0 : i32
    return %c0_i32, %c0_i32_0, %c0_i32_1 : i32, i32, i32
  }
  func.func @transform_3(%arg0: i32, %arg1: i32) -> (i32, i32, i32) {
    %c0_i32 = arith.constant 0 : i32
    %c0_i32_0 = arith.constant 0 : i32
    %c0_i32_1 = arith.constant 0 : i32
    %c0_i32_2 = arith.constant 0 : i32
    return %c0_i32, %c0_i32_0, %c0_i32_1 : i32, i32, i32
  }
  func.func @transform_4(%arg0: i32, %arg1: i32) -> (i32, i32, i32) {
    %c0_i32 = arith.constant 0 : i32
    %c0_i32_0 = arith.constant 0 : i32
    %c0_i32_1 = arith.constant 0 : i32
    %c0_i32_2 = arith.constant 0 : i32
    return %c0_i32, %c0_i32_0, %c0_i32_1 : i32, i32, i32
  }
  func.func @transform_5(%arg0: i32, %arg1: i32) -> (i32, i32) {
    %c0_i32 = arith.constant 0 : i32
    %c0_i32_0 = arith.constant 0 : i32
    %c0_i32_1 = arith.constant 0 : i32
    return %c0_i32, %c0_i32_0 : i32, i32
  }
  func.func @transform_6(%arg0: i32, %arg1: i32) -> (i32, i32, i32, i32) {
    %c0_i32 = arith.constant 0 : i32
    %c0_i32_0 = arith.constant 0 : i32
    %c0_i32_1 = arith.constant 0 : i32
    return %arg0, %c0_i32, %arg1, %c0_i32_0 : i32, i32, i32, i32
  }
}

module attributes {stable_mosaic.version = 11 : i64} {
  func.func @_half_step_kernel(%arg0: i32, %arg1: i32, %arg2: memref<1x16x8x32xf32, #tpu.memory_space<vmem>>, %arg3: memref<1x20x8x32xbf16, #tpu.memory_space<vmem>>, %arg4: memref<5x32x96xbf16, #tpu.memory_space<vmem>>, %arg5: memref<5x32x64xf32, #tpu.memory_space<vmem>>, %arg6: memref<5x32x32xf32, #tpu.memory_space<vmem>>, %arg7: memref<1x96xf32, #tpu.memory_space<vmem>>, %arg8: memref<1x16x8x32xf32, #tpu.memory_space<vmem>>, %arg9: memref<20x8x32xf32, #tpu.memory_space<vmem>>) attributes {dimension_semantics = [#tpu.dimension_semantics<parallel>, #tpu.dimension_semantics<parallel>], iteration_bounds = array<i64: 2, 1>, scalar_prefetch = 0 : i64, scratch_operands = 1 : i64, tpu.core_type = #tpu.core_type<tc>, window_params = [{transform_indices = @transform_0, window_bounds = array<i64: 1, 16, 8, 32>}, {transform_indices = @transform_1, window_bounds = array<i64: 1, 20, 8, 32>}, {pipeline_mode = #tpu.pipeline_mode<synchronous>, transform_indices = @transform_2, window_bounds = array<i64: 5, 32, 96>}, {pipeline_mode = #tpu.pipeline_mode<synchronous>, transform_indices = @transform_3, window_bounds = array<i64: 5, 32, 64>}, {pipeline_mode = #tpu.pipeline_mode<synchronous>, transform_indices = @transform_4, window_bounds = array<i64: 5, 32, 32>}, {pipeline_mode = #tpu.pipeline_mode<synchronous>, transform_indices = @transform_5, window_bounds = array<i64: 1, 96>}, {transform_indices = @transform_6, window_bounds = array<i64: 1, 16, 8, 32>}]} {
    %c0 = arith.constant 0 : index
    %c0_0 = arith.constant 0 : index
    %c0_1 = arith.constant 0 : index
    %c0_2 = arith.constant 0 : index
    %0 = vector.load %arg2[%c0, %c0_0, %c0_1, %c0_2] : memref<1x16x8x32xf32, #tpu.memory_space<vmem>>, vector<1x16x8x32xf32>
    %1 = vector.shape_cast %0 : vector<1x16x8x32xf32> to vector<16x8x32xf32>
    %2 = vector.shape_cast %1 : vector<16x8x32xf32> to vector<128x32xf32>
    %c0_3 = arith.constant 0 : index
    %c0_4 = arith.constant 0 : index
    %c0_5 = arith.constant 0 : index
    %c0_6 = arith.constant 0 : index
    %3 = vector.load %arg3[%c0_3, %c0_4, %c0_5, %c0_6] : memref<1x20x8x32xbf16, #tpu.memory_space<vmem>>, vector<1x20x8x32xbf16>
    %4 = vector.shape_cast %3 : vector<1x20x8x32xbf16> to vector<20x8x32xbf16>
    %5 = vector.shape_cast %4 : vector<20x8x32xbf16> to vector<160x32xbf16>
    %c0_7 = arith.constant 0 : index
    %c0_8 = arith.constant 0 : index
    %6 = vector.load %arg7[%c0_7, %c0_8] : memref<1x96xf32, #tpu.memory_space<vmem>>, vector<1x96xf32>
    %7 = vector.shape_cast %6 : vector<1x96xf32> to vector<1x96xf32>
    %8 = vector.broadcast %7 : vector<1x96xf32> to vector<128x96xf32>
    %9 = vector.extract_strided_slice %5 {offsets = [0, 0], sizes = [128, 32], strides = [1, 1]} : vector<160x32xbf16> to vector<128x32xbf16>
    %c0_9 = arith.constant 0 : index
    %c0_10 = arith.constant 0 : index
    %c0_11 = arith.constant 0 : index
    %10 = vector.load %arg4[%c0_9, %c0_10, %c0_11] : memref<5x32x96xbf16, #tpu.memory_space<vmem>>, vector<1x32x96xbf16>
    %11 = vector.shape_cast %10 : vector<1x32x96xbf16> to vector<32x96xbf16>
    %cst = arith.constant dense<0.000000e+00> : vector<128x96xf32>
    %12 = tpu.matmul %9, %11, %cst {dimension_numbers = #tpu.dot_dimension_numbers<[1], [0], [0], [1], [0, 0, 1, 1], [], []>} : vector<128x32xbf16>, vector<32x96xbf16>, vector<128x96xf32> -> vector<128x96xf32>
    %13 = arith.addf %8, %12 : vector<128x96xf32>
    %14 = vector.extract_strided_slice %5 {offsets = [8, 0], sizes = [128, 32], strides = [1, 1]} : vector<160x32xbf16> to vector<128x32xbf16>
    %c1 = arith.constant 1 : index
    %c0_12 = arith.constant 0 : index
    %c0_13 = arith.constant 0 : index
    %15 = vector.load %arg4[%c1, %c0_12, %c0_13] : memref<5x32x96xbf16, #tpu.memory_space<vmem>>, vector<1x32x96xbf16>
    %16 = vector.shape_cast %15 : vector<1x32x96xbf16> to vector<32x96xbf16>
    %cst_14 = arith.constant dense<0.000000e+00> : vector<128x96xf32>
    %17 = tpu.matmul %14, %16, %cst_14 {dimension_numbers = #tpu.dot_dimension_numbers<[1], [0], [0], [1], [0, 0, 1, 1], [], []>} : vector<128x32xbf16>, vector<32x96xbf16>, vector<128x96xf32> -> vector<128x96xf32>
    %18 = arith.addf %13, %17 : vector<128x96xf32>
    %19 = vector.extract_strided_slice %5 {offsets = [16, 0], sizes = [128, 32], strides = [1, 1]} : vector<160x32xbf16> to vector<128x32xbf16>
    %c2 = arith.constant 2 : index
    %c0_15 = arith.constant 0 : index
    %c0_16 = arith.constant 0 : index
    %20 = vector.load %arg4[%c2, %c0_15, %c0_16] : memref<5x32x96xbf16, #tpu.memory_space<vmem>>, vector<1x32x96xbf16>
    %21 = vector.shape_cast %20 : vector<1x32x96xbf16> to vector<32x96xbf16>
    %cst_17 = arith.constant dense<0.000000e+00> : vector<128x96xf32>
    %22 = tpu.matmul %19, %21, %cst_17 {dimension_numbers = #tpu.dot_dimension_numbers<[1], [0], [0], [1], [0, 0, 1, 1], [], []>} : vector<128x32xbf16>, vector<32x96xbf16>, vector<128x96xf32> -> vector<128x96xf32>
    %23 = arith.addf %18, %22 : vector<128x96xf32>
    %24 = vector.extract_strided_slice %5 {offsets = [24, 0], sizes = [128, 32], strides = [1, 1]} : vector<160x32xbf16> to vector<128x32xbf16>
    %c3 = arith.constant 3 : index
    %c0_18 = arith.constant 0 : index
    %c0_19 = arith.constant 0 : index
    %25 = vector.load %arg4[%c3, %c0_18, %c0_19] : memref<5x32x96xbf16, #tpu.memory_space<vmem>>, vector<1x32x96xbf16>
    %26 = vector.shape_cast %25 : vector<1x32x96xbf16> to vector<32x96xbf16>
    %cst_20 = arith.constant dense<0.000000e+00> : vector<128x96xf32>
    %27 = tpu.matmul %24, %26, %cst_20 {dimension_numbers = #tpu.dot_dimension_numbers<[1], [0], [0], [1], [0, 0, 1, 1], [], []>} : vector<128x32xbf16>, vector<32x96xbf16>, vector<128x96xf32> -> vector<128x96xf32>
    %28 = arith.addf %23, %27 : vector<128x96xf32>
    %29 = vector.extract_strided_slice %5 {offsets = [32, 0], sizes = [128, 32], strides = [1, 1]} : vector<160x32xbf16> to vector<128x32xbf16>
    %c4 = arith.constant 4 : index
    %c0_21 = arith.constant 0 : index
    %c0_22 = arith.constant 0 : index
    %30 = vector.load %arg4[%c4, %c0_21, %c0_22] : memref<5x32x96xbf16, #tpu.memory_space<vmem>>, vector<1x32x96xbf16>
    %31 = vector.shape_cast %30 : vector<1x32x96xbf16> to vector<32x96xbf16>
    %cst_23 = arith.constant dense<0.000000e+00> : vector<128x96xf32>
    %32 = tpu.matmul %29, %31, %cst_23 {dimension_numbers = #tpu.dot_dimension_numbers<[1], [0], [0], [1], [0, 0, 1, 1], [], []>} : vector<128x32xbf16>, vector<32x96xbf16>, vector<128x96xf32> -> vector<128x96xf32>
    %33 = arith.addf %28, %32 : vector<128x96xf32>
    %34 = vector.extract_strided_slice %33 {offsets = [0, 0], sizes = [128, 64], strides = [1, 1]} : vector<128x96xf32> to vector<128x64xf32>
    %35 = vector.extract_strided_slice %33 {offsets = [0, 64], sizes = [128, 32], strides = [1, 1]} : vector<128x96xf32> to vector<128x32xf32>
    %cst_24 = arith.constant 0.000000e+00 : f32
    %36 = vector.broadcast %cst_24 : f32 to vector<2x8x32xf32>
    %c0_25 = arith.constant 0 : index
    %c0_26 = arith.constant 0 : index
    %c0_27 = arith.constant 0 : index
    %37 = vector.load %arg9[%c0_25, %c0_26, %c0_27] : memref<20x8x32xf32, #tpu.memory_space<vmem>>, vector<2x8x32xf32>
    tpu.vector_store %arg9[%c0_25, %c0_26, %c0_27], %36 {strides = array<i32>} : memref<20x8x32xf32, #tpu.memory_space<vmem>>, vector<2x8x32xf32>,
    %c18 = arith.constant 18 : index
    %c0_28 = arith.constant 0 : index
    %c0_29 = arith.constant 0 : index
    %38 = vector.load %arg9[%c18, %c0_28, %c0_29] : memref<20x8x32xf32, #tpu.memory_space<vmem>>, vector<2x8x32xf32>
    tpu.vector_store %arg9[%c18, %c0_28, %c0_29], %36 {strides = array<i32>} : memref<20x8x32xf32, #tpu.memory_space<vmem>>, vector<2x8x32xf32>,
    %c2_30 = arith.constant 2 : index
    %c0_31 = arith.constant 0 : index
    %c0_32 = arith.constant 0 : index
    %39 = vector.load %arg9[%c2_30, %c0_31, %c0_32] : memref<20x8x32xf32, #tpu.memory_space<vmem>>, vector<16x8x32xf32>
    tpu.vector_store %arg9[%c2_30, %c0_31, %c0_32], %1 {strides = array<i32>} : memref<20x8x32xf32, #tpu.memory_space<vmem>>, vector<16x8x32xf32>,
    %c0_33 = arith.constant 0 : index
    %c0_34 = arith.constant 0 : index
    %c0_35 = arith.constant 0 : index
    %40 = vector.load %arg9[%c0_33, %c0_34, %c0_35] : memref<20x8x32xf32, #tpu.memory_space<vmem>>, vector<20x8x32xf32>
    %41 = vector.shape_cast %40 : vector<20x8x32xf32> to vector<160x32xf32>
    %cst_36 = arith.constant 0.000000e+00 : f32
    %42 = vector.broadcast %cst_36 : f32 to vector<128x64xf32>
    %43 = vector.extract_strided_slice %41 {offsets = [0, 0], sizes = [128, 32], strides = [1, 1]} : vector<160x32xf32> to vector<128x32xf32>
    %c0_37 = arith.constant 0 : index
    %c0_38 = arith.constant 0 : index
    %c0_39 = arith.constant 0 : index
    %44 = vector.load %arg5[%c0_37, %c0_38, %c0_39] : memref<5x32x64xf32, #tpu.memory_space<vmem>>, vector<1x32x64xf32>
    %45 = vector.shape_cast %44 : vector<1x32x64xf32> to vector<32x64xf32>
    %cst_40 = arith.constant dense<0.000000e+00> : vector<128x64xf32>
    %46 = tpu.matmul %43, %45, %cst_40 {dimension_numbers = #tpu.dot_dimension_numbers<[1], [0], [0], [1], [0, 0, 1, 1], [], []>} : vector<128x32xf32>, vector<32x64xf32>, vector<128x64xf32> -> vector<128x64xf32>
    %47 = arith.addf %42, %46 : vector<128x64xf32>
    %48 = vector.extract_strided_slice %41 {offsets = [8, 0], sizes = [128, 32], strides = [1, 1]} : vector<160x32xf32> to vector<128x32xf32>
    %c1_41 = arith.constant 1 : index
    %c0_42 = arith.constant 0 : index
    %c0_43 = arith.constant 0 : index
    %49 = vector.load %arg5[%c1_41, %c0_42, %c0_43] : memref<5x32x64xf32, #tpu.memory_space<vmem>>, vector<1x32x64xf32>
    %50 = vector.shape_cast %49 : vector<1x32x64xf32> to vector<32x64xf32>
    %cst_44 = arith.constant dense<0.000000e+00> : vector<128x64xf32>
    %51 = tpu.matmul %48, %50, %cst_44 {dimension_numbers = #tpu.dot_dimension_numbers<[1], [0], [0], [1], [0, 0, 1, 1], [], []>} : vector<128x32xf32>, vector<32x64xf32>, vector<128x64xf32> -> vector<128x64xf32>
    %52 = arith.addf %47, %51 : vector<128x64xf32>
    %53 = vector.extract_strided_slice %41 {offsets = [16, 0], sizes = [128, 32], strides = [1, 1]} : vector<160x32xf32> to vector<128x32xf32>
    %c2_45 = arith.constant 2 : index
    %c0_46 = arith.constant 0 : index
    %c0_47 = arith.constant 0 : index
    %54 = vector.load %arg5[%c2_45, %c0_46, %c0_47] : memref<5x32x64xf32, #tpu.memory_space<vmem>>, vector<1x32x64xf32>
    %55 = vector.shape_cast %54 : vector<1x32x64xf32> to vector<32x64xf32>
    %cst_48 = arith.constant dense<0.000000e+00> : vector<128x64xf32>
    %56 = tpu.matmul %53, %55, %cst_48 {dimension_numbers = #tpu.dot_dimension_numbers<[1], [0], [0], [1], [0, 0, 1, 1], [], []>} : vector<128x32xf32>, vector<32x64xf32>, vector<128x64xf32> -> vector<128x64xf32>
    %57 = arith.addf %52, %56 : vector<128x64xf32>
    %58 = vector.extract_strided_slice %41 {offsets = [24, 0], sizes = [128, 32], strides = [1, 1]} : vector<160x32xf32> to vector<128x32xf32>
    %c3_49 = arith.constant 3 : index
    %c0_50 = arith.constant 0 : index
    %c0_51 = arith.constant 0 : index
    %59 = vector.load %arg5[%c3_49, %c0_50, %c0_51] : memref<5x32x64xf32, #tpu.memory_space<vmem>>, vector<1x32x64xf32>
    %60 = vector.shape_cast %59 : vector<1x32x64xf32> to vector<32x64xf32>
    %cst_52 = arith.constant dense<0.000000e+00> : vector<128x64xf32>
    %61 = tpu.matmul %58, %60, %cst_52 {dimension_numbers = #tpu.dot_dimension_numbers<[1], [0], [0], [1], [0, 0, 1, 1], [], []>} : vector<128x32xf32>, vector<32x64xf32>, vector<128x64xf32> -> vector<128x64xf32>
    %62 = arith.addf %57, %61 : vector<128x64xf32>
    %63 = vector.extract_strided_slice %41 {offsets = [32, 0], sizes = [128, 32], strides = [1, 1]} : vector<160x32xf32> to vector<128x32xf32>
    %c4_53 = arith.constant 4 : index
    %c0_54 = arith.constant 0 : index
    %c0_55 = arith.constant 0 : index
    %64 = vector.load %arg5[%c4_53, %c0_54, %c0_55] : memref<5x32x64xf32, #tpu.memory_space<vmem>>, vector<1x32x64xf32>
    %65 = vector.shape_cast %64 : vector<1x32x64xf32> to vector<32x64xf32>
    %cst_56 = arith.constant dense<0.000000e+00> : vector<128x64xf32>
    %66 = tpu.matmul %63, %65, %cst_56 {dimension_numbers = #tpu.dot_dimension_numbers<[1], [0], [0], [1], [0, 0, 1, 1], [], []>} : vector<128x32xf32>, vector<32x64xf32>, vector<128x64xf32> -> vector<128x64xf32>
    %67 = arith.addf %62, %66 : vector<128x64xf32>
    %68 = arith.addf %34, %67 : vector<128x64xf32>
    %69 = arith.negf %68 : vector<128x64xf32>
    %70 = math.exp %69 : vector<128x64xf32>
    %cst_57 = arith.constant 1.000000e+00 : f32
    %71 = vector.broadcast %cst_57 : f32 to vector<128x64xf32>
    %72 = arith.addf %71, %70 : vector<128x64xf32>
    %73 = arith.divf %71, %72 : vector<128x64xf32>
    %74 = vector.extract_strided_slice %73 {offsets = [0, 0], sizes = [128, 32], strides = [1, 1]} : vector<128x64xf32> to vector<128x32xf32>
    %75 = vector.extract_strided_slice %73 {offsets = [0, 32], sizes = [128, 32], strides = [1, 1]} : vector<128x64xf32> to vector<128x32xf32>
    %76 = arith.mulf %75, %2 : vector<128x32xf32>
    %77 = vector.shape_cast %76 : vector<128x32xf32> to vector<16x8x32xf32>
    %c2_58 = arith.constant 2 : index
    %c0_59 = arith.constant 0 : index
    %c0_60 = arith.constant 0 : index
    %78 = vector.load %arg9[%c2_58, %c0_59, %c0_60] : memref<20x8x32xf32, #tpu.memory_space<vmem>>, vector<16x8x32xf32>
    tpu.vector_store %arg9[%c2_58, %c0_59, %c0_60], %77 {strides = array<i32>} : memref<20x8x32xf32, #tpu.memory_space<vmem>>, vector<16x8x32xf32>,
    %c0_61 = arith.constant 0 : index
    %c0_62 = arith.constant 0 : index
    %c0_63 = arith.constant 0 : index
    %79 = vector.load %arg9[%c0_61, %c0_62, %c0_63] : memref<20x8x32xf32, #tpu.memory_space<vmem>>, vector<20x8x32xf32>
    %80 = vector.shape_cast %79 : vector<20x8x32xf32> to vector<160x32xf32>
    %cst_64 = arith.constant 0.000000e+00 : f32
    %81 = vector.broadcast %cst_64 : f32 to vector<128x32xf32>
    %82 = vector.extract_strided_slice %80 {offsets = [0, 0], sizes = [128, 32], strides = [1, 1]} : vector<160x32xf32> to vector<128x32xf32>
    %c0_65 = arith.constant 0 : index
    %c0_66 = arith.constant 0 : index
    %c0_67 = arith.constant 0 : index
    %83 = vector.load %arg6[%c0_65, %c0_66, %c0_67] : memref<5x32x32xf32, #tpu.memory_space<vmem>>, vector<1x32x32xf32>
    %84 = vector.shape_cast %83 : vector<1x32x32xf32> to vector<32x32xf32>
    %cst_68 = arith.constant dense<0.000000e+00> : vector<128x32xf32>
    %85 = tpu.matmul %82, %84, %cst_68 {dimension_numbers = #tpu.dot_dimension_numbers<[1], [0], [0], [1], [0, 0, 1, 1], [], []>} : vector<128x32xf32>, vector<32x32xf32>, vector<128x32xf32> -> vector<128x32xf32>
    %86 = arith.addf %81, %85 : vector<128x32xf32>
    %87 = vector.extract_strided_slice %80 {offsets = [8, 0], sizes = [128, 32], strides = [1, 1]} : vector<160x32xf32> to vector<128x32xf32>
    %c1_69 = arith.constant 1 : index
    %c0_70 = arith.constant 0 : index
    %c0_71 = arith.constant 0 : index
    %88 = vector.load %arg6[%c1_69, %c0_70, %c0_71] : memref<5x32x32xf32, #tpu.memory_space<vmem>>, vector<1x32x32xf32>
    %89 = vector.shape_cast %88 : vector<1x32x32xf32> to vector<32x32xf32>
    %cst_72 = arith.constant dense<0.000000e+00> : vector<128x32xf32>
    %90 = tpu.matmul %87, %89, %cst_72 {dimension_numbers = #tpu.dot_dimension_numbers<[1], [0], [0], [1], [0, 0, 1, 1], [], []>} : vector<128x32xf32>, vector<32x32xf32>, vector<128x32xf32> -> vector<128x32xf32>
    %91 = arith.addf %86, %90 : vector<128x32xf32>
    %92 = vector.extract_strided_slice %80 {offsets = [16, 0], sizes = [128, 32], strides = [1, 1]} : vector<160x32xf32> to vector<128x32xf32>
    %c2_73 = arith.constant 2 : index
    %c0_74 = arith.constant 0 : index
    %c0_75 = arith.constant 0 : index
    %93 = vector.load %arg6[%c2_73, %c0_74, %c0_75] : memref<5x32x32xf32, #tpu.memory_space<vmem>>, vector<1x32x32xf32>
    %94 = vector.shape_cast %93 : vector<1x32x32xf32> to vector<32x32xf32>
    %cst_76 = arith.constant dense<0.000000e+00> : vector<128x32xf32>
    %95 = tpu.matmul %92, %94, %cst_76 {dimension_numbers = #tpu.dot_dimension_numbers<[1], [0], [0], [1], [0, 0, 1, 1], [], []>} : vector<128x32xf32>, vector<32x32xf32>, vector<128x32xf32> -> vector<128x32xf32>
    %96 = arith.addf %91, %95 : vector<128x32xf32>
    %97 = vector.extract_strided_slice %80 {offsets = [24, 0], sizes = [128, 32], strides = [1, 1]} : vector<160x32xf32> to vector<128x32xf32>
    %c3_77 = arith.constant 3 : index
    %c0_78 = arith.constant 0 : index
    %c0_79 = arith.constant 0 : index
    %98 = vector.load %arg6[%c3_77, %c0_78, %c0_79] : memref<5x32x32xf32, #tpu.memory_space<vmem>>, vector<1x32x32xf32>
    %99 = vector.shape_cast %98 : vector<1x32x32xf32> to vector<32x32xf32>
    %cst_80 = arith.constant dense<0.000000e+00> : vector<128x32xf32>
    %100 = tpu.matmul %97, %99, %cst_80 {dimension_numbers = #tpu.dot_dimension_numbers<[1], [0], [0], [1], [0, 0, 1, 1], [], []>} : vector<128x32xf32>, vector<32x32xf32>, vector<128x32xf32> -> vector<128x32xf32>
    %101 = arith.addf %96, %100 : vector<128x32xf32>
    %102 = vector.extract_strided_slice %80 {offsets = [32, 0], sizes = [128, 32], strides = [1, 1]} : vector<160x32xf32> to vector<128x32xf32>
    %c4_81 = arith.constant 4 : index
    %c0_82 = arith.constant 0 : index
    %c0_83 = arith.constant 0 : index
    %103 = vector.load %arg6[%c4_81, %c0_82, %c0_83] : memref<5x32x32xf32, #tpu.memory_space<vmem>>, vector<1x32x32xf32>
    %104 = vector.shape_cast %103 : vector<1x32x32xf32> to vector<32x32xf32>
    %cst_84 = arith.constant dense<0.000000e+00> : vector<128x32xf32>
    %105 = tpu.matmul %102, %104, %cst_84 {dimension_numbers = #tpu.dot_dimension_numbers<[1], [0], [0], [1], [0, 0, 1, 1], [], []>} : vector<128x32xf32>, vector<32x32xf32>, vector<128x32xf32> -> vector<128x32xf32>
    %106 = arith.addf %101, %105 : vector<128x32xf32>
    %107 = arith.addf %35, %106 : vector<128x32xf32>
    %108 = math.tanh %107 : vector<128x32xf32>
    %cst_85 = arith.constant 1.000000e+00 : f32
    %109 = vector.broadcast %cst_85 : f32 to vector<128x32xf32>
    %110 = arith.subf %109, %74 : vector<128x32xf32>
    %111 = arith.mulf %110, %2 : vector<128x32xf32>
    %112 = arith.mulf %74, %108 : vector<128x32xf32>
    %113 = arith.addf %111, %112 : vector<128x32xf32>
    %114 = vector.shape_cast %113 : vector<128x32xf32> to vector<16x8x32xf32>
    %c0_86 = arith.constant 0 : index
    %c0_87 = arith.constant 0 : index
    %c0_88 = arith.constant 0 : index
    %c0_89 = arith.constant 0 : index
    %115 = vector.load %arg8[%c0_86, %c0_87, %c0_88, %c0_89] : memref<1x16x8x32xf32, #tpu.memory_space<vmem>>, vector<1x16x8x32xf32>
    %116 = vector.shape_cast %115 : vector<1x16x8x32xf32> to vector<16x8x32xf32>
    %117 = vector.shape_cast %114 : vector<16x8x32xf32> to vector<1x16x8x32xf32>
    tpu.vector_store %arg8[%c0_86, %c0_87, %c0_88, %c0_89], %117 {strides = array<i32>} : memref<1x16x8x32xf32, #tpu.memory_space<vmem>>, vector<1x16x8x32xf32>,
    return
  }
  func.func @transform_0(%arg0: i32, %arg1: i32) -> (i32, i32, i32, i32) {
    %c0_i32 = arith.constant 0 : i32
    %c0_i32_0 = arith.constant 0 : i32
    %c0_i32_1 = arith.constant 0 : i32
    return %arg0, %c0_i32, %arg1, %c0_i32_0 : i32, i32, i32, i32
  }
  func.func @transform_1(%arg0: i32, %arg1: i32) -> (i32, i32, i32, i32) {
    %c0_i32 = arith.constant 0 : i32
    %c0_i32_0 = arith.constant 0 : i32
    %c0_i32_1 = arith.constant 0 : i32
    return %arg0, %c0_i32, %arg1, %c0_i32_0 : i32, i32, i32, i32
  }
  func.func @transform_2(%arg0: i32, %arg1: i32) -> (i32, i32, i32) {
    %c0_i32 = arith.constant 0 : i32
    %c0_i32_0 = arith.constant 0 : i32
    %c0_i32_1 = arith.constant 0 : i32
    %c0_i32_2 = arith.constant 0 : i32
    return %c0_i32, %c0_i32_0, %c0_i32_1 : i32, i32, i32
  }
  func.func @transform_3(%arg0: i32, %arg1: i32) -> (i32, i32, i32) {
    %c0_i32 = arith.constant 0 : i32
    %c0_i32_0 = arith.constant 0 : i32
    %c0_i32_1 = arith.constant 0 : i32
    %c0_i32_2 = arith.constant 0 : i32
    return %c0_i32, %c0_i32_0, %c0_i32_1 : i32, i32, i32
  }
  func.func @transform_4(%arg0: i32, %arg1: i32) -> (i32, i32, i32) {
    %c0_i32 = arith.constant 0 : i32
    %c0_i32_0 = arith.constant 0 : i32
    %c0_i32_1 = arith.constant 0 : i32
    %c0_i32_2 = arith.constant 0 : i32
    return %c0_i32, %c0_i32_0, %c0_i32_1 : i32, i32, i32
  }
  func.func @transform_5(%arg0: i32, %arg1: i32) -> (i32, i32) {
    %c0_i32 = arith.constant 0 : i32
    %c0_i32_0 = arith.constant 0 : i32
    %c0_i32_1 = arith.constant 0 : i32
    return %c0_i32, %c0_i32_0 : i32, i32
  }
  func.func @transform_6(%arg0: i32, %arg1: i32) -> (i32, i32, i32, i32) {
    %c0_i32 = arith.constant 0 : i32
    %c0_i32_0 = arith.constant 0 : i32
    %c0_i32_1 = arith.constant 0 : i32
    return %arg0, %c0_i32, %arg1, %c0_i32_0 : i32, i32, i32, i32
  }
}

</mosaic_0001>

<llo_original>
// kernel: sep_conv_gru.3
$region0: #{sep_conv_gru.3}
  #allocation0 [shape = 'u32[]', space=smem, size = 0x4, offset = 0x4, fixed_abs, tag = 'smem constant byte address 0x4 - core index']
  #allocation1 [shape = 'u32[144,128]{1,0:T(1,128)}', space=vmem, size = 0x12000, scoped, tag = 'internal scratch']
  #allocation2 [shape = 'f32[12,8,32]{2,1,0:T(8,128)}', space=vmem, size = 0xc000, scoped, tag = 'scratch operand']
  %s0 = inlined_call_operand.hbm [shape: f32[2,8,16,32], index: 0, kind: input, shape index: {}, may-alias: {0,6}]
  %s1 = inlined_call_operand.vmem [shape: bf16[2,12,16,32], index: 1, kind: input, shape index: {}]
  %s2 = inlined_call_operand.vmem [shape: bf16[5,32,96], index: 2, kind: input, shape index: {}]
  %s3 = inlined_call_operand.vmem [shape: f32[5,32,64], index: 3, kind: input, shape index: {}]
  %s4 = inlined_call_operand.vmem [shape: f32[5,32,32], index: 4, kind: input, shape index: {}]
  %s5 = inlined_call_operand.vmem [shape: f32[1,96], index: 5, kind: input, shape index: {}]
  %s6 = inlined_call_operand.hbm [shape: f32[2,8,16,32], index: 6, kind: output, shape index: {}, may-alias: {0,6}]
  %s7 = sld [smem:[#allocation0]]
  $region102: #{sep_conv_gru.3} parent=0
    _
  %s9 = ssub.s32 1, %s7
  %s10 = scalar_select 0, %s9, %s7
  $region1: #{sep_conv_gru.3} parent=0
    #allocation3 [shape = 'u8[65536]{0}', space=vmem, size = 0x10000, scoped, tag = 'input window, operand 0']
    #allocation4 [shape = 's32[2]{0}', space=sflag, size = 0x8, scoped, tag = 'scoped memory for sep_conv_gru.3']
    #allocation5 [shape = 's32[2]{0}', space=sflag, size = 0x8, scoped, tag = 'scoped memory for sep_conv_gru.3']
    #allocation6 [shape = 'u8[49152]{0}', space=vmem, size = 0xc000, scoped, tag = 'input window, operand 1']
    #allocation7 [shape = 'u8[65536]{0}', space=vmem, size = 0x10000, scoped, tag = 'output window, operand 0']
    %11 = vsyncpa [#allocation4], 0
    %s12 = scalar_lea.sflag [#allocation4], 1
    %13 = vsyncpa %s12, 0
    %14 = vsyncpa [#allocation5], 0
    %s15 = scalar_lea.sflag [#allocation5], 1
    %16 = vsyncpa %s15, 0
    loop: start=0, step=1, limit=6
    $region2: #{sep_conv_gru.3} parent=1 // loop_pre_header
      _
    $region3: #{sep_conv_gru.3} parent=1 // loop_header
      %s18 = sphi 0, %s22
      %p19 = scmp.ge.s32.totalorder %s18, 6
      %s25 = sphi 0, %s37
      %s26 = sphi 0, %s33
      %s27 = sphi 0, %s25
      %s28 = sphi 0, %s26
      %s29 = sphi 0, %s27
      %s30 = sphi 0, %s28
      %s42 = sphi 0, %s44
      %s45 = sphi 0, %s42
      %s46 = sphi 0, %s45
      %s62 = sphi 0, %s46
      %s70 = sphi 0, %s72
      %s73 = sphi 0, %s70
      %s74 = sphi 0, %s73
      %s90 = sphi 0, %s74
      %s94 = sphi 0, %s94
      %s96 = sphi 0, %s94
      %s97 = sphi 0, %s96
      %s111 = sphi 0, %s97
      %s115 = sphi 0, %s115
      %s117 = sphi 0, %s115
      %s118 = sphi 0, %s117
      %s132 = sphi 0, %s118
      %s136 = sphi 0, %s136
      %s138 = sphi 0, %s136
      %s139 = sphi 0, %s138
      %s153 = sphi 0, %s139
      %s157 = sphi 0, %s157
      %s159 = sphi 0, %s157
      %s160 = sphi 0, %s159
      %s174 = sphi 0, %s160
      %s182 = sphi 0, %s184
      %s185 = sphi 0, %s182
      %s186 = sphi 0, %s185
      %s202 = sphi 0, %s186
    $region4: #{sep_conv_gru.3} parent=1 // loop_header_branch
      %21 = sbr.rel (%p19) target = $region8
    $region5: #{sep_conv_gru.3} parent=1 // loop_body
      %s23 = ssub.s32 %s18, 1
      %s24 = ssub.s32 %s18, 2
      %s31 = sadd.s32 1, %s26
      %p32 = scmp.ge.s32.totalorder %s31, 2
      %s33 = scalar_select %p32, 0, %s31
      %s34 = sadd.s32 1, %s25
      %s35 = scalar_select %p32, %s34, %s25
      %p36 = scmp.ge.s32.totalorder %s35, 2
      %s37 = scalar_select %p36, 0, %s35
      %s38 = ssub.s32 %s25, %s37
      %s39 = ssub.s32 %s26, %s33
      %s40 = sor.u32 %s38, %s39
      %p41 = scmp.eq.s32.totalorder %s40, 0
      %s43 = sadd.s32 %s42, 1
      %s44 = scalar_select %p41, %s42, %s43
      %p47 = pneg %p41
      %p48 = scmp.eq.s32.totalorder %s18, 3
      %p49 = por %p47, %p48
      %p50 = scmp.ne.s32.totalorder %s42, %s45
      %p51 = scmp.eq.s32.totalorder %s18, 0
      %p52 = por %p50, %p51
      %p53 = scmp.ne.s32.totalorder %s42, %s45
      %p54 = scmp.eq.s32.totalorder %s23, 3
      %p55 = por %p53, %p54
      %p56 = scmp.ne.s32.totalorder %s45, %s46
      %p57 = scmp.eq.s32.totalorder %s23, 0
      %p58 = por %p56, %p57
      %p59 = scmp.ne.s32.totalorder %s45, %s46
      %p60 = scmp.eq.s32.totalorder %s24, 3
      %p61 = por %p59, %p60
      %p63 = scmp.ne.s32.totalorder %s46, %s62
      %p64 = scmp.eq.s32.totalorder %s24, 0
      %p65 = por %p63, %p64
      %s66 = ssub.s32 %s25, %s37
      %s67 = ssub.s32 %s26, %s33
      %s68 = sor.u32 %s66, %s67
      %p69 = scmp.eq.s32.totalorder %s68, 0
      %s71 = sadd.s32 %s70, 1
      %s72 = scalar_select %p69, %s70, %s71
      %p75 = pneg %p69
      %p76 = scmp.eq.s32.totalorder %s18, 3
      %p77 = por %p75, %p76
      %p78 = scmp.ne.s32.totalorder %s70, %s73
      %p79 = scmp.eq.s32.totalorder %s18, 0
      %p80 = por %p78, %p79
      %p81 = scmp.ne.s32.totalorder %s70, %s73
      %p82 = scmp.eq.s32.totalorder %s23, 3
      %p83 = por %p81, %p82
      %p84 = scmp.ne.s32.totalorder %s73, %s74
      %p85 = scmp.eq.s32.totalorder %s23, 0
      %p86 = por %p84, %p85
      %p87 = scmp.ne.s32.totalorder %s73, %s74
      %p88 = scmp.eq.s32.totalorder %s24, 3
      %p89 = por %p87, %p88
      %p91 = scmp.ne.s32.totalorder %s74, %s90
      %p92 = scmp.eq.s32.totalorder %s24, 0
      %p93 = por %p91, %p92
      %s95 = sadd.s32 %s94, 1
      %p98 = scmp.eq.s32.totalorder %s18, 3
      %p99 = scmp.ne.s32.totalorder %s94, %s96
      %p100 = scmp.eq.s32.totalorder %s18, 0
      %p101 = por %p99, %p100
      %p102 = scmp.ne.s32.totalorder %s94, %s96
      %p103 = scmp.eq.s32.totalorder %s23, 3
      %p104 = por %p102, %p103
      %p105 = scmp.ne.s32.totalorder %s96, %s97
      %p106 = scmp.eq.s32.totalorder %s23, 0
      %p107 = por %p105, %p106
      %p108 = scmp.ne.s32.totalorder %s96, %s97
      %p109 = scmp.eq.s32.totalorder %s24, 3
      %p110 = por %p108, %p109
      %p112 = scmp.ne.s32.totalorder %s97, %s111
      %p113 = scmp.eq.s32.totalorder %s24, 0
      %p114 = por %p112, %p113
      %s116 = sadd.s32 %s115, 1
      %p119 = scmp.eq.s32.totalorder %s18, 3
      %p120 = scmp.ne.s32.totalorder %s115, %s117
      %p121 = scmp.eq.s32.totalorder %s18, 0
      %p122 = por %p120, %p121
      %p123 = scmp.ne.s32.totalorder %s115, %s117
      %p124 = scmp.eq.s32.totalorder %s23, 3
      %p125 = por %p123, %p124
      %p126 = scmp.ne.s32.totalorder %s117, %s118
      %p127 = scmp.eq.s32.totalorder %s23, 0
      %p128 = por %p126, %p127
      %p129 = scmp.ne.s32.totalorder %s117, %s118
      %p130 = scmp.eq.s32.totalorder %s24, 3
      %p131 = por %p129, %p130
      %p133 = scmp.ne.s32.totalorder %s118, %s132
      %p134 = scmp.eq.s32.totalorder %s24, 0
      %p135 = por %p133, %p134
      %s137 = sadd.s32 %s136, 1
      %p140 = scmp.eq.s32.totalorder %s18, 3
      %p141 = scmp.ne.s32.totalorder %s136, %s138
      %p142 = scmp.eq.s32.totalorder %s18, 0
      %p143 = por %p141, %p142
      %p144 = scmp.ne.s32.totalorder %s136, %s138
      %p145 = scmp.eq.s32.totalorder %s23, 3
      %p146 = por %p144, %p145
      %p147 = scmp.ne.s32.totalorder %s138, %s139
      %p148 = scmp.eq.s32.totalorder %s23, 0
      %p149 = por %p147, %p148
      %p150 = scmp.ne.s32.totalorder %s138, %s139
      %p151 = scmp.eq.s32.totalorder %s24, 3
      %p152 = por %p150, %p151
      %p154 = scmp.ne.s32.totalorder %s139, %s153
      %p155 = scmp.eq.s32.totalorder %s24, 0
      %p156 = por %p154, %p155
      %s158 = sadd.s32 %s157, 1
      %p161 = scmp.eq.s32.totalorder %s18, 3
      %p162 = scmp.ne.s32.totalorder %s157, %s159
      %p163 = scmp.eq.s32.totalorder %s18, 0
      %p164 = por %p162, %p163
      %p165 = scmp.ne.s32.totalorder %s157, %s159
      %p166 = scmp.eq.s32.totalorder %s23, 3
      %p167 = por %p165, %p166
      %p168 = scmp.ne.s32.totalorder %s159, %s160
      %p169 = scmp.eq.s32.totalorder %s23, 0
      %p170 = por %p168, %p169
      %p171 = scmp.ne.s32.totalorder %s159, %s160
      %p172 = scmp.eq.s32.totalorder %s24, 3
      %p173 = por %p171, %p172
      %p175 = scmp.ne.s32.totalorder %s160, %s174
      %p176 = scmp.eq.s32.totalorder %s24, 0
      %p177 = por %p175, %p176
      %s178 = ssub.s32 %s25, %s37
      %s179 = ssub.s32 %s26, %s33
      %s180 = sor.u32 %s178, %s179
      %p181 = scmp.eq.s32.totalorder %s180, 0
      %s183 = sadd.s32 %s182, 1
      %s184 = scalar_select %p181, %s182, %s183
      %p187 = pneg %p181
      %p188 = scmp.eq.s32.totalorder %s18, 3
      %p189 = por %p187, %p188
      %p190 = scmp.ne.s32.totalorder %s182, %s185
      %p191 = scmp.eq.s32.totalorder %s18, 0
      %p192 = por %p190, %p191
      %p193 = scmp.ne.s32.totalorder %s182, %s185
      %p194 = scmp.eq.s32.totalorder %s23, 3
      %p195 = por %p193, %p194
      %p196 = scmp.ne.s32.totalorder %s185, %s186
      %p197 = scmp.eq.s32.totalorder %s23, 0
      %p198 = por %p196, %p197
      %p199 = scmp.ne.s32.totalorder %s185, %s186
      %p200 = scmp.eq.s32.totalorder %s24, 3
      %p201 = por %p199, %p200
      %p203 = scmp.ne.s32.totalorder %s186, %s202
      %p204 = scmp.eq.s32.totalorder %s24, 0
      %p205 = por %p203, %p204
      %p206 = scmp.le.s32.totalorder 1, %s18
      %p207 = scmp.lt.s32.totalorder %s18, 5
      %p208 = pnand %p206, %p207
      %p209 = pneg %p208
      // Predicated region
      $region9: #{sep_conv_gru.3} parent=5 // pred_check
        _
      $region10: #{sep_conv_gru.3} parent=5 // pred_check_branch
        %211 = sbr.rel (%p208) target = $region12
      $region11: #{sep_conv_gru.3} parent=5 // pred_region
        %s212 = ssub.s32 %s18, 1
        // Predicated region
        $region13: #{sep_conv_gru.3} parent=11 // pred_check
          %p213 = pneg %p107
        $region14: #{sep_conv_gru.3} parent=11 // pred_check_branch
          %215 = sbr.rel (%p213) target = $region16
        $region15: #{sep_conv_gru.3} parent=11 // pred_region
          _
        $region16: #{sep_conv_gru.3} parent=11 // pred_fallthru
          _
        // Predicated region
        $region17: #{sep_conv_gru.3} parent=11 // pred_check
          %p216 = pneg %p128
        $region18: #{sep_conv_gru.3} parent=11 // pred_check_branch
          %218 = sbr.rel (%p216) target = $region20
        $region19: #{sep_conv_gru.3} parent=11 // pred_region
          _
        $region20: #{sep_conv_gru.3} parent=11 // pred_fallthru
          _
        // Predicated region
        $region21: #{sep_conv_gru.3} parent=11 // pred_check
          %p219 = pneg %p149
        $region22: #{sep_conv_gru.3} parent=11 // pred_check_branch
          %221 = sbr.rel (%p219) target = $region24
        $region23: #{sep_conv_gru.3} parent=11 // pred_region
          _
        $region24: #{sep_conv_gru.3} parent=11 // pred_fallthru
          _
        // Predicated region
        $region25: #{sep_conv_gru.3} parent=11 // pred_check
          %p222 = pneg %p170
        $region26: #{sep_conv_gru.3} parent=11 // pred_check_branch
          %224 = sbr.rel (%p222) target = $region28
        $region27: #{sep_conv_gru.3} parent=11 // pred_region
          _
        $region28: #{sep_conv_gru.3} parent=11 // pred_fallthru
          _
      $region12: #{sep_conv_gru.3} parent=5 // pred_fallthru
        _
      %p225 = scmp.lt.s32.totalorder %s18, 4
      // Predicated region
      $region29: #{sep_conv_gru.3} parent=5 // pred_check
        %p226 = pneg %p225
      $region30: #{sep_conv_gru.3} parent=5 // pred_check_branch
        %228 = sbr.rel (%p226) target = $region32
      $region31: #{sep_conv_gru.3} parent=5 // pred_region
        // Predicated region
        $region33: #{sep_conv_gru.3} parent=31 // pred_check
          %p229 = pneg %p52
        $region34: #{sep_conv_gru.3} parent=31 // pred_check_branch
          %231 = sbr.rel (%p229) target = $region36
        $region35: #{sep_conv_gru.3} parent=31 // pred_region
          %s232 = sand.u32 %s42, 1
          %s233 = scalar_lea.sflag [#allocation4], %s232
          %s234 = sand.u32 %s42, 1
          %s235 = smul.addr %s234, 64
          %s236 = scalar_lea.vmem [#allocation3], %s235
          %s238 = ssub.s32 1024, 1024
          %239 = vsyncadd %s233, %s238
          %s240 = smul.addr %s25, 16
          %s241 = sadd.s32 %s26, %s240
          %s242 = smul.addr %s241, 128
          %s243 = scalar_lea.hbm %s0, %s242
          %s244 = sshll.u32 %s236, 4
          %s245 = int_to_ptr.vmem [resolvable:$true] %s244
          %250 = dma.hbm_to_vmem [thread:$0]  %s243, 1024, %s245, %s233, 256, 128, 8
        $region36: #{sep_conv_gru.3} parent=31 // pred_fallthru
          _
        // Predicated region
        $region37: #{sep_conv_gru.3} parent=31 // pred_check
          %p251 = pneg %p80
        $region38: #{sep_conv_gru.3} parent=31 // pred_check_branch
          %253 = sbr.rel (%p251) target = $region40
        $region39: #{sep_conv_gru.3} parent=31 // pred_region
          %s254 = sand.u32 %s70, 1
          %s255 = sand.u32 %s70, 1
          %s256 = smul.addr %s255, 48
          %s257 = scalar_lea.vmem [#allocation6], %s256
          %s258 = smul.addr %s25, 24
          %s259 = sadd.s32 %s26, %s258
          %s260 = smul.addr %s259, 4
          %s261 = scalar_lea.vmem %s1, %s260
          // Predicated region
          $region41: #{sep_conv_gru.3} parent=39 // pred_check
            _
          $region42: #{sep_conv_gru.3} parent=39 // pred_check_branch
            %263 = sbr.rel (0) target = $region44
          $region43: #{sep_conv_gru.3} parent=39 // pred_region
            // Predicated region
            $region45: #{sep_conv_gru.3} parent=43 // pred_check
              _
            $region46: #{sep_conv_gru.3} parent=43 // pred_check_branch
              %265 = sbr.rel target = $region48
            $region47: #{sep_conv_gru.3} parent=43 // pred_region
              // Predicated region
              $region60: #{sep_conv_gru.3} parent=47 // pred_check
                _
              $region61: #{sep_conv_gru.3} parent=47 // pred_check_branch
                %302 = sbr.rel (0) target = $region63
              $region62: #{sep_conv_gru.3} parent=47 // pred_region
                loop: start=0, step=1, limit=1
                $region64: #{sep_conv_gru.3} parent=62 // loop_pre_header
                  _
                $region65: #{sep_conv_gru.3} parent=62 // loop_header
                  %s304 = sphi 0, %s308
                  %p305 = scmp.ge.s32.totalorder %s304, 1
                  %s309 = sphi %s261, %s261
                  %s310 = sphi %s257, %s257
                $region66: #{sep_conv_gru.3} parent=62 // loop_header_branch
                  %307 = sbr.rel (%p305) target = $region70
                $region67: #{sep_conv_gru.3} parent=62 // loop_body
                  _
                $region68: #{sep_conv_gru.3} parent=62 // loop_footer
                  %s308 = sadd.s32 1, %s304
                $region69: #{sep_conv_gru.3} parent=62 // loop_footer_branch
                  %303 = sbr.rel target = $region65
                $region70: #{sep_conv_gru.3} parent=62 // loop_exit
                  _
                loop: start=0, step=1, limit=1
                $region71: #{sep_conv_gru.3} parent=62 // loop_pre_header
                  _
                $region72: #{sep_conv_gru.3} parent=62 // loop_header
                  %s313 = sphi 0, %s317
                  %p314 = scmp.ge.s32.totalorder %s313, 1
                  %s318 = sphi %s261, %s261
                  %s319 = sphi %s257, %s257
                $region73: #{sep_conv_gru.3} parent=62 // loop_header_branch
                  %316 = sbr.rel (%p314) target = $region77
                $region74: #{sep_conv_gru.3} parent=62 // loop_body
                  %v320 = vld [vmem:[%s318] sm:$0xf]
                  %321 = vst [vmem:[%s319] sm:$0xf] %v320
                  %v322 = vld [vmem:[%s318 + $0x8] sm:$0xf]
                  %323 = vst [vmem:[%s319 + $0x4] sm:$0xf] %v322
                  %v324 = vld [vmem:[%s318 + $0x10] sm:$0xf]
                  %325 = vst [vmem:[%s319 + $0x8] sm:$0xf] %v324
                  %v326 = vld [vmem:[%s318 + $0x18] sm:$0xf]
                  %327 = vst [vmem:[%s319 + $0xc] sm:$0xf] %v326
                  %v328 = vld [vmem:[%s318 + $0x20] sm:$0xf]
                  %329 = vst [vmem:[%s319 + $0x10] sm:$0xf] %v328
                  %v330 = vld [vmem:[%s318 + $0x28] sm:$0xf]
                  %331 = vst [vmem:[%s319 + $0x14] sm:$0xf] %v330
                  %v332 = vld [vmem:[%s318 + $0x30] sm:$0xf]
                  %333 = vst [vmem:[%s319 + $0x18] sm:$0xf] %v332
                  %v334 = vld [vmem:[%s318 + $0x38] sm:$0xf]
                  %335 = vst [vmem:[%s319 + $0x1c] sm:$0xf] %v334
                  %v336 = vld [vmem:[%s318 + $0x40] sm:$0xf]
                  %337 = vst [vmem:[%s319 + $0x20] sm:$0xf] %v336
                  %v338 = vld [vmem:[%s318 + $0x48] sm:$0xf]
                  %339 = vst [vmem:[%s319 + $0x24] sm:$0xf] %v338
                  %v340 = vld [vmem:[%s318 + $0x50] sm:$0xf]
                  %341 = vst [vmem:[%s319 + $0x28] sm:$0xf] %v340
                  %v342 = vld [vmem:[%s318 + $0x58] sm:$0xf]
                  %343 = vst [vmem:[%s319 + $0x2c] sm:$0xf] %v342
                $region75: #{sep_conv_gru.3} parent=62 // loop_footer
                  %s317 = sadd.s32 1, %s313
                $region76: #{sep_conv_gru.3} parent=62 // loop_footer_branch
                  %312 = sbr.rel target = $region72
                $region77: #{sep_conv_gru.3} parent=62 // loop_exit
                  _
              $region63: #{sep_conv_gru.3} parent=47 // pred_fallthru
                _
            $region48: #{sep_conv_gru.3} parent=43 // pred_fallthru
              _
            // Predicated region
            $region49: #{sep_conv_gru.3} parent=43 // pred_check
              _
            $region50: #{sep_conv_gru.3} parent=43 // pred_check_branch
              %267 = sbr.rel (0) target = $region52
            $region51: #{sep_conv_gru.3} parent=43 // pred_region
              loop: start=0, step=1, limit=1
              $region53: #{sep_conv_gru.3} parent=51 // loop_pre_header
                _
              $region54: #{sep_conv_gru.3} parent=51 // loop_header
                %s270 = sphi 0, %s274
                %p271 = scmp.ge.s32.totalorder %s270, 1
                %s275 = sphi %s261, %s261
                %s276 = sphi %s257, %s257
              $region55: #{sep_conv_gru.3} parent=51 // loop_header_branch
                %273 = sbr.rel (%p271) target = $region59
              $region56: #{sep_conv_gru.3} parent=51 // loop_body
                %v277 = vld [vmem:[%s275] sm:$0xf]
                %278 = vst [vmem:[%s276] sm:$0xf] %v277
                %v279 = vld [vmem:[%s275 + $0x8] sm:$0xf]
                %280 = vst [vmem:[%s276 + $0x4] sm:$0xf] %v279
                %v281 = vld [vmem:[%s275 + $0x10] sm:$0xf]
                %282 = vst [vmem:[%s276 + $0x8] sm:$0xf] %v281
                %v283 = vld [vmem:[%s275 + $0x18] sm:$0xf]
                %284 = vst [vmem:[%s276 + $0xc] sm:$0xf] %v283
                %v285 = vld [vmem:[%s275 + $0x20] sm:$0xf]
                %286 = vst [vmem:[%s276 + $0x10] sm:$0xf] %v285
                %v287 = vld [vmem:[%s275 + $0x28] sm:$0xf]
                %288 = vst [vmem:[%s276 + $0x14] sm:$0xf] %v287
                %v289 = vld [vmem:[%s275 + $0x30] sm:$0xf]
                %290 = vst [vmem:[%s276 + $0x18] sm:$0xf] %v289
                %v291 = vld [vmem:[%s275 + $0x38] sm:$0xf]
                %292 = vst [vmem:[%s276 + $0x1c] sm:$0xf] %v291
                %v293 = vld [vmem:[%s275 + $0x40] sm:$0xf]
                %294 = vst [vmem:[%s276 + $0x20] sm:$0xf] %v293
                %v295 = vld [vmem:[%s275 + $0x48] sm:$0xf]
                %296 = vst [vmem:[%s276 + $0x24] sm:$0xf] %v295
                %v297 = vld [vmem:[%s275 + $0x50] sm:$0xf]
                %298 = vst [vmem:[%s276 + $0x28] sm:$0xf] %v297
                %v299 = vld [vmem:[%s275 + $0x58] sm:$0xf]
                %300 = vst [vmem:[%s276 + $0x2c] sm:$0xf] %v299
              $region57: #{sep_conv_gru.3} parent=51 // loop_footer
                %s274 = sadd.s32 1, %s270
              $region58: #{sep_conv_gru.3} parent=51 // loop_footer_branch
                %269 = sbr.rel target = $region54
              $region59: #{sep_conv_gru.3} parent=51 // loop_exit
                _
            $region52: #{sep_conv_gru.3} parent=43 // pred_fallthru
              _
          $region44: #{sep_conv_gru.3} parent=39 // pred_fallthru
            _
          %344 = vnop
        $region40: #{sep_conv_gru.3} parent=31 // pred_fallthru
          _
      $region32: #{sep_conv_gru.3} parent=5 // pred_fallthru
        _
      %p345 = scmp.le.s32.totalorder 1, %s18
      %p346 = scmp.lt.s32.totalorder %s18, 5
      %p347 = pnand %p345, %p346
      %p348 = pneg %p347
      // Predicated region
      $region78: #{sep_conv_gru.3} parent=5 // pred_check
        _
      $region79: #{sep_conv_gru.3} parent=5 // pred_check_branch
        %350 = sbr.rel (%p347) target = $region81
      $region80: #{sep_conv_gru.3} parent=5 // pred_region
        %s351 = ssub.s32 %s18, 1
        %s352 = sand.u32 %s45, 1
        %s353 = scalar_lea.sflag [#allocation4], %s352
        %s354 = sand.u32 %s45, 1
        %s355 = smul.addr %s354, 64
        %s356 = scalar_lea.vmem [#allocation3], %s355
        // Predicated region
        $region82: #{sep_conv_gru.3} parent=80 // pred_check
          %p357 = pneg %p58
        $region83: #{sep_conv_gru.3} parent=80 // pred_check_branch
          %359 = sbr.rel (%p357) target = $region85
        $region84: #{sep_conv_gru.3} parent=80 // pred_region
          %360 = dma.done %s353, 1024
        $region85: #{sep_conv_gru.3} parent=80 // pred_fallthru
          _
        %s361 = sand.u32 %s73, 1
        %s362 = sand.u32 %s73, 1
        %s363 = smul.addr %s362, 48
        %s364 = scalar_lea.vmem [#allocation6], %s363
        // Predicated region
        $region86: #{sep_conv_gru.3} parent=80 // pred_check
          %p365 = pneg %p86
        $region87: #{sep_conv_gru.3} parent=80 // pred_check_branch
          %367 = sbr.rel (%p365) target = $region89
        $region88: #{sep_conv_gru.3} parent=80 // pred_region
          _
        $region89: #{sep_conv_gru.3} parent=80 // pred_fallthru
          _
        %s368 = sand.u32 %s45, 1
        %s369 = scalar_lea.sflag [#allocation4], %s368
        %s370 = sand.u32 %s45, 1
        %s371 = smul.addr %s370, 64
        %s372 = scalar_lea.vmem [#allocation3], %s371
        %p373 = pneg %p58
        %p374 = pneg %p55
        %s375 = sand.u32 %s73, 1
        %s376 = sand.u32 %s73, 1
        %s377 = smul.addr %s376, 48
        %s378 = scalar_lea.vmem [#allocation6], %s377
        %p379 = pneg %p86
        %p380 = pneg %p83
        %p381 = pneg %p107
        %p382 = pneg %p104
        %p383 = pneg %p128
        %p384 = pneg %p125
        %p385 = pneg %p149
        %p386 = pneg %p146
        %p387 = pneg %p170
        %p388 = pneg %p167
        %p389 = pneg %p198
        %p390 = pneg %p195
        %s391 = sand.u32 %s185, 1
        %s392 = scalar_lea.sflag [#allocation5], %s391
        %s393 = sand.u32 %s185, 1
        %s394 = smul.addr %s393, 64
        %s395 = scalar_lea.vmem [#allocation7], %s394
        %v397 = vld [vmem:[%s356] sm:$0xff]
        %v398 = vld [vmem:[%s356 + $0x8] sm:$0xff]
        %v399 = vld [vmem:[%s356 + $0x10] sm:$0xff]
        %v400 = vld [vmem:[%s356 + $0x18] sm:$0xff]
        %v401 = vld [vmem:[%s356 + $0x20] sm:$0xff]
        %v402 = vld [vmem:[%s356 + $0x28] sm:$0xff]
        %v403 = vld [vmem:[%s356 + $0x30] sm:$0xff]
        %v404 = vld [vmem:[%s356 + $0x38] sm:$0xff]
        %v405 = vld [vmem:[%s364] sm:$0xf]
        %v406 = vld [vmem:[%s364 + $0x4] sm:$0xf]
        %v407 = vld [vmem:[%s364 + $0x8] sm:$0xf]
        %v408 = vld [vmem:[%s364 + $0xc] sm:$0xf]
        %v409 = vld [vmem:[%s364 + $0x10] sm:$0xf]
        %v410 = vld [vmem:[%s364 + $0x14] sm:$0xf]
        %v411 = vld [vmem:[%s364 + $0x18] sm:$0xf]
        %v412 = vld [vmem:[%s364 + $0x1c] sm:$0xf]
        %v413 = vld [vmem:[%s364 + $0x20] sm:$0xf]
        %v414 = vld [vmem:[%s364 + $0x24] sm:$0xf]
        %v415 = vld [vmem:[%s364 + $0x28] sm:$0xf]
        %v416 = vld [vmem:[%s364 + $0x2c] sm:$0xf]
        %v417 = vld [vmem:[%s5] sm:$0x1]
        %v419 = vlaneseq
        %v420 = vshrl.u32 %v419, 7
        %v421 = vsub.s32 0, %v420
        %v422 = vrot.slane %v417, %v421
        %v424 = vld [vmem:[%s2] sm:$0xf]
        %v425 = vld [vmem:[%s2 + $0x4] sm:$0xf]
        %v426 = vld [vmem:[%s2 + $0x8] sm:$0xf]
        %v427 = vld [vmem:[%s2 + $0xc] sm:$0xf]
        %v436 = vunpack.c.l.b16 %v405
        %v437 = vunpack.c.l.b16 %v406
        %v438 = vunpack.c.l.b16 %v407
        %v439 = vunpack.c.l.b16 %v408
        %v440 = vunpack.c.l.b16 %v409
        %v441 = vunpack.c.l.b16 %v410
        %v442 = vunpack.c.l.b16 %v411
        %v443 = vunpack.c.l.b16 %v412
        %v444 = vpack.c.b16 %v437, %v436
        %v445 = vpack.c.b16 %v439, %v438
        %v446 = vpack.c.b16 %v441, %v440
        %v447 = vpack.c.b16 %v443, %v442
        %v452 = vunpack.c.l.b16 %v424
        %v453 = vunpack.c.l.b16 %v425
        %v454 = vunpack.c.l.b16 %v426
        %v455 = vunpack.c.l.b16 %v427
        %v456 = vpack.c.b16 %v453, %v452
        %v457 = vpack.c.b16 %v455, %v454
        %vm460 = vcmask 261120
        %v462 = vsel %vm460, %v444, 0
        %v465 = vsel %vm460, %v445, 0
        %v468 = vsel %vm460, %v446, 0
        %v471 = vsel %vm460, %v447, 0
        %473 = vmatprep.subr.bf16.mxu0 0
        %474 = vmatpush1.bf16.msra.mxu0 %v456
        %475 = vmatprep.subr.bf16.mxu0 0
        %476 = vmatpush1.bf16.msra.mxu0 %v457
        %477 = vmatprep.subr.bf16.mxu0 0
        %478 = vmatpush1.bf16.msra.mxu0 0
        %479 = vmatprep.subr.bf16.mxu0 0
        %480 = vmatpush1.bf16.msra.mxu0 0
        %481 = vmatprep.subr.bf16.mxu0 0
        %482 = vmatpush1.bf16.msra.mxu0 0
        %483 = vmatprep.subr.bf16.mxu0 0
        %484 = vmatpush1.bf16.msra.mxu0 0
        %485 = vmatprep.subr.bf16.mxu0 0
        %486 = vmatpush1.bf16.msra.mxu0 0
        %487 = vmatprep.subr.bf16.mxu0 0
        %488 = vmatpush1.bf16.msra.mxu0 0
        %489 = vmatprep.subr.bf16.mxu0 0
        %490 = vmatpush1.bf16.msra.mxu0 0
        %491 = vmatprep.subr.bf16.mxu0 0
        %492 = vmatpush1.bf16.msra.mxu0 0
        %493 = vmatprep.subr.bf16.mxu0 0
        %494 = vmatpush1.bf16.msra.mxu0 0
        %495 = vmatprep.subr.bf16.mxu0 0
        %496 = vmatpush1.bf16.msra.mxu0 0
        %497 = vmatprep.subr.bf16.mxu0 0
        %498 = vmatpush1.bf16.msra.mxu0 0
        %499 = vmatprep.subr.bf16.mxu0 0
        %500 = vmatpush1.bf16.msra.mxu0 0
        %501 = vmatprep.subr.bf16.mxu0 0
        %502 = vmatpush1.bf16.msra.mxu0 0
        %503 = vmatprep.subr.bf16.mxu0 0
        %504 = vmatpush1.bf16.msra.mxu0 0
        %505 = vmatprep.mubr.bf16.mxu0 0
        %506 = vmatmul.mubr.bf16.gmra.mrb[0].mxu0 %v462
        %v507 = vpop.f32.mrb[0].mxu0
        %v508 = vadd.f32 0.0, %v507
        %v509 = vpop.f32.mrb[0].mxu0
        %v510 = vpop.f32.mrb[0].mxu0
        %v511 = vadd.f32 0.0, %v510
        %v512 = vpop.f32.mrb[0].mxu0
        %513 = vmatprep.mubr.bf16.mxu0 0
        %514 = vmatmul.mubr.bf16.gmra.mrb[0].mxu0 %v465
        %v515 = vpop.f32.mrb[0].mxu0
        %v516 = vadd.f32 0.0, %v515
        %v517 = vpop.f32.mrb[0].mxu0
        %v518 = vpop.f32.mrb[0].mxu0
        %v519 = vadd.f32 0.0, %v518
        %v520 = vpop.f32.mrb[0].mxu0
        %521 = vmatprep.mubr.bf16.mxu0 0
        %522 = vmatmul.mubr.bf16.gmra.mrb[0].mxu0 %v468
        %v523 = vpop.f32.mrb[0].mxu0
        %v524 = vadd.f32 0.0, %v523
        %v525 = vpop.f32.mrb[0].mxu0
        %v526 = vpop.f32.mrb[0].mxu0
        %v527 = vadd.f32 0.0, %v526
        %v528 = vpop.f32.mrb[0].mxu0
        %529 = vmatprep.mubr.bf16.mxu0 0
        %530 = vmatmul.mubr.bf16.gmra.mrb[0].mxu0 %v471
        %v531 = vpop.f32.mrb[0].mxu0
        %v532 = vadd.f32 0.0, %v531
        %v533 = vpop.f32.mrb[0].mxu0
        %v534 = vpop.f32.mrb[0].mxu0
        %v535 = vadd.f32 0.0, %v534
        %v536 = vpop.f32.mrb[0].mxu0
        %537 = vdwg.mxu0
        %v538 = vadd.f32 %v422, %v508
        %v539 = vadd.f32 %v422, %v511
        %v540 = vadd.f32 %v422, %v516
        %v541 = vadd.f32 %v422, %v519
        %v542 = vadd.f32 %v422, %v524
        %v543 = vadd.f32 %v422, %v527
        %v544 = vadd.f32 %v422, %v532
        %v545 = vadd.f32 %v422, %v535
        %s546 = scalar_lea.vmem %s2, 16
        %v547 = vld [vmem:[%s546] sm:$0xf]
        %v548 = vld [vmem:[%s546 + $0x4] sm:$0xf]
        %v549 = vld [vmem:[%s546 + $0x8] sm:$0xf]
        %v550 = vld [vmem:[%s546 + $0xc] sm:$0xf]
        %v552 = vunpack.c.l.b16 %v413
        %v553 = vpack.c.b16 %v438, %v437
        %v554 = vpack.c.b16 %v440, %v439
        %v555 = vpack.c.b16 %v442, %v441
        %v556 = vpack.c.b16 %v552, %v443
        %v561 = vunpack.c.l.b16 %v547
        %v562 = vunpack.c.l.b16 %v548
        %v563 = vunpack.c.l.b16 %v549
        %v564 = vunpack.c.l.b16 %v550
        %v565 = vpack.c.b16 %v562, %v561
        %v566 = vpack.c.b16 %v564, %v563
        %v570 = vsel %vm460, %v553, 0
        %v573 = vsel %vm460, %v554, 0
        %v576 = vsel %vm460, %v555, 0
        %v579 = vsel %vm460, %v556, 0
        %581 = vmatprep.subr.bf16.mxu0 0
        %582 = vmatpush1.bf16.msra.mxu0 %v565
        %583 = vmatprep.subr.bf16.mxu0 0
        %584 = vmatpush1.bf16.msra.mxu0 %v566
        %585 = vmatprep.subr.bf16.mxu0 0
        %586 = vmatpush1.bf16.msra.mxu0 0
        %587 = vmatprep.subr.bf16.mxu0 0
        %588 = vmatpush1.bf16.msra.mxu0 0
        %589 = vmatprep.subr.bf16.mxu0 0
        %590 = vmatpush1.bf16.msra.mxu0 0
        %591 = vmatprep.subr.bf16.mxu0 0
        %592 = vmatpush1.bf16.msra.mxu0 0
        %593 = vmatprep.subr.bf16.mxu0 0
        %594 = vmatpush1.bf16.msra.mxu0 0
        %595 = vmatprep.subr.bf16.mxu0 0
        %596 = vmatpush1.bf16.msra.mxu0 0
        %597 = vmatprep.subr.bf16.mxu0 0
        %598 = vmatpush1.bf16.msra.mxu0 0
        %599 = vmatprep.subr.bf16.mxu0 0
        %600 = vmatpush1.bf16.msra.mxu0 0
        %601 = vmatprep.subr.bf16.mxu0 0
        %602 = vmatpush1.bf16.msra.mxu0 0
        %603 = vmatprep.subr.bf16.mxu0 0
        %604 = vmatpush1.bf16.msra.mxu0 0
        %605 = vmatprep.subr.bf16.mxu0 0
        %606 = vmatpush1.bf16.msra.mxu0 0
        %607 = vmatprep.subr.bf16.mxu0 0
        %608 = vmatpush1.bf16.msra.mxu0 0
        %609 = vmatprep.subr.bf16.mxu0 0
        %610 = vmatpush1.bf16.msra.mxu0 0
        %611 = vmatprep.subr.bf16.mxu0 0
        %612 = vmatpush1.bf16.msra.mxu0 0
        %613 = vmatprep.mubr.bf16.mxu0 0
        %614 = vmatmul.mubr.bf16.gmra.mrb[0].mxu0 %v570
        %v615 = vpop.f32.mrb[0].mxu0
        %v616 = vadd.f32 0.0, %v615
        %v617 = vpop.f32.mrb[0].mxu0
        %v618 = vpop.f32.mrb[0].mxu0
        %v619 = vadd.f32 0.0, %v618
        %v620 = vpop.f32.mrb[0].mxu0
        %621 = vmatprep.mubr.bf16.mxu0 0
        %622 = vmatmul.mubr.bf16.gmra.mrb[0].mxu0 %v573
        %v623 = vpop.f32.mrb[0].mxu0
        %v624 = vadd.f32 0.0, %v623
        %v625 = vpop.f32.mrb[0].mxu0
        %v626 = vpop.f32.mrb[0].mxu0
        %v627 = vadd.f32 0.0, %v626
        %v628 = vpop.f32.mrb[0].mxu0
        %629 = vmatprep.mubr.bf16.mxu0 0
        %630 = vmatmul.mubr.bf16.gmra.mrb[0].mxu0 %v576
        %v631 = vpop.f32.mrb[0].mxu0
        %v632 = vadd.f32 0.0, %v631
        %v633 = vpop.f32.mrb[0].mxu0
        %v634 = vpop.f32.mrb[0].mxu0
        %v635 = vadd.f32 0.0, %v634
        %v636 = vpop.f32.mrb[0].mxu0
        %637 = vmatprep.mubr.bf16.mxu0 0
        %638 = vmatmul.mubr.bf16.gmra.mrb[0].mxu0 %v579
        %v639 = vpop.f32.mrb[0].mxu0
        %v640 = vadd.f32 0.0, %v639
        %v641 = vpop.f32.mrb[0].mxu0
        %v642 = vpop.f32.mrb[0].mxu0
        %v643 = vadd.f32 0.0, %v642
        %v644 = vpop.f32.mrb[0].mxu0
        %645 = vdwg.mxu0
        %v646 = vadd.f32 %v538, %v616
        %v647 = vadd.f32 %v539, %v619
        %v648 = vadd.f32 %v540, %v624
        %v649 = vadd.f32 %v541, %v627
        %v650 = vadd.f32 %v542, %v632
        %v651 = vadd.f32 %v543, %v635
        %v652 = vadd.f32 %v544, %v640
        %v653 = vadd.f32 %v545, %v643
        %s654 = scalar_lea.vmem %s2, 32
        %v655 = vld [vmem:[%s654] sm:$0xf]
        %v656 = vld [vmem:[%s654 + $0x4] sm:$0xf]
        %v657 = vld [vmem:[%s654 + $0x8] sm:$0xf]
        %v658 = vld [vmem:[%s654 + $0xc] sm:$0xf]
        %v660 = vunpack.c.l.b16 %v414
        %v661 = vpack.c.b16 %v660, %v552
        %v666 = vunpack.c.l.b16 %v655
        %v667 = vunpack.c.l.b16 %v656
        %v668 = vunpack.c.l.b16 %v657
        %v669 = vunpack.c.l.b16 %v658
        %v670 = vpack.c.b16 %v667, %v666
        %v671 = vpack.c.b16 %v669, %v668
        %v675 = vsel %vm460, %v661, 0
        %677 = vmatprep.subr.bf16.mxu0 0
        %678 = vmatpush1.bf16.msra.mxu0 %v670
        %679 = vmatprep.subr.bf16.mxu0 0
        %680 = vmatpush1.bf16.msra.mxu0 %v671
        %681 = vmatprep.subr.bf16.mxu0 0
        %682 = vmatpush1.bf16.msra.mxu0 0
        %683 = vmatprep.subr.bf16.mxu0 0
        %684 = vmatpush1.bf16.msra.mxu0 0
        %685 = vmatprep.subr.bf16.mxu0 0
        %686 = vmatpush1.bf16.msra.mxu0 0
        %687 = vmatprep.subr.bf16.mxu0 0
        %688 = vmatpush1.bf16.msra.mxu0 0
        %689 = vmatprep.subr.bf16.mxu0 0
        %690 = vmatpush1.bf16.msra.mxu0 0
        %691 = vmatprep.subr.bf16.mxu0 0
        %692 = vmatpush1.bf16.msra.mxu0 0
        %693 = vmatprep.subr.bf16.mxu0 0
        %694 = vmatpush1.bf16.msra.mxu0 0
        %695 = vmatprep.subr.bf16.mxu0 0
        %696 = vmatpush1.bf16.msra.mxu0 0
        %697 = vmatprep.subr.bf16.mxu0 0
        %698 = vmatpush1.bf16.msra.mxu0 0
        %699 = vmatprep.subr.bf16.mxu0 0
        %700 = vmatpush1.bf16.msra.mxu0 0
        %701 = vmatprep.subr.bf16.mxu0 0
        %702 = vmatpush1.bf16.msra.mxu0 0
        %703 = vmatprep.subr.bf16.mxu0 0
        %704 = vmatpush1.bf16.msra.mxu0 0
        %705 = vmatprep.subr.bf16.mxu0 0
        %706 = vmatpush1.bf16.msra.mxu0 0
        %707 = vmatprep.subr.bf16.mxu0 0
        %708 = vmatpush1.bf16.msra.mxu0 0
        %709 = vmatprep.mubr.bf16.mxu0 0
        %710 = vmatmul.mubr.bf16.gmra.mrb[0].mxu0 %v465
        %v711 = vpop.f32.mrb[0].mxu0
        %v712 = vadd.f32 0.0, %v711
        %v713 = vpop.f32.mrb[0].mxu0
        %v714 = vpop.f32.mrb[0].mxu0
        %v715 = vadd.f32 0.0, %v714
        %v716 = vpop.f32.mrb[0].mxu0
        %717 = vmatprep.mubr.bf16.mxu0 0
        %718 = vmatmul.mubr.bf16.gmra.mrb[0].mxu0 %v468
        %v719 = vpop.f32.mrb[0].mxu0
        %v720 = vadd.f32 0.0, %v719
        %v721 = vpop.f32.mrb[0].mxu0
        %v722 = vpop.f32.mrb[0].mxu0
        %v723 = vadd.f32 0.0, %v722
        %v724 = vpop.f32.mrb[0].mxu0
        %725 = vmatprep.mubr.bf16.mxu0 0
        %726 = vmatmul.mubr.bf16.gmra.mrb[0].mxu0 %v471
        %v727 = vpop.f32.mrb[0].mxu0
        %v728 = vadd.f32 0.0, %v727
        %v729 = vpop.f32.mrb[0].mxu0
        %v730 = vpop.f32.mrb[0].mxu0
        %v731 = vadd.f32 0.0, %v730
        %v732 = vpop.f32.mrb[0].mxu0
        %733 = vmatprep.mubr.bf16.mxu0 0
        %734 = vmatmul.mubr.bf16.gmra.mrb[0].mxu0 %v675
        %v735 = vpop.f32.mrb[0].mxu0
        %v736 = vadd.f32 0.0, %v735
        %v737 = vpop.f32.mrb[0].mxu0
        %v738 = vpop.f32.mrb[0].mxu0
        %v739 = vadd.f32 0.0, %v738
        %v740 = vpop.f32.mrb[0].mxu0
        %741 = vdwg.mxu0
        %v742 = vadd.f32 %v646, %v712
        %v743 = vadd.f32 %v647, %v715
        %v744 = vadd.f32 %v648, %v720
        %v745 = vadd.f32 %v649, %v723
        %v746 = vadd.f32 %v650, %v728
        %v747 = vadd.f32 %v651, %v731
        %v748 = vadd.f32 %v652, %v736
        %v749 = vadd.f32 %v653, %v739
        %s750 = scalar_lea.vmem %s2, 48
        %v751 = vld [vmem:[%s750] sm:$0xf]
        %v752 = vld [vmem:[%s750 + $0x4] sm:$0xf]
        %v753 = vld [vmem:[%s750 + $0x8] sm:$0xf]
        %v754 = vld [vmem:[%s750 + $0xc] sm:$0xf]
        %v756 = vunpack.c.l.b16 %v415
        %v757 = vpack.c.b16 %v756, %v660
        %v762 = vunpack.c.l.b16 %v751
        %v763 = vunpack.c.l.b16 %v752
        %v764 = vunpack.c.l.b16 %v753
        %v765 = vunpack.c.l.b16 %v754
        %v766 = vpack.c.b16 %v763, %v762
        %v767 = vpack.c.b16 %v765, %v764
        %v771 = vsel %vm460, %v757, 0
        %773 = vmatprep.subr.bf16.mxu0 0
        %774 = vmatpush1.bf16.msra.mxu0 %v766
        %775 = vmatprep.subr.bf16.mxu0 0
        %776 = vmatpush1.bf16.msra.mxu0 %v767
        %777 = vmatprep.subr.bf16.mxu0 0
        %778 = vmatpush1.bf16.msra.mxu0 0
        %779 = vmatprep.subr.bf16.mxu0 0
        %780 = vmatpush1.bf16.msra.mxu0 0
        %781 = vmatprep.subr.bf16.mxu0 0
        %782 = vmatpush1.bf16.msra.mxu0 0
        %783 = vmatprep.subr.bf16.mxu0 0
        %784 = vmatpush1.bf16.msra.mxu0 0
        %785 = vmatprep.subr.bf16.mxu0 0
        %786 = vmatpush1.bf16.msra.mxu0 0
        %787 = vmatprep.subr.bf16.mxu0 0
        %788 = vmatpush1.bf16.msra.mxu0 0
        %789 = vmatprep.subr.bf16.mxu0 0
        %790 = vmatpush1.bf16.msra.mxu0 0
        %791 = vmatprep.subr.bf16.mxu0 0
        %792 = vmatpush1.bf16.msra.mxu0 0
        %793 = vmatprep.subr.bf16.mxu0 0
        %794 = vmatpush1.bf16.msra.mxu0 0
        %795 = vmatprep.subr.bf16.mxu0 0
        %796 = vmatpush1.bf16.msra.mxu0 0
        %797 = vmatprep.subr.bf16.mxu0 0
        %798 = vmatpush1.bf16.msra.mxu0 0
        %799 = vmatprep.subr.bf16.mxu0 0
        %800 = vmatpush1.bf16.msra.mxu0 0
        %801 = vmatprep.subr.bf16.mxu0 0
        %802 = vmatpush1.bf16.msra.mxu0 0
        %803 = vmatprep.subr.bf16.mxu0 0
        %804 = vmatpush1.bf16.msra.mxu0 0
        %805 = vmatprep.mubr.bf16.mxu0 0
        %806 = vmatmul.mubr.bf16.gmra.mrb[0].mxu0 %v573
        %v807 = vpop.f32.mrb[0].mxu0
        %v808 = vadd.f32 0.0, %v807
        %v809 = vpop.f32.mrb[0].mxu0
        %v810 = vpop.f32.mrb[0].mxu0
        %v811 = vadd.f32 0.0, %v810
        %v812 = vpop.f32.mrb[0].mxu0
        %813 = vmatprep.mubr.bf16.mxu0 0
        %814 = vmatmul.mubr.bf16.gmra.mrb[0].mxu0 %v576
        %v815 = vpop.f32.mrb[0].mxu0
        %v816 = vadd.f32 0.0, %v815
        %v817 = vpop.f32.mrb[0].mxu0
        %v818 = vpop.f32.mrb[0].mxu0
        %v819 = vadd.f32 0.0, %v818
        %v820 = vpop.f32.mrb[0].mxu0
        %821 = vmatprep.mubr.bf16.mxu0 0
        %822 = vmatmul.mubr.bf16.gmra.mrb[0].mxu0 %v579
        %v823 = vpop.f32.mrb[0].mxu0
        %v824 = vadd.f32 0.0, %v823
        %v825 = vpop.f32.mrb[0].mxu0
        %v826 = vpop.f32.mrb[0].mxu0
        %v827 = vadd.f32 0.0, %v826
        %v828 = vpop.f32.mrb[0].mxu0
        %829 = vmatprep.mubr.bf16.mxu0 0
        %830 = vmatmul.mubr.bf16.gmra.mrb[0].mxu0 %v771
        %v831 = vpop.f32.mrb[0].mxu0
        %v832 = vadd.f32 0.0, %v831
        %v833 = vpop.f32.mrb[0].mxu0
        %v834 = vpop.f32.mrb[0].mxu0
        %v835 = vadd.f32 0.0, %v834
        %v836 = vpop.f32.mrb[0].mxu0
        %837 = vdwg.mxu0
        %v838 = vadd.f32 %v742, %v808
        %v839 = vadd.f32 %v743, %v811
        %v840 = vadd.f32 %v744, %v816
        %v841 = vadd.f32 %v745, %v819
        %v842 = vadd.f32 %v746, %v824
        %v843 = vadd.f32 %v747, %v827
        %v844 = vadd.f32 %v748, %v832
        %v845 = vadd.f32 %v749, %v835
        %s846 = scalar_lea.vmem %s2, 64
        %v847 = vld [vmem:[%s846] sm:$0xf]
        %v848 = vld [vmem:[%s846 + $0x4] sm:$0xf]
        %v849 = vld [vmem:[%s846 + $0x8] sm:$0xf]
        %v850 = vld [vmem:[%s846 + $0xc] sm:$0xf]
        %v852 = vunpack.c.l.b16 %v416
        %v853 = vpack.c.b16 %v852, %v756
        %v858 = vunpack.c.l.b16 %v847
        %v859 = vunpack.c.l.b16 %v848
        %v860 = vunpack.c.l.b16 %v849
        %v861 = vunpack.c.l.b16 %v850
        %v862 = vpack.c.b16 %v859, %v858
        %v863 = vpack.c.b16 %v861, %v860
        %v867 = vsel %vm460, %v853, 0
        %869 = vmatprep.subr.bf16.mxu0 0
        %870 = vmatpush1.bf16.msra.mxu0 %v862
        %871 = vmatprep.subr.bf16.mxu0 0
        %872 = vmatpush1.bf16.msra.mxu0 %v863
        %873 = vmatprep.subr.bf16.mxu0 0
        %874 = vmatpush1.bf16.msra.mxu0 0
        %875 = vmatprep.subr.bf16.mxu0 0
        %876 = vmatpush1.bf16.msra.mxu0 0
        %877 = vmatprep.subr.bf16.mxu0 0
        %878 = vmatpush1.bf16.msra.mxu0 0
        %879 = vmatprep.subr.bf16.mxu0 0
        %880 = vmatpush1.bf16.msra.mxu0 0
        %881 = vmatprep.subr.bf16.mxu0 0
        %882 = vmatpush1.bf16.msra.mxu0 0
        %883 = vmatprep.subr.bf16.mxu0 0
        %884 = vmatpush1.bf16.msra.mxu0 0
        %885 = vmatprep.subr.bf16.mxu0 0
        %886 = vmatpush1.bf16.msra.mxu0 0
        %887 = vmatprep.subr.bf16.mxu0 0
        %888 = vmatpush1.bf16.msra.mxu0 0
        %889 = vmatprep.subr.bf16.mxu0 0
        %890 = vmatpush1.bf16.msra.mxu0 0
        %891 = vmatprep.subr.bf16.mxu0 0
        %892 = vmatpush1.bf16.msra.mxu0 0
        %893 = vmatprep.subr.bf16.mxu0 0
        %894 = vmatpush1.bf16.msra.mxu0 0
        %895 = vmatprep.subr.bf16.mxu0 0
        %896 = vmatpush1.bf16.msra.mxu0 0
        %897 = vmatprep.subr.bf16.mxu0 0
        %898 = vmatpush1.bf16.msra.mxu0 0
        %899 = vmatprep.subr.bf16.mxu0 0
        %900 = vmatpush1.bf16.msra.mxu0 0
        %901 = vmatprep.mubr.bf16.mxu0 0
        %902 = vmatmul.mubr.bf16.gmra.mrb[0].mxu0 %v468
        %v903 = vpop.f32.mrb[0].mxu0
        %v904 = vadd.f32 0.0, %v903
        %v905 = vpop.f32.mrb[0].mxu0
        %v906 = vpop.f32.mrb[0].mxu0
        %v907 = vadd.f32 0.0, %v906
        %v908 = vpop.f32.mrb[0].mxu0
        %909 = vmatprep.mubr.bf16.mxu0 0
        %910 = vmatmul.mubr.bf16.gmra.mrb[0].mxu0 %v471
        %v911 = vpop.f32.mrb[0].mxu0
        %v912 = vadd.f32 0.0, %v911
        %v913 = vpop.f32.mrb[0].mxu0
        %v914 = vpop.f32.mrb[0].mxu0
        %v915 = vadd.f32 0.0, %v914
        %v916 = vpop.f32.mrb[0].mxu0
        %917 = vmatprep.mubr.bf16.mxu0 0
        %918 = vmatmul.mubr.bf16.gmra.mrb[0].mxu0 %v675
        %v919 = vpop.f32.mrb[0].mxu0
        %v920 = vadd.f32 0.0, %v919
        %v921 = vpop.f32.mrb[0].mxu0
        %v922 = vpop.f32.mrb[0].mxu0
        %v923 = vadd.f32 0.0, %v922
        %v924 = vpop.f32.mrb[0].mxu0
        %925 = vmatprep.mubr.bf16.mxu0 0
        %926 = vmatmul.mubr.bf16.gmra.mrb[0].mxu0 %v867
        %v927 = vpop.f32.mrb[0].mxu0
        %v928 = vadd.f32 0.0, %v927
        %v929 = vpop.f32.mrb[0].mxu0
        %v930 = vpop.f32.mrb[0].mxu0
        %v931 = vadd.f32 0.0, %v930
        %v932 = vpop.f32.mrb[0].mxu0
        %933 = vdwg.mxu0
        %v934 = vadd.f32 %v838, %v904
        %v935 = vadd.f32 %v839, %v907
        %v936 = vadd.f32 %v840, %v912
        %v937 = vadd.f32 %v841, %v915
        %v938 = vadd.f32 %v842, %v920
        %v939 = vadd.f32 %v843, %v923
        %v940 = vadd.f32 %v844, %v928
        %v941 = vadd.f32 %v845, %v931
        %942 = vst.msk [vmem:[#allocation2] sm:$0xff] %vm460, 0.0
        %943 = vst.msk [vmem:[#allocation2 + $0x8] sm:$0xff] %vm460, 0.0
        %s944 = scalar_lea.vmem [#allocation2], 80
        %945 = vst.msk [vmem:[%s944] sm:$0xff] %vm460, 0.0
        %946 = vst.msk [vmem:[%s944 + $0x8] sm:$0xff] %vm460, 0.0
        %s947 = scalar_lea.vmem [#allocation2], 16
        %948 = vst.msk [vmem:[%s947] sm:$0xff] %vm460, %v397
        %949 = vst.msk [vmem:[%s947 + $0x8] sm:$0xff] %vm460, %v398
        %950 = vst.msk [vmem:[%s947 + $0x10] sm:$0xff] %vm460, %v399
        %951 = vst.msk [vmem:[%s947 + $0x18] sm:$0xff] %vm460, %v400
        %952 = vst.msk [vmem:[%s947 + $0x20] sm:$0xff] %vm460, %v401
        %953 = vst.msk [vmem:[%s947 + $0x28] sm:$0xff] %vm460, %v402
        %954 = vst.msk [vmem:[%s947 + $0x30] sm:$0xff] %vm460, %v403
        %955 = vst.msk [vmem:[%s947 + $0x38] sm:$0xff] %vm460, %v404
        %v956 = vld [vmem:[#allocation2] sm:$0xff]
        %v957 = vld [vmem:[#allocation2 + $0x8] sm:$0xff]
        %v958 = vld [vmem:[#allocation2 + $0x10] sm:$0xff]
        %v959 = vld [vmem:[#allocation2 + $0x18] sm:$0xff]
        %v960 = vld [vmem:[#allocation2 + $0x20] sm:$0xff]
        %v961 = vld [vmem:[#allocation2 + $0x28] sm:$0xff]
        %v962 = vld [vmem:[#allocation2 + $0x30] sm:$0xff]
        %v963 = vld [vmem:[#allocation2 + $0x38] sm:$0xff]
        %v964 = vld [vmem:[#allocation2 + $0x40] sm:$0xff]
        %v965 = vld [vmem:[#allocation2 + $0x48] sm:$0xff]
        %v966 = vld [vmem:[#allocation2 + $0x50] sm:$0xff]
        %v967 = vld [vmem:[#allocation2 + $0x58] sm:$0xff]
        %v968 = vld [vmem:[%s3] sm:$0xff]
        %v969 = vld [vmem:[%s3 + $0x8] sm:$0xff]
        %v970 = vld [vmem:[%s3 + $0x10] sm:$0xff]
        %v971 = vld [vmem:[%s3 + $0x18] sm:$0xff]
        %s972 = scalar_lea.vmem %s3, 32
        %v973 = vld [vmem:[%s972] sm:$0xff]
        %v974 = vld [vmem:[%s972 + $0x8] sm:$0xff]
        %v975 = vld [vmem:[%s972 + $0x10] sm:$0xff]
        %v976 = vld [vmem:[%s972 + $0x18] sm:$0xff]
        %v978 = vsel %vm460, %v957, 0
        %v981 = vsel %vm460, %v958, 0
        %v984 = vsel %vm460, %v959, 0
        %v987 = vsel %vm460, %v960, 0
        %v990 = vsel %vm460, %v961, 0
        %v993 = vsel %vm460, %v962, 0
        %v996 = vsel %vm460, %v963, 0
        %v999 = vsel %vm460, %v964, 0
        %1001 = vmatprep.subr.mxu0 0.0
        %1002 = vmatpush1.msra.mxu0 %v973
        %1003 = vmatprep.subr.mxu0 0.0
        %1004 = vmatpush1.msra.mxu0 %v974
        %1005 = vmatprep.subr.mxu0 0.0
        %1006 = vmatpush1.msra.mxu0 %v975
        %1007 = vmatprep.subr.mxu0 0.0
        %1008 = vmatpush1.msra.mxu0 %v976
        %1009 = vmatprep.subr.mxu0 0.0
        %1010 = vmatpush1.msra.mxu0 0.0
        %1011 = vmatprep.subr.mxu0 0.0
        %1012 = vmatpush1.msra.mxu0 0.0
        %1013 = vmatprep.subr.mxu0 0.0
        %1014 = vmatpush1.msra.mxu0 0.0
        %1015 = vmatprep.subr.mxu0 0.0
        %1016 = vmatpush1.msra.mxu0 0.0
        %1017 = vmatprep.subr.mxu0 0.0
        %1018 = vmatpush1.msra.mxu0 0.0
        %1019 = vmatprep.subr.mxu0 0.0
        %1020 = vmatpush1.msra.mxu0 0.0
        %1021 = vmatprep.subr.mxu0 0.0
        %1022 = vmatpush1.msra.mxu0 0.0
        %1023 = vmatprep.subr.mxu0 0.0
        %1024 = vmatpush1.msra.mxu0 0.0
        %1025 = vmatprep.subr.mxu0 0.0
        %1026 = vmatpush1.msra.mxu0 0.0
        %1027 = vmatprep.subr.mxu0 0.0
        %1028 = vmatpush1.msra.mxu0 0.0
        %1029 = vmatprep.subr.mxu0 0.0
        %1030 = vmatpush1.msra.mxu0 0.0
        %1031 = vmatprep.subr.mxu0 0.0
        %1032 = vmatpush1.msra.mxu0 0.0
        %1033 = vmatprep.subr.mxu0 0.0
        %1034 = vmatpush1.msra.mxu0 0.0
        %1035 = vmatprep.subr.mxu0 0.0
        %1036 = vmatpush1.msra.mxu0 0.0
        %1037 = vmatprep.subr.mxu0 0.0
        %1038 = vmatpush1.msra.mxu0 0.0
        %1039 = vmatprep.subr.mxu0 0.0
        %1040 = vmatpush1.msra.mxu0 0.0
        %1041 = vmatprep.subr.mxu0 0.0
        %1042 = vmatpush1.msra.mxu0 0.0
        %1043 = vmatprep.subr.mxu0 0.0
        %1044 = vmatpush1.msra.mxu0 0.0
        %1045 = vmatprep.subr.mxu0 0.0
        %1046 = vmatpush1.msra.mxu0 0.0
        %1047 = vmatprep.subr.mxu0 0.0
        %1048 = vmatpush1.msra.mxu0 0.0
        %1049 = vmatprep.subr.mxu0 0.0
        %1050 = vmatpush1.msra.mxu0 0.0
        %1051 = vmatprep.subr.mxu0 0.0
        %1052 = vmatpush1.msra.mxu0 0.0
        %1053 = vmatprep.subr.mxu0 0.0
        %1054 = vmatpush1.msra.mxu0 0.0
        %1055 = vmatprep.subr.mxu0 0.0
        %1056 = vmatpush1.msra.mxu0 0.0
        %1057 = vmatprep.subr.mxu0 0.0
        %1058 = vmatpush1.msra.mxu0 0.0
        %1059 = vmatprep.subr.mxu0 0.0
        %1060 = vmatpush1.msra.mxu0 0.0
        %1061 = vmatprep.subr.mxu0 0.0
        %1062 = vmatpush1.msra.mxu0 0.0
        %1063 = vmatprep.subr.mxu0 0.0
        %1064 = vmatpush1.msra.mxu0 0.0
        %1065 = vmatprep.mubr.f32.mxu0 0.0
        %1066 = vmatmul.mubr.f32.gmra.mrb[0].mxu0 %v978
        %v1067 = vpop.f32.mrb[0].mxu0
        %v1068 = vadd.f32 0.0, %v1067
        %v1069 = vpop.f32.mrb[0].mxu0
        %1070 = vmatprep.mubr.f32.mxu0 0.0
        %1071 = vmatmul.mubr.f32.gmra.mrb[0].mxu0 %v981
        %v1072 = vpop.f32.mrb[0].mxu0
        %v1073 = vadd.f32 0.0, %v1072
        %v1074 = vpop.f32.mrb[0].mxu0
        %1075 = vmatprep.mubr.f32.mxu0 0.0
        %1076 = vmatmul.mubr.f32.gmra.mrb[0].mxu0 %v984
        %v1077 = vpop.f32.mrb[0].mxu0
        %v1078 = vadd.f32 0.0, %v1077
        %v1079 = vpop.f32.mrb[0].mxu0
        %1080 = vmatprep.mubr.f32.mxu0 0.0
        %1081 = vmatmul.mubr.f32.gmra.mrb[0].mxu0 %v987
        %v1082 = vpop.f32.mrb[0].mxu0
        %v1083 = vadd.f32 0.0, %v1082
        %v1084 = vpop.f32.mrb[0].mxu0
        %1085 = vmatprep.mubr.f32.mxu0 0.0
        %1086 = vmatmul.mubr.f32.gmra.mrb[0].mxu0 %v990
        %v1087 = vpop.f32.mrb[0].mxu0
        %v1088 = vadd.f32 0.0, %v1087
        %v1089 = vpop.f32.mrb[0].mxu0
        %1090 = vmatprep.mubr.f32.mxu0 0.0
        %1091 = vmatmul.mubr.f32.gmra.mrb[0].mxu0 %v993
        %v1092 = vpop.f32.mrb[0].mxu0
        %v1093 = vadd.f32 0.0, %v1092
        %v1094 = vpop.f32.mrb[0].mxu0
        %1095 = vmatprep.mubr.f32.mxu0 0.0
        %1096 = vmatmul.mubr.f32.gmra.mrb[0].mxu0 %v996
        %v1097 = vpop.f32.mrb[0].mxu0
        %v1098 = vadd.f32 0.0, %v1097
        %v1099 = vpop.f32.mrb[0].mxu0
        %1100 = vmatprep.mubr.f32.mxu0 0.0
        %1101 = vmatmul.mubr.f32.gmra.mrb[0].mxu0 %v999
        %v1102 = vpop.f32.mrb[0].mxu0
        %v1103 = vadd.f32 0.0, %v1102
        %v1104 = vpop.f32.mrb[0].mxu0
        %1105 = vdwg.mxu0
        %v1107 = vsel %vm460, %v956, 0
        %1109 = vmatprep.subr.mxu0 0.0
        %1110 = vmatpush1.msra.mxu0 %v968
        %1111 = vmatprep.subr.mxu0 0.0
        %1112 = vmatpush1.msra.mxu0 %v969
        %1113 = vmatprep.subr.mxu0 0.0
        %1114 = vmatpush1.msra.mxu0 %v970
        %1115 = vmatprep.subr.mxu0 0.0
        %1116 = vmatpush1.msra.mxu0 %v971
        %1117 = vmatprep.subr.mxu0 0.0
        %1118 = vmatpush1.msra.mxu0 0.0
        %1119 = vmatprep.subr.mxu0 0.0
        %1120 = vmatpush1.msra.mxu0 0.0
        %1121 = vmatprep.subr.mxu0 0.0
        %1122 = vmatpush1.msra.mxu0 0.0
        %1123 = vmatprep.subr.mxu0 0.0
        %1124 = vmatpush1.msra.mxu0 0.0
        %1125 = vmatprep.subr.mxu0 0.0
        %1126 = vmatpush1.msra.mxu0 0.0
        %1127 = vmatprep.subr.mxu0 0.0
        %1128 = vmatpush1.msra.mxu0 0.0
        %1129 = vmatprep.subr.mxu0 0.0
        %1130 = vmatpush1.msra.mxu0 0.0
        %1131 = vmatprep.subr.mxu0 0.0
        %1132 = vmatpush1.msra.mxu0 0.0
        %1133 = vmatprep.subr.mxu0 0.0
        %1134 = vmatpush1.msra.mxu0 0.0
        %1135 = vmatprep.subr.mxu0 0.0
        %1136 = vmatpush1.msra.mxu0 0.0
        %1137 = vmatprep.subr.mxu0 0.0
        %1138 = vmatpush1.msra.mxu0 0.0
        %1139 = vmatprep.subr.mxu0 0.0
        %1140 = vmatpush1.msra.mxu0 0.0
        %1141 = vmatprep.subr.mxu0 0.0
        %1142 = vmatpush1.msra.mxu0 0.0
        %1143 = vmatprep.subr.mxu0 0.0
        %1144 = vmatpush1.msra.mxu0 0.0
        %1145 = vmatprep.subr.mxu0 0.0
        %1146 = vmatpush1.msra.mxu0 0.0
        %1147 = vmatprep.subr.mxu0 0.0
        %1148 = vmatpush1.msra.mxu0 0.0
        %1149 = vmatprep.subr.mxu0 0.0
        %1150 = vmatpush1.msra.mxu0 0.0
        %1151 = vmatprep.subr.mxu0 0.0
        %1152 = vmatpush1.msra.mxu0 0.0
        %1153 = vmatprep.subr.mxu0 0.0
        %1154 = vmatpush1.msra.mxu0 0.0
        %1155 = vmatprep.subr.mxu0 0.0
        %1156 = vmatpush1.msra.mxu0 0.0
        %1157 = vmatprep.subr.mxu0 0.0
        %1158 = vmatpush1.msra.mxu0 0.0
        %1159 = vmatprep.subr.mxu0 0.0
        %1160 = vmatpush1.msra.mxu0 0.0
        %1161 = vmatprep.subr.mxu0 0.0
        %1162 = vmatpush1.msra.mxu0 0.0
        %1163 = vmatprep.subr.mxu0 0.0
        %1164 = vmatpush1.msra.mxu0 0.0
        %1165 = vmatprep.subr.mxu0 0.0
        %1166 = vmatpush1.msra.mxu0 0.0
        %1167 = vmatprep.subr.mxu0 0.0
        %1168 = vmatpush1.msra.mxu0 0.0
        %1169 = vmatprep.subr.mxu0 0.0
        %1170 = vmatpush1.msra.mxu0 0.0
        %1171 = vmatprep.subr.mxu0 0.0
        %1172 = vmatpush1.msra.mxu0 0.0
        %1173 = vmatprep.mubr.f32.mxu0 0.0
        %1174 = vmatmul.mubr.f32.gmra.mrb[0].mxu0 %v1107
        %v1175 = vpop.f32.mrb[0].mxu0
        %v1176 = vadd.f32 %v1068, %v1175
        %v1177 = vpop.f32.mrb[0].mxu0
        %1178 = vmatprep.mubr.f32.mxu0 0.0
        %1179 = vmatmul.mubr.f32.gmra.mrb[0].mxu0 %v978
        %v1180 = vpop.f32.mrb[0].mxu0
        %v1181 = vadd.f32 %v1073, %v1180
        %v1182 = vpop.f32.mrb[0].mxu0
        %1183 = vmatprep.mubr.f32.mxu0 0.0
        %1184 = vmatmul.mubr.f32.gmra.mrb[0].mxu0 %v981
        %v1185 = vpop.f32.mrb[0].mxu0
        %v1186 = vadd.f32 %v1078, %v1185
        %v1187 = vpop.f32.mrb[0].mxu0
        %1188 = vmatprep.mubr.f32.mxu0 0.0
        %1189 = vmatmul.mubr.f32.gmra.mrb[0].mxu0 %v984
        %v1190 = vpop.f32.mrb[0].mxu0
        %v1191 = vadd.f32 %v1083, %v1190
        %v1192 = vpop.f32.mrb[0].mxu0
        %1193 = vmatprep.mubr.f32.mxu0 0.0
        %1194 = vmatmul.mubr.f32.gmra.mrb[0].mxu0 %v987
        %v1195 = vpop.f32.mrb[0].mxu0
        %v1196 = vadd.f32 %v1088, %v1195
        %v1197 = vpop.f32.mrb[0].mxu0
        %1198 = vmatprep.mubr.f32.mxu0 0.0
        %1199 = vmatmul.mubr.f32.gmra.mrb[0].mxu0 %v990
        %v1200 = vpop.f32.mrb[0].mxu0
        %v1201 = vadd.f32 %v1093, %v1200
        %v1202 = vpop.f32.mrb[0].mxu0
        %1203 = vmatprep.mubr.f32.mxu0 0.0
        %1204 = vmatmul.mubr.f32.gmra.mrb[0].mxu0 %v993
        %v1205 = vpop.f32.mrb[0].mxu0
        %v1206 = vadd.f32 %v1098, %v1205
        %v1207 = vpop.f32.mrb[0].mxu0
        %1208 = vmatprep.mubr.f32.mxu0 0.0
        %1209 = vmatmul.mubr.f32.gmra.mrb[0].mxu0 %v996
        %v1210 = vpop.f32.mrb[0].mxu0
        %v1211 = vadd.f32 %v1103, %v1210
        %v1212 = vpop.f32.mrb[0].mxu0
        %1213 = vdwg.mxu0
        %s1214 = scalar_lea.vmem %s3, 64
        %v1215 = vld [vmem:[%s1214] sm:$0xff]
        %v1216 = vld [vmem:[%s1214 + $0x8] sm:$0xff]
        %v1217 = vld [vmem:[%s1214 + $0x10] sm:$0xff]
        %v1218 = vld [vmem:[%s1214 + $0x18] sm:$0xff]
        %v1220 = vsel %vm460, %v965, 0
        %1222 = vmatprep.subr.mxu0 0.0
        %1223 = vmatpush1.msra.mxu0 %v1215
        %1224 = vmatprep.subr.mxu0 0.0
        %1225 = vmatpush1.msra.mxu0 %v1216
        %1226 = vmatprep.subr.mxu0 0.0
        %1227 = vmatpush1.msra.mxu0 %v1217
        %1228 = vmatprep.subr.mxu0 0.0
        %1229 = vmatpush1.msra.mxu0 %v1218
        %1230 = vmatprep.subr.mxu0 0.0
        %1231 = vmatpush1.msra.mxu0 0.0
        %1232 = vmatprep.subr.mxu0 0.0
        %1233 = vmatpush1.msra.mxu0 0.0
        %1234 = vmatprep.subr.mxu0 0.0
        %1235 = vmatpush1.msra.mxu0 0.0
        %1236 = vmatprep.subr.mxu0 0.0
        %1237 = vmatpush1.msra.mxu0 0.0
        %1238 = vmatprep.subr.mxu0 0.0
        %1239 = vmatpush1.msra.mxu0 0.0
        %1240 = vmatprep.subr.mxu0 0.0
        %1241 = vmatpush1.msra.mxu0 0.0
        %1242 = vmatprep.subr.mxu0 0.0
        %1243 = vmatpush1.msra.mxu0 0.0
        %1244 = vmatprep.subr.mxu0 0.0
        %1245 = vmatpush1.msra.mxu0 0.0
        %1246 = vmatprep.subr.mxu0 0.0
        %1247 = vmatpush1.msra.mxu0 0.0
        %1248 = vmatprep.subr.mxu0 0.0
        %1249 = vmatpush1.msra.mxu0 0.0
        %1250 = vmatprep.subr.mxu0 0.0
        %1251 = vmatpush1.msra.mxu0 0.0
        %1252 = vmatprep.subr.mxu0 0.0
        %1253 = vmatpush1.msra.mxu0 0.0
        %1254 = vmatprep.subr.mxu0 0.0
        %1255 = vmatpush1.msra.mxu0 0.0
        %1256 = vmatprep.subr.mxu0 0.0
        %1257 = vmatpush1.msra.mxu0 0.0
        %1258 = vmatprep.subr.mxu0 0.0
        %1259 = vmatpush1.msra.mxu0 0.0
        %1260 = vmatprep.subr.mxu0 0.0
        %1261 = vmatpush1.msra.mxu0 0.0
        %1262 = vmatprep.subr.mxu0 0.0
        %1263 = vmatpush1.msra.mxu0 0.0
        %1264 = vmatprep.subr.mxu0 0.0
        %1265 = vmatpush1.msra.mxu0 0.0
        %1266 = vmatprep.subr.mxu0 0.0
        %1267 = vmatpush1.msra.mxu0 0.0
        %1268 = vmatprep.subr.mxu0 0.0
        %1269 = vmatpush1.msra.mxu0 0.0
        %1270 = vmatprep.subr.mxu0 0.0
        %1271 = vmatpush1.msra.mxu0 0.0
        %1272 = vmatprep.subr.mxu0 0.0
        %1273 = vmatpush1.msra.mxu0 0.0
        %1274 = vmatprep.subr.mxu0 0.0
        %1275 = vmatpush1.msra.mxu0 0.0
        %1276 = vmatprep.subr.mxu0 0.0
        %1277 = vmatpush1.msra.mxu0 0.0
        %1278 = vmatprep.subr.mxu0 0.0
        %1279 = vmatpush1.msra.mxu0 0.0
        %1280 = vmatprep.subr.mxu0 0.0
        %1281 = vmatpush1.msra.mxu0 0.0
        %1282 = vmatprep.subr.mxu0 0.0
        %1283 = vmatpush1.msra.mxu0 0.0
        %1284 = vmatprep.subr.mxu0 0.0
        %1285 = vmatpush1.msra.mxu0 0.0
        %1286 = vmatprep.mubr.f32.mxu0 0.0
        %1287 = vmatmul.mubr.f32.gmra.mrb[0].mxu0 %v981
        %v1288 = vpop.f32.mrb[0].mxu0
        %v1289 = vadd.f32 0.0, %v1288
        %v1290 = vpop.f32.mrb[0].mxu0
        %1291 = vmatprep.mubr.f32.mxu0 0.0
        %1292 = vmatmul.mubr.f32.gmra.mrb[0].mxu0 %v984
        %v1293 = vpop.f32.mrb[0].mxu0
        %v1294 = vadd.f32 0.0, %v1293
        %v1295 = vpop.f32.mrb[0].mxu0
        %1296 = vmatprep.mubr.f32.mxu0 0.0
        %1297 = vmatmul.mubr.f32.gmra.mrb[0].mxu0 %v987
        %v1298 = vpop.f32.mrb[0].mxu0
        %v1299 = vadd.f32 0.0, %v1298
        %v1300 = vpop.f32.mrb[0].mxu0
        %1301 = vmatprep.mubr.f32.mxu0 0.0
        %1302 = vmatmul.mubr.f32.gmra.mrb[0].mxu0 %v990
        %v1303 = vpop.f32.mrb[0].mxu0
        %v1304 = vadd.f32 0.0, %v1303
        %v1305 = vpop.f32.mrb[0].mxu0
        %1306 = vmatprep.mubr.f32.mxu0 0.0
        %1307 = vmatmul.mubr.f32.gmra.mrb[0].mxu0 %v993
        %v1308 = vpop.f32.mrb[0].mxu0
        %v1309 = vadd.f32 0.0, %v1308
        %v1310 = vpop.f32.mrb[0].mxu0
        %1311 = vmatprep.mubr.f32.mxu0 0.0
        %1312 = vmatmul.mubr.f32.gmra.mrb[0].mxu0 %v996
        %v1313 = vpop.f32.mrb[0].mxu0
        %v1314 = vadd.f32 0.0, %v1313
        %v1315 = vpop.f32.mrb[0].mxu0
        %1316 = vmatprep.mubr.f32.mxu0 0.0
        %1317 = vmatmul.mubr.f32.gmra.mrb[0].mxu0 %v999
        %v1318 = vpop.f32.mrb[0].mxu0
        %v1319 = vadd.f32 0.0, %v1318
        %v1320 = vpop.f32.mrb[0].mxu0
        %1321 = vmatprep.mubr.f32.mxu0 0.0
        %1322 = vmatmul.mubr.f32.gmra.mrb[0].mxu0 %v1220
        %v1323 = vpop.f32.mrb[0].mxu0
        %v1324 = vadd.f32 0.0, %v1323
        %v1325 = vpop.f32.mrb[0].mxu0
        %1326 = vdwg.mxu0
        %v1327 = vadd.f32 %v1176, %v1289
        %v1328 = vadd.f32 %v1181, %v1294
        %v1329 = vadd.f32 %v1186, %v1299
        %v1330 = vadd.f32 %v1191, %v1304
        %v1331 = vadd.f32 %v1196, %v1309
        %v1332 = vadd.f32 %v1201, %v1314
        %v1333 = vadd.f32 %v1206, %v1319
        %v1334 = vadd.f32 %v1211, %v1324
        %s1335 = scalar_lea.vmem %s3, 96
        %v1336 = vld [vmem:[%s1335] sm:$0xff]
        %v1337 = vld [vmem:[%s1335 + $0x8] sm:$0xff]
        %v1338 = vld [vmem:[%s1335 + $0x10] sm:$0xff]
        %v1339 = vld [vmem:[%s1335 + $0x18] sm:$0xff]
        %v1341 = vsel %vm460, %v966, 0
        %1343 = vmatprep.subr.mxu0 0.0
        %1344 = vmatpush1.msra.mxu0 %v1336
        %1345 = vmatprep.subr.mxu0 0.0
        %1346 = vmatpush1.msra.mxu0 %v1337
        %1347 = vmatprep.subr.mxu0 0.0
        %1348 = vmatpush1.msra.mxu0 %v1338
        %1349 = vmatprep.subr.mxu0 0.0
        %1350 = vmatpush1.msra.mxu0 %v1339
        %1351 = vmatprep.subr.mxu0 0.0
        %1352 = vmatpush1.msra.mxu0 0.0
        %1353 = vmatprep.subr.mxu0 0.0
        %1354 = vmatpush1.msra.mxu0 0.0
        %1355 = vmatprep.subr.mxu0 0.0
        %1356 = vmatpush1.msra.mxu0 0.0
        %1357 = vmatprep.subr.mxu0 0.0
        %1358 = vmatpush1.msra.mxu0 0.0
        %1359 = vmatprep.subr.mxu0 0.0
        %1360 = vmatpush1.msra.mxu0 0.0
        %1361 = vmatprep.subr.mxu0 0.0
        %1362 = vmatpush1.msra.mxu0 0.0
        %1363 = vmatprep.subr.mxu0 0.0
        %1364 = vmatpush1.msra.mxu0 0.0
        %1365 = vmatprep.subr.mxu0 0.0
        %1366 = vmatpush1.msra.mxu0 0.0
        %1367 = vmatprep.subr.mxu0 0.0
        %1368 = vmatpush1.msra.mxu0 0.0
        %1369 = vmatprep.subr.mxu0 0.0
        %1370 = vmatpush1.msra.mxu0 0.0
        %1371 = vmatprep.subr.mxu0 0.0
        %1372 = vmatpush1.msra.mxu0 0.0
        %1373 = vmatprep.subr.mxu0 0.0
        %1374 = vmatpush1.msra.mxu0 0.0
        %1375 = vmatprep.subr.mxu0 0.0
        %1376 = vmatpush1.msra.mxu0 0.0
        %1377 = vmatprep.subr.mxu0 0.0
        %1378 = vmatpush1.msra.mxu0 0.0
        %1379 = vmatprep.subr.mxu0 0.0
        %1380 = vmatpush1.msra.mxu0 0.0
        %1381 = vmatprep.subr.mxu0 0.0
        %1382 = vmatpush1.msra.mxu0 0.0
        %1383 = vmatprep.subr.mxu0 0.0
        %1384 = vmatpush1.msra.mxu0 0.0
        %1385 = vmatprep.subr.mxu0 0.0
        %1386 = vmatpush1.msra.mxu0 0.0
        %1387 = vmatprep.subr.mxu0 0.0
        %1388 = vmatpush1.msra.mxu0 0.0
        %1389 = vmatprep.subr.mxu0 0.0
        %1390 = vmatpush1.msra.mxu0 0.0
        %1391 = vmatprep.subr.mxu0 0.0
        %1392 = vmatpush1.msra.mxu0 0.0
        %1393 = vmatprep.subr.mxu0 0.0
        %1394 = vmatpush1.msra.mxu0 0.0
        %1395 = vmatprep.subr.mxu0 0.0
        %1396 = vmatpush1.msra.mxu0 0.0
        %1397 = vmatprep.subr.mxu0 0.0
        %1398 = vmatpush1.msra.mxu0 0.0
        %1399 = vmatprep.subr.mxu0 0.0
        %1400 = vmatpush1.msra.mxu0 0.0
        %1401 = vmatprep.subr.mxu0 0.0
        %1402 = vmatpush1.msra.mxu0 0.0
        %1403 = vmatprep.subr.mxu0 0.0
        %1404 = vmatpush1.msra.mxu0 0.0
        %1405 = vmatprep.subr.mxu0 0.0
        %1406 = vmatpush1.msra.mxu0 0.0
        %1407 = vmatprep.mubr.f32.mxu0 0.0
        %1408 = vmatmul.mubr.f32.gmra.mrb[0].mxu0 %v984
        %v1409 = vpop.f32.mrb[0].mxu0
        %v1410 = vadd.f32 0.0, %v1409
        %v1411 = vpop.f32.mrb[0].mxu0
        %1412 = vmatprep.mubr.f32.mxu0 0.0
        %1413 = vmatmul.mubr.f32.gmra.mrb[0].mxu0 %v987
        %v1414 = vpop.f32.mrb[0].mxu0
        %v1415 = vadd.f32 0.0, %v1414
        %v1416 = vpop.f32.mrb[0].mxu0
        %1417 = vmatprep.mubr.f32.mxu0 0.0
        %1418 = vmatmul.mubr.f32.gmra.mrb[0].mxu0 %v990
        %v1419 = vpop.f32.mrb[0].mxu0
        %v1420 = vadd.f32 0.0, %v1419
        %v1421 = vpop.f32.mrb[0].mxu0
        %1422 = vmatprep.mubr.f32.mxu0 0.0
        %1423 = vmatmul.mubr.f32.gmra.mrb[0].mxu0 %v993
        %v1424 = vpop.f32.mrb[0].mxu0
        %v1425 = vadd.f32 0.0, %v1424
        %v1426 = vpop.f32.mrb[0].mxu0
        %1427 = vmatprep.mubr.f32.mxu0 0.0
        %1428 = vmatmul.mubr.f32.gmra.mrb[0].mxu0 %v996
        %v1429 = vpop.f32.mrb[0].mxu0
        %v1430 = vadd.f32 0.0, %v1429
        %v1431 = vpop.f32.mrb[0].mxu0
        %1432 = vmatprep.mubr.f32.mxu0 0.0
        %1433 = vmatmul.mubr.f32.gmra.mrb[0].mxu0 %v999
        %v1434 = vpop.f32.mrb[0].mxu0
        %v1435 = vadd.f32 0.0, %v1434
        %v1436 = vpop.f32.mrb[0].mxu0
        %1437 = vmatprep.mubr.f32.mxu0 0.0
        %1438 = vmatmul.mubr.f32.gmra.mrb[0].mxu0 %v1220
        %v1439 = vpop.f32.mrb[0].mxu0
        %v1440 = vadd.f32 0.0, %v1439
        %v1441 = vpop.f32.mrb[0].mxu0
        %1442 = vmatprep.mubr.f32.mxu0 0.0
        %1443 = vmatmul.mubr.f32.gmra.mrb[0].mxu0 %v1341
        %v1444 = vpop.f32.mrb[0].mxu0
        %v1445 = vadd.f32 0.0, %v1444
        %v1446 = vpop.f32.mrb[0].mxu0
        %1447 = vdwg.mxu0
        %v1448 = vadd.f32 %v1327, %v1410
        %v1449 = vadd.f32 %v1328, %v1415
        %v1450 = vadd.f32 %v1329, %v1420
        %v1451 = vadd.f32 %v1330, %v1425
        %v1452 = vadd.f32 %v1331, %v1430
        %v1453 = vadd.f32 %v1332, %v1435
        %v1454 = vadd.f32 %v1333, %v1440
        %v1455 = vadd.f32 %v1334, %v1445
        %s1456 = scalar_lea.vmem %s3, 128
        %v1457 = vld [vmem:[%s1456] sm:$0xff]
        %v1458 = vld [vmem:[%s1456 + $0x8] sm:$0xff]
        %v1459 = vld [vmem:[%s1456 + $0x10] sm:$0xff]
        %v1460 = vld [vmem:[%s1456 + $0x18] sm:$0xff]
        %v1462 = vsel %vm460, %v967, 0
        %1464 = vmatprep.subr.mxu0 0.0
        %1465 = vmatpush1.msra.mxu0 %v1457
        %1466 = vmatprep.subr.mxu0 0.0
        %1467 = vmatpush1.msra.mxu0 %v1458
        %1468 = vmatprep.subr.mxu0 0.0
        %1469 = vmatpush1.msra.mxu0 %v1459
        %1470 = vmatprep.subr.mxu0 0.0
        %1471 = vmatpush1.msra.mxu0 %v1460
        %1472 = vmatprep.subr.mxu0 0.0
        %1473 = vmatpush1.msra.mxu0 0.0
        %1474 = vmatprep.subr.mxu0 0.0
        %1475 = vmatpush1.msra.mxu0 0.0
        %1476 = vmatprep.subr.mxu0 0.0
        %1477 = vmatpush1.msra.mxu0 0.0
        %1478 = vmatprep.subr.mxu0 0.0
        %1479 = vmatpush1.msra.mxu0 0.0
        %1480 = vmatprep.subr.mxu0 0.0
        %1481 = vmatpush1.msra.mxu0 0.0
        %1482 = vmatprep.subr.mxu0 0.0
        %1483 = vmatpush1.msra.mxu0 0.0
        %1484 = vmatprep.subr.mxu0 0.0
        %1485 = vmatpush1.msra.mxu0 0.0
        %1486 = vmatprep.subr.mxu0 0.0
        %1487 = vmatpush1.msra.mxu0 0.0
        %1488 = vmatprep.subr.mxu0 0.0
        %1489 = vmatpush1.msra.mxu0 0.0
        %1490 = vmatprep.subr.mxu0 0.0
        %1491 = vmatpush1.msra.mxu0 0.0
        %1492 = vmatprep.subr.mxu0 0.0
        %1493 = vmatpush1.msra.mxu0 0.0
        %1494 = vmatprep.subr.mxu0 0.0
        %1495 = vmatpush1.msra.mxu0 0.0
        %1496 = vmatprep.subr.mxu0 0.0
        %1497 = vmatpush1.msra.mxu0 0.0
        %1498 = vmatprep.subr.mxu0 0.0
        %1499 = vmatpush1.msra.mxu0 0.0
        %1500 = vmatprep.subr.mxu0 0.0
        %1501 = vmatpush1.msra.mxu0 0.0
        %1502 = vmatprep.subr.mxu0 0.0
        %1503 = vmatpush1.msra.mxu0 0.0
        %1504 = vmatprep.subr.mxu0 0.0
        %1505 = vmatpush1.msra.mxu0 0.0
        %1506 = vmatprep.subr.mxu0 0.0
        %1507 = vmatpush1.msra.mxu0 0.0
        %1508 = vmatprep.subr.mxu0 0.0
        %1509 = vmatpush1.msra.mxu0 0.0
        %1510 = vmatprep.subr.mxu0 0.0
        %1511 = vmatpush1.msra.mxu0 0.0
        %1512 = vmatprep.subr.mxu0 0.0
        %1513 = vmatpush1.msra.mxu0 0.0
        %1514 = vmatprep.subr.mxu0 0.0
        %1515 = vmatpush1.msra.mxu0 0.0
        %1516 = vmatprep.subr.mxu0 0.0
        %1517 = vmatpush1.msra.mxu0 0.0
        %1518 = vmatprep.subr.mxu0 0.0
        %1519 = vmatpush1.msra.mxu0 0.0
        %1520 = vmatprep.subr.mxu0 0.0
        %1521 = vmatpush1.msra.mxu0 0.0
        %1522 = vmatprep.subr.mxu0 0.0
        %1523 = vmatpush1.msra.mxu0 0.0
        %1524 = vmatprep.subr.mxu0 0.0
        %1525 = vmatpush1.msra.mxu0 0.0
        %1526 = vmatprep.subr.mxu0 0.0
        %1527 = vmatpush1.msra.mxu0 0.0
        %1528 = vmatprep.mubr.f32.mxu0 0.0
        %1529 = vmatmul.mubr.f32.gmra.mrb[0].mxu0 %v987
        %v1530 = vpop.f32.mrb[0].mxu0
        %v1531 = vadd.f32 0.0, %v1530
        %v1532 = vpop.f32.mrb[0].mxu0
        %1533 = vmatprep.mubr.f32.mxu0 0.0
        %1534 = vmatmul.mubr.f32.gmra.mrb[0].mxu0 %v990
        %v1535 = vpop.f32.mrb[0].mxu0
        %v1536 = vadd.f32 0.0, %v1535
        %v1537 = vpop.f32.mrb[0].mxu0
        %1538 = vmatprep.mubr.f32.mxu0 0.0
        %1539 = vmatmul.mubr.f32.gmra.mrb[0].mxu0 %v993
        %v1540 = vpop.f32.mrb[0].mxu0
        %v1541 = vadd.f32 0.0, %v1540
        %v1542 = vpop.f32.mrb[0].mxu0
        %1543 = vmatprep.mubr.f32.mxu0 0.0
        %1544 = vmatmul.mubr.f32.gmra.mrb[0].mxu0 %v996
        %v1545 = vpop.f32.mrb[0].mxu0
        %v1546 = vadd.f32 0.0, %v1545
        %v1547 = vpop.f32.mrb[0].mxu0
        %1548 = vmatprep.mubr.f32.mxu0 0.0
        %1549 = vmatmul.mubr.f32.gmra.mrb[0].mxu0 %v999
        %v1550 = vpop.f32.mrb[0].mxu0
        %v1551 = vadd.f32 0.0, %v1550
        %v1552 = vpop.f32.mrb[0].mxu0
        %1553 = vmatprep.mubr.f32.mxu0 0.0
        %1554 = vmatmul.mubr.f32.gmra.mrb[0].mxu0 %v1220
        %v1555 = vpop.f32.mrb[0].mxu0
        %v1556 = vadd.f32 0.0, %v1555
        %v1557 = vpop.f32.mrb[0].mxu0
        %1558 = vmatprep.mubr.f32.mxu0 0.0
        %1559 = vmatmul.mubr.f32.gmra.mrb[0].mxu0 %v1341
        %v1560 = vpop.f32.mrb[0].mxu0
        %v1561 = vadd.f32 0.0, %v1560
        %v1562 = vpop.f32.mrb[0].mxu0
        %1563 = vmatprep.mubr.f32.mxu0 0.0
        %1564 = vmatmul.mubr.f32.gmra.mrb[0].mxu0 %v1462
        %v1565 = vpop.f32.mrb[0].mxu0
        %v1566 = vadd.f32 0.0, %v1565
        %v1567 = vpop.f32.mrb[0].mxu0
        %1568 = vdwg.mxu0
        %v1569 = vadd.f32 %v1448, %v1531
        %v1570 = vadd.f32 %v1449, %v1536
        %v1571 = vadd.f32 %v1450, %v1541
        %v1572 = vadd.f32 %v1451, %v1546
        %v1573 = vadd.f32 %v1452, %v1551
        %v1574 = vadd.f32 %v1453, %v1556
        %v1575 = vadd.f32 %v1454, %v1561
        %v1576 = vadd.f32 %v1455, %v1566
        %v1577 = vadd.f32 %v934, %v1569
        %v1578 = vadd.f32 %v935, %v1570
        %v1579 = vadd.f32 %v936, %v1571
        %v1580 = vadd.f32 %v937, %v1572
        %v1581 = vadd.f32 %v938, %v1573
        %v1582 = vadd.f32 %v939, %v1574
        %v1583 = vadd.f32 %v940, %v1575
        %v1584 = vadd.f32 %v941, %v1576
        %v1585 = vxor.u32 %v1577, 2147483648
        %v1586 = vxor.u32 %v1578, 2147483648
        %v1587 = vxor.u32 %v1579, 2147483648
        %v1588 = vxor.u32 %v1580, 2147483648
        %v1589 = vxor.u32 %v1581, 2147483648
        %v1590 = vxor.u32 %v1582, 2147483648
        %v1591 = vxor.u32 %v1583, 2147483648
        %v1592 = vxor.u32 %v1584, 2147483648
        %v1593 = vmul.f32 %v1585, 1.442695
        %v1594 = vpow.pop %v1593
        %v1595 = vmul.f32 %v1586, 1.442695
        %v1596 = vpow.pop %v1595
        %v1597 = vmul.f32 %v1587, 1.442695
        %v1598 = vpow.pop %v1597
        %v1599 = vmul.f32 %v1588, 1.442695
        %v1600 = vpow.pop %v1599
        %v1601 = vmul.f32 %v1589, 1.442695
        %v1602 = vpow.pop %v1601
        %v1603 = vmul.f32 %v1590, 1.442695
        %v1604 = vpow.pop %v1603
        %v1605 = vmul.f32 %v1591, 1.442695
        %v1606 = vpow.pop %v1605
        %v1607 = vmul.f32 %v1592, 1.442695
        %v1608 = vpow.pop %v1607
        %v1609 = vadd.f32 %v1594, 1.0
        %v1610 = vadd.f32 %v1596, 1.0
        %v1611 = vadd.f32 %v1598, 1.0
        %v1612 = vadd.f32 %v1600, 1.0
        %v1613 = vadd.f32 %v1602, 1.0
        %v1614 = vadd.f32 %v1604, 1.0
        %v1615 = vadd.f32 %v1606, 1.0
        %v1616 = vadd.f32 %v1608, 1.0
        %v1617 = vrcp.pop %v1609
        %v1618 = vmul.f32 1.0, %v1617
        %v1619 = vrcp.pop %v1610
        %v1620 = vmul.f32 1.0, %v1619
        %v1621 = vrcp.pop %v1611
        %v1622 = vmul.f32 1.0, %v1621
        %v1623 = vrcp.pop %v1612
        %v1624 = vmul.f32 1.0, %v1623
        %v1625 = vrcp.pop %v1613
        %v1626 = vmul.f32 1.0, %v1625
        %v1627 = vrcp.pop %v1614
        %v1628 = vmul.f32 1.0, %v1627
        %v1629 = vrcp.pop %v1615
        %v1630 = vmul.f32 1.0, %v1629
        %v1631 = vrcp.pop %v1616
        %v1632 = vmul.f32 1.0, %v1631
        %1641 = vrot.lane.b32.xlu0 %v397, 32
        %v1642 = vpop.permute.xlu0 %1641
        %1643 = vrot.lane.b32.xlu0 %v398, 32
        %v1644 = vpop.permute.xlu0 %1643
        %1645 = vrot.lane.b32.xlu0 %v399, 32
        %v1646 = vpop.permute.xlu0 %1645
        %1647 = vrot.lane.b32.xlu0 %v400, 32
        %v1648 = vpop.permute.xlu0 %1647
        %1649 = vrot.lane.b32.xlu0 %v401, 32
        %v1650 = vpop.permute.xlu0 %1649
        %1651 = vrot.lane.b32.xlu0 %v402, 32
        %v1652 = vpop.permute.xlu0 %1651
        %1653 = vrot.lane.b32.xlu0 %v403, 32
        %v1654 = vpop.permute.xlu0 %1653
        %1655 = vrot.lane.b32.xlu0 %v404, 32
        %v1656 = vpop.permute.xlu0 %1655
        %v1665 = vmul.f32 %v1618, %v1642
        %v1666 = vmul.f32 %v1620, %v1644
        %v1667 = vmul.f32 %v1622, %v1646
        %v1668 = vmul.f32 %v1624, %v1648
        %v1669 = vmul.f32 %v1626, %v1650
        %v1670 = vmul.f32 %v1628, %v1652
        %v1671 = vmul.f32 %v1630, %v1654
        %v1672 = vmul.f32 %v1632, %v1656
        %1681 = vrot.lane.b32.xlu0 %v1665, 96
        %v1682 = vpop.permute.xlu0 %1681
        %1683 = vrot.lane.b32.xlu0 %v1666, 96
        %v1684 = vpop.permute.xlu0 %1683
        %1685 = vrot.lane.b32.xlu0 %v1667, 96
        %v1686 = vpop.permute.xlu0 %1685
        %1687 = vrot.lane.b32.xlu0 %v1668, 96
        %v1688 = vpop.permute.xlu0 %1687
        %1689 = vrot.lane.b32.xlu0 %v1669, 96
        %v1690 = vpop.permute.xlu0 %1689
        %1691 = vrot.lane.b32.xlu0 %v1670, 96
        %v1692 = vpop.permute.xlu0 %1691
        %1693 = vrot.lane.b32.xlu0 %v1671, 96
        %v1694 = vpop.permute.xlu0 %1693
        %1695 = vrot.lane.b32.xlu0 %v1672, 96
        %v1696 = vpop.permute.xlu0 %1695
        %1705 = vst.msk [vmem:[%s947] sm:$0xff] %vm460, %v1682
        %1706 = vst.msk [vmem:[%s947 + $0x8] sm:$0xff] %vm460, %v1684
        %1707 = vst.msk [vmem:[%s947 + $0x10] sm:$0xff] %vm460, %v1686
        %1708 = vst.msk [vmem:[%s947 + $0x18] sm:$0xff] %vm460, %v1688
        %1709 = vst.msk [vmem:[%s947 + $0x20] sm:$0xff] %vm460, %v1690
        %1710 = vst.msk [vmem:[%s947 + $0x28] sm:$0xff] %vm460, %v1692
        %1711 = vst.msk [vmem:[%s947 + $0x30] sm:$0xff] %vm460, %v1694
        %1712 = vst.msk [vmem:[%s947 + $0x38] sm:$0xff] %vm460, %v1696
        %v1713 = vld [vmem:[#allocation2] sm:$0xff]
        %v1714 = vld [vmem:[#allocation2 + $0x8] sm:$0xff]
        %v1715 = vld [vmem:[#allocation2 + $0x10] sm:$0xff]
        %v1716 = vld [vmem:[#allocation2 + $0x18] sm:$0xff]
        %v1717 = vld [vmem:[#allocation2 + $0x20] sm:$0xff]
        %v1718 = vld [vmem:[#allocation2 + $0x28] sm:$0xff]
        %v1719 = vld [vmem:[#allocation2 + $0x30] sm:$0xff]
        %v1720 = vld [vmem:[#allocation2 + $0x38] sm:$0xff]
        %v1721 = vld [vmem:[#allocation2 + $0x40] sm:$0xff]
        %v1722 = vld [vmem:[#allocation2 + $0x48] sm:$0xff]
        %v1723 = vld [vmem:[#allocation2 + $0x50] sm:$0xff]
        %v1724 = vld [vmem:[#allocation2 + $0x58] sm:$0xff]
        %v1725 = vld [vmem:[%s4] sm:$0xff]
        %v1726 = vld [vmem:[%s4 + $0x8] sm:$0xff]
        %v1727 = vld [vmem:[%s4 + $0x10] sm:$0xff]
        %v1728 = vld [vmem:[%s4 + $0x18] sm:$0xff]
        %s1729 = scalar_lea.vmem %s4, 32
        %v1730 = vld [vmem:[%s1729] sm:$0xff]
        %v1731 = vld [vmem:[%s1729 + $0x8] sm:$0xff]
        %v1732 = vld [vmem:[%s1729 + $0x10] sm:$0xff]
        %v1733 = vld [vmem:[%s1729 + $0x18] sm:$0xff]
        %v1735 = vsel %vm460, %v1714, 0
        %v1738 = vsel %vm460, %v1715, 0
        %v1741 = vsel %vm460, %v1716, 0
        %v1744 = vsel %vm460, %v1717, 0
        %v1747 = vsel %vm460, %v1718, 0
        %v1750 = vsel %vm460, %v1719, 0
        %v1753 = vsel %vm460, %v1720, 0
        %v1756 = vsel %vm460, %v1721, 0
        %1758 = vmatprep.subr.mxu0 0.0
        %1759 = vmatpush1.msra.mxu0 %v1730
        %1760 = vmatprep.subr.mxu0 0.0
        %1761 = vmatpush1.msra.mxu0 %v1731
        %1762 = vmatprep.subr.mxu0 0.0
        %1763 = vmatpush1.msra.mxu0 %v1732
        %1764 = vmatprep.subr.mxu0 0.0
        %1765 = vmatpush1.msra.mxu0 %v1733
        %1766 = vmatprep.subr.mxu0 0.0
        %1767 = vmatpush1.msra.mxu0 0.0
        %1768 = vmatprep.subr.mxu0 0.0
        %1769 = vmatpush1.msra.mxu0 0.0
        %1770 = vmatprep.subr.mxu0 0.0
        %1771 = vmatpush1.msra.mxu0 0.0
        %1772 = vmatprep.subr.mxu0 0.0
        %1773 = vmatpush1.msra.mxu0 0.0
        %1774 = vmatprep.subr.mxu0 0.0
        %1775 = vmatpush1.msra.mxu0 0.0
        %1776 = vmatprep.subr.mxu0 0.0
        %1777 = vmatpush1.msra.mxu0 0.0
        %1778 = vmatprep.subr.mxu0 0.0
        %1779 = vmatpush1.msra.mxu0 0.0
        %1780 = vmatprep.subr.mxu0 0.0
        %1781 = vmatpush1.msra.mxu0 0.0
        %1782 = vmatprep.subr.mxu0 0.0
        %1783 = vmatpush1.msra.mxu0 0.0
        %1784 = vmatprep.subr.mxu0 0.0
        %1785 = vmatpush1.msra.mxu0 0.0
        %1786 = vmatprep.subr.mxu0 0.0
        %1787 = vmatpush1.msra.mxu0 0.0
        %1788 = vmatprep.subr.mxu0 0.0
        %1789 = vmatpush1.msra.mxu0 0.0
        %1790 = vmatprep.subr.mxu0 0.0
        %1791 = vmatpush1.msra.mxu0 0.0
        %1792 = vmatprep.subr.mxu0 0.0
        %1793 = vmatpush1.msra.mxu0 0.0
        %1794 = vmatprep.subr.mxu0 0.0
        %1795 = vmatpush1.msra.mxu0 0.0
        %1796 = vmatprep.subr.mxu0 0.0
        %1797 = vmatpush1.msra.mxu0 0.0
        %1798 = vmatprep.subr.mxu0 0.0
        %1799 = vmatpush1.msra.mxu0 0.0
        %1800 = vmatprep.subr.mxu0 0.0
        %1801 = vmatpush1.msra.mxu0 0.0
        %1802 = vmatprep.subr.mxu0 0.0
        %1803 = vmatpush1.msra.mxu0 0.0
        %1804 = vmatprep.subr.mxu0 0.0
        %1805 = vmatpush1.msra.mxu0 0.0
        %1806 = vmatprep.subr.mxu0 0.0
        %1807 = vmatpush1.msra.mxu0 0.0
        %1808 = vmatprep.subr.mxu0 0.0
        %1809 = vmatpush1.msra.mxu0 0.0
        %1810 = vmatprep.subr.mxu0 0.0
        %1811 = vmatpush1.msra.mxu0 0.0
        %1812 = vmatprep.subr.mxu0 0.0
        %1813 = vmatpush1.msra.mxu0 0.0
        %1814 = vmatprep.subr.mxu0 0.0
        %1815 = vmatpush1.msra.mxu0 0.0
        %1816 = vmatprep.subr.mxu0 0.0
        %1817 = vmatpush1.msra.mxu0 0.0
        %1818 = vmatprep.subr.mxu0 0.0
        %1819 = vmatpush1.msra.mxu0 0.0
        %1820 = vmatprep.subr.mxu0 0.0
        %1821 = vmatpush1.msra.mxu0 0.0
        %1822 = vmatprep.mubr.f32.mxu0 0.0
        %1823 = vmatmul.mubr.f32.gmra.mrb[0].mxu0 %v1735
        %v1824 = vpop.f32.mrb[0].mxu0
        %v1825 = vadd.f32 0.0, %v1824
        %v1826 = vpop.f32.mrb[0].mxu0
        %1827 = vmatprep.mubr.f32.mxu0 0.0
        %1828 = vmatmul.mubr.f32.gmra.mrb[0].mxu0 %v1738
        %v1829 = vpop.f32.mrb[0].mxu0
        %v1830 = vadd.f32 0.0, %v1829
        %v1831 = vpop.f32.mrb[0].mxu0
        %1832 = vmatprep.mubr.f32.mxu0 0.0
        %1833 = vmatmul.mubr.f32.gmra.mrb[0].mxu0 %v1741
        %v1834 = vpop.f32.mrb[0].mxu0
        %v1835 = vadd.f32 0.0, %v1834
        %v1836 = vpop.f32.mrb[0].mxu0
        %1837 = vmatprep.mubr.f32.mxu0 0.0
        %1838 = vmatmul.mubr.f32.gmra.mrb[0].mxu0 %v1744
        %v1839 = vpop.f32.mrb[0].mxu0
        %v1840 = vadd.f32 0.0, %v1839
        %v1841 = vpop.f32.mrb[0].mxu0
        %1842 = vmatprep.mubr.f32.mxu0 0.0
        %1843 = vmatmul.mubr.f32.gmra.mrb[0].mxu0 %v1747
        %v1844 = vpop.f32.mrb[0].mxu0
        %v1845 = vadd.f32 0.0, %v1844
        %v1846 = vpop.f32.mrb[0].mxu0
        %1847 = vmatprep.mubr.f32.mxu0 0.0
        %1848 = vmatmul.mubr.f32.gmra.mrb[0].mxu0 %v1750
        %v1849 = vpop.f32.mrb[0].mxu0
        %v1850 = vadd.f32 0.0, %v1849
        %v1851 = vpop.f32.mrb[0].mxu0
        %1852 = vmatprep.mubr.f32.mxu0 0.0
        %1853 = vmatmul.mubr.f32.gmra.mrb[0].mxu0 %v1753
        %v1854 = vpop.f32.mrb[0].mxu0
        %v1855 = vadd.f32 0.0, %v1854
        %v1856 = vpop.f32.mrb[0].mxu0
        %1857 = vmatprep.mubr.f32.mxu0 0.0
        %1858 = vmatmul.mubr.f32.gmra.mrb[0].mxu0 %v1756
        %v1859 = vpop.f32.mrb[0].mxu0
        %v1860 = vadd.f32 0.0, %v1859
        %v1861 = vpop.f32.mrb[0].mxu0
        %1862 = vdwg.mxu0
        %v1864 = vsel %vm460, %v1713, 0
        %1866 = vmatprep.subr.mxu0 0.0
        %1867 = vmatpush1.msra.mxu0 %v1725
        %1868 = vmatprep.subr.mxu0 0.0
        %1869 = vmatpush1.msra.mxu0 %v1726
        %1870 = vmatprep.subr.mxu0 0.0
        %1871 = vmatpush1.msra.mxu0 %v1727
        %1872 = vmatprep.subr.mxu0 0.0
        %1873 = vmatpush1.msra.mxu0 %v1728
        %1874 = vmatprep.subr.mxu0 0.0
        %1875 = vmatpush1.msra.mxu0 0.0
        %1876 = vmatprep.subr.mxu0 0.0
        %1877 = vmatpush1.msra.mxu0 0.0
        %1878 = vmatprep.subr.mxu0 0.0
        %1879 = vmatpush1.msra.mxu0 0.0
        %1880 = vmatprep.subr.mxu0 0.0
        %1881 = vmatpush1.msra.mxu0 0.0
        %1882 = vmatprep.subr.mxu0 0.0
        %1883 = vmatpush1.msra.mxu0 0.0
        %1884 = vmatprep.subr.mxu0 0.0
        %1885 = vmatpush1.msra.mxu0 0.0
        %1886 = vmatprep.subr.mxu0 0.0
        %1887 = vmatpush1.msra.mxu0 0.0
        %1888 = vmatprep.subr.mxu0 0.0
        %1889 = vmatpush1.msra.mxu0 0.0
        %1890 = vmatprep.subr.mxu0 0.0
        %1891 = vmatpush1.msra.mxu0 0.0
        %1892 = vmatprep.subr.mxu0 0.0
        %1893 = vmatpush1.msra.mxu0 0.0
        %1894 = vmatprep.subr.mxu0 0.0
        %1895 = vmatpush1.msra.mxu0 0.0
        %1896 = vmatprep.subr.mxu0 0.0
        %1897 = vmatpush1.msra.mxu0 0.0
        %1898 = vmatprep.subr.mxu0 0.0
        %1899 = vmatpush1.msra.mxu0 0.0
        %1900 = vmatprep.subr.mxu0 0.0
        %1901 = vmatpush1.msra.mxu0 0.0
        %1902 = vmatprep.subr.mxu0 0.0
        %1903 = vmatpush1.msra.mxu0 0.0
        %1904 = vmatprep.subr.mxu0 0.0
        %1905 = vmatpush1.msra.mxu0 0.0
        %1906 = vmatprep.subr.mxu0 0.0
        %1907 = vmatpush1.msra.mxu0 0.0
        %1908 = vmatprep.subr.mxu0 0.0
        %1909 = vmatpush1.msra.mxu0 0.0
        %1910 = vmatprep.subr.mxu0 0.0
        %1911 = vmatpush1.msra.mxu0 0.0
        %1912 = vmatprep.subr.mxu0 0.0
        %1913 = vmatpush1.msra.mxu0 0.0
        %1914 = vmatprep.subr.mxu0 0.0
        %1915 = vmatpush1.msra.mxu0 0.0
        %1916 = vmatprep.subr.mxu0 0.0
        %1917 = vmatpush1.msra.mxu0 0.0
        %1918 = vmatprep.subr.mxu0 0.0
        %1919 = vmatpush1.msra.mxu0 0.0
        %1920 = vmatprep.subr.mxu0 0.0
        %1921 = vmatpush1.msra.mxu0 0.0
        %1922 = vmatprep.subr.mxu0 0.0
        %1923 = vmatpush1.msra.mxu0 0.0
        %1924 = vmatprep.subr.mxu0 0.0
        %1925 = vmatpush1.msra.mxu0 0.0
        %1926 = vmatprep.subr.mxu0 0.0
        %1927 = vmatpush1.msra.mxu0 0.0
        %1928 = vmatprep.subr.mxu0 0.0
        %1929 = vmatpush1.msra.mxu0 0.0
        %1930 = vmatprep.mubr.f32.mxu0 0.0
        %1931 = vmatmul.mubr.f32.gmra.mrb[0].mxu0 %v1864
        %v1932 = vpop.f32.mrb[0].mxu0
        %v1933 = vadd.f32 %v1825, %v1932
        %v1934 = vpop.f32.mrb[0].mxu0
        %1935 = vmatprep.mubr.f32.mxu0 0.0
        %1936 = vmatmul.mubr.f32.gmra.mrb[0].mxu0 %v1735
        %v1937 = vpop.f32.mrb[0].mxu0
        %v1938 = vadd.f32 %v1830, %v1937
        %v1939 = vpop.f32.mrb[0].mxu0
        %1940 = vmatprep.mubr.f32.mxu0 0.0
        %1941 = vmatmul.mubr.f32.gmra.mrb[0].mxu0 %v1738
        %v1942 = vpop.f32.mrb[0].mxu0
        %v1943 = vadd.f32 %v1835, %v1942
        %v1944 = vpop.f32.mrb[0].mxu0
        %1945 = vmatprep.mubr.f32.mxu0 0.0
        %1946 = vmatmul.mubr.f32.gmra.mrb[0].mxu0 %v1741
        %v1947 = vpop.f32.mrb[0].mxu0
        %v1948 = vadd.f32 %v1840, %v1947
        %v1949 = vpop.f32.mrb[0].mxu0
        %1950 = vmatprep.mubr.f32.mxu0 0.0
        %1951 = vmatmul.mubr.f32.gmra.mrb[0].mxu0 %v1744
        %v1952 = vpop.f32.mrb[0].mxu0
        %v1953 = vadd.f32 %v1845, %v1952
        %v1954 = vpop.f32.mrb[0].mxu0
        %1955 = vmatprep.mubr.f32.mxu0 0.0
        %1956 = vmatmul.mubr.f32.gmra.mrb[0].mxu0 %v1747
        %v1957 = vpop.f32.mrb[0].mxu0
        %v1958 = vadd.f32 %v1850, %v1957
        %v1959 = vpop.f32.mrb[0].mxu0
        %1960 = vmatprep.mubr.f32.mxu0 0.0
        %1961 = vmatmul.mubr.f32.gmra.mrb[0].mxu0 %v1750
        %v1962 = vpop.f32.mrb[0].mxu0
        %v1963 = vadd.f32 %v1855, %v1962
        %v1964 = vpop.f32.mrb[0].mxu0
        %1965 = vmatprep.mubr.f32.mxu0 0.0
        %1966 = vmatmul.mubr.f32.gmra.mrb[0].mxu0 %v1753
        %v1967 = vpop.f32.mrb[0].mxu0
        %v1968 = vadd.f32 %v1860, %v1967
        %v1969 = vpop.f32.mrb[0].mxu0
        %1970 = vdwg.mxu0
        %s1971 = scalar_lea.vmem %s4, 64
        %v1972 = vld [vmem:[%s1971] sm:$0xff]
        %v1973 = vld [vmem:[%s1971 + $0x8] sm:$0xff]
        %v1974 = vld [vmem:[%s1971 + $0x10] sm:$0xff]
        %v1975 = vld [vmem:[%s1971 + $0x18] sm:$0xff]
        %v1977 = vsel %vm460, %v1722, 0
        %1979 = vmatprep.subr.mxu0 0.0
        %1980 = vmatpush1.msra.mxu0 %v1972
        %1981 = vmatprep.subr.mxu0 0.0
        %1982 = vmatpush1.msra.mxu0 %v1973
        %1983 = vmatprep.subr.mxu0 0.0
        %1984 = vmatpush1.msra.mxu0 %v1974
        %1985 = vmatprep.subr.mxu0 0.0
        %1986 = vmatpush1.msra.mxu0 %v1975
        %1987 = vmatprep.subr.mxu0 0.0
        %1988 = vmatpush1.msra.mxu0 0.0
        %1989 = vmatprep.subr.mxu0 0.0
        %1990 = vmatpush1.msra.mxu0 0.0
        %1991 = vmatprep.subr.mxu0 0.0
        %1992 = vmatpush1.msra.mxu0 0.0
        %1993 = vmatprep.subr.mxu0 0.0
        %1994 = vmatpush1.msra.mxu0 0.0
        %1995 = vmatprep.subr.mxu0 0.0
        %1996 = vmatpush1.msra.mxu0 0.0
        %1997 = vmatprep.subr.mxu0 0.0
        %1998 = vmatpush1.msra.mxu0 0.0
        %1999 = vmatprep.subr.mxu0 0.0
        %2000 = vmatpush1.msra.mxu0 0.0
        %2001 = vmatprep.subr.mxu0 0.0
        %2002 = vmatpush1.msra.mxu0 0.0
        %2003 = vmatprep.subr.mxu0 0.0
        %2004 = vmatpush1.msra.mxu0 0.0
        %2005 = vmatprep.subr.mxu0 0.0
        %2006 = vmatpush1.msra.mxu0 0.0
        %2007 = vmatprep.subr.mxu0 0.0
        %2008 = vmatpush1.msra.mxu0 0.0
        %2009 = vmatprep.subr.mxu0 0.0
        %2010 = vmatpush1.msra.mxu0 0.0
        %2011 = vmatprep.subr.mxu0 0.0
        %2012 = vmatpush1.msra.mxu0 0.0
        %2013 = vmatprep.subr.mxu0 0.0
        %2014 = vmatpush1.msra.mxu0 0.0
        %2015 = vmatprep.subr.mxu0 0.0
        %2016 = vmatpush1.msra.mxu0 0.0
        %2017 = vmatprep.subr.mxu0 0.0
        %2018 = vmatpush1.msra.mxu0 0.0
        %2019 = vmatprep.subr.mxu0 0.0
        %2020 = vmatpush1.msra.mxu0 0.0
        %2021 = vmatprep.subr.mxu0 0.0
        %2022 = vmatpush1.msra.mxu0 0.0
        %2023 = vmatprep.subr.mxu0 0.0
        %2024 = vmatpush1.msra.mxu0 0.0
        %2025 = vmatprep.subr.mxu0 0.0
        %2026 = vmatpush1.msra.mxu0 0.0
        %2027 = vmatprep.subr.mxu0 0.0
        %2028 = vmatpush1.msra.mxu0 0.0
        %2029 = vmatprep.subr.mxu0 0.0
        %2030 = vmatpush1.msra.mxu0 0.0
        %2031 = vmatprep.subr.mxu0 0.0
        %2032 = vmatpush1.msra.mxu0 0.0
        %2033 = vmatprep.subr.mxu0 0.0
        %2034 = vmatpush1.msra.mxu0 0.0
        %2035 = vmatprep.subr.mxu0 0.0
        %2036 = vmatpush1.msra.mxu0 0.0
        %2037 = vmatprep.subr.mxu0 0.0
        %2038 = vmatpush1.msra.mxu0 0.0
        %2039 = vmatprep.subr.mxu0 0.0
        %2040 = vmatpush1.msra.mxu0 0.0
        %2041 = vmatprep.subr.mxu0 0.0
        %2042 = vmatpush1.msra.mxu0 0.0
        %2043 = vmatprep.mubr.f32.mxu0 0.0
        %2044 = vmatmul.mubr.f32.gmra.mrb[0].mxu0 %v1738
        %v2045 = vpop.f32.mrb[0].mxu0
        %v2046 = vadd.f32 0.0, %v2045
        %v2047 = vpop.f32.mrb[0].mxu0
        %2048 = vmatprep.mubr.f32.mxu0 0.0
        %2049 = vmatmul.mubr.f32.gmra.mrb[0].mxu0 %v1741
        %v2050 = vpop.f32.mrb[0].mxu0
        %v2051 = vadd.f32 0.0, %v2050
        %v2052 = vpop.f32.mrb[0].mxu0
        %2053 = vmatprep.mubr.f32.mxu0 0.0
        %2054 = vmatmul.mubr.f32.gmra.mrb[0].mxu0 %v1744
        %v2055 = vpop.f32.mrb[0].mxu0
        %v2056 = vadd.f32 0.0, %v2055
        %v2057 = vpop.f32.mrb[0].mxu0
        %2058 = vmatprep.mubr.f32.mxu0 0.0
        %2059 = vmatmul.mubr.f32.gmra.mrb[0].mxu0 %v1747
        %v2060 = vpop.f32.mrb[0].mxu0
        %v2061 = vadd.f32 0.0, %v2060
        %v2062 = vpop.f32.mrb[0].mxu0
        %2063 = vmatprep.mubr.f32.mxu0 0.0
        %2064 = vmatmul.mubr.f32.gmra.mrb[0].mxu0 %v1750
        %v2065 = vpop.f32.mrb[0].mxu0
        %v2066 = vadd.f32 0.0, %v2065
        %v2067 = vpop.f32.mrb[0].mxu0
        %2068 = vmatprep.mubr.f32.mxu0 0.0
        %2069 = vmatmul.mubr.f32.gmra.mrb[0].mxu0 %v1753
        %v2070 = vpop.f32.mrb[0].mxu0
        %v2071 = vadd.f32 0.0, %v2070
        %v2072 = vpop.f32.mrb[0].mxu0
        %2073 = vmatprep.mubr.f32.mxu0 0.0
        %2074 = vmatmul.mubr.f32.gmra.mrb[0].mxu0 %v1756
        %v2075 = vpop.f32.mrb[0].mxu0
        %v2076 = vadd.f32 0.0, %v2075
        %v2077 = vpop.f32.mrb[0].mxu0
        %2078 = vmatprep.mubr.f32.mxu0 0.0
        %2079 = vmatmul.mubr.f32.gmra.mrb[0].mxu0 %v1977
        %v2080 = vpop.f32.mrb[0].mxu0
        %v2081 = vadd.f32 0.0, %v2080
        %v2082 = vpop.f32.mrb[0].mxu0
        %2083 = vdwg.mxu0
        %v2084 = vadd.f32 %v1933, %v2046
        %v2085 = vadd.f32 %v1938, %v2051
        %v2086 = vadd.f32 %v1943, %v2056
        %v2087 = vadd.f32 %v1948, %v2061
        %v2088 = vadd.f32 %v1953, %v2066
        %v2089 = vadd.f32 %v1958, %v2071
        %v2090 = vadd.f32 %v1963, %v2076
        %v2091 = vadd.f32 %v1968, %v2081
        %s2092 = scalar_lea.vmem %s4, 96
        %v2093 = vld [vmem:[%s2092] sm:$0xff]
        %v2094 = vld [vmem:[%s2092 + $0x8] sm:$0xff]
        %v2095 = vld [vmem:[%s2092 + $0x10] sm:$0xff]
        %v2096 = vld [vmem:[%s2092 + $0x18] sm:$0xff]
        %v2098 = vsel %vm460, %v1723, 0
        %2100 = vmatprep.subr.mxu0 0.0
        %2101 = vmatpush1.msra.mxu0 %v2093
        %2102 = vmatprep.subr.mxu0 0.0
        %2103 = vmatpush1.msra.mxu0 %v2094
        %2104 = vmatprep.subr.mxu0 0.0
        %2105 = vmatpush1.msra.mxu0 %v2095
        %2106 = vmatprep.subr.mxu0 0.0
        %2107 = vmatpush1.msra.mxu0 %v2096
        %2108 = vmatprep.subr.mxu0 0.0
        %2109 = vmatpush1.msra.mxu0 0.0
        %2110 = vmatprep.subr.mxu0 0.0
        %2111 = vmatpush1.msra.mxu0 0.0
        %2112 = vmatprep.subr.mxu0 0.0
        %2113 = vmatpush1.msra.mxu0 0.0
        %2114 = vmatprep.subr.mxu0 0.0
        %2115 = vmatpush1.msra.mxu0 0.0
        %2116 = vmatprep.subr.mxu0 0.0
        %2117 = vmatpush1.msra.mxu0 0.0
        %2118 = vmatprep.subr.mxu0 0.0
        %2119 = vmatpush1.msra.mxu0 0.0
        %2120 = vmatprep.subr.mxu0 0.0
        %2121 = vmatpush1.msra.mxu0 0.0
        %2122 = vmatprep.subr.mxu0 0.0
        %2123 = vmatpush1.msra.mxu0 0.0
        %2124 = vmatprep.subr.mxu0 0.0
        %2125 = vmatpush1.msra.mxu0 0.0
        %2126 = vmatprep.subr.mxu0 0.0
        %2127 = vmatpush1.msra.mxu0 0.0
        %2128 = vmatprep.subr.mxu0 0.0
        %2129 = vmatpush1.msra.mxu0 0.0
        %2130 = vmatprep.subr.mxu0 0.0
        %2131 = vmatpush1.msra.mxu0 0.0
        %2132 = vmatprep.subr.mxu0 0.0
        %2133 = vmatpush1.msra.mxu0 0.0
        %2134 = vmatprep.subr.mxu0 0.0
        %2135 = vmatpush1.msra.mxu0 0.0
        %2136 = vmatprep.subr.mxu0 0.0
        %2137 = vmatpush1.msra.mxu0 0.0
        %2138 = vmatprep.subr.mxu0 0.0
        %2139 = vmatpush1.msra.mxu0 0.0
        %2140 = vmatprep.subr.mxu0 0.0
        %2141 = vmatpush1.msra.mxu0 0.0
        %2142 = vmatprep.subr.mxu0 0.0
        %2143 = vmatpush1.msra.mxu0 0.0
        %2144 = vmatprep.subr.mxu0 0.0
        %2145 = vmatpush1.msra.mxu0 0.0
        %2146 = vmatprep.subr.mxu0 0.0
        %2147 = vmatpush1.msra.mxu0 0.0
        %2148 = vmatprep.subr.mxu0 0.0
        %2149 = vmatpush1.msra.mxu0 0.0
        %2150 = vmatprep.subr.mxu0 0.0
        %2151 = vmatpush1.msra.mxu0 0.0
        %2152 = vmatprep.subr.mxu0 0.0
        %2153 = vmatpush1.msra.mxu0 0.0
        %2154 = vmatprep.subr.mxu0 0.0
        %2155 = vmatpush1.msra.mxu0 0.0
        %2156 = vmatprep.subr.mxu0 0.0
        %2157 = vmatpush1.msra.mxu0 0.0
        %2158 = vmatprep.subr.mxu0 0.0
        %2159 = vmatpush1.msra.mxu0 0.0
        %2160 = vmatprep.subr.mxu0 0.0
        %2161 = vmatpush1.msra.mxu0 0.0
        %2162 = vmatprep.subr.mxu0 0.0
        %2163 = vmatpush1.msra.mxu0 0.0
        %2164 = vmatprep.mubr.f32.mxu0 0.0
        %2165 = vmatmul.mubr.f32.gmra.mrb[0].mxu0 %v1741
        %v2166 = vpop.f32.mrb[0].mxu0
        %v2167 = vadd.f32 0.0, %v2166
        %v2168 = vpop.f32.mrb[0].mxu0
        %2169 = vmatprep.mubr.f32.mxu0 0.0
        %2170 = vmatmul.mubr.f32.gmra.mrb[0].mxu0 %v1744
        %v2171 = vpop.f32.mrb[0].mxu0
        %v2172 = vadd.f32 0.0, %v2171
        %v2173 = vpop.f32.mrb[0].mxu0
        %2174 = vmatprep.mubr.f32.mxu0 0.0
        %2175 = vmatmul.mubr.f32.gmra.mrb[0].mxu0 %v1747
        %v2176 = vpop.f32.mrb[0].mxu0
        %v2177 = vadd.f32 0.0, %v2176
        %v2178 = vpop.f32.mrb[0].mxu0
        %2179 = vmatprep.mubr.f32.mxu0 0.0
        %2180 = vmatmul.mubr.f32.gmra.mrb[0].mxu0 %v1750
        %v2181 = vpop.f32.mrb[0].mxu0
        %v2182 = vadd.f32 0.0, %v2181
        %v2183 = vpop.f32.mrb[0].mxu0
        %2184 = vmatprep.mubr.f32.mxu0 0.0
        %2185 = vmatmul.mubr.f32.gmra.mrb[0].mxu0 %v1753
        %v2186 = vpop.f32.mrb[0].mxu0
        %v2187 = vadd.f32 0.0, %v2186
        %v2188 = vpop.f32.mrb[0].mxu0
        %2189 = vmatprep.mubr.f32.mxu0 0.0
        %2190 = vmatmul.mubr.f32.gmra.mrb[0].mxu0 %v1756
        %v2191 = vpop.f32.mrb[0].mxu0
        %v2192 = vadd.f32 0.0, %v2191
        %v2193 = vpop.f32.mrb[0].mxu0
        %2194 = vmatprep.mubr.f32.mxu0 0.0
        %2195 = vmatmul.mubr.f32.gmra.mrb[0].mxu0 %v1977
        %v2196 = vpop.f32.mrb[0].mxu0
        %v2197 = vadd.f32 0.0, %v2196
        %v2198 = vpop.f32.mrb[0].mxu0
        %2199 = vmatprep.mubr.f32.mxu0 0.0
        %2200 = vmatmul.mubr.f32.gmra.mrb[0].mxu0 %v2098
        %v2201 = vpop.f32.mrb[0].mxu0
        %v2202 = vadd.f32 0.0, %v2201
        %v2203 = vpop.f32.mrb[0].mxu0
        %2204 = vdwg.mxu0
        %v2205 = vadd.f32 %v2084, %v2167
        %v2206 = vadd.f32 %v2085, %v2172
        %v2207 = vadd.f32 %v2086, %v2177
        %v2208 = vadd.f32 %v2087, %v2182
        %v2209 = vadd.f32 %v2088, %v2187
        %v2210 = vadd.f32 %v2089, %v2192
        %v2211 = vadd.f32 %v2090, %v2197
        %v2212 = vadd.f32 %v2091, %v2202
        %s2213 = scalar_lea.vmem %s4, 128
        %v2214 = vld [vmem:[%s2213] sm:$0xff]
        %v2215 = vld [vmem:[%s2213 + $0x8] sm:$0xff]
        %v2216 = vld [vmem:[%s2213 + $0x10] sm:$0xff]
        %v2217 = vld [vmem:[%s2213 + $0x18] sm:$0xff]
        %v2219 = vsel %vm460, %v1724, 0
        %2221 = vmatprep.subr.mxu0 0.0
        %2222 = vmatpush1.msra.mxu0 %v2214
        %2223 = vmatprep.subr.mxu0 0.0
        %2224 = vmatpush1.msra.mxu0 %v2215
        %2225 = vmatprep.subr.mxu0 0.0
        %2226 = vmatpush1.msra.mxu0 %v2216
        %2227 = vmatprep.subr.mxu0 0.0
        %2228 = vmatpush1.msra.mxu0 %v2217
        %2229 = vmatprep.subr.mxu0 0.0
        %2230 = vmatpush1.msra.mxu0 0.0
        %2231 = vmatprep.subr.mxu0 0.0
        %2232 = vmatpush1.msra.mxu0 0.0
        %2233 = vmatprep.subr.mxu0 0.0
        %2234 = vmatpush1.msra.mxu0 0.0
        %2235 = vmatprep.subr.mxu0 0.0
        %2236 = vmatpush1.msra.mxu0 0.0
        %2237 = vmatprep.subr.mxu0 0.0
        %2238 = vmatpush1.msra.mxu0 0.0
        %2239 = vmatprep.subr.mxu0 0.0
        %2240 = vmatpush1.msra.mxu0 0.0
        %2241 = vmatprep.subr.mxu0 0.0
        %2242 = vmatpush1.msra.mxu0 0.0
        %2243 = vmatprep.subr.mxu0 0.0
        %2244 = vmatpush1.msra.mxu0 0.0
        %2245 = vmatprep.subr.mxu0 0.0
        %2246 = vmatpush1.msra.mxu0 0.0
        %2247 = vmatprep.subr.mxu0 0.0
        %2248 = vmatpush1.msra.mxu0 0.0
        %2249 = vmatprep.subr.mxu0 0.0
        %2250 = vmatpush1.msra.mxu0 0.0
        %2251 = vmatprep.subr.mxu0 0.0
        %2252 = vmatpush1.msra.mxu0 0.0
        %2253 = vmatprep.subr.mxu0 0.0
        %2254 = vmatpush1.msra.mxu0 0.0
        %2255 = vmatprep.subr.mxu0 0.0
        %2256 = vmatpush1.msra.mxu0 0.0
        %2257 = vmatprep.subr.mxu0 0.0
        %2258 = vmatpush1.msra.mxu0 0.0
        %2259 = vmatprep.subr.mxu0 0.0
        %2260 = vmatpush1.msra.mxu0 0.0
        %2261 = vmatprep.subr.mxu0 0.0
        %2262 = vmatpush1.msra.mxu0 0.0
        %2263 = vmatprep.subr.mxu0 0.0
        %2264 = vmatpush1.msra.mxu0 0.0
        %2265 = vmatprep.subr.mxu0 0.0
        %2266 = vmatpush1.msra.mxu0 0.0
        %2267 = vmatprep.subr.mxu0 0.0
        %2268 = vmatpush1.msra.mxu0 0.0
        %2269 = vmatprep.subr.mxu0 0.0
        %2270 = vmatpush1.msra.mxu0 0.0
        %2271 = vmatprep.subr.mxu0 0.0
        %2272 = vmatpush1.msra.mxu0 0.0
        %2273 = vmatprep.subr.mxu0 0.0
        %2274 = vmatpush1.msra.mxu0 0.0
        %2275 = vmatprep.subr.mxu0 0.0
        %2276 = vmatpush1.msra.mxu0 0.0
        %2277 = vmatprep.subr.mxu0 0.0
        %2278 = vmatpush1.msra.mxu0 0.0
        %2279 = vmatprep.subr.mxu0 0.0
        %2280 = vmatpush1.msra.mxu0 0.0
        %2281 = vmatprep.subr.mxu0 0.0
        %2282 = vmatpush1.msra.mxu0 0.0
        %2283 = vmatprep.subr.mxu0 0.0
        %2284 = vmatpush1.msra.mxu0 0.0
        %2285 = vmatprep.mubr.f32.mxu0 0.0
        %2286 = vmatmul.mubr.f32.gmra.mrb[0].mxu0 %v1744
        %v2287 = vpop.f32.mrb[0].mxu0
        %v2288 = vadd.f32 0.0, %v2287
        %v2289 = vpop.f32.mrb[0].mxu0
        %2290 = vmatprep.mubr.f32.mxu0 0.0
        %2291 = vmatmul.mubr.f32.gmra.mrb[0].mxu0 %v1747
        %v2292 = vpop.f32.mrb[0].mxu0
        %v2293 = vadd.f32 0.0, %v2292
        %v2294 = vpop.f32.mrb[0].mxu0
        %2295 = vmatprep.mubr.f32.mxu0 0.0
        %2296 = vmatmul.mubr.f32.gmra.mrb[0].mxu0 %v1750
        %v2297 = vpop.f32.mrb[0].mxu0
        %v2298 = vadd.f32 0.0, %v2297
        %v2299 = vpop.f32.mrb[0].mxu0
        %2300 = vmatprep.mubr.f32.mxu0 0.0
        %2301 = vmatmul.mubr.f32.gmra.mrb[0].mxu0 %v1753
        %v2302 = vpop.f32.mrb[0].mxu0
        %v2303 = vadd.f32 0.0, %v2302
        %v2304 = vpop.f32.mrb[0].mxu0
        %2305 = vmatprep.mubr.f32.mxu0 0.0
        %2306 = vmatmul.mubr.f32.gmra.mrb[0].mxu0 %v1756
        %v2307 = vpop.f32.mrb[0].mxu0
        %v2308 = vadd.f32 0.0, %v2307
        %v2309 = vpop.f32.mrb[0].mxu0
        %2310 = vmatprep.mubr.f32.mxu0 0.0
        %2311 = vmatmul.mubr.f32.gmra.mrb[0].mxu0 %v1977
        %v2312 = vpop.f32.mrb[0].mxu0
        %v2313 = vadd.f32 0.0, %v2312
        %v2314 = vpop.f32.mrb[0].mxu0
        %2315 = vmatprep.mubr.f32.mxu0 0.0
        %2316 = vmatmul.mubr.f32.gmra.mrb[0].mxu0 %v2098
        %v2317 = vpop.f32.mrb[0].mxu0
        %v2318 = vadd.f32 0.0, %v2317
        %v2319 = vpop.f32.mrb[0].mxu0
        %2320 = vmatprep.mubr.f32.mxu0 0.0
        %2321 = vmatmul.mubr.f32.gmra.mrb[0].mxu0 %v2219
        %v2322 = vpop.f32.mrb[0].mxu0
        %v2323 = vadd.f32 0.0, %v2322
        %v2324 = vpop.f32.mrb[0].mxu0
        %2325 = vdwg.mxu0
        %v2326 = vadd.f32 %v2205, %v2288
        %v2327 = vadd.f32 %v2206, %v2293
        %v2328 = vadd.f32 %v2207, %v2298
        %v2329 = vadd.f32 %v2208, %v2303
        %v2330 = vadd.f32 %v2209, %v2308
        %v2331 = vadd.f32 %v2210, %v2313
        %v2332 = vadd.f32 %v2211, %v2318
        %v2333 = vadd.f32 %v2212, %v2323
        %2342 = vrot.lane.b32.xlu0 %v2326, 64
        %v2343 = vpop.permute.xlu0 %2342
        %2344 = vrot.lane.b32.xlu0 %v2327, 64
        %v2345 = vpop.permute.xlu0 %2344
        %2346 = vrot.lane.b32.xlu0 %v2328, 64
        %v2347 = vpop.permute.xlu0 %2346
        %2348 = vrot.lane.b32.xlu0 %v2329, 64
        %v2349 = vpop.permute.xlu0 %2348
        %2350 = vrot.lane.b32.xlu0 %v2330, 64
        %v2351 = vpop.permute.xlu0 %2350
        %2352 = vrot.lane.b32.xlu0 %v2331, 64
        %v2353 = vpop.permute.xlu0 %2352
        %2354 = vrot.lane.b32.xlu0 %v2332, 64
        %v2355 = vpop.permute.xlu0 %2354
        %2356 = vrot.lane.b32.xlu0 %v2333, 64
        %v2357 = vpop.permute.xlu0 %2356
        %v2366 = vadd.f32 %v934, %v2343
        %v2367 = vadd.f32 %v935, %v2345
        %v2368 = vadd.f32 %v936, %v2347
        %v2369 = vadd.f32 %v937, %v2349
        %v2370 = vadd.f32 %v938, %v2351
        %v2371 = vadd.f32 %v939, %v2353
        %v2372 = vadd.f32 %v940, %v2355
        %v2373 = vadd.f32 %v941, %v2357
        %v2374 = vtanh.pop %v2366
        %v2375 = vtanh.pop %v2367
        %v2376 = vtanh.pop %v2368
        %v2377 = vtanh.pop %v2369
        %v2378 = vtanh.pop %v2370
        %v2379 = vtanh.pop %v2371
        %v2380 = vtanh.pop %v2372
        %v2381 = vtanh.pop %v2373
        %v2382 = vsub.f32 1.0, %v1618
        %v2383 = vsub.f32 1.0, %v1620
        %v2384 = vsub.f32 1.0, %v1622
        %v2385 = vsub.f32 1.0, %v1624
        %v2386 = vsub.f32 1.0, %v1626
        %v2387 = vsub.f32 1.0, %v1628
        %v2388 = vsub.f32 1.0, %v1630
        %v2389 = vsub.f32 1.0, %v1632
        %v2390 = vmul.f32 %v2382, %v397
        %v2391 = vmul.f32 %v2383, %v398
        %v2392 = vmul.f32 %v2384, %v399
        %v2393 = vmul.f32 %v2385, %v400
        %v2394 = vmul.f32 %v2386, %v401
        %v2395 = vmul.f32 %v2387, %v402
        %v2396 = vmul.f32 %v2388, %v403
        %v2397 = vmul.f32 %v2389, %v404
        %2406 = vrot.lane.b32.xlu0 %v2374, 64
        %v2407 = vpop.permute.xlu0 %2406
        %2408 = vrot.lane.b32.xlu0 %v2375, 64
        %v2409 = vpop.permute.xlu0 %2408
        %2410 = vrot.lane.b32.xlu0 %v2376, 64
        %v2411 = vpop.permute.xlu0 %2410
        %2412 = vrot.lane.b32.xlu0 %v2377, 64
        %v2413 = vpop.permute.xlu0 %2412
        %2414 = vrot.lane.b32.xlu0 %v2378, 64
        %v2415 = vpop.permute.xlu0 %2414
        %2416 = vrot.lane.b32.xlu0 %v2379, 64
        %v2417 = vpop.permute.xlu0 %2416
        %2418 = vrot.lane.b32.xlu0 %v2380, 64
        %v2419 = vpop.permute.xlu0 %2418
        %2420 = vrot.lane.b32.xlu0 %v2381, 64
        %v2421 = vpop.permute.xlu0 %2420
        %v2430 = vmul.f32 %v1618, %v2407
        %v2431 = vmul.f32 %v1620, %v2409
        %v2432 = vmul.f32 %v1622, %v2411
        %v2433 = vmul.f32 %v1624, %v2413
        %v2434 = vmul.f32 %v1626, %v2415
        %v2435 = vmul.f32 %v1628, %v2417
        %v2436 = vmul.f32 %v1630, %v2419
        %v2437 = vmul.f32 %v1632, %v2421
        %v2438 = vadd.f32 %v2390, %v2430
        %v2439 = vadd.f32 %v2391, %v2431
        %v2440 = vadd.f32 %v2392, %v2432
        %v2441 = vadd.f32 %v2393, %v2433
        %v2442 = vadd.f32 %v2394, %v2434
        %v2443 = vadd.f32 %v2395, %v2435
        %v2444 = vadd.f32 %v2396, %v2436
        %v2445 = vadd.f32 %v2397, %v2437
        %2446 = vst.msk [vmem:[%s395] sm:$0xff] %vm460, %v2438
        %2447 = vst.msk [vmem:[%s395 + $0x8] sm:$0xff] %vm460, %v2439
        %2448 = vst.msk [vmem:[%s395 + $0x10] sm:$0xff] %vm460, %v2440
        %2449 = vst.msk [vmem:[%s395 + $0x18] sm:$0xff] %vm460, %v2441
        %2450 = vst.msk [vmem:[%s395 + $0x20] sm:$0xff] %vm460, %v2442
        %2451 = vst.msk [vmem:[%s395 + $0x28] sm:$0xff] %vm460, %v2443
        %2452 = vst.msk [vmem:[%s395 + $0x30] sm:$0xff] %vm460, %v2444
        %2453 = vst.msk [vmem:[%s395 + $0x38] sm:$0xff] %vm460, %v2445
        %s2454 = sand.u32 %s185, 1
        %s2455 = scalar_lea.sflag [#allocation5], %s2454
        %s2456 = sand.u32 %s185, 1
        %s2457 = smul.addr %s2456, 64
        %s2458 = scalar_lea.vmem [#allocation7], %s2457
        // Predicated region
        $region90: #{sep_conv_gru.3} parent=80 // pred_check
          %p2459 = pneg %p195
        $region91: #{sep_conv_gru.3} parent=80 // pred_check_branch
          %2461 = sbr.rel (%p2459) target = $region93
        $region92: #{sep_conv_gru.3} parent=80 // pred_region
          %s2463 = ssub.s32 1024, 1024
          %2464 = vsyncadd %s2455, %s2463
          %s2465 = smul.addr %s27, 16
          %s2466 = sadd.s32 %s28, %s2465
          %s2467 = smul.addr %s2466, 128
          %s2468 = scalar_lea.hbm %s6, %s2467
          %s2469 = sshll.u32 %s2458, 4
          %s2470 = int_to_ptr.vmem [resolvable:$true] %s2469
          %2475 = dma.vmem_to_hbm [thread:$0]  %s2470, 1024, %s2468, %s2455, 128, 256, 8
        $region93: #{sep_conv_gru.3} parent=80 // pred_fallthru
          _
      $region81: #{sep_conv_gru.3} parent=5 // pred_fallthru
        _
      %p2476 = scmp.le.s32.totalorder 2, %s18
      // Predicated region
      $region94: #{sep_conv_gru.3} parent=5 // pred_check
        %p2477 = pneg %p2476
      $region95: #{sep_conv_gru.3} parent=5 // pred_check_branch
        %2479 = sbr.rel (%p2477) target = $region97
      $region96: #{sep_conv_gru.3} parent=5 // pred_region
        %s2480 = ssub.s32 %s18, 2
        // Predicated region
        $region98: #{sep_conv_gru.3} parent=96 // pred_check
          %p2481 = pneg %p201
        $region99: #{sep_conv_gru.3} parent=96 // pred_check_branch
          %2483 = sbr.rel (%p2481) target = $region101
        $region100: #{sep_conv_gru.3} parent=96 // pred_region
          %s2484 = sand.u32 %s186, 1
          %s2485 = scalar_lea.sflag [#allocation5], %s2484
          %s2486 = sand.u32 %s186, 1
          %s2487 = smul.addr %s2486, 64
          %s2488 = scalar_lea.vmem [#allocation7], %s2487
          %2489 = dma.done %s2485, 1024
        $region101: #{sep_conv_gru.3} parent=96 // pred_fallthru
          _
      $region97: #{sep_conv_gru.3} parent=5 // pred_fallthru
        _
    $region6: #{sep_conv_gru.3} parent=1 // loop_footer
      %s22 = sadd.s32 1, %s18
    $region7: #{sep_conv_gru.3} parent=1 // loop_footer_branch
      %17 = sbr.rel target = $region3
    $region8: #{sep_conv_gru.3} parent=1 // loop_exit
      _
    %2490 = vsyncpa [#allocation4], 1
    %s2491 = scalar_lea.sflag [#allocation4], 1
    %2492 = vsyncpa %s2491, 1
    %2493 = vsyncpa [#allocation5], 1
    %s2494 = scalar_lea.sflag [#allocation5], 1
    %2495 = vsyncpa %s2494, 1

// kernel: sep_conv_gru.2
$region0: #{sep_conv_gru.2}
  #allocation0 [shape = 'u32[]', space=smem, size = 0x4, offset = 0x4, fixed_abs, tag = 'smem constant byte address 0x4 - core index']
  #allocation1 [shape = 'u32[144,128]{1,0:T(1,128)}', space=vmem, size = 0x12000, scoped, tag = 'internal scratch']
  #allocation2 [shape = 'f32[20,8,32]{2,1,0:T(8,128)}', space=vmem, size = 0x14000, scoped, tag = 'scratch operand']
  %s0 = inlined_call_operand.vmem [shape: f32[2,16,8,32], index: 0, kind: input, shape index: {}, may-alias: {0,6}]
  %s1 = inlined_call_operand.vmem [shape: bf16[2,20,8,32], index: 1, kind: input, shape index: {}]
  %s2 = inlined_call_operand.vmem [shape: bf16[5,32,96], index: 2, kind: input, shape index: {}]
  %s3 = inlined_call_operand.vmem [shape: f32[5,32,64], index: 3, kind: input, shape index: {}]
  %s4 = inlined_call_operand.vmem [shape: f32[5,32,32], index: 4, kind: input, shape index: {}]
  %s5 = inlined_call_operand.vmem [shape: f32[1,96], index: 5, kind: input, shape index: {}]
  %s6 = inlined_call_operand.vmem [shape: f32[2,16,8,32], index: 6, kind: output, shape index: {}, may-alias: {0,6}]
  %s7 = sld [smem:[#allocation0]]
  $region57: #{sep_conv_gru.2} parent=0
    _
  %s9 = ssub.s32 1, %s7
  %s10 = scalar_select 0, %s9, %s7
  loop: start=0, step=1, limit=4
  $region2: #{sep_conv_gru.2} parent=0 // loop_pre_header
    _
  $region3: #{sep_conv_gru.2} parent=0 // loop_header
    %s12 = sphi 0, %s16
    %p13 = scmp.ge.s32.totalorder %s12, 4
    %s19 = sphi 0, %s31
    %s20 = sphi 0, %s27
    %s21 = sphi 0, %s19
    %s22 = sphi 0, %s20
    %s23 = sphi 0, %s21
    %s24 = sphi 0, %s22
    %s36 = sphi 0, %s38
    %s39 = sphi 0, %s36
    %s40 = sphi 0, %s39
    %s56 = sphi 0, %s40
    %s64 = sphi 0, %s66
    %s67 = sphi 0, %s64
    %s68 = sphi 0, %s67
    %s84 = sphi 0, %s68
    %s88 = sphi 0, %s88
    %s90 = sphi 0, %s88
    %s91 = sphi 0, %s90
    %s105 = sphi 0, %s91
    %s109 = sphi 0, %s109
    %s111 = sphi 0, %s109
    %s112 = sphi 0, %s111
    %s126 = sphi 0, %s112
    %s130 = sphi 0, %s130
    %s132 = sphi 0, %s130
    %s133 = sphi 0, %s132
    %s147 = sphi 0, %s133
    %s151 = sphi 0, %s151
    %s153 = sphi 0, %s151
    %s154 = sphi 0, %s153
    %s168 = sphi 0, %s154
    %s176 = sphi 0, %s178
    %s179 = sphi 0, %s176
    %s180 = sphi 0, %s179
    %s196 = sphi 0, %s180
  $region4: #{sep_conv_gru.2} parent=0 // loop_header_branch
    %15 = sbr.rel (%p13) target = $region8
  $region5: #{sep_conv_gru.2} parent=0 // loop_body
    %s17 = ssub.s32 %s12, 1
    %s18 = ssub.s32 %s12, 2
    %s25 = sadd.s32 1, %s20
    %p26 = scmp.ge.s32.totalorder %s25, 1
    %s27 = scalar_select %p26, 0, %s25
    %s28 = sadd.s32 1, %s19
    %s29 = scalar_select %p26, %s28, %s19
    %p30 = scmp.ge.s32.totalorder %s29, 2
    %s31 = scalar_select %p30, 0, %s29
    %s32 = ssub.s32 %s19, %s31
    %s33 = ssub.s32 %s20, %s27
    %s34 = sor.u32 %s32, %s33
    %p35 = scmp.eq.s32.totalorder %s34, 0
    %s37 = sadd.s32 %s36, 1
    %s38 = scalar_select %p35, %s36, %s37
    %p41 = pneg %p35
    %p42 = scmp.eq.s32.totalorder %s12, 1
    %p43 = por %p41, %p42
    %p44 = scmp.ne.s32.totalorder %s36, %s39
    %p45 = scmp.eq.s32.totalorder %s12, 0
    %p46 = por %p44, %p45
    %p47 = scmp.ne.s32.totalorder %s36, %s39
    %p48 = scmp.eq.s32.totalorder %s17, 1
    %p49 = por %p47, %p48
    %p50 = scmp.ne.s32.totalorder %s39, %s40
    %p51 = scmp.eq.s32.totalorder %s17, 0
    %p52 = por %p50, %p51
    %p53 = scmp.ne.s32.totalorder %s39, %s40
    %p54 = scmp.eq.s32.totalorder %s18, 1
    %p55 = por %p53, %p54
    %p57 = scmp.ne.s32.totalorder %s40, %s56
    %p58 = scmp.eq.s32.totalorder %s18, 0
    %p59 = por %p57, %p58
    %s60 = ssub.s32 %s19, %s31
    %s61 = ssub.s32 %s20, %s27
    %s62 = sor.u32 %s60, %s61
    %p63 = scmp.eq.s32.totalorder %s62, 0
    %s65 = sadd.s32 %s64, 1
    %s66 = scalar_select %p63, %s64, %s65
    %p69 = pneg %p63
    %p70 = scmp.eq.s32.totalorder %s12, 1
    %p71 = por %p69, %p70
    %p72 = scmp.ne.s32.totalorder %s64, %s67
    %p73 = scmp.eq.s32.totalorder %s12, 0
    %p74 = por %p72, %p73
    %p75 = scmp.ne.s32.totalorder %s64, %s67
    %p76 = scmp.eq.s32.totalorder %s17, 1
    %p77 = por %p75, %p76
    %p78 = scmp.ne.s32.totalorder %s67, %s68
    %p79 = scmp.eq.s32.totalorder %s17, 0
    %p80 = por %p78, %p79
    %p81 = scmp.ne.s32.totalorder %s67, %s68
    %p82 = scmp.eq.s32.totalorder %s18, 1
    %p83 = por %p81, %p82
    %p85 = scmp.ne.s32.totalorder %s68, %s84
    %p86 = scmp.eq.s32.totalorder %s18, 0
    %p87 = por %p85, %p86
    %s89 = sadd.s32 %s88, 1
    %p92 = scmp.eq.s32.totalorder %s12, 1
    %p93 = scmp.ne.s32.totalorder %s88, %s90
    %p94 = scmp.eq.s32.totalorder %s12, 0
    %p95 = por %p93, %p94
    %p96 = scmp.ne.s32.totalorder %s88, %s90
    %p97 = scmp.eq.s32.totalorder %s17, 1
    %p98 = por %p96, %p97
    %p99 = scmp.ne.s32.totalorder %s90, %s91
    %p100 = scmp.eq.s32.totalorder %s17, 0
    %p101 = por %p99, %p100
    %p102 = scmp.ne.s32.totalorder %s90, %s91
    %p103 = scmp.eq.s32.totalorder %s18, 1
    %p104 = por %p102, %p103
    %p106 = scmp.ne.s32.totalorder %s91, %s105
    %p107 = scmp.eq.s32.totalorder %s18, 0
    %p108 = por %p106, %p107
    %s110 = sadd.s32 %s109, 1
    %p113 = scmp.eq.s32.totalorder %s12, 1
    %p114 = scmp.ne.s32.totalorder %s109, %s111
    %p115 = scmp.eq.s32.totalorder %s12, 0
    %p116 = por %p114, %p115
    %p117 = scmp.ne.s32.totalorder %s109, %s111
    %p118 = scmp.eq.s32.totalorder %s17, 1
    %p119 = por %p117, %p118
    %p120 = scmp.ne.s32.totalorder %s111, %s112
    %p121 = scmp.eq.s32.totalorder %s17, 0
    %p122 = por %p120, %p121
    %p123 = scmp.ne.s32.totalorder %s111, %s112
    %p124 = scmp.eq.s32.totalorder %s18, 1
    %p125 = por %p123, %p124
    %p127 = scmp.ne.s32.totalorder %s112, %s126
    %p128 = scmp.eq.s32.totalorder %s18, 0
    %p129 = por %p127, %p128
    %s131 = sadd.s32 %s130, 1
    %p134 = scmp.eq.s32.totalorder %s12, 1
    %p135 = scmp.ne.s32.totalorder %s130, %s132
    %p136 = scmp.eq.s32.totalorder %s12, 0
    %p137 = por %p135, %p136
    %p138 = scmp.ne.s32.totalorder %s130, %s132
    %p139 = scmp.eq.s32.totalorder %s17, 1
    %p140 = por %p138, %p139
    %p141 = scmp.ne.s32.totalorder %s132, %s133
    %p142 = scmp.eq.s32.totalorder %s17, 0
    %p143 = por %p141, %p142
    %p144 = scmp.ne.s32.totalorder %s132, %s133
    %p145 = scmp.eq.s32.totalorder %s18, 1
    %p146 = por %p144, %p145
    %p148 = scmp.ne.s32.totalorder %s133, %s147
    %p149 = scmp.eq.s32.totalorder %s18, 0
    %p150 = por %p148, %p149
    %s152 = sadd.s32 %s151, 1
    %p155 = scmp.eq.s32.totalorder %s12, 1
    %p156 = scmp.ne.s32.totalorder %s151, %s153
    %p157 = scmp.eq.s32.totalorder %s12, 0
    %p158 = por %p156, %p157
    %p159 = scmp.ne.s32.totalorder %s151, %s153
    %p160 = scmp.eq.s32.totalorder %s17, 1
    %p161 = por %p159, %p160
    %p162 = scmp.ne.s32.totalorder %s153, %s154
    %p163 = scmp.eq.s32.totalorder %s17, 0
    %p164 = por %p162, %p163
    %p165 = scmp.ne.s32.totalorder %s153, %s154
    %p166 = scmp.eq.s32.totalorder %s18, 1
    %p167 = por %p165, %p166
    %p169 = scmp.ne.s32.totalorder %s154, %s168
    %p170 = scmp.eq.s32.totalorder %s18, 0
    %p171 = por %p169, %p170
    %s172 = ssub.s32 %s19, %s31
    %s173 = ssub.s32 %s20, %s27
    %s174 = sor.u32 %s172, %s173
    %p175 = scmp.eq.s32.totalorder %s174, 0
    %s177 = sadd.s32 %s176, 1
    %s178 = scalar_select %p175, %s176, %s177
    %p181 = pneg %p175
    %p182 = scmp.eq.s32.totalorder %s12, 1
    %p183 = por %p181, %p182
    %p184 = scmp.ne.s32.totalorder %s176, %s179
    %p185 = scmp.eq.s32.totalorder %s12, 0
    %p186 = por %p184, %p185
    %p187 = scmp.ne.s32.totalorder %s176, %s179
    %p188 = scmp.eq.s32.totalorder %s17, 1
    %p189 = por %p187, %p188
    %p190 = scmp.ne.s32.totalorder %s179, %s180
    %p191 = scmp.eq.s32.totalorder %s17, 0
    %p192 = por %p190, %p191
    %p193 = scmp.ne.s32.totalorder %s179, %s180
    %p194 = scmp.eq.s32.totalorder %s18, 1
    %p195 = por %p193, %p194
    %p197 = scmp.ne.s32.totalorder %s180, %s196
    %p198 = scmp.eq.s32.totalorder %s18, 0
    %p199 = por %p197, %p198
    %p200 = scmp.le.s32.totalorder 1, %s12
    %p201 = scmp.lt.s32.totalorder %s12, 3
    %p202 = pnand %p200, %p201
    %p203 = pneg %p202
    // Predicated region
    $region9: #{sep_conv_gru.2} parent=5 // pred_check
      _
    $region10: #{sep_conv_gru.2} parent=5 // pred_check_branch
      %205 = sbr.rel (%p202) target = $region12
    $region11: #{sep_conv_gru.2} parent=5 // pred_region
      %s206 = ssub.s32 %s12, 1
      // Predicated region
      $region13: #{sep_conv_gru.2} parent=11 // pred_check
        %p207 = pneg %p101
      $region14: #{sep_conv_gru.2} parent=11 // pred_check_branch
        %209 = sbr.rel (%p207) target = $region16
      $region15: #{sep_conv_gru.2} parent=11 // pred_region
        _
      $region16: #{sep_conv_gru.2} parent=11 // pred_fallthru
        _
      // Predicated region
      $region17: #{sep_conv_gru.2} parent=11 // pred_check
        %p210 = pneg %p122
      $region18: #{sep_conv_gru.2} parent=11 // pred_check_branch
        %212 = sbr.rel (%p210) target = $region20
      $region19: #{sep_conv_gru.2} parent=11 // pred_region
        _
      $region20: #{sep_conv_gru.2} parent=11 // pred_fallthru
        _
      // Predicated region
      $region21: #{sep_conv_gru.2} parent=11 // pred_check
        %p213 = pneg %p143
      $region22: #{sep_conv_gru.2} parent=11 // pred_check_branch
        %215 = sbr.rel (%p213) target = $region24
      $region23: #{sep_conv_gru.2} parent=11 // pred_region
        _
      $region24: #{sep_conv_gru.2} parent=11 // pred_fallthru
        _
      // Predicated region
      $region25: #{sep_conv_gru.2} parent=11 // pred_check
        %p216 = pneg %p164
      $region26: #{sep_conv_gru.2} parent=11 // pred_check_branch
        %218 = sbr.rel (%p216) target = $region28
      $region27: #{sep_conv_gru.2} parent=11 // pred_region
        _
      $region28: #{sep_conv_gru.2} parent=11 // pred_fallthru
        _
    $region12: #{sep_conv_gru.2} parent=5 // pred_fallthru
      _
    %p219 = scmp.lt.s32.totalorder %s12, 2
    // Predicated region
    $region29: #{sep_conv_gru.2} parent=5 // pred_check
      %p220 = pneg %p219
    $region30: #{sep_conv_gru.2} parent=5 // pred_check_branch
      %222 = sbr.rel (%p220) target = $region32
    $region31: #{sep_conv_gru.2} parent=5 // pred_region
      // Predicated region
      $region33: #{sep_conv_gru.2} parent=31 // pred_check
        %p223 = pneg %p46
      $region34: #{sep_conv_gru.2} parent=31 // pred_check_branch
        %225 = sbr.rel (%p223) target = $region36
      $region35: #{sep_conv_gru.2} parent=31 // pred_region
        %p226 = scmp.lt.s32.totalorder %s19, 1
        %s227 = scalar_select %p226, %s19, 1
        %p228 = scmp.lt.s32.totalorder %s20, 0
        %s229 = scalar_select %p228, %s20, 0
        %s230 = smul.addr %s227, 16
        %s231 = sadd.s32 %s229, %s230
        %s232 = smul.addr %s231, 8
        %s233 = scalar_lea.vmem %s0, %s232
      $region36: #{sep_conv_gru.2} parent=31 // pred_fallthru
        _
      // Predicated region
      $region37: #{sep_conv_gru.2} parent=31 // pred_check
        %p234 = pneg %p74
      $region38: #{sep_conv_gru.2} parent=31 // pred_check_branch
        %236 = sbr.rel (%p234) target = $region40
      $region39: #{sep_conv_gru.2} parent=31 // pred_region
        %p237 = scmp.lt.s32.totalorder %s19, 1
        %s238 = scalar_select %p237, %s19, 1
        %p239 = scmp.lt.s32.totalorder %s20, 0
        %s240 = scalar_select %p239, %s20, 0
        %s241 = smul.addr %s238, 20
        %s242 = sadd.s32 %s240, %s241
        %s243 = smul.addr %s242, 4
        %s244 = scalar_lea.vmem %s1, %s243
      $region40: #{sep_conv_gru.2} parent=31 // pred_fallthru
        _
    $region32: #{sep_conv_gru.2} parent=5 // pred_fallthru
      _
    %p245 = scmp.le.s32.totalorder 1, %s12
    %p246 = scmp.lt.s32.totalorder %s12, 3
    %p247 = pnand %p245, %p246
    %p248 = pneg %p247
    // Predicated region
    $region41: #{sep_conv_gru.2} parent=5 // pred_check
      _
    $region42: #{sep_conv_gru.2} parent=5 // pred_check_branch
      %250 = sbr.rel (%p247) target = $region44
    $region43: #{sep_conv_gru.2} parent=5 // pred_region
      %s251 = ssub.s32 %s12, 1
      %p252 = scmp.lt.s32.totalorder %s21, 1
      %s253 = scalar_select %p252, %s21, 1
      %p254 = scmp.lt.s32.totalorder %s22, 0
      %s255 = scalar_select %p254, %s22, 0
      %s256 = smul.addr %s253, 16
      %s257 = sadd.s32 %s255, %s256
      %s258 = smul.addr %s257, 8
      %s259 = scalar_lea.vmem %s0, %s258
      %p260 = pneg %p52
      %p261 = pneg %p49
      %p262 = scmp.lt.s32.totalorder %s21, 1
      %s263 = scalar_select %p262, %s21, 1
      %p264 = scmp.lt.s32.totalorder %s22, 0
      %s265 = scalar_select %p264, %s22, 0
      %s266 = smul.addr %s263, 20
      %s267 = sadd.s32 %s265, %s266
      %s268 = smul.addr %s267, 4
      %s269 = scalar_lea.vmem %s1, %s268
      %p270 = pneg %p80
      %p271 = pneg %p77
      %p272 = pneg %p101
      %p273 = pneg %p98
      %p274 = pneg %p122
      %p275 = pneg %p119
      %p276 = pneg %p143
      %p277 = pneg %p140
      %p278 = pneg %p164
      %p279 = pneg %p161
      %p280 = pneg %p192
      %p281 = pneg %p189
      %p282 = scmp.lt.s32.totalorder %s21, 1
      %s283 = scalar_select %p282, %s21, 1
      %p284 = scmp.lt.s32.totalorder %s22, 0
      %s285 = scalar_select %p284, %s22, 0
      %s286 = smul.addr %s283, 16
      %s287 = sadd.s32 %s285, %s286
      %s288 = smul.addr %s287, 8
      %s289 = scalar_lea.vmem %s6, %s288
      %p290 = scmp.lt.s32.totalorder %s21, 1
      %s291 = scalar_select %p290, %s21, 1
      %p292 = scmp.lt.s32.totalorder %s22, 0
      %s293 = scalar_select %p292, %s22, 0
      %s294 = smul.addr %s291, 16
      %s295 = sadd.s32 %s293, %s294
      %s296 = smul.addr %s295, 8
      %s297 = scalar_lea.vmem %s0, %s296
      %p298 = scmp.lt.s32.totalorder %s21, 1
      %s299 = scalar_select %p298, %s21, 1
      %p300 = scmp.lt.s32.totalorder %s22, 0
      %s301 = scalar_select %p300, %s22, 0
      %s302 = smul.addr %s299, 20
      %s303 = sadd.s32 %s301, %s302
      %s304 = smul.addr %s303, 4
      %s305 = scalar_lea.vmem %s1, %s304
      %p306 = scmp.lt.s32.totalorder %s21, 1
      %s307 = scalar_select %p306, %s21, 1
      %p308 = scmp.lt.s32.totalorder %s22, 0
      %s309 = scalar_select %p308, %s22, 0
      %s310 = smul.addr %s307, 16
      %s311 = sadd.s32 %s309, %s310
      %s312 = smul.addr %s311, 8
      %s313 = scalar_lea.vmem %s6, %s312
      %v315 = vld [vmem:[%s297] sm:$0xff]
      %v316 = vld [vmem:[%s297 + $0x8] sm:$0xff]
      %v317 = vld [vmem:[%s297 + $0x10] sm:$0xff]
      %v318 = vld [vmem:[%s297 + $0x18] sm:$0xff]
      %v319 = vld [vmem:[%s297 + $0x20] sm:$0xff]
      %v320 = vld [vmem:[%s297 + $0x28] sm:$0xff]
      %v321 = vld [vmem:[%s297 + $0x30] sm:$0xff]
      %v322 = vld [vmem:[%s297 + $0x38] sm:$0xff]
      %v323 = vld [vmem:[%s297 + $0x40] sm:$0xff]
      %v324 = vld [vmem:[%s297 + $0x48] sm:$0xff]
      %v325 = vld [vmem:[%s297 + $0x50] sm:$0xff]
      %v326 = vld [vmem:[%s297 + $0x58] sm:$0xff]
      %v327 = vld [vmem:[%s297 + $0x60] sm:$0xff]
      %v328 = vld [vmem:[%s297 + $0x68] sm:$0xff]
      %v329 = vld [vmem:[%s297 + $0x70] sm:$0xff]
      %v330 = vld [vmem:[%s297 + $0x78] sm:$0xff]
      %v331 = vld [vmem:[%s305] sm:$0xf]
      %v332 = vld [vmem:[%s305 + $0x4] sm:$0xf]
      %v333 = vld [vmem:[%s305 + $0x8] sm:$0xf]
      %v334 = vld [vmem:[%s305 + $0xc] sm:$0xf]
      %v335 = vld [vmem:[%s305 + $0x10] sm:$0xf]
      %v336 = vld [vmem:[%s305 + $0x14] sm:$0xf]
      %v337 = vld [vmem:[%s305 + $0x18] sm:$0xf]
      %v338 = vld [vmem:[%s305 + $0x1c] sm:$0xf]
      %v339 = vld [vmem:[%s305 + $0x20] sm:$0xf]
      %v340 = vld [vmem:[%s305 + $0x24] sm:$0xf]
      %v341 = vld [vmem:[%s305 + $0x28] sm:$0xf]
      %v342 = vld [vmem:[%s305 + $0x2c] sm:$0xf]
      %v343 = vld [vmem:[%s305 + $0x30] sm:$0xf]
      %v344 = vld [vmem:[%s305 + $0x34] sm:$0xf]
      %v345 = vld [vmem:[%s305 + $0x38] sm:$0xf]
      %v346 = vld [vmem:[%s305 + $0x3c] sm:$0xf]
      %v347 = vld [vmem:[%s305 + $0x40] sm:$0xf]
      %v348 = vld [vmem:[%s305 + $0x44] sm:$0xf]
      %v349 = vld [vmem:[%s305 + $0x48] sm:$0xf]
      %v350 = vld [vmem:[%s305 + $0x4c] sm:$0xf]
      %v351 = vld [vmem:[%s5] sm:$0x1]
      %v353 = vlaneseq
      %v354 = vshrl.u32 %v353, 7
      %v355 = vsub.s32 0, %v354
      %v356 = vrot.slane %v351, %v355
      %v358 = vld [vmem:[%s2] sm:$0xf]
      %v359 = vld [vmem:[%s2 + $0x4] sm:$0xf]
      %v360 = vld [vmem:[%s2 + $0x8] sm:$0xf]
      %v361 = vld [vmem:[%s2 + $0xc] sm:$0xf]
      %v378 = vunpack.c.l.b16 %v331
      %v379 = vunpack.c.l.b16 %v332
      %v380 = vunpack.c.l.b16 %v333
      %v381 = vunpack.c.l.b16 %v334
      %v382 = vunpack.c.l.b16 %v335
      %v383 = vunpack.c.l.b16 %v336
      %v384 = vunpack.c.l.b16 %v337
      %v385 = vunpack.c.l.b16 %v338
      %v386 = vunpack.c.l.b16 %v339
      %v387 = vunpack.c.l.b16 %v340
      %v388 = vunpack.c.l.b16 %v341
      %v389 = vunpack.c.l.b16 %v342
      %v390 = vunpack.c.l.b16 %v343
      %v391 = vunpack.c.l.b16 %v344
      %v392 = vunpack.c.l.b16 %v345
      %v393 = vunpack.c.l.b16 %v346
      %v394 = vpack.c.b16 %v379, %v378
      %v395 = vpack.c.b16 %v381, %v380
      %v396 = vpack.c.b16 %v383, %v382
      %v397 = vpack.c.b16 %v385, %v384
      %v398 = vpack.c.b16 %v387, %v386
      %v399 = vpack.c.b16 %v389, %v388
      %v400 = vpack.c.b16 %v391, %v390
      %v401 = vpack.c.b16 %v393, %v392
      %v406 = vunpack.c.l.b16 %v358
      %v407 = vunpack.c.l.b16 %v359
      %v408 = vunpack.c.l.b16 %v360
      %v409 = vunpack.c.l.b16 %v361
      %v410 = vpack.c.b16 %v407, %v406
      %v411 = vpack.c.b16 %v409, %v408
      %vm414 = vcmask 261120
      %v416 = vsel %vm414, %v394, 0
      %v419 = vsel %vm414, %v395, 0
      %v422 = vsel %vm414, %v396, 0
      %v425 = vsel %vm414, %v397, 0
      %v428 = vsel %vm414, %v398, 0
      %v431 = vsel %vm414, %v399, 0
      %v434 = vsel %vm414, %v400, 0
      %v437 = vsel %vm414, %v401, 0
      %439 = vmatprep.subr.bf16.mxu0 0
      %440 = vmatpush1.bf16.msra.mxu0 %v410
      %441 = vmatprep.subr.bf16.mxu0 0
      %442 = vmatpush1.bf16.msra.mxu0 %v411
      %443 = vmatprep.subr.bf16.mxu0 0
      %444 = vmatpush1.bf16.msra.mxu0 0
      %445 = vmatprep.subr.bf16.mxu0 0
      %446 = vmatpush1.bf16.msra.mxu0 0
      %447 = vmatprep.subr.bf16.mxu0 0
      %448 = vmatpush1.bf16.msra.mxu0 0
      %449 = vmatprep.subr.bf16.mxu0 0
      %450 = vmatpush1.bf16.msra.mxu0 0
      %451 = vmatprep.subr.bf16.mxu0 0
      %452 = vmatpush1.bf16.msra.mxu0 0
      %453 = vmatprep.subr.bf16.mxu0 0
      %454 = vmatpush1.bf16.msra.mxu0 0
      %455 = vmatprep.subr.bf16.mxu0 0
      %456 = vmatpush1.bf16.msra.mxu0 0
      %457 = vmatprep.subr.bf16.mxu0 0
      %458 = vmatpush1.bf16.msra.mxu0 0
      %459 = vmatprep.subr.bf16.mxu0 0
      %460 = vmatpush1.bf16.msra.mxu0 0
      %461 = vmatprep.subr.bf16.mxu0 0
      %462 = vmatpush1.bf16.msra.mxu0 0
      %463 = vmatprep.subr.bf16.mxu0 0
      %464 = vmatpush1.bf16.msra.mxu0 0
      %465 = vmatprep.subr.bf16.mxu0 0
      %466 = vmatpush1.bf16.msra.mxu0 0
      %467 = vmatprep.subr.bf16.mxu0 0
      %468 = vmatpush1.bf16.msra.mxu0 0
      %469 = vmatprep.subr.bf16.mxu0 0
      %470 = vmatpush1.bf16.msra.mxu0 0
      %471 = vmatprep.mubr.bf16.mxu0 0
      %472 = vmatmul.mubr.bf16.gmra.mrb[0].mxu0 %v416
      %v473 = vpop.f32.mrb[0].mxu0
      %v474 = vadd.f32 0.0, %v473
      %v475 = vpop.f32.mrb[0].mxu0
      %v476 = vpop.f32.mrb[0].mxu0
      %v477 = vadd.f32 0.0, %v476
      %v478 = vpop.f32.mrb[0].mxu0
      %479 = vmatprep.mubr.bf16.mxu0 0
      %480 = vmatmul.mubr.bf16.gmra.mrb[0].mxu0 %v419
      %v481 = vpop.f32.mrb[0].mxu0
      %v482 = vadd.f32 0.0, %v481
      %v483 = vpop.f32.mrb[0].mxu0
      %v484 = vpop.f32.mrb[0].mxu0
      %v485 = vadd.f32 0.0, %v484
      %v486 = vpop.f32.mrb[0].mxu0
      %487 = vmatprep.mubr.bf16.mxu0 0
      %488 = vmatmul.mubr.bf16.gmra.mrb[0].mxu0 %v422
      %v489 = vpop.f32.mrb[0].mxu0
      %v490 = vadd.f32 0.0, %v489
      %v491 = vpop.f32.mrb[0].mxu0
      %v492 = vpop.f32.mrb[0].mxu0
      %v493 = vadd.f32 0.0, %v492
      %v494 = vpop.f32.mrb[0].mxu0
      %495 = vmatprep.mubr.bf16.mxu0 0
      %496 = vmatmul.mubr.bf16.gmra.mrb[0].mxu0 %v425
      %v497 = vpop.f32.mrb[0].mxu0
      %v498 = vadd.f32 0.0, %v497
      %v499 = vpop.f32.mrb[0].mxu0
      %v500 = vpop.f32.mrb[0].mxu0
      %v501 = vadd.f32 0.0, %v500
      %v502 = vpop.f32.mrb[0].mxu0
      %503 = vmatprep.mubr.bf16.mxu0 0
      %504 = vmatmul.mubr.bf16.gmra.mrb[0].mxu0 %v428
      %v505 = vpop.f32.mrb[0].mxu0
      %v506 = vadd.f32 0.0, %v505
      %v507 = vpop.f32.mrb[0].mxu0
      %v508 = vpop.f32.mrb[0].mxu0
      %v509 = vadd.f32 0.0, %v508
      %v510 = vpop.f32.mrb[0].mxu0
      %511 = vmatprep.mubr.bf16.mxu0 0
      %512 = vmatmul.mubr.bf16.gmra.mrb[0].mxu0 %v431
      %v513 = vpop.f32.mrb[0].mxu0
      %v514 = vadd.f32 0.0, %v513
      %v515 = vpop.f32.mrb[0].mxu0
      %v516 = vpop.f32.mrb[0].mxu0
      %v517 = vadd.f32 0.0, %v516
      %v518 = vpop.f32.mrb[0].mxu0
      %519 = vmatprep.mubr.bf16.mxu0 0
      %520 = vmatmul.mubr.bf16.gmra.mrb[0].mxu0 %v434
      %v521 = vpop.f32.mrb[0].mxu0
      %v522 = vadd.f32 0.0, %v521
      %v523 = vpop.f32.mrb[0].mxu0
      %v524 = vpop.f32.mrb[0].mxu0
      %v525 = vadd.f32 0.0, %v524
      %v526 = vpop.f32.mrb[0].mxu0
      %527 = vmatprep.mubr.bf16.mxu0 0
      %528 = vmatmul.mubr.bf16.gmra.mrb[0].mxu0 %v437
      %v529 = vpop.f32.mrb[0].mxu0
      %v530 = vadd.f32 0.0, %v529
      %v531 = vpop.f32.mrb[0].mxu0
      %v532 = vpop.f32.mrb[0].mxu0
      %v533 = vadd.f32 0.0, %v532
      %v534 = vpop.f32.mrb[0].mxu0
      %535 = vdwg.mxu0
      %v536 = vadd.f32 %v356, %v474
      %v537 = vadd.f32 %v356, %v477
      %v538 = vadd.f32 %v356, %v482
      %v539 = vadd.f32 %v356, %v485
      %v540 = vadd.f32 %v356, %v490
      %v541 = vadd.f32 %v356, %v493
      %v542 = vadd.f32 %v356, %v498
      %v543 = vadd.f32 %v356, %v501
      %v544 = vadd.f32 %v356, %v506
      %v545 = vadd.f32 %v356, %v509
      %v546 = vadd.f32 %v356, %v514
      %v547 = vadd.f32 %v356, %v517
      %v548 = vadd.f32 %v356, %v522
      %v549 = vadd.f32 %v356, %v525
      %v550 = vadd.f32 %v356, %v530
      %v551 = vadd.f32 %v356, %v533
      %s552 = scalar_lea.vmem %s2, 16
      %v553 = vld [vmem:[%s552] sm:$0xf]
      %v554 = vld [vmem:[%s552 + $0x4] sm:$0xf]
      %v555 = vld [vmem:[%s552 + $0x8] sm:$0xf]
      %v556 = vld [vmem:[%s552 + $0xc] sm:$0xf]
      %v558 = vunpack.c.l.b16 %v347
      %v559 = vpack.c.b16 %v380, %v379
      %v560 = vpack.c.b16 %v382, %v381
      %v561 = vpack.c.b16 %v384, %v383
      %v562 = vpack.c.b16 %v386, %v385
      %v563 = vpack.c.b16 %v388, %v387
      %v564 = vpack.c.b16 %v390, %v389
      %v565 = vpack.c.b16 %v392, %v391
      %v566 = vpack.c.b16 %v558, %v393
      %v571 = vunpack.c.l.b16 %v553
      %v572 = vunpack.c.l.b16 %v554
      %v573 = vunpack.c.l.b16 %v555
      %v574 = vunpack.c.l.b16 %v556
      %v575 = vpack.c.b16 %v572, %v571
      %v576 = vpack.c.b16 %v574, %v573
      %v580 = vsel %vm414, %v559, 0
      %v583 = vsel %vm414, %v560, 0
      %v586 = vsel %vm414, %v561, 0
      %v589 = vsel %vm414, %v562, 0
      %v592 = vsel %vm414, %v563, 0
      %v595 = vsel %vm414, %v564, 0
      %v598 = vsel %vm414, %v565, 0
      %v601 = vsel %vm414, %v566, 0
      %603 = vmatprep.subr.bf16.mxu0 0
      %604 = vmatpush1.bf16.msra.mxu0 %v575
      %605 = vmatprep.subr.bf16.mxu0 0
      %606 = vmatpush1.bf16.msra.mxu0 %v576
      %607 = vmatprep.subr.bf16.mxu0 0
      %608 = vmatpush1.bf16.msra.mxu0 0
      %609 = vmatprep.subr.bf16.mxu0 0
      %610 = vmatpush1.bf16.msra.mxu0 0
      %611 = vmatprep.subr.bf16.mxu0 0
      %612 = vmatpush1.bf16.msra.mxu0 0
      %613 = vmatprep.subr.bf16.mxu0 0
      %614 = vmatpush1.bf16.msra.mxu0 0
      %615 = vmatprep.subr.bf16.mxu0 0
      %616 = vmatpush1.bf16.msra.mxu0 0
      %617 = vmatprep.subr.bf16.mxu0 0
      %618 = vmatpush1.bf16.msra.mxu0 0
      %619 = vmatprep.subr.bf16.mxu0 0
      %620 = vmatpush1.bf16.msra.mxu0 0
      %621 = vmatprep.subr.bf16.mxu0 0
      %622 = vmatpush1.bf16.msra.mxu0 0
      %623 = vmatprep.subr.bf16.mxu0 0
      %624 = vmatpush1.bf16.msra.mxu0 0
      %625 = vmatprep.subr.bf16.mxu0 0
      %626 = vmatpush1.bf16.msra.mxu0 0
      %627 = vmatprep.subr.bf16.mxu0 0
      %628 = vmatpush1.bf16.msra.mxu0 0
      %629 = vmatprep.subr.bf16.mxu0 0
      %630 = vmatpush1.bf16.msra.mxu0 0
      %631 = vmatprep.subr.bf16.mxu0 0
      %632 = vmatpush1.bf16.msra.mxu0 0
      %633 = vmatprep.subr.bf16.mxu0 0
      %634 = vmatpush1.bf16.msra.mxu0 0
      %635 = vmatprep.mubr.bf16.mxu0 0
      %636 = vmatmul.mubr.bf16.gmra.mrb[0].mxu0 %v580
      %v637 = vpop.f32.mrb[0].mxu0
      %v638 = vadd.f32 0.0, %v637
      %v639 = vpop.f32.mrb[0].mxu0
      %v640 = vpop.f32.mrb[0].mxu0
      %v641 = vadd.f32 0.0, %v640
      %v642 = vpop.f32.mrb[0].mxu0
      %643 = vmatprep.mubr.bf16.mxu0 0
      %644 = vmatmul.mubr.bf16.gmra.mrb[0].mxu0 %v583
      %v645 = vpop.f32.mrb[0].mxu0
      %v646 = vadd.f32 0.0, %v645
      %v647 = vpop.f32.mrb[0].mxu0
      %v648 = vpop.f32.mrb[0].mxu0
      %v649 = vadd.f32 0.0, %v648
      %v650 = vpop.f32.mrb[0].mxu0
      %651 = vmatprep.mubr.bf16.mxu0 0
      %652 = vmatmul.mubr.bf16.gmra.mrb[0].mxu0 %v586
      %v653 = vpop.f32.mrb[0].mxu0
      %v654 = vadd.f32 0.0, %v653
      %v655 = vpop.f32.mrb[0].mxu0
      %v656 = vpop.f32.mrb[0].mxu0
      %v657 = vadd.f32 0.0, %v656
      %v658 = vpop.f32.mrb[0].mxu0
      %659 = vmatprep.mubr.bf16.mxu0 0
      %660 = vmatmul.mubr.bf16.gmra.mrb[0].mxu0 %v589
      %v661 = vpop.f32.mrb[0].mxu0
      %v662 = vadd.f32 0.0, %v661
      %v663 = vpop.f32.mrb[0].mxu0
      %v664 = vpop.f32.mrb[0].mxu0
      %v665 = vadd.f32 0.0, %v664
      %v666 = vpop.f32.mrb[0].mxu0
      %667 = vmatprep.mubr.bf16.mxu0 0
      %668 = vmatmul.mubr.bf16.gmra.mrb[0].mxu0 %v592
      %v669 = vpop.f32.mrb[0].mxu0
      %v670 = vadd.f32 0.0, %v669
      %v671 = vpop.f32.mrb[0].mxu0
      %v672 = vpop.f32.mrb[0].mxu0
      %v673 = vadd.f32 0.0, %v672
      %v674 = vpop.f32.mrb[0].mxu0
      %675 = vmatprep.mubr.bf16.mxu0 0
      %676 = vmatmul.mubr.bf16.gmra.mrb[0].mxu0 %v595
      %v677 = vpop.f32.mrb[0].mxu0
      %v678 = vadd.f32 0.0, %v677
      %v679 = vpop.f32.mrb[0].mxu0
      %v680 = vpop.f32.mrb[0].mxu0
      %v681 = vadd.f32 0.0, %v680
      %v682 = vpop.f32.mrb[0].mxu0
      %683 = vmatprep.mubr.bf16.mxu0 0
      %684 = vmatmul.mubr.bf16.gmra.mrb[0].mxu0 %v598
      %v685 = vpop.f32.mrb[0].mxu0
      %v686 = vadd.f32 0.0, %v685
      %v687 = vpop.f32.mrb[0].mxu0
      %v688 = vpop.f32.mrb[0].mxu0
      %v689 = vadd.f32 0.0, %v688
      %v690 = vpop.f32.mrb[0].mxu0
      %691 = vmatprep.mubr.bf16.mxu0 0
      %692 = vmatmul.mubr.bf16.gmra.mrb[0].mxu0 %v601
      %v693 = vpop.f32.mrb[0].mxu0
      %v694 = vadd.f32 0.0, %v693
      %v695 = vpop.f32.mrb[0].mxu0
      %v696 = vpop.f32.mrb[0].mxu0
      %v697 = vadd.f32 0.0, %v696
      %v698 = vpop.f32.mrb[0].mxu0
      %699 = vdwg.mxu0
      %v700 = vadd.f32 %v536, %v638
      %v701 = vadd.f32 %v537, %v641
      %v702 = vadd.f32 %v538, %v646
      %v703 = vadd.f32 %v539, %v649
      %v704 = vadd.f32 %v540, %v654
      %v705 = vadd.f32 %v541, %v657
      %v706 = vadd.f32 %v542, %v662
      %v707 = vadd.f32 %v543, %v665
      %v708 = vadd.f32 %v544, %v670
      %v709 = vadd.f32 %v545, %v673
      %v710 = vadd.f32 %v546, %v678
      %v711 = vadd.f32 %v547, %v681
      %v712 = vadd.f32 %v548, %v686
      %v713 = vadd.f32 %v549, %v689
      %v714 = vadd.f32 %v550, %v694
      %v715 = vadd.f32 %v551, %v697
      %s716 = scalar_lea.vmem %s2, 32
      %v717 = vld [vmem:[%s716] sm:$0xf]
      %v718 = vld [vmem:[%s716 + $0x4] sm:$0xf]
      %v719 = vld [vmem:[%s716 + $0x8] sm:$0xf]
      %v720 = vld [vmem:[%s716 + $0xc] sm:$0xf]
      %v722 = vunpack.c.l.b16 %v348
      %v723 = vpack.c.b16 %v722, %v558
      %v728 = vunpack.c.l.b16 %v717
      %v729 = vunpack.c.l.b16 %v718
      %v730 = vunpack.c.l.b16 %v719
      %v731 = vunpack.c.l.b16 %v720
      %v732 = vpack.c.b16 %v729, %v728
      %v733 = vpack.c.b16 %v731, %v730
      %v737 = vsel %vm414, %v723, 0
      %739 = vmatprep.subr.bf16.mxu0 0
      %740 = vmatpush1.bf16.msra.mxu0 %v732
      %741 = vmatprep.subr.bf16.mxu0 0
      %742 = vmatpush1.bf16.msra.mxu0 %v733
      %743 = vmatprep.subr.bf16.mxu0 0
      %744 = vmatpush1.bf16.msra.mxu0 0
      %745 = vmatprep.subr.bf16.mxu0 0
      %746 = vmatpush1.bf16.msra.mxu0 0
      %747 = vmatprep.subr.bf16.mxu0 0
      %748 = vmatpush1.bf16.msra.mxu0 0
      %749 = vmatprep.subr.bf16.mxu0 0
      %750 = vmatpush1.bf16.msra.mxu0 0
      %751 = vmatprep.subr.bf16.mxu0 0
      %752 = vmatpush1.bf16.msra.mxu0 0
      %753 = vmatprep.subr.bf16.mxu0 0
      %754 = vmatpush1.bf16.msra.mxu0 0
      %755 = vmatprep.subr.bf16.mxu0 0
      %756 = vmatpush1.bf16.msra.mxu0 0
      %757 = vmatprep.subr.bf16.mxu0 0
      %758 = vmatpush1.bf16.msra.mxu0 0
      %759 = vmatprep.subr.bf16.mxu0 0
      %760 = vmatpush1.bf16.msra.mxu0 0
      %761 = vmatprep.subr.bf16.mxu0 0
      %762 = vmatpush1.bf16.msra.mxu0 0
      %763 = vmatprep.subr.bf16.mxu0 0
      %764 = vmatpush1.bf16.msra.mxu0 0
      %765 = vmatprep.subr.bf16.mxu0 0
      %766 = vmatpush1.bf16.msra.mxu0 0
      %767 = vmatprep.subr.bf16.mxu0 0
      %768 = vmatpush1.bf16.msra.mxu0 0
      %769 = vmatprep.subr.bf16.mxu0 0
      %770 = vmatpush1.bf16.msra.mxu0 0
      %771 = vmatprep.mubr.bf16.mxu0 0
      %772 = vmatmul.mubr.bf16.gmra.mrb[0].mxu0 %v419
      %v773 = vpop.f32.mrb[0].mxu0
      %v774 = vadd.f32 0.0, %v773
      %v775 = vpop.f32.mrb[0].mxu0
      %v776 = vpop.f32.mrb[0].mxu0
      %v777 = vadd.f32 0.0, %v776
      %v778 = vpop.f32.mrb[0].mxu0
      %779 = vmatprep.mubr.bf16.mxu0 0
      %780 = vmatmul.mubr.bf16.gmra.mrb[0].mxu0 %v422
      %v781 = vpop.f32.mrb[0].mxu0
      %v782 = vadd.f32 0.0, %v781
      %v783 = vpop.f32.mrb[0].mxu0
      %v784 = vpop.f32.mrb[0].mxu0
      %v785 = vadd.f32 0.0, %v784
      %v786 = vpop.f32.mrb[0].mxu0
      %787 = vmatprep.mubr.bf16.mxu0 0
      %788 = vmatmul.mubr.bf16.gmra.mrb[0].mxu0 %v425
      %v789 = vpop.f32.mrb[0].mxu0
      %v790 = vadd.f32 0.0, %v789
      %v791 = vpop.f32.mrb[0].mxu0
      %v792 = vpop.f32.mrb[0].mxu0
      %v793 = vadd.f32 0.0, %v792
      %v794 = vpop.f32.mrb[0].mxu0
      %795 = vmatprep.mubr.bf16.mxu0 0
      %796 = vmatmul.mubr.bf16.gmra.mrb[0].mxu0 %v428
      %v797 = vpop.f32.mrb[0].mxu0
      %v798 = vadd.f32 0.0, %v797
      %v799 = vpop.f32.mrb[0].mxu0
      %v800 = vpop.f32.mrb[0].mxu0
      %v801 = vadd.f32 0.0, %v800
      %v802 = vpop.f32.mrb[0].mxu0
      %803 = vmatprep.mubr.bf16.mxu0 0
      %804 = vmatmul.mubr.bf16.gmra.mrb[0].mxu0 %v431
      %v805 = vpop.f32.mrb[0].mxu0
      %v806 = vadd.f32 0.0, %v805
      %v807 = vpop.f32.mrb[0].mxu0
      %v808 = vpop.f32.mrb[0].mxu0
      %v809 = vadd.f32 0.0, %v808
      %v810 = vpop.f32.mrb[0].mxu0
      %811 = vmatprep.mubr.bf16.mxu0 0
      %812 = vmatmul.mubr.bf16.gmra.mrb[0].mxu0 %v434
      %v813 = vpop.f32.mrb[0].mxu0
      %v814 = vadd.f32 0.0, %v813
      %v815 = vpop.f32.mrb[0].mxu0
      %v816 = vpop.f32.mrb[0].mxu0
      %v817 = vadd.f32 0.0, %v816
      %v818 = vpop.f32.mrb[0].mxu0
      %819 = vmatprep.mubr.bf16.mxu0 0
      %820 = vmatmul.mubr.bf16.gmra.mrb[0].mxu0 %v437
      %v821 = vpop.f32.mrb[0].mxu0
      %v822 = vadd.f32 0.0, %v821
      %v823 = vpop.f32.mrb[0].mxu0
      %v824 = vpop.f32.mrb[0].mxu0
      %v825 = vadd.f32 0.0, %v824
      %v826 = vpop.f32.mrb[0].mxu0
      %827 = vmatprep.mubr.bf16.mxu0 0
      %828 = vmatmul.mubr.bf16.gmra.mrb[0].mxu0 %v737
      %v829 = vpop.f32.mrb[0].mxu0
      %v830 = vadd.f32 0.0, %v829
      %v831 = vpop.f32.mrb[0].mxu0
      %v832 = vpop.f32.mrb[0].mxu0
      %v833 = vadd.f32 0.0, %v832
      %v834 = vpop.f32.mrb[0].mxu0
      %835 = vdwg.mxu0
      %v836 = vadd.f32 %v700, %v774
      %v837 = vadd.f32 %v701, %v777
      %v838 = vadd.f32 %v702, %v782
      %v839 = vadd.f32 %v703, %v785
      %v840 = vadd.f32 %v704, %v790
      %v841 = vadd.f32 %v705, %v793
      %v842 = vadd.f32 %v706, %v798
      %v843 = vadd.f32 %v707, %v801
      %v844 = vadd.f32 %v708, %v806
      %v845 = vadd.f32 %v709, %v809
      %v846 = vadd.f32 %v710, %v814
      %v847 = vadd.f32 %v711, %v817
      %v848 = vadd.f32 %v712, %v822
      %v849 = vadd.f32 %v713, %v825
      %v850 = vadd.f32 %v714, %v830
      %v851 = vadd.f32 %v715, %v833
      %s852 = scalar_lea.vmem %s2, 48
      %v853 = vld [vmem:[%s852] sm:$0xf]
      %v854 = vld [vmem:[%s852 + $0x4] sm:$0xf]
      %v855 = vld [vmem:[%s852 + $0x8] sm:$0xf]
      %v856 = vld [vmem:[%s852 + $0xc] sm:$0xf]
      %v858 = vunpack.c.l.b16 %v349
      %v859 = vpack.c.b16 %v858, %v722
      %v864 = vunpack.c.l.b16 %v853
      %v865 = vunpack.c.l.b16 %v854
      %v866 = vunpack.c.l.b16 %v855
      %v867 = vunpack.c.l.b16 %v856
      %v868 = vpack.c.b16 %v865, %v864
      %v869 = vpack.c.b16 %v867, %v866
      %v873 = vsel %vm414, %v859, 0
      %875 = vmatprep.subr.bf16.mxu0 0
      %876 = vmatpush1.bf16.msra.mxu0 %v868
      %877 = vmatprep.subr.bf16.mxu0 0
      %878 = vmatpush1.bf16.msra.mxu0 %v869
      %879 = vmatprep.subr.bf16.mxu0 0
      %880 = vmatpush1.bf16.msra.mxu0 0
      %881 = vmatprep.subr.bf16.mxu0 0
      %882 = vmatpush1.bf16.msra.mxu0 0
      %883 = vmatprep.subr.bf16.mxu0 0
      %884 = vmatpush1.bf16.msra.mxu0 0
      %885 = vmatprep.subr.bf16.mxu0 0
      %886 = vmatpush1.bf16.msra.mxu0 0
      %887 = vmatprep.subr.bf16.mxu0 0
      %888 = vmatpush1.bf16.msra.mxu0 0
      %889 = vmatprep.subr.bf16.mxu0 0
      %890 = vmatpush1.bf16.msra.mxu0 0
      %891 = vmatprep.subr.bf16.mxu0 0
      %892 = vmatpush1.bf16.msra.mxu0 0
      %893 = vmatprep.subr.bf16.mxu0 0
      %894 = vmatpush1.bf16.msra.mxu0 0
      %895 = vmatprep.subr.bf16.mxu0 0
      %896 = vmatpush1.bf16.msra.mxu0 0
      %897 = vmatprep.subr.bf16.mxu0 0
      %898 = vmatpush1.bf16.msra.mxu0 0
      %899 = vmatprep.subr.bf16.mxu0 0
      %900 = vmatpush1.bf16.msra.mxu0 0
      %901 = vmatprep.subr.bf16.mxu0 0
      %902 = vmatpush1.bf16.msra.mxu0 0
      %903 = vmatprep.subr.bf16.mxu0 0
      %904 = vmatpush1.bf16.msra.mxu0 0
      %905 = vmatprep.subr.bf16.mxu0 0
      %906 = vmatpush1.bf16.msra.mxu0 0
      %907 = vmatprep.mubr.bf16.mxu0 0
      %908 = vmatmul.mubr.bf16.gmra.mrb[0].mxu0 %v583
      %v909 = vpop.f32.mrb[0].mxu0
      %v910 = vadd.f32 0.0, %v909
      %v911 = vpop.f32.mrb[0].mxu0
      %v912 = vpop.f32.mrb[0].mxu0
      %v913 = vadd.f32 0.0, %v912
      %v914 = vpop.f32.mrb[0].mxu0
      %915 = vmatprep.mubr.bf16.mxu0 0
      %916 = vmatmul.mubr.bf16.gmra.mrb[0].mxu0 %v586
      %v917 = vpop.f32.mrb[0].mxu0
      %v918 = vadd.f32 0.0, %v917
      %v919 = vpop.f32.mrb[0].mxu0
      %v920 = vpop.f32.mrb[0].mxu0
      %v921 = vadd.f32 0.0, %v920
      %v922 = vpop.f32.mrb[0].mxu0
      %923 = vmatprep.mubr.bf16.mxu0 0
      %924 = vmatmul.mubr.bf16.gmra.mrb[0].mxu0 %v589
      %v925 = vpop.f32.mrb[0].mxu0
      %v926 = vadd.f32 0.0, %v925
      %v927 = vpop.f32.mrb[0].mxu0
      %v928 = vpop.f32.mrb[0].mxu0
      %v929 = vadd.f32 0.0, %v928
      %v930 = vpop.f32.mrb[0].mxu0
      %931 = vmatprep.mubr.bf16.mxu0 0
      %932 = vmatmul.mubr.bf16.gmra.mrb[0].mxu0 %v592
      %v933 = vpop.f32.mrb[0].mxu0
      %v934 = vadd.f32 0.0, %v933
      %v935 = vpop.f32.mrb[0].mxu0
      %v936 = vpop.f32.mrb[0].mxu0
      %v937 = vadd.f32 0.0, %v936
      %v938 = vpop.f32.mrb[0].mxu0
      %939 = vmatprep.mubr.bf16.mxu0 0
      %940 = vmatmul.mubr.bf16.gmra.mrb[0].mxu0 %v595
      %v941 = vpop.f32.mrb[0].mxu0
      %v942 = vadd.f32 0.0, %v941
      %v943 = vpop.f32.mrb[0].mxu0
      %v944 = vpop.f32.mrb[0].mxu0
      %v945 = vadd.f32 0.0, %v944
      %v946 = vpop.f32.mrb[0].mxu0
      %947 = vmatprep.mubr.bf16.mxu0 0
      %948 = vmatmul.mubr.bf16.gmra.mrb[0].mxu0 %v598
      %v949 = vpop.f32.mrb[0].mxu0
      %v950 = vadd.f32 0.0, %v949
      %v951 = vpop.f32.mrb[0].mxu0
      %v952 = vpop.f32.mrb[0].mxu0
      %v953 = vadd.f32 0.0, %v952
      %v954 = vpop.f32.mrb[0].mxu0
      %955 = vmatprep.mubr.bf16.mxu0 0
      %956 = vmatmul.mubr.bf16.gmra.mrb[0].mxu0 %v601
      %v957 = vpop.f32.mrb[0].mxu0
      %v958 = vadd.f32 0.0, %v957
      %v959 = vpop.f32.mrb[0].mxu0
      %v960 = vpop.f32.mrb[0].mxu0
      %v961 = vadd.f32 0.0, %v960
      %v962 = vpop.f32.mrb[0].mxu0
      %963 = vmatprep.mubr.bf16.mxu0 0
      %964 = vmatmul.mubr.bf16.gmra.mrb[0].mxu0 %v873
      %v965 = vpop.f32.mrb[0].mxu0
      %v966 = vadd.f32 0.0, %v965
      %v967 = vpop.f32.mrb[0].mxu0
      %v968 = vpop.f32.mrb[0].mxu0
      %v969 = vadd.f32 0.0, %v968
      %v970 = vpop.f32.mrb[0].mxu0
      %971 = vdwg.mxu0
      %v972 = vadd.f32 %v836, %v910
      %v973 = vadd.f32 %v837, %v913
      %v974 = vadd.f32 %v838, %v918
      %v975 = vadd.f32 %v839, %v921
      %v976 = vadd.f32 %v840, %v926
      %v977 = vadd.f32 %v841, %v929
      %v978 = vadd.f32 %v842, %v934
      %v979 = vadd.f32 %v843, %v937
      %v980 = vadd.f32 %v844, %v942
      %v981 = vadd.f32 %v845, %v945
      %v982 = vadd.f32 %v846, %v950
      %v983 = vadd.f32 %v847, %v953
      %v984 = vadd.f32 %v848, %v958
      %v985 = vadd.f32 %v849, %v961
      %v986 = vadd.f32 %v850, %v966
      %v987 = vadd.f32 %v851, %v969
      %s988 = scalar_lea.vmem %s2, 64
      %v989 = vld [vmem:[%s988] sm:$0xf]
      %v990 = vld [vmem:[%s988 + $0x4] sm:$0xf]
      %v991 = vld [vmem:[%s988 + $0x8] sm:$0xf]
      %v992 = vld [vmem:[%s988 + $0xc] sm:$0xf]
      %v994 = vunpack.c.l.b16 %v350
      %v995 = vpack.c.b16 %v994, %v858
      %v1000 = vunpack.c.l.b16 %v989
      %v1001 = vunpack.c.l.b16 %v990
      %v1002 = vunpack.c.l.b16 %v991
      %v1003 = vunpack.c.l.b16 %v992
      %v1004 = vpack.c.b16 %v1001, %v1000
      %v1005 = vpack.c.b16 %v1003, %v1002
      %v1009 = vsel %vm414, %v995, 0
      %1011 = vmatprep.subr.bf16.mxu0 0
      %1012 = vmatpush1.bf16.msra.mxu0 %v1004
      %1013 = vmatprep.subr.bf16.mxu0 0
      %1014 = vmatpush1.bf16.msra.mxu0 %v1005
      %1015 = vmatprep.subr.bf16.mxu0 0
      %1016 = vmatpush1.bf16.msra.mxu0 0
      %1017 = vmatprep.subr.bf16.mxu0 0
      %1018 = vmatpush1.bf16.msra.mxu0 0
      %1019 = vmatprep.subr.bf16.mxu0 0
      %1020 = vmatpush1.bf16.msra.mxu0 0
      %1021 = vmatprep.subr.bf16.mxu0 0
      %1022 = vmatpush1.bf16.msra.mxu0 0
      %1023 = vmatprep.subr.bf16.mxu0 0
      %1024 = vmatpush1.bf16.msra.mxu0 0
      %1025 = vmatprep.subr.bf16.mxu0 0
      %1026 = vmatpush1.bf16.msra.mxu0 0
      %1027 = vmatprep.subr.bf16.mxu0 0
      %1028 = vmatpush1.bf16.msra.mxu0 0
      %1029 = vmatprep.subr.bf16.mxu0 0
      %1030 = vmatpush1.bf16.msra.mxu0 0
      %1031 = vmatprep.subr.bf16.mxu0 0
      %1032 = vmatpush1.bf16.msra.mxu0 0
      %1033 = vmatprep.subr.bf16.mxu0 0
      %1034 = vmatpush1.bf16.msra.mxu0 0
      %1035 = vmatprep.subr.bf16.mxu0 0
      %1036 = vmatpush1.bf16.msra.mxu0 0
      %1037 = vmatprep.subr.bf16.mxu0 0
      %1038 = vmatpush1.bf16.msra.mxu0 0
      %1039 = vmatprep.subr.bf16.mxu0 0
      %1040 = vmatpush1.bf16.msra.mxu0 0
      %1041 = vmatprep.subr.bf16.mxu0 0
      %1042 = vmatpush1.bf16.msra.mxu0 0
      %1043 = vmatprep.mubr.bf16.mxu0 0
      %1044 = vmatmul.mubr.bf16.gmra.mrb[0].mxu0 %v422
      %v1045 = vpop.f32.mrb[0].mxu0
      %v1046 = vadd.f32 0.0, %v1045
      %v1047 = vpop.f32.mrb[0].mxu0
      %v1048 = vpop.f32.mrb[0].mxu0
      %v1049 = vadd.f32 0.0, %v1048
      %v1050 = vpop.f32.mrb[0].mxu0
      %1051 = vmatprep.mubr.bf16.mxu0 0
      %1052 = vmatmul.mubr.bf16.gmra.mrb[0].mxu0 %v425
      %v1053 = vpop.f32.mrb[0].mxu0
      %v1054 = vadd.f32 0.0, %v1053
      %v1055 = vpop.f32.mrb[0].mxu0
      %v1056 = vpop.f32.mrb[0].mxu0
      %v1057 = vadd.f32 0.0, %v1056
      %v1058 = vpop.f32.mrb[0].mxu0
      %1059 = vmatprep.mubr.bf16.mxu0 0
      %1060 = vmatmul.mubr.bf16.gmra.mrb[0].mxu0 %v428
      %v1061 = vpop.f32.mrb[0].mxu0
      %v1062 = vadd.f32 0.0, %v1061
      %v1063 = vpop.f32.mrb[0].mxu0
      %v1064 = vpop.f32.mrb[0].mxu0
      %v1065 = vadd.f32 0.0, %v1064
      %v1066 = vpop.f32.mrb[0].mxu0
      %1067 = vmatprep.mubr.bf16.mxu0 0
      %1068 = vmatmul.mubr.bf16.gmra.mrb[0].mxu0 %v431
      %v1069 = vpop.f32.mrb[0].mxu0
      %v1070 = vadd.f32 0.0, %v1069
      %v1071 = vpop.f32.mrb[0].mxu0
      %v1072 = vpop.f32.mrb[0].mxu0
      %v1073 = vadd.f32 0.0, %v1072
      %v1074 = vpop.f32.mrb[0].mxu0
      %1075 = vmatprep.mubr.bf16.mxu0 0
      %1076 = vmatmul.mubr.bf16.gmra.mrb[0].mxu0 %v434
      %v1077 = vpop.f32.mrb[0].mxu0
      %v1078 = vadd.f32 0.0, %v1077
      %v1079 = vpop.f32.mrb[0].mxu0
      %v1080 = vpop.f32.mrb[0].mxu0
      %v1081 = vadd.f32 0.0, %v1080
      %v1082 = vpop.f32.mrb[0].mxu0
      %1083 = vmatprep.mubr.bf16.mxu0 0
      %1084 = vmatmul.mubr.bf16.gmra.mrb[0].mxu0 %v437
      %v1085 = vpop.f32.mrb[0].mxu0
      %v1086 = vadd.f32 0.0, %v1085
      %v1087 = vpop.f32.mrb[0].mxu0
      %v1088 = vpop.f32.mrb[0].mxu0
      %v1089 = vadd.f32 0.0, %v1088
      %v1090 = vpop.f32.mrb[0].mxu0
      %1091 = vmatprep.mubr.bf16.mxu0 0
      %1092 = vmatmul.mubr.bf16.gmra.mrb[0].mxu0 %v737
      %v1093 = vpop.f32.mrb[0].mxu0
      %v1094 = vadd.f32 0.0, %v1093
      %v1095 = vpop.f32.mrb[0].mxu0
      %v1096 = vpop.f32.mrb[0].mxu0
      %v1097 = vadd.f32 0.0, %v1096
      %v1098 = vpop.f32.mrb[0].mxu0
      %1099 = vmatprep.mubr.bf16.mxu0 0
      %1100 = vmatmul.mubr.bf16.gmra.mrb[0].mxu0 %v1009
      %v1101 = vpop.f32.mrb[0].mxu0
      %v1102 = vadd.f32 0.0, %v1101
      %v1103 = vpop.f32.mrb[0].mxu0
      %v1104 = vpop.f32.mrb[0].mxu0
      %v1105 = vadd.f32 0.0, %v1104
      %v1106 = vpop.f32.mrb[0].mxu0
      %1107 = vdwg.mxu0
      %v1108 = vadd.f32 %v972, %v1046
      %v1109 = vadd.f32 %v973, %v1049
      %v1110 = vadd.f32 %v974, %v1054
      %v1111 = vadd.f32 %v975, %v1057
      %v1112 = vadd.f32 %v976, %v1062
      %v1113 = vadd.f32 %v977, %v1065
      %v1114 = vadd.f32 %v978, %v1070
      %v1115 = vadd.f32 %v979, %v1073
      %v1116 = vadd.f32 %v980, %v1078
      %v1117 = vadd.f32 %v981, %v1081
      %v1118 = vadd.f32 %v982, %v1086
      %v1119 = vadd.f32 %v983, %v1089
      %v1120 = vadd.f32 %v984, %v1094
      %v1121 = vadd.f32 %v985, %v1097
      %v1122 = vadd.f32 %v986, %v1102
      %v1123 = vadd.f32 %v987, %v1105
      %1124 = vst.msk [vmem:[#allocation2] sm:$0xff] %vm414, 0.0
      %1125 = vst.msk [vmem:[#allocation2 + $0x8] sm:$0xff] %vm414, 0.0
      %s1126 = scalar_lea.vmem [#allocation2], 144
      %1127 = vst.msk [vmem:[%s1126] sm:$0xff] %vm414, 0.0
      %1128 = vst.msk [vmem:[%s1126 + $0x8] sm:$0xff] %vm414, 0.0
      %s1129 = scalar_lea.vmem [#allocation2], 16
      %1130 = vst.msk [vmem:[%s1129] sm:$0xff] %vm414, %v315
      %1131 = vst.msk [vmem:[%s1129 + $0x8] sm:$0xff] %vm414, %v316
      %1132 = vst.msk [vmem:[%s1129 + $0x10] sm:$0xff] %vm414, %v317
      %1133 = vst.msk [vmem:[%s1129 + $0x18] sm:$0xff] %vm414, %v318
      %1134 = vst.msk [vmem:[%s1129 + $0x20] sm:$0xff] %vm414, %v319
      %1135 = vst.msk [vmem:[%s1129 + $0x28] sm:$0xff] %vm414, %v320
      %1136 = vst.msk [vmem:[%s1129 + $0x30] sm:$0xff] %vm414, %v321
      %1137 = vst.msk [vmem:[%s1129 + $0x38] sm:$0xff] %vm414, %v322
      %1138 = vst.msk [vmem:[%s1129 + $0x40] sm:$0xff] %vm414, %v323
      %1139 = vst.msk [vmem:[%s1129 + $0x48] sm:$0xff] %vm414, %v324
      %1140 = vst.msk [vmem:[%s1129 + $0x50] sm:$0xff] %vm414, %v325
      %1141 = vst.msk [vmem:[%s1129 + $0x58] sm:$0xff] %vm414, %v326
      %1142 = vst.msk [vmem:[%s1129 + $0x60] sm:$0xff] %vm414, %v327
      %1143 = vst.msk [vmem:[%s1129 + $0x68] sm:$0xff] %vm414, %v328
      %1144 = vst.msk [vmem:[%s1129 + $0x70] sm:$0xff] %vm414, %v329
      %1145 = vst.msk [vmem:[%s1129 + $0x78] sm:$0xff] %vm414, %v330
      %v1146 = vld [vmem:[#allocation2] sm:$0xff]
      %v1147 = vld [vmem:[#allocation2 + $0x8] sm:$0xff]
      %v1148 = vld [vmem:[#allocation2 + $0x10] sm:$0xff]
      %v1149 = vld [vmem:[#allocation2 + $0x18] sm:$0xff]
      %v1150 = vld [vmem:[#allocation2 + $0x20] sm:$0xff]
      %v1151 = vld [vmem:[#allocation2 + $0x28] sm:$0xff]
      %v1152 = vld [vmem:[#allocation2 + $0x30] sm:$0xff]
      %v1153 = vld [vmem:[#allocation2 + $0x38] sm:$0xff]
      %v1154 = vld [vmem:[#allocation2 + $0x40] sm:$0xff]
      %v1155 = vld [vmem:[#allocation2 + $0x48] sm:$0xff]
      %v1156 = vld [vmem:[#allocation2 + $0x50] sm:$0xff]
      %v1157 = vld [vmem:[#allocation2 + $0x58] sm:$0xff]
      %v1158 = vld [vmem:[#allocation2 + $0x60] sm:$0xff]
      %v1159 = vld [vmem:[#allocation2 + $0x68] sm:$0xff]
      %v1160 = vld [vmem:[#allocation2 + $0x70] sm:$0xff]
      %v1161 = vld [vmem:[#allocation2 + $0x78] sm:$0xff]
      %v1162 = vld [vmem:[#allocation2 + $0x80] sm:$0xff]
      %v1163 = vld [vmem:[#allocation2 + $0x88] sm:$0xff]
      %v1164 = vld [vmem:[#allocation2 + $0x90] sm:$0xff]
      %v1165 = vld [vmem:[#allocation2 + $0x98] sm:$0xff]
      %v1166 = vld [vmem:[%s3] sm:$0xff]
      %v1167 = vld [vmem:[%s3 + $0x8] sm:$0xff]
      %v1168 = vld [vmem:[%s3 + $0x10] sm:$0xff]
      %v1169 = vld [vmem:[%s3 + $0x18] sm:$0xff]
      %s1170 = scalar_lea.vmem %s3, 32
      %v1171 = vld [vmem:[%s1170] sm:$0xff]
      %v1172 = vld [vmem:[%s1170 + $0x8] sm:$0xff]
      %v1173 = vld [vmem:[%s1170 + $0x10] sm:$0xff]
      %v1174 = vld [vmem:[%s1170 + $0x18] sm:$0xff]
      %v1176 = vsel %vm414, %v1147, 0
      %v1179 = vsel %vm414, %v1148, 0
      %v1182 = vsel %vm414, %v1149, 0
      %v1185 = vsel %vm414, %v1150, 0
      %v1188 = vsel %vm414, %v1151, 0
      %v1191 = vsel %vm414, %v1152, 0
      %v1194 = vsel %vm414, %v1153, 0
      %v1197 = vsel %vm414, %v1154, 0
      %v1200 = vsel %vm414, %v1155, 0
      %v1203 = vsel %vm414, %v1156, 0
      %v1206 = vsel %vm414, %v1157, 0
      %v1209 = vsel %vm414, %v1158, 0
      %v1212 = vsel %vm414, %v1159, 0
      %v1215 = vsel %vm414, %v1160, 0
      %v1218 = vsel %vm414, %v1161, 0
      %v1221 = vsel %vm414, %v1162, 0
      %1223 = vmatprep.subr.mxu0 0.0
      %1224 = vmatpush1.msra.mxu0 %v1171
      %1225 = vmatprep.subr.mxu0 0.0
      %1226 = vmatpush1.msra.mxu0 %v1172
      %1227 = vmatprep.subr.mxu0 0.0
      %1228 = vmatpush1.msra.mxu0 %v1173
      %1229 = vmatprep.subr.mxu0 0.0
      %1230 = vmatpush1.msra.mxu0 %v1174
      %1231 = vmatprep.subr.mxu0 0.0
      %1232 = vmatpush1.msra.mxu0 0.0
      %1233 = vmatprep.subr.mxu0 0.0
      %1234 = vmatpush1.msra.mxu0 0.0
      %1235 = vmatprep.subr.mxu0 0.0
      %1236 = vmatpush1.msra.mxu0 0.0
      %1237 = vmatprep.subr.mxu0 0.0
      %1238 = vmatpush1.msra.mxu0 0.0
      %1239 = vmatprep.subr.mxu0 0.0
      %1240 = vmatpush1.msra.mxu0 0.0
      %1241 = vmatprep.subr.mxu0 0.0
      %1242 = vmatpush1.msra.mxu0 0.0
      %1243 = vmatprep.subr.mxu0 0.0
      %1244 = vmatpush1.msra.mxu0 0.0
      %1245 = vmatprep.subr.mxu0 0.0
      %1246 = vmatpush1.msra.mxu0 0.0
      %1247 = vmatprep.subr.mxu0 0.0
      %1248 = vmatpush1.msra.mxu0 0.0
      %1249 = vmatprep.subr.mxu0 0.0
      %1250 = vmatpush1.msra.mxu0 0.0
      %1251 = vmatprep.subr.mxu0 0.0
      %1252 = vmatpush1.msra.mxu0 0.0
      %1253 = vmatprep.subr.mxu0 0.0
      %1254 = vmatpush1.msra.mxu0 0.0
      %1255 = vmatprep.subr.mxu0 0.0
      %1256 = vmatpush1.msra.mxu0 0.0
      %1257 = vmatprep.subr.mxu0 0.0
      %1258 = vmatpush1.msra.mxu0 0.0
      %1259 = vmatprep.subr.mxu0 0.0
      %1260 = vmatpush1.msra.mxu0 0.0
      %1261 = vmatprep.subr.mxu0 0.0
      %1262 = vmatpush1.msra.mxu0 0.0
      %1263 = vmatprep.subr.mxu0 0.0
      %1264 = vmatpush1.msra.mxu0 0.0
      %1265 = vmatprep.subr.mxu0 0.0
      %1266 = vmatpush1.msra.mxu0 0.0
      %1267 = vmatprep.subr.mxu0 0.0
      %1268 = vmatpush1.msra.mxu0 0.0
      %1269 = vmatprep.subr.mxu0 0.0
      %1270 = vmatpush1.msra.mxu0 0.0
      %1271 = vmatprep.subr.mxu0 0.0
      %1272 = vmatpush1.msra.mxu0 0.0
      %1273 = vmatprep.subr.mxu0 0.0
      %1274 = vmatpush1.msra.mxu0 0.0
      %1275 = vmatprep.subr.mxu0 0.0
      %1276 = vmatpush1.msra.mxu0 0.0
      %1277 = vmatprep.subr.mxu0 0.0
      %1278 = vmatpush1.msra.mxu0 0.0
      %1279 = vmatprep.subr.mxu0 0.0
      %1280 = vmatpush1.msra.mxu0 0.0
      %1281 = vmatprep.subr.mxu0 0.0
      %1282 = vmatpush1.msra.mxu0 0.0
      %1283 = vmatprep.subr.mxu0 0.0
      %1284 = vmatpush1.msra.mxu0 0.0
      %1285 = vmatprep.subr.mxu0 0.0
      %1286 = vmatpush1.msra.mxu0 0.0
      %1287 = vmatprep.mubr.f32.mxu0 0.0
      %1288 = vmatmul.mubr.f32.gmra.mrb[0].mxu0 %v1176
      %v1289 = vpop.f32.mrb[0].mxu0
      %v1290 = vadd.f32 0.0, %v1289
      %v1291 = vpop.f32.mrb[0].mxu0
      %1292 = vmatprep.mubr.f32.mxu0 0.0
      %1293 = vmatmul.mubr.f32.gmra.mrb[0].mxu0 %v1179
      %v1294 = vpop.f32.mrb[0].mxu0
      %v1295 = vadd.f32 0.0, %v1294
      %v1296 = vpop.f32.mrb[0].mxu0
      %1297 = vmatprep.mubr.f32.mxu0 0.0
      %1298 = vmatmul.mubr.f32.gmra.mrb[0].mxu0 %v1182
      %v1299 = vpop.f32.mrb[0].mxu0
      %v1300 = vadd.f32 0.0, %v1299
      %v1301 = vpop.f32.mrb[0].mxu0
      %1302 = vmatprep.mubr.f32.mxu0 0.0
      %1303 = vmatmul.mubr.f32.gmra.mrb[0].mxu0 %v1185
      %v1304 = vpop.f32.mrb[0].mxu0
      %v1305 = vadd.f32 0.0, %v1304
      %v1306 = vpop.f32.mrb[0].mxu0
      %1307 = vmatprep.mubr.f32.mxu0 0.0
      %1308 = vmatmul.mubr.f32.gmra.mrb[0].mxu0 %v1188
      %v1309 = vpop.f32.mrb[0].mxu0
      %v1310 = vadd.f32 0.0, %v1309
      %v1311 = vpop.f32.mrb[0].mxu0
      %1312 = vmatprep.mubr.f32.mxu0 0.0
      %1313 = vmatmul.mubr.f32.gmra.mrb[0].mxu0 %v1191
      %v1314 = vpop.f32.mrb[0].mxu0
      %v1315 = vadd.f32 0.0, %v1314
      %v1316 = vpop.f32.mrb[0].mxu0
      %1317 = vmatprep.mubr.f32.mxu0 0.0
      %1318 = vmatmul.mubr.f32.gmra.mrb[0].mxu0 %v1194
      %v1319 = vpop.f32.mrb[0].mxu0
      %v1320 = vadd.f32 0.0, %v1319
      %v1321 = vpop.f32.mrb[0].mxu0
      %1322 = vmatprep.mubr.f32.mxu0 0.0
      %1323 = vmatmul.mubr.f32.gmra.mrb[0].mxu0 %v1197
      %v1324 = vpop.f32.mrb[0].mxu0
      %v1325 = vadd.f32 0.0, %v1324
      %v1326 = vpop.f32.mrb[0].mxu0
      %1327 = vmatprep.mubr.f32.mxu0 0.0
      %1328 = vmatmul.mubr.f32.gmra.mrb[0].mxu0 %v1200
      %v1329 = vpop.f32.mrb[0].mxu0
      %v1330 = vadd.f32 0.0, %v1329
      %v1331 = vpop.f32.mrb[0].mxu0
      %1332 = vmatprep.mubr.f32.mxu0 0.0
      %1333 = vmatmul.mubr.f32.gmra.mrb[0].mxu0 %v1203
      %v1334 = vpop.f32.mrb[0].mxu0
      %v1335 = vadd.f32 0.0, %v1334
      %v1336 = vpop.f32.mrb[0].mxu0
      %1337 = vmatprep.mubr.f32.mxu0 0.0
      %1338 = vmatmul.mubr.f32.gmra.mrb[0].mxu0 %v1206
      %v1339 = vpop.f32.mrb[0].mxu0
      %v1340 = vadd.f32 0.0, %v1339
      %v1341 = vpop.f32.mrb[0].mxu0
      %1342 = vmatprep.mubr.f32.mxu0 0.0
      %1343 = vmatmul.mubr.f32.gmra.mrb[0].mxu0 %v1209
      %v1344 = vpop.f32.mrb[0].mxu0
      %v1345 = vadd.f32 0.0, %v1344
      %v1346 = vpop.f32.mrb[0].mxu0
      %1347 = vmatprep.mubr.f32.mxu0 0.0
      %1348 = vmatmul.mubr.f32.gmra.mrb[0].mxu0 %v1212
      %v1349 = vpop.f32.mrb[0].mxu0
      %v1350 = vadd.f32 0.0, %v1349
      %v1351 = vpop.f32.mrb[0].mxu0
      %1352 = vmatprep.mubr.f32.mxu0 0.0
      %1353 = vmatmul.mubr.f32.gmra.mrb[0].mxu0 %v1215
      %v1354 = vpop.f32.mrb[0].mxu0
      %v1355 = vadd.f32 0.0, %v1354
      %v1356 = vpop.f32.mrb[0].mxu0
      %1357 = vmatprep.mubr.f32.mxu0 0.0
      %1358 = vmatmul.mubr.f32.gmra.mrb[0].mxu0 %v1218
      %v1359 = vpop.f32.mrb[0].mxu0
      %v1360 = vadd.f32 0.0, %v1359
      %v1361 = vpop.f32.mrb[0].mxu0
      %1362 = vmatprep.mubr.f32.mxu0 0.0
      %1363 = vmatmul.mubr.f32.gmra.mrb[0].mxu0 %v1221
      %v1364 = vpop.f32.mrb[0].mxu0
      %v1365 = vadd.f32 0.0, %v1364
      %v1366 = vpop.f32.mrb[0].mxu0
      %1367 = vdwg.mxu0
      %v1369 = vsel %vm414, %v1146, 0
      %1371 = vmatprep.subr.mxu0 0.0
      %1372 = vmatpush1.msra.mxu0 %v1166
      %1373 = vmatprep.subr.mxu0 0.0
      %1374 = vmatpush1.msra.mxu0 %v1167
      %1375 = vmatprep.subr.mxu0 0.0
      %1376 = vmatpush1.msra.mxu0 %v1168
      %1377 = vmatprep.subr.mxu0 0.0
      %1378 = vmatpush1.msra.mxu0 %v1169
      %1379 = vmatprep.subr.mxu0 0.0
      %1380 = vmatpush1.msra.mxu0 0.0
      %1381 = vmatprep.subr.mxu0 0.0
      %1382 = vmatpush1.msra.mxu0 0.0
      %1383 = vmatprep.subr.mxu0 0.0
      %1384 = vmatpush1.msra.mxu0 0.0
      %1385 = vmatprep.subr.mxu0 0.0
      %1386 = vmatpush1.msra.mxu0 0.0
      %1387 = vmatprep.subr.mxu0 0.0
      %1388 = vmatpush1.msra.mxu0 0.0
      %1389 = vmatprep.subr.mxu0 0.0
      %1390 = vmatpush1.msra.mxu0 0.0
      %1391 = vmatprep.subr.mxu0 0.0
      %1392 = vmatpush1.msra.mxu0 0.0
      %1393 = vmatprep.subr.mxu0 0.0
      %1394 = vmatpush1.msra.mxu0 0.0
      %1395 = vmatprep.subr.mxu0 0.0
      %1396 = vmatpush1.msra.mxu0 0.0
      %1397 = vmatprep.subr.mxu0 0.0
      %1398 = vmatpush1.msra.mxu0 0.0
      %1399 = vmatprep.subr.mxu0 0.0
      %1400 = vmatpush1.msra.mxu0 0.0
      %1401 = vmatprep.subr.mxu0 0.0
      %1402 = vmatpush1.msra.mxu0 0.0
      %1403 = vmatprep.subr.mxu0 0.0
      %1404 = vmatpush1.msra.mxu0 0.0
      %1405 = vmatprep.subr.mxu0 0.0
      %1406 = vmatpush1.msra.mxu0 0.0
      %1407 = vmatprep.subr.mxu0 0.0
      %1408 = vmatpush1.msra.mxu0 0.0
      %1409 = vmatprep.subr.mxu0 0.0
      %1410 = vmatpush1.msra.mxu0 0.0
      %1411 = vmatprep.subr.mxu0 0.0
      %1412 = vmatpush1.msra.mxu0 0.0
      %1413 = vmatprep.subr.mxu0 0.0
      %1414 = vmatpush1.msra.mxu0 0.0
      %1415 = vmatprep.subr.mxu0 0.0
      %1416 = vmatpush1.msra.mxu0 0.0
      %1417 = vmatprep.subr.mxu0 0.0
      %1418 = vmatpush1.msra.mxu0 0.0
      %1419 = vmatprep.subr.mxu0 0.0
      %1420 = vmatpush1.msra.mxu0 0.0
      %1421 = vmatprep.subr.mxu0 0.0
      %1422 = vmatpush1.msra.mxu0 0.0
      %1423 = vmatprep.subr.mxu0 0.0
      %1424 = vmatpush1.msra.mxu0 0.0
      %1425 = vmatprep.subr.mxu0 0.0
      %1426 = vmatpush1.msra.mxu0 0.0
      %1427 = vmatprep.subr.mxu0 0.0
      %1428 = vmatpush1.msra.mxu0 0.0
      %1429 = vmatprep.subr.mxu0 0.0
      %1430 = vmatpush1.msra.mxu0 0.0
      %1431 = vmatprep.subr.mxu0 0.0
      %1432 = vmatpush1.msra.mxu0 0.0
      %1433 = vmatprep.subr.mxu0 0.0
      %1434 = vmatpush1.msra.mxu0 0.0
      %1435 = vmatprep.mubr.f32.mxu0 0.0
      %1436 = vmatmul.mubr.f32.gmra.mrb[0].mxu0 %v1369
      %v1437 = vpop.f32.mrb[0].mxu0
      %v1438 = vadd.f32 %v1290, %v1437
      %v1439 = vpop.f32.mrb[0].mxu0
      %1440 = vmatprep.mubr.f32.mxu0 0.0
      %1441 = vmatmul.mubr.f32.gmra.mrb[0].mxu0 %v1176
      %v1442 = vpop.f32.mrb[0].mxu0
      %v1443 = vadd.f32 %v1295, %v1442
      %v1444 = vpop.f32.mrb[0].mxu0
      %1445 = vmatprep.mubr.f32.mxu0 0.0
      %1446 = vmatmul.mubr.f32.gmra.mrb[0].mxu0 %v1179
      %v1447 = vpop.f32.mrb[0].mxu0
      %v1448 = vadd.f32 %v1300, %v1447
      %v1449 = vpop.f32.mrb[0].mxu0
      %1450 = vmatprep.mubr.f32.mxu0 0.0
      %1451 = vmatmul.mubr.f32.gmra.mrb[0].mxu0 %v1182
      %v1452 = vpop.f32.mrb[0].mxu0
      %v1453 = vadd.f32 %v1305, %v1452
      %v1454 = vpop.f32.mrb[0].mxu0
      %1455 = vmatprep.mubr.f32.mxu0 0.0
      %1456 = vmatmul.mubr.f32.gmra.mrb[0].mxu0 %v1185
      %v1457 = vpop.f32.mrb[0].mxu0
      %v1458 = vadd.f32 %v1310, %v1457
      %v1459 = vpop.f32.mrb[0].mxu0
      %1460 = vmatprep.mubr.f32.mxu0 0.0
      %1461 = vmatmul.mubr.f32.gmra.mrb[0].mxu0 %v1188
      %v1462 = vpop.f32.mrb[0].mxu0
      %v1463 = vadd.f32 %v1315, %v1462
      %v1464 = vpop.f32.mrb[0].mxu0
      %1465 = vmatprep.mubr.f32.mxu0 0.0
      %1466 = vmatmul.mubr.f32.gmra.mrb[0].mxu0 %v1191
      %v1467 = vpop.f32.mrb[0].mxu0
      %v1468 = vadd.f32 %v1320, %v1467
      %v1469 = vpop.f32.mrb[0].mxu0
      %1470 = vmatprep.mubr.f32.mxu0 0.0
      %1471 = vmatmul.mubr.f32.gmra.mrb[0].mxu0 %v1194
      %v1472 = vpop.f32.mrb[0].mxu0
      %v1473 = vadd.f32 %v1325, %v1472
      %v1474 = vpop.f32.mrb[0].mxu0
      %1475 = vmatprep.mubr.f32.mxu0 0.0
      %1476 = vmatmul.mubr.f32.gmra.mrb[0].mxu0 %v1197
      %v1477 = vpop.f32.mrb[0].mxu0
      %v1478 = vadd.f32 %v1330, %v1477
      %v1479 = vpop.f32.mrb[0].mxu0
      %1480 = vmatprep.mubr.f32.mxu0 0.0
      %1481 = vmatmul.mubr.f32.gmra.mrb[0].mxu0 %v1200
      %v1482 = vpop.f32.mrb[0].mxu0
      %v1483 = vadd.f32 %v1335, %v1482
      %v1484 = vpop.f32.mrb[0].mxu0
      %1485 = vmatprep.mubr.f32.mxu0 0.0
      %1486 = vmatmul.mubr.f32.gmra.mrb[0].mxu0 %v1203
      %v1487 = vpop.f32.mrb[0].mxu0
      %v1488 = vadd.f32 %v1340, %v1487
      %v1489 = vpop.f32.mrb[0].mxu0
      %1490 = vmatprep.mubr.f32.mxu0 0.0
      %1491 = vmatmul.mubr.f32.gmra.mrb[0].mxu0 %v1206
      %v1492 = vpop.f32.mrb[0].mxu0
      %v1493 = vadd.f32 %v1345, %v1492
      %v1494 = vpop.f32.mrb[0].mxu0
      %1495 = vmatprep.mubr.f32.mxu0 0.0
      %1496 = vmatmul.mubr.f32.gmra.mrb[0].mxu0 %v1209
      %v1497 = vpop.f32.mrb[0].mxu0
      %v1498 = vadd.f32 %v1350, %v1497
      %v1499 = vpop.f32.mrb[0].mxu0
      %1500 = vmatprep.mubr.f32.mxu0 0.0
      %1501 = vmatmul.mubr.f32.gmra.mrb[0].mxu0 %v1212
      %v1502 = vpop.f32.mrb[0].mxu0
      %v1503 = vadd.f32 %v1355, %v1502
      %v1504 = vpop.f32.mrb[0].mxu0
      %1505 = vmatprep.mubr.f32.mxu0 0.0
      %1506 = vmatmul.mubr.f32.gmra.mrb[0].mxu0 %v1215
      %v1507 = vpop.f32.mrb[0].mxu0
      %v1508 = vadd.f32 %v1360, %v1507
      %v1509 = vpop.f32.mrb[0].mxu0
      %1510 = vmatprep.mubr.f32.mxu0 0.0
      %1511 = vmatmul.mubr.f32.gmra.mrb[0].mxu0 %v1218
      %v1512 = vpop.f32.mrb[0].mxu0
      %v1513 = vadd.f32 %v1365, %v1512
      %v1514 = vpop.f32.mrb[0].mxu0
      %1515 = vdwg.mxu0
      %s1516 = scalar_lea.vmem %s3, 64
      %v1517 = vld [vmem:[%s1516] sm:$0xff]
      %v1518 = vld [vmem:[%s1516 + $0x8] sm:$0xff]
      %v1519 = vld [vmem:[%s1516 + $0x10] sm:$0xff]
      %v1520 = vld [vmem:[%s1516 + $0x18] sm:$0xff]
      %v1522 = vsel %vm414, %v1163, 0
      %1524 = vmatprep.subr.mxu0 0.0
      %1525 = vmatpush1.msra.mxu0 %v1517
      %1526 = vmatprep.subr.mxu0 0.0
      %1527 = vmatpush1.msra.mxu0 %v1518
      %1528 = vmatprep.subr.mxu0 0.0
      %1529 = vmatpush1.msra.mxu0 %v1519
      %1530 = vmatprep.subr.mxu0 0.0
      %1531 = vmatpush1.msra.mxu0 %v1520
      %1532 = vmatprep.subr.mxu0 0.0
      %1533 = vmatpush1.msra.mxu0 0.0
      %1534 = vmatprep.subr.mxu0 0.0
      %1535 = vmatpush1.msra.mxu0 0.0
      %1536 = vmatprep.subr.mxu0 0.0
      %1537 = vmatpush1.msra.mxu0 0.0
      %1538 = vmatprep.subr.mxu0 0.0
      %1539 = vmatpush1.msra.mxu0 0.0
      %1540 = vmatprep.subr.mxu0 0.0
      %1541 = vmatpush1.msra.mxu0 0.0
      %1542 = vmatprep.subr.mxu0 0.0
      %1543 = vmatpush1.msra.mxu0 0.0
      %1544 = vmatprep.subr.mxu0 0.0
      %1545 = vmatpush1.msra.mxu0 0.0
      %1546 = vmatprep.subr.mxu0 0.0
      %1547 = vmatpush1.msra.mxu0 0.0
      %1548 = vmatprep.subr.mxu0 0.0
      %1549 = vmatpush1.msra.mxu0 0.0
      %1550 = vmatprep.subr.mxu0 0.0
      %1551 = vmatpush1.msra.mxu0 0.0
      %1552 = vmatprep.subr.mxu0 0.0
      %1553 = vmatpush1.msra.mxu0 0.0
      %1554 = vmatprep.subr.mxu0 0.0
      %1555 = vmatpush1.msra.mxu0 0.0
      %1556 = vmatprep.subr.mxu0 0.0
      %1557 = vmatpush1.msra.mxu0 0.0
      %1558 = vmatprep.subr.mxu0 0.0
      %1559 = vmatpush1.msra.mxu0 0.0
      %1560 = vmatprep.subr.mxu0 0.0
      %1561 = vmatpush1.msra.mxu0 0.0
      %1562 = vmatprep.subr.mxu0 0.0
      %1563 = vmatpush1.msra.mxu0 0.0
      %1564 = vmatprep.subr.mxu0 0.0
      %1565 = vmatpush1.msra.mxu0 0.0
      %1566 = vmatprep.subr.mxu0 0.0
      %1567 = vmatpush1.msra.mxu0 0.0
      %1568 = vmatprep.subr.mxu0 0.0
      %1569 = vmatpush1.msra.mxu0 0.0
      %1570 = vmatprep.subr.mxu0 0.0
      %1571 = vmatpush1.msra.mxu0 0.0
      %1572 = vmatprep.subr.mxu0 0.0
      %1573 = vmatpush1.msra.mxu0 0.0
      %1574 = vmatprep.subr.mxu0 0.0
      %1575 = vmatpush1.msra.mxu0 0.0
      %1576 = vmatprep.subr.mxu0 0.0
      %1577 = vmatpush1.msra.mxu0 0.0
      %1578 = vmatprep.subr.mxu0 0.0
      %1579 = vmatpush1.msra.mxu0 0.0
      %1580 = vmatprep.subr.mxu0 0.0
      %1581 = vmatpush1.msra.mxu0 0.0
      %1582 = vmatprep.subr.mxu0 0.0
      %1583 = vmatpush1.msra.mxu0 0.0
      %1584 = vmatprep.subr.mxu0 0.0
      %1585 = vmatpush1.msra.mxu0 0.0
      %1586 = vmatprep.subr.mxu0 0.0
      %1587 = vmatpush1.msra.mxu0 0.0
      %1588 = vmatprep.mubr.f32.mxu0 0.0
      %1589 = vmatmul.mubr.f32.gmra.mrb[0].mxu0 %v1179
      %v1590 = vpop.f32.mrb[0].mxu0
      %v1591 = vadd.f32 0.0, %v1590
      %v1592 = vpop.f32.mrb[0].mxu0
      %1593 = vmatprep.mubr.f32.mxu0 0.0
      %1594 = vmatmul.mubr.f32.gmra.mrb[0].mxu0 %v1182
      %v1595 = vpop.f32.mrb[0].mxu0
      %v1596 = vadd.f32 0.0, %v1595
      %v1597 = vpop.f32.mrb[0].mxu0
      %1598 = vmatprep.mubr.f32.mxu0 0.0
      %1599 = vmatmul.mubr.f32.gmra.mrb[0].mxu0 %v1185
      %v1600 = vpop.f32.mrb[0].mxu0
      %v1601 = vadd.f32 0.0, %v1600
      %v1602 = vpop.f32.mrb[0].mxu0
      %1603 = vmatprep.mubr.f32.mxu0 0.0
      %1604 = vmatmul.mubr.f32.gmra.mrb[0].mxu0 %v1188
      %v1605 = vpop.f32.mrb[0].mxu0
      %v1606 = vadd.f32 0.0, %v1605
      %v1607 = vpop.f32.mrb[0].mxu0
      %1608 = vmatprep.mubr.f32.mxu0 0.0
      %1609 = vmatmul.mubr.f32.gmra.mrb[0].mxu0 %v1191
      %v1610 = vpop.f32.mrb[0].mxu0
      %v1611 = vadd.f32 0.0, %v1610
      %v1612 = vpop.f32.mrb[0].mxu0
      %1613 = vmatprep.mubr.f32.mxu0 0.0
      %1614 = vmatmul.mubr.f32.gmra.mrb[0].mxu0 %v1194
      %v1615 = vpop.f32.mrb[0].mxu0
      %v1616 = vadd.f32 0.0, %v1615
      %v1617 = vpop.f32.mrb[0].mxu0
      %1618 = vmatprep.mubr.f32.mxu0 0.0
      %1619 = vmatmul.mubr.f32.gmra.mrb[0].mxu0 %v1197
      %v1620 = vpop.f32.mrb[0].mxu0
      %v1621 = vadd.f32 0.0, %v1620
      %v1622 = vpop.f32.mrb[0].mxu0
      %1623 = vmatprep.mubr.f32.mxu0 0.0
      %1624 = vmatmul.mubr.f32.gmra.mrb[0].mxu0 %v1200
      %v1625 = vpop.f32.mrb[0].mxu0
      %v1626 = vadd.f32 0.0, %v1625
      %v1627 = vpop.f32.mrb[0].mxu0
      %1628 = vmatprep.mubr.f32.mxu0 0.0
      %1629 = vmatmul.mubr.f32.gmra.mrb[0].mxu0 %v1203
      %v1630 = vpop.f32.mrb[0].mxu0
      %v1631 = vadd.f32 0.0, %v1630
      %v1632 = vpop.f32.mrb[0].mxu0
      %1633 = vmatprep.mubr.f32.mxu0 0.0
      %1634 = vmatmul.mubr.f32.gmra.mrb[0].mxu0 %v1206
      %v1635 = vpop.f32.mrb[0].mxu0
      %v1636 = vadd.f32 0.0, %v1635
      %v1637 = vpop.f32.mrb[0].mxu0
      %1638 = vmatprep.mubr.f32.mxu0 0.0
      %1639 = vmatmul.mubr.f32.gmra.mrb[0].mxu0 %v1209
      %v1640 = vpop.f32.mrb[0].mxu0
      %v1641 = vadd.f32 0.0, %v1640
      %v1642 = vpop.f32.mrb[0].mxu0
      %1643 = vmatprep.mubr.f32.mxu0 0.0
      %1644 = vmatmul.mubr.f32.gmra.mrb[0].mxu0 %v1212
      %v1645 = vpop.f32.mrb[0].mxu0
      %v1646 = vadd.f32 0.0, %v1645
      %v1647 = vpop.f32.mrb[0].mxu0
      %1648 = vmatprep.mubr.f32.mxu0 0.0
      %1649 = vmatmul.mubr.f32.gmra.mrb[0].mxu0 %v1215
      %v1650 = vpop.f32.mrb[0].mxu0
      %v1651 = vadd.f32 0.0, %v1650
      %v1652 = vpop.f32.mrb[0].mxu0
      %1653 = vmatprep.mubr.f32.mxu0 0.0
      %1654 = vmatmul.mubr.f32.gmra.mrb[0].mxu0 %v1218
      %v1655 = vpop.f32.mrb[0].mxu0
      %v1656 = vadd.f32 0.0, %v1655
      %v1657 = vpop.f32.mrb[0].mxu0
      %1658 = vmatprep.mubr.f32.mxu0 0.0
      %1659 = vmatmul.mubr.f32.gmra.mrb[0].mxu0 %v1221
      %v1660 = vpop.f32.mrb[0].mxu0
      %v1661 = vadd.f32 0.0, %v1660
      %v1662 = vpop.f32.mrb[0].mxu0
      %1663 = vmatprep.mubr.f32.mxu0 0.0
      %1664 = vmatmul.mubr.f32.gmra.mrb[0].mxu0 %v1522
      %v1665 = vpop.f32.mrb[0].mxu0
      %v1666 = vadd.f32 0.0, %v1665
      %v1667 = vpop.f32.mrb[0].mxu0
      %1668 = vdwg.mxu0
      %v1669 = vadd.f32 %v1438, %v1591
      %v1670 = vadd.f32 %v1443, %v1596
      %v1671 = vadd.f32 %v1448, %v1601
      %v1672 = vadd.f32 %v1453, %v1606
      %v1673 = vadd.f32 %v1458, %v1611
      %v1674 = vadd.f32 %v1463, %v1616
      %v1675 = vadd.f32 %v1468, %v1621
      %v1676 = vadd.f32 %v1473, %v1626
      %v1677 = vadd.f32 %v1478, %v1631
      %v1678 = vadd.f32 %v1483, %v1636
      %v1679 = vadd.f32 %v1488, %v1641
      %v1680 = vadd.f32 %v1493, %v1646
      %v1681 = vadd.f32 %v1498, %v1651
      %v1682 = vadd.f32 %v1503, %v1656
      %v1683 = vadd.f32 %v1508, %v1661
      %v1684 = vadd.f32 %v1513, %v1666
      %s1685 = scalar_lea.vmem %s3, 96
      %v1686 = vld [vmem:[%s1685] sm:$0xff]
      %v1687 = vld [vmem:[%s1685 + $0x8] sm:$0xff]
      %v1688 = vld [vmem:[%s1685 + $0x10] sm:$0xff]
      %v1689 = vld [vmem:[%s1685 + $0x18] sm:$0xff]
      %v1691 = vsel %vm414, %v1164, 0
      %1693 = vmatprep.subr.mxu0 0.0
      %1694 = vmatpush1.msra.mxu0 %v1686
      %1695 = vmatprep.subr.mxu0 0.0
      %1696 = vmatpush1.msra.mxu0 %v1687
      %1697 = vmatprep.subr.mxu0 0.0
      %1698 = vmatpush1.msra.mxu0 %v1688
      %1699 = vmatprep.subr.mxu0 0.0
      %1700 = vmatpush1.msra.mxu0 %v1689
      %1701 = vmatprep.subr.mxu0 0.0
      %1702 = vmatpush1.msra.mxu0 0.0
      %1703 = vmatprep.subr.mxu0 0.0
      %1704 = vmatpush1.msra.mxu0 0.0
      %1705 = vmatprep.subr.mxu0 0.0
      %1706 = vmatpush1.msra.mxu0 0.0
      %1707 = vmatprep.subr.mxu0 0.0
      %1708 = vmatpush1.msra.mxu0 0.0
      %1709 = vmatprep.subr.mxu0 0.0
      %1710 = vmatpush1.msra.mxu0 0.0
      %1711 = vmatprep.subr.mxu0 0.0
      %1712 = vmatpush1.msra.mxu0 0.0
      %1713 = vmatprep.subr.mxu0 0.0
      %1714 = vmatpush1.msra.mxu0 0.0
      %1715 = vmatprep.subr.mxu0 0.0
      %1716 = vmatpush1.msra.mxu0 0.0
      %1717 = vmatprep.subr.mxu0 0.0
      %1718 = vmatpush1.msra.mxu0 0.0
      %1719 = vmatprep.subr.mxu0 0.0
      %1720 = vmatpush1.msra.mxu0 0.0
      %1721 = vmatprep.subr.mxu0 0.0
      %1722 = vmatpush1.msra.mxu0 0.0
      %1723 = vmatprep.subr.mxu0 0.0
      %1724 = vmatpush1.msra.mxu0 0.0
      %1725 = vmatprep.subr.mxu0 0.0
      %1726 = vmatpush1.msra.mxu0 0.0
      %1727 = vmatprep.subr.mxu0 0.0
      %1728 = vmatpush1.msra.mxu0 0.0
      %1729 = vmatprep.subr.mxu0 0.0
      %1730 = vmatpush1.msra.mxu0 0.0
      %1731 = vmatprep.subr.mxu0 0.0
      %1732 = vmatpush1.msra.mxu0 0.0
      %1733 = vmatprep.subr.mxu0 0.0
      %1734 = vmatpush1.msra.mxu0 0.0
      %1735 = vmatprep.subr.mxu0 0.0
      %1736 = vmatpush1.msra.mxu0 0.0
      %1737 = vmatprep.subr.mxu0 0.0
      %1738 = vmatpush1.msra.mxu0 0.0
      %1739 = vmatprep.subr.mxu0 0.0
      %1740 = vmatpush1.msra.mxu0 0.0
      %1741 = vmatprep.subr.mxu0 0.0
      %1742 = vmatpush1.msra.mxu0 0.0
      %1743 = vmatprep.subr.mxu0 0.0
      %1744 = vmatpush1.msra.mxu0 0.0
      %1745 = vmatprep.subr.mxu0 0.0
      %1746 = vmatpush1.msra.mxu0 0.0
      %1747 = vmatprep.subr.mxu0 0.0
      %1748 = vmatpush1.msra.mxu0 0.0
      %1749 = vmatprep.subr.mxu0 0.0
      %1750 = vmatpush1.msra.mxu0 0.0
      %1751 = vmatprep.subr.mxu0 0.0
      %1752 = vmatpush1.msra.mxu0 0.0
      %1753 = vmatprep.subr.mxu0 0.0
      %1754 = vmatpush1.msra.mxu0 0.0
      %1755 = vmatprep.subr.mxu0 0.0
      %1756 = vmatpush1.msra.mxu0 0.0
      %1757 = vmatprep.mubr.f32.mxu0 0.0
      %1758 = vmatmul.mubr.f32.gmra.mrb[0].mxu0 %v1182
      %v1759 = vpop.f32.mrb[0].mxu0
      %v1760 = vadd.f32 0.0, %v1759
      %v1761 = vpop.f32.mrb[0].mxu0
      %1762 = vmatprep.mubr.f32.mxu0 0.0
      %1763 = vmatmul.mubr.f32.gmra.mrb[0].mxu0 %v1185
      %v1764 = vpop.f32.mrb[0].mxu0
      %v1765 = vadd.f32 0.0, %v1764
      %v1766 = vpop.f32.mrb[0].mxu0
      %1767 = vmatprep.mubr.f32.mxu0 0.0
      %1768 = vmatmul.mubr.f32.gmra.mrb[0].mxu0 %v1188
      %v1769 = vpop.f32.mrb[0].mxu0
      %v1770 = vadd.f32 0.0, %v1769
      %v1771 = vpop.f32.mrb[0].mxu0
      %1772 = vmatprep.mubr.f32.mxu0 0.0
      %1773 = vmatmul.mubr.f32.gmra.mrb[0].mxu0 %v1191
      %v1774 = vpop.f32.mrb[0].mxu0
      %v1775 = vadd.f32 0.0, %v1774
      %v1776 = vpop.f32.mrb[0].mxu0
      %1777 = vmatprep.mubr.f32.mxu0 0.0
      %1778 = vmatmul.mubr.f32.gmra.mrb[0].mxu0 %v1194
      %v1779 = vpop.f32.mrb[0].mxu0
      %v1780 = vadd.f32 0.0, %v1779
      %v1781 = vpop.f32.mrb[0].mxu0
      %1782 = vmatprep.mubr.f32.mxu0 0.0
      %1783 = vmatmul.mubr.f32.gmra.mrb[0].mxu0 %v1197
      %v1784 = vpop.f32.mrb[0].mxu0
      %v1785 = vadd.f32 0.0, %v1784
      %v1786 = vpop.f32.mrb[0].mxu0
      %1787 = vmatprep.mubr.f32.mxu0 0.0
      %1788 = vmatmul.mubr.f32.gmra.mrb[0].mxu0 %v1200
      %v1789 = vpop.f32.mrb[0].mxu0
      %v1790 = vadd.f32 0.0, %v1789
      %v1791 = vpop.f32.mrb[0].mxu0
      %1792 = vmatprep.mubr.f32.mxu0 0.0
      %1793 = vmatmul.mubr.f32.gmra.mrb[0].mxu0 %v1203
      %v1794 = vpop.f32.mrb[0].mxu0
      %v1795 = vadd.f32 0.0, %v1794
      %v1796 = vpop.f32.mrb[0].mxu0
      %1797 = vmatprep.mubr.f32.mxu0 0.0
      %1798 = vmatmul.mubr.f32.gmra.mrb[0].mxu0 %v1206
      %v1799 = vpop.f32.mrb[0].mxu0
      %v1800 = vadd.f32 0.0, %v1799
      %v1801 = vpop.f32.mrb[0].mxu0
      %1802 = vmatprep.mubr.f32.mxu0 0.0
      %1803 = vmatmul.mubr.f32.gmra.mrb[0].mxu0 %v1209
      %v1804 = vpop.f32.mrb[0].mxu0
      %v1805 = vadd.f32 0.0, %v1804
      %v1806 = vpop.f32.mrb[0].mxu0
      %1807 = vmatprep.mubr.f32.mxu0 0.0
      %1808 = vmatmul.mubr.f32.gmra.mrb[0].mxu0 %v1212
      %v1809 = vpop.f32.mrb[0].mxu0
      %v1810 = vadd.f32 0.0, %v1809
      %v1811 = vpop.f32.mrb[0].mxu0
      %1812 = vmatprep.mubr.f32.mxu0 0.0
      %1813 = vmatmul.mubr.f32.gmra.mrb[0].mxu0 %v1215
      %v1814 = vpop.f32.mrb[0].mxu0
      %v1815 = vadd.f32 0.0, %v1814
      %v1816 = vpop.f32.mrb[0].mxu0
      %1817 = vmatprep.mubr.f32.mxu0 0.0
      %1818 = vmatmul.mubr.f32.gmra.mrb[0].mxu0 %v1218
      %v1819 = vpop.f32.mrb[0].mxu0
      %v1820 = vadd.f32 0.0, %v1819
      %v1821 = vpop.f32.mrb[0].mxu0
      %1822 = vmatprep.mubr.f32.mxu0 0.0
      %1823 = vmatmul.mubr.f32.gmra.mrb[0].mxu0 %v1221
      %v1824 = vpop.f32.mrb[0].mxu0
      %v1825 = vadd.f32 0.0, %v1824
      %v1826 = vpop.f32.mrb[0].mxu0
      %1827 = vmatprep.mubr.f32.mxu0 0.0
      %1828 = vmatmul.mubr.f32.gmra.mrb[0].mxu0 %v1522
      %v1829 = vpop.f32.mrb[0].mxu0
      %v1830 = vadd.f32 0.0, %v1829
      %v1831 = vpop.f32.mrb[0].mxu0
      %1832 = vmatprep.mubr.f32.mxu0 0.0
      %1833 = vmatmul.mubr.f32.gmra.mrb[0].mxu0 %v1691
      %v1834 = vpop.f32.mrb[0].mxu0
      %v1835 = vadd.f32 0.0, %v1834
      %v1836 = vpop.f32.mrb[0].mxu0
      %1837 = vdwg.mxu0
      %v1838 = vadd.f32 %v1669, %v1760
      %v1839 = vadd.f32 %v1670, %v1765
      %v1840 = vadd.f32 %v1671, %v1770
      %v1841 = vadd.f32 %v1672, %v1775
      %v1842 = vadd.f32 %v1673, %v1780
      %v1843 = vadd.f32 %v1674, %v1785
      %v1844 = vadd.f32 %v1675, %v1790
      %v1845 = vadd.f32 %v1676, %v1795
      %v1846 = vadd.f32 %v1677, %v1800
      %v1847 = vadd.f32 %v1678, %v1805
      %v1848 = vadd.f32 %v1679, %v1810
      %v1849 = vadd.f32 %v1680, %v1815
      %v1850 = vadd.f32 %v1681, %v1820
      %v1851 = vadd.f32 %v1682, %v1825
      %v1852 = vadd.f32 %v1683, %v1830
      %v1853 = vadd.f32 %v1684, %v1835
      %s1854 = scalar_lea.vmem %s3, 128
      %v1855 = vld [vmem:[%s1854] sm:$0xff]
      %v1856 = vld [vmem:[%s1854 + $0x8] sm:$0xff]
      %v1857 = vld [vmem:[%s1854 + $0x10] sm:$0xff]
      %v1858 = vld [vmem:[%s1854 + $0x18] sm:$0xff]
      %v1860 = vsel %vm414, %v1165, 0
      %1862 = vmatprep.subr.mxu0 0.0
      %1863 = vmatpush1.msra.mxu0 %v1855
      %1864 = vmatprep.subr.mxu0 0.0
      %1865 = vmatpush1.msra.mxu0 %v1856
      %1866 = vmatprep.subr.mxu0 0.0
      %1867 = vmatpush1.msra.mxu0 %v1857
      %1868 = vmatprep.subr.mxu0 0.0
      %1869 = vmatpush1.msra.mxu0 %v1858
      %1870 = vmatprep.subr.mxu0 0.0
      %1871 = vmatpush1.msra.mxu0 0.0
      %1872 = vmatprep.subr.mxu0 0.0
      %1873 = vmatpush1.msra.mxu0 0.0
      %1874 = vmatprep.subr.mxu0 0.0
      %1875 = vmatpush1.msra.mxu0 0.0
      %1876 = vmatprep.subr.mxu0 0.0
      %1877 = vmatpush1.msra.mxu0 0.0
      %1878 = vmatprep.subr.mxu0 0.0
      %1879 = vmatpush1.msra.mxu0 0.0
      %1880 = vmatprep.subr.mxu0 0.0
      %1881 = vmatpush1.msra.mxu0 0.0
      %1882 = vmatprep.subr.mxu0 0.0
      %1883 = vmatpush1.msra.mxu0 0.0
      %1884 = vmatprep.subr.mxu0 0.0
      %1885 = vmatpush1.msra.mxu0 0.0
      %1886 = vmatprep.subr.mxu0 0.0
      %1887 = vmatpush1.msra.mxu0 0.0
      %1888 = vmatprep.subr.mxu0 0.0
      %1889 = vmatpush1.msra.mxu0 0.0
      %1890 = vmatprep.subr.mxu0 0.0
      %1891 = vmatpush1.msra.mxu0 0.0
      %1892 = vmatprep.subr.mxu0 0.0
      %1893 = vmatpush1.msra.mxu0 0.0
      %1894 = vmatprep.subr.mxu0 0.0
      %1895 = vmatpush1.msra.mxu0 0.0
      %1896 = vmatprep.subr.mxu0 0.0
      %1897 = vmatpush1.msra.mxu0 0.0
      %1898 = vmatprep.subr.mxu0 0.0
      %1899 = vmatpush1.msra.mxu0 0.0
      %1900 = vmatprep.subr.mxu0 0.0
      %1901 = vmatpush1.msra.mxu0 0.0
      %1902 = vmatprep.subr.mxu0 0.0
      %1903 = vmatpush1.msra.mxu0 0.0
      %1904 = vmatprep.subr.mxu0 0.0
      %1905 = vmatpush1.msra.mxu0 0.0
      %1906 = vmatprep.subr.mxu0 0.0
      %1907 = vmatpush1.msra.mxu0 0.0
      %1908 = vmatprep.subr.mxu0 0.0
      %1909 = vmatpush1.msra.mxu0 0.0
      %1910 = vmatprep.subr.mxu0 0.0
      %1911 = vmatpush1.msra.mxu0 0.0
      %1912 = vmatprep.subr.mxu0 0.0
      %1913 = vmatpush1.msra.mxu0 0.0
      %1914 = vmatprep.subr.mxu0 0.0
      %1915 = vmatpush1.msra.mxu0 0.0
      %1916 = vmatprep.subr.mxu0 0.0
      %1917 = vmatpush1.msra.mxu0 0.0
      %1918 = vmatprep.subr.mxu0 0.0
      %1919 = vmatpush1.msra.mxu0 0.0
      %1920 = vmatprep.subr.mxu0 0.0
      %1921 = vmatpush1.msra.mxu0 0.0
      %1922 = vmatprep.subr.mxu0 0.0
      %1923 = vmatpush1.msra.mxu0 0.0
      %1924 = vmatprep.subr.mxu0 0.0
      %1925 = vmatpush1.msra.mxu0 0.0
      %1926 = vmatprep.mubr.f32.mxu0 0.0
      %1927 = vmatmul.mubr.f32.gmra.mrb[0].mxu0 %v1185
      %v1928 = vpop.f32.mrb[0].mxu0
      %v1929 = vadd.f32 0.0, %v1928
      %v1930 = vpop.f32.mrb[0].mxu0
      %1931 = vmatprep.mubr.f32.mxu0 0.0
      %1932 = vmatmul.mubr.f32.gmra.mrb[0].mxu0 %v1188
      %v1933 = vpop.f32.mrb[0].mxu0
      %v1934 = vadd.f32 0.0, %v1933
      %v1935 = vpop.f32.mrb[0].mxu0
      %1936 = vmatprep.mubr.f32.mxu0 0.0
      %1937 = vmatmul.mubr.f32.gmra.mrb[0].mxu0 %v1191
      %v1938 = vpop.f32.mrb[0].mxu0
      %v1939 = vadd.f32 0.0, %v1938
      %v1940 = vpop.f32.mrb[0].mxu0
      %1941 = vmatprep.mubr.f32.mxu0 0.0
      %1942 = vmatmul.mubr.f32.gmra.mrb[0].mxu0 %v1194
      %v1943 = vpop.f32.mrb[0].mxu0
      %v1944 = vadd.f32 0.0, %v1943
      %v1945 = vpop.f32.mrb[0].mxu0
      %1946 = vmatprep.mubr.f32.mxu0 0.0
      %1947 = vmatmul.mubr.f32.gmra.mrb[0].mxu0 %v1197
      %v1948 = vpop.f32.mrb[0].mxu0
      %v1949 = vadd.f32 0.0, %v1948
      %v1950 = vpop.f32.mrb[0].mxu0
      %1951 = vmatprep.mubr.f32.mxu0 0.0
      %1952 = vmatmul.mubr.f32.gmra.mrb[0].mxu0 %v1200
      %v1953 = vpop.f32.mrb[0].mxu0
      %v1954 = vadd.f32 0.0, %v1953
      %v1955 = vpop.f32.mrb[0].mxu0
      %1956 = vmatprep.mubr.f32.mxu0 0.0
      %1957 = vmatmul.mubr.f32.gmra.mrb[0].mxu0 %v1203
      %v1958 = vpop.f32.mrb[0].mxu0
      %v1959 = vadd.f32 0.0, %v1958
      %v1960 = vpop.f32.mrb[0].mxu0
      %1961 = vmatprep.mubr.f32.mxu0 0.0
      %1962 = vmatmul.mubr.f32.gmra.mrb[0].mxu0 %v1206
      %v1963 = vpop.f32.mrb[0].mxu0
      %v1964 = vadd.f32 0.0, %v1963
      %v1965 = vpop.f32.mrb[0].mxu0
      %1966 = vmatprep.mubr.f32.mxu0 0.0
      %1967 = vmatmul.mubr.f32.gmra.mrb[0].mxu0 %v1209
      %v1968 = vpop.f32.mrb[0].mxu0
      %v1969 = vadd.f32 0.0, %v1968
      %v1970 = vpop.f32.mrb[0].mxu0
      %1971 = vmatprep.mubr.f32.mxu0 0.0
      %1972 = vmatmul.mubr.f32.gmra.mrb[0].mxu0 %v1212
      %v1973 = vpop.f32.mrb[0].mxu0
      %v1974 = vadd.f32 0.0, %v1973
      %v1975 = vpop.f32.mrb[0].mxu0
      %1976 = vmatprep.mubr.f32.mxu0 0.0
      %1977 = vmatmul.mubr.f32.gmra.mrb[0].mxu0 %v1215
      %v1978 = vpop.f32.mrb[0].mxu0
      %v1979 = vadd.f32 0.0, %v1978
      %v1980 = vpop.f32.mrb[0].mxu0
      %1981 = vmatprep.mubr.f32.mxu0 0.0
      %1982 = vmatmul.mubr.f32.gmra.mrb[0].mxu0 %v1218
      %v1983 = vpop.f32.mrb[0].mxu0
      %v1984 = vadd.f32 0.0, %v1983
      %v1985 = vpop.f32.mrb[0].mxu0
      %1986 = vmatprep.mubr.f32.mxu0 0.0
      %1987 = vmatmul.mubr.f32.gmra.mrb[0].mxu0 %v1221
      %v1988 = vpop.f32.mrb[0].mxu0
      %v1989 = vadd.f32 0.0, %v1988
      %v1990 = vpop.f32.mrb[0].mxu0
      %1991 = vmatprep.mubr.f32.mxu0 0.0
      %1992 = vmatmul.mubr.f32.gmra.mrb[0].mxu0 %v1522
      %v1993 = vpop.f32.mrb[0].mxu0
      %v1994 = vadd.f32 0.0, %v1993
      %v1995 = vpop.f32.mrb[0].mxu0
      %1996 = vmatprep.mubr.f32.mxu0 0.0
      %1997 = vmatmul.mubr.f32.gmra.mrb[0].mxu0 %v1691
      %v1998 = vpop.f32.mrb[0].mxu0
      %v1999 = vadd.f32 0.0, %v1998
      %v2000 = vpop.f32.mrb[0].mxu0
      %2001 = vmatprep.mubr.f32.mxu0 0.0
      %2002 = vmatmul.mubr.f32.gmra.mrb[0].mxu0 %v1860
      %v2003 = vpop.f32.mrb[0].mxu0
      %v2004 = vadd.f32 0.0, %v2003
      %v2005 = vpop.f32.mrb[0].mxu0
      %2006 = vdwg.mxu0
      %v2007 = vadd.f32 %v1838, %v1929
      %v2008 = vadd.f32 %v1839, %v1934
      %v2009 = vadd.f32 %v1840, %v1939
      %v2010 = vadd.f32 %v1841, %v1944
      %v2011 = vadd.f32 %v1842, %v1949
      %v2012 = vadd.f32 %v1843, %v1954
      %v2013 = vadd.f32 %v1844, %v1959
      %v2014 = vadd.f32 %v1845, %v1964
      %v2015 = vadd.f32 %v1846, %v1969
      %v2016 = vadd.f32 %v1847, %v1974
      %v2017 = vadd.f32 %v1848, %v1979
      %v2018 = vadd.f32 %v1849, %v1984
      %v2019 = vadd.f32 %v1850, %v1989
      %v2020 = vadd.f32 %v1851, %v1994
      %v2021 = vadd.f32 %v1852, %v1999
      %v2022 = vadd.f32 %v1853, %v2004
      %v2023 = vadd.f32 %v1108, %v2007
      %v2024 = vadd.f32 %v1109, %v2008
      %v2025 = vadd.f32 %v1110, %v2009
      %v2026 = vadd.f32 %v1111, %v2010
      %v2027 = vadd.f32 %v1112, %v2011
      %v2028 = vadd.f32 %v1113, %v2012
      %v2029 = vadd.f32 %v1114, %v2013
      %v2030 = vadd.f32 %v1115, %v2014
      %v2031 = vadd.f32 %v1116, %v2015
      %v2032 = vadd.f32 %v1117, %v2016
      %v2033 = vadd.f32 %v1118, %v2017
      %v2034 = vadd.f32 %v1119, %v2018
      %v2035 = vadd.f32 %v1120, %v2019
      %v2036 = vadd.f32 %v1121, %v2020
      %v2037 = vadd.f32 %v1122, %v2021
      %v2038 = vadd.f32 %v1123, %v2022
      %v2039 = vxor.u32 %v2023, 2147483648
      %v2040 = vxor.u32 %v2024, 2147483648
      %v2041 = vxor.u32 %v2025, 2147483648
      %v2042 = vxor.u32 %v2026, 2147483648
      %v2043 = vxor.u32 %v2027, 2147483648
      %v2044 = vxor.u32 %v2028, 2147483648
      %v2045 = vxor.u32 %v2029, 2147483648
      %v2046 = vxor.u32 %v2030, 2147483648
      %v2047 = vxor.u32 %v2031, 2147483648
      %v2048 = vxor.u32 %v2032, 2147483648
      %v2049 = vxor.u32 %v2033, 2147483648
      %v2050 = vxor.u32 %v2034, 2147483648
      %v2051 = vxor.u32 %v2035, 2147483648
      %v2052 = vxor.u32 %v2036, 2147483648
      %v2053 = vxor.u32 %v2037, 2147483648
      %v2054 = vxor.u32 %v2038, 2147483648
      %v2055 = vmul.f32 %v2039, 1.442695
      %v2056 = vpow.pop %v2055
      %v2057 = vmul.f32 %v2040, 1.442695
      %v2058 = vpow.pop %v2057
      %v2059 = vmul.f32 %v2041, 1.442695
      %v2060 = vpow.pop %v2059
      %v2061 = vmul.f32 %v2042, 1.442695
      %v2062 = vpow.pop %v2061
      %v2063 = vmul.f32 %v2043, 1.442695
      %v2064 = vpow.pop %v2063
      %v2065 = vmul.f32 %v2044, 1.442695
      %v2066 = vpow.pop %v2065
      %v2067 = vmul.f32 %v2045, 1.442695
      %v2068 = vpow.pop %v2067
      %v2069 = vmul.f32 %v2046, 1.442695
      %v2070 = vpow.pop %v2069
      %v2071 = vmul.f32 %v2047, 1.442695
      %v2072 = vpow.pop %v2071
      %v2073 = vmul.f32 %v2048, 1.442695
      %v2074 = vpow.pop %v2073
      %v2075 = vmul.f32 %v2049, 1.442695
      %v2076 = vpow.pop %v2075
      %v2077 = vmul.f32 %v2050, 1.442695
      %v2078 = vpow.pop %v2077
      %v2079 = vmul.f32 %v2051, 1.442695
      %v2080 = vpow.pop %v2079
      %v2081 = vmul.f32 %v2052, 1.442695
      %v2082 = vpow.pop %v2081
      %v2083 = vmul.f32 %v2053, 1.442695
      %v2084 = vpow.pop %v2083
      %v2085 = vmul.f32 %v2054, 1.442695
      %v2086 = vpow.pop %v2085
      %v2087 = vadd.f32 %v2056, 1.0
      %v2088 = vadd.f32 %v2058, 1.0
      %v2089 = vadd.f32 %v2060, 1.0
      %v2090 = vadd.f32 %v2062, 1.0
      %v2091 = vadd.f32 %v2064, 1.0
      %v2092 = vadd.f32 %v2066, 1.0
      %v2093 = vadd.f32 %v2068, 1.0
      %v2094 = vadd.f32 %v2070, 1.0
      %v2095 = vadd.f32 %v2072, 1.0
      %v2096 = vadd.f32 %v2074, 1.0
      %v2097 = vadd.f32 %v2076, 1.0
      %v2098 = vadd.f32 %v2078, 1.0
      %v2099 = vadd.f32 %v2080, 1.0
      %v2100 = vadd.f32 %v2082, 1.0
      %v2101 = vadd.f32 %v2084, 1.0
      %v2102 = vadd.f32 %v2086, 1.0
      %v2103 = vrcp.pop %v2087
      %v2104 = vmul.f32 1.0, %v2103
      %v2105 = vrcp.pop %v2088
      %v2106 = vmul.f32 1.0, %v2105
      %v2107 = vrcp.pop %v2089
      %v2108 = vmul.f32 1.0, %v2107
      %v2109 = vrcp.pop %v2090
      %v2110 = vmul.f32 1.0, %v2109
      %v2111 = vrcp.pop %v2091
      %v2112 = vmul.f32 1.0, %v2111
      %v2113 = vrcp.pop %v2092
      %v2114 = vmul.f32 1.0, %v2113
      %v2115 = vrcp.pop %v2093
      %v2116 = vmul.f32 1.0, %v2115
      %v2117 = vrcp.pop %v2094
      %v2118 = vmul.f32 1.0, %v2117
      %v2119 = vrcp.pop %v2095
      %v2120 = vmul.f32 1.0, %v2119
      %v2121 = vrcp.pop %v2096
      %v2122 = vmul.f32 1.0, %v2121
      %v2123 = vrcp.pop %v2097
      %v2124 = vmul.f32 1.0, %v2123
      %v2125 = vrcp.pop %v2098
      %v2126 = vmul.f32 1.0, %v2125
      %v2127 = vrcp.pop %v2099
      %v2128 = vmul.f32 1.0, %v2127
      %v2129 = vrcp.pop %v2100
      %v2130 = vmul.f32 1.0, %v2129
      %v2131 = vrcp.pop %v2101
      %v2132 = vmul.f32 1.0, %v2131
      %v2133 = vrcp.pop %v2102
      %v2134 = vmul.f32 1.0, %v2133
      %2151 = vrot.lane.b32.xlu0 %v315, 32
      %v2152 = vpop.permute.xlu0 %2151
      %2153 = vrot.lane.b32.xlu0 %v316, 32
      %v2154 = vpop.permute.xlu0 %2153
      %2155 = vrot.lane.b32.xlu0 %v317, 32
      %v2156 = vpop.permute.xlu0 %2155
      %2157 = vrot.lane.b32.xlu0 %v318, 32
      %v2158 = vpop.permute.xlu0 %2157
      %2159 = vrot.lane.b32.xlu0 %v319, 32
      %v2160 = vpop.permute.xlu0 %2159
      %2161 = vrot.lane.b32.xlu0 %v320, 32
      %v2162 = vpop.permute.xlu0 %2161
      %2163 = vrot.lane.b32.xlu0 %v321, 32
      %v2164 = vpop.permute.xlu0 %2163
      %2165 = vrot.lane.b32.xlu0 %v322, 32
      %v2166 = vpop.permute.xlu0 %2165
      %2167 = vrot.lane.b32.xlu0 %v323, 32
      %v2168 = vpop.permute.xlu0 %2167
      %2169 = vrot.lane.b32.xlu0 %v324, 32
      %v2170 = vpop.permute.xlu0 %2169
      %2171 = vrot.lane.b32.xlu0 %v325, 32
      %v2172 = vpop.permute.xlu0 %2171
      %2173 = vrot.lane.b32.xlu0 %v326, 32
      %v2174 = vpop.permute.xlu0 %2173
      %2175 = vrot.lane.b32.xlu0 %v327, 32
      %v2176 = vpop.permute.xlu0 %2175
      %2177 = vrot.lane.b32.xlu0 %v328, 32
      %v2178 = vpop.permute.xlu0 %2177
      %2179 = vrot.lane.b32.xlu0 %v329, 32
      %v2180 = vpop.permute.xlu0 %2179
      %2181 = vrot.lane.b32.xlu0 %v330, 32
      %v2182 = vpop.permute.xlu0 %2181
      %v2199 = vmul.f32 %v2104, %v2152
      %v2200 = vmul.f32 %v2106, %v2154
      %v2201 = vmul.f32 %v2108, %v2156
      %v2202 = vmul.f32 %v2110, %v2158
      %v2203 = vmul.f32 %v2112, %v2160
      %v2204 = vmul.f32 %v2114, %v2162
      %v2205 = vmul.f32 %v2116, %v2164
      %v2206 = vmul.f32 %v2118, %v2166
      %v2207 = vmul.f32 %v2120, %v2168
      %v2208 = vmul.f32 %v2122, %v2170
      %v2209 = vmul.f32 %v2124, %v2172
      %v2210 = vmul.f32 %v2126, %v2174
      %v2211 = vmul.f32 %v2128, %v2176
      %v2212 = vmul.f32 %v2130, %v2178
      %v2213 = vmul.f32 %v2132, %v2180
      %v2214 = vmul.f32 %v2134, %v2182
      %2231 = vrot.lane.b32.xlu0 %v2199, 96
      %v2232 = vpop.permute.xlu0 %2231
      %2233 = vrot.lane.b32.xlu0 %v2200, 96
      %v2234 = vpop.permute.xlu0 %2233
      %2235 = vrot.lane.b32.xlu0 %v2201, 96
      %v2236 = vpop.permute.xlu0 %2235
      %2237 = vrot.lane.b32.xlu0 %v2202, 96
      %v2238 = vpop.permute.xlu0 %2237
      %2239 = vrot.lane.b32.xlu0 %v2203, 96
      %v2240 = vpop.permute.xlu0 %2239
      %2241 = vrot.lane.b32.xlu0 %v2204, 96
      %v2242 = vpop.permute.xlu0 %2241
      %2243 = vrot.lane.b32.xlu0 %v2205, 96
      %v2244 = vpop.permute.xlu0 %2243
      %2245 = vrot.lane.b32.xlu0 %v2206, 96
      %v2246 = vpop.permute.xlu0 %2245
      %2247 = vrot.lane.b32.xlu0 %v2207, 96
      %v2248 = vpop.permute.xlu0 %2247
      %2249 = vrot.lane.b32.xlu0 %v2208, 96
      %v2250 = vpop.permute.xlu0 %2249
      %2251 = vrot.lane.b32.xlu0 %v2209, 96
      %v2252 = vpop.permute.xlu0 %2251
      %2253 = vrot.lane.b32.xlu0 %v2210, 96
      %v2254 = vpop.permute.xlu0 %2253
      %2255 = vrot.lane.b32.xlu0 %v2211, 96
      %v2256 = vpop.permute.xlu0 %2255
      %2257 = vrot.lane.b32.xlu0 %v2212, 96
      %v2258 = vpop.permute.xlu0 %2257
      %2259 = vrot.lane.b32.xlu0 %v2213, 96
      %v2260 = vpop.permute.xlu0 %2259
      %2261 = vrot.lane.b32.xlu0 %v2214, 96
      %v2262 = vpop.permute.xlu0 %2261
      %2279 = vst.msk [vmem:[%s1129] sm:$0xff] %vm414, %v2232
      %2280 = vst.msk [vmem:[%s1129 + $0x8] sm:$0xff] %vm414, %v2234
      %2281 = vst.msk [vmem:[%s1129 + $0x10] sm:$0xff] %vm414, %v2236
      %2282 = vst.msk [vmem:[%s1129 + $0x18] sm:$0xff] %vm414, %v2238
      %2283 = vst.msk [vmem:[%s1129 + $0x20] sm:$0xff] %vm414, %v2240
      %2284 = vst.msk [vmem:[%s1129 + $0x28] sm:$0xff] %vm414, %v2242
      %2285 = vst.msk [vmem:[%s1129 + $0x30] sm:$0xff] %vm414, %v2244
      %2286 = vst.msk [vmem:[%s1129 + $0x38] sm:$0xff] %vm414, %v2246
      %2287 = vst.msk [vmem:[%s1129 + $0x40] sm:$0xff] %vm414, %v2248
      %2288 = vst.msk [vmem:[%s1129 + $0x48] sm:$0xff] %vm414, %v2250
      %2289 = vst.msk [vmem:[%s1129 + $0x50] sm:$0xff] %vm414, %v2252
      %2290 = vst.msk [vmem:[%s1129 + $0x58] sm:$0xff] %vm414, %v2254
      %2291 = vst.msk [vmem:[%s1129 + $0x60] sm:$0xff] %vm414, %v2256
      %2292 = vst.msk [vmem:[%s1129 + $0x68] sm:$0xff] %vm414, %v2258
      %2293 = vst.msk [vmem:[%s1129 + $0x70] sm:$0xff] %vm414, %v2260
      %2294 = vst.msk [vmem:[%s1129 + $0x78] sm:$0xff] %vm414, %v2262
      %v2295 = vld [vmem:[#allocation2] sm:$0xff]
      %v2296 = vld [vmem:[#allocation2 + $0x8] sm:$0xff]
      %v2297 = vld [vmem:[#allocation2 + $0x10] sm:$0xff]
      %v2298 = vld [vmem:[#allocation2 + $0x18] sm:$0xff]
      %v2299 = vld [vmem:[#allocation2 + $0x20] sm:$0xff]
      %v2300 = vld [vmem:[#allocation2 + $0x28] sm:$0xff]
      %v2301 = vld [vmem:[#allocation2 + $0x30] sm:$0xff]
      %v2302 = vld [vmem:[#allocation2 + $0x38] sm:$0xff]
      %v2303 = vld [vmem:[#allocation2 + $0x40] sm:$0xff]
      %v2304 = vld [vmem:[#allocation2 + $0x48] sm:$0xff]
      %v2305 = vld [vmem:[#allocation2 + $0x50] sm:$0xff]
      %v2306 = vld [vmem:[#allocation2 + $0x58] sm:$0xff]
      %v2307 = vld [vmem:[#allocation2 + $0x60] sm:$0xff]
      %v2308 = vld [vmem:[#allocation2 + $0x68] sm:$0xff]
      %v2309 = vld [vmem:[#allocation2 + $0x70] sm:$0xff]
      %v2310 = vld [vmem:[#allocation2 + $0x78] sm:$0xff]
      %v2311 = vld [vmem:[#allocation2 + $0x80] sm:$0xff]
      %v2312 = vld [vmem:[#allocation2 + $0x88] sm:$0xff]
      %v2313 = vld [vmem:[#allocation2 + $0x90] sm:$0xff]
      %v2314 = vld [vmem:[#allocation2 + $0x98] sm:$0xff]
      %v2315 = vld [vmem:[%s4] sm:$0xff]
      %v2316 = vld [vmem:[%s4 + $0x8] sm:$0xff]
      %v2317 = vld [vmem:[%s4 + $0x10] sm:$0xff]
      %v2318 = vld [vmem:[%s4 + $0x18] sm:$0xff]
      %s2319 = scalar_lea.vmem %s4, 32
      %v2320 = vld [vmem:[%s2319] sm:$0xff]
      %v2321 = vld [vmem:[%s2319 + $0x8] sm:$0xff]
      %v2322 = vld [vmem:[%s2319 + $0x10] sm:$0xff]
      %v2323 = vld [vmem:[%s2319 + $0x18] sm:$0xff]
      %v2325 = vsel %vm414, %v2296, 0
      %v2328 = vsel %vm414, %v2297, 0
      %v2331 = vsel %vm414, %v2298, 0
      %v2334 = vsel %vm414, %v2299, 0
      %v2337 = vsel %vm414, %v2300, 0
      %v2340 = vsel %vm414, %v2301, 0
      %v2343 = vsel %vm414, %v2302, 0
      %v2346 = vsel %vm414, %v2303, 0
      %v2349 = vsel %vm414, %v2304, 0
      %v2352 = vsel %vm414, %v2305, 0
      %v2355 = vsel %vm414, %v2306, 0
      %v2358 = vsel %vm414, %v2307, 0
      %v2361 = vsel %vm414, %v2308, 0
      %v2364 = vsel %vm414, %v2309, 0
      %v2367 = vsel %vm414, %v2310, 0
      %v2370 = vsel %vm414, %v2311, 0
      %2372 = vmatprep.subr.mxu0 0.0
      %2373 = vmatpush1.msra.mxu0 %v2320
      %2374 = vmatprep.subr.mxu0 0.0
      %2375 = vmatpush1.msra.mxu0 %v2321
      %2376 = vmatprep.subr.mxu0 0.0
      %2377 = vmatpush1.msra.mxu0 %v2322
      %2378 = vmatprep.subr.mxu0 0.0
      %2379 = vmatpush1.msra.mxu0 %v2323
      %2380 = vmatprep.subr.mxu0 0.0
      %2381 = vmatpush1.msra.mxu0 0.0
      %2382 = vmatprep.subr.mxu0 0.0
      %2383 = vmatpush1.msra.mxu0 0.0
      %2384 = vmatprep.subr.mxu0 0.0
      %2385 = vmatpush1.msra.mxu0 0.0
      %2386 = vmatprep.subr.mxu0 0.0
      %2387 = vmatpush1.msra.mxu0 0.0
      %2388 = vmatprep.subr.mxu0 0.0
      %2389 = vmatpush1.msra.mxu0 0.0
      %2390 = vmatprep.subr.mxu0 0.0
      %2391 = vmatpush1.msra.mxu0 0.0
      %2392 = vmatprep.subr.mxu0 0.0
      %2393 = vmatpush1.msra.mxu0 0.0
      %2394 = vmatprep.subr.mxu0 0.0
      %2395 = vmatpush1.msra.mxu0 0.0
      %2396 = vmatprep.subr.mxu0 0.0
      %2397 = vmatpush1.msra.mxu0 0.0
      %2398 = vmatprep.subr.mxu0 0.0
      %2399 = vmatpush1.msra.mxu0 0.0
      %2400 = vmatprep.subr.mxu0 0.0
      %2401 = vmatpush1.msra.mxu0 0.0
      %2402 = vmatprep.subr.mxu0 0.0
      %2403 = vmatpush1.msra.mxu0 0.0
      %2404 = vmatprep.subr.mxu0 0.0
      %2405 = vmatpush1.msra.mxu0 0.0
      %2406 = vmatprep.subr.mxu0 0.0
      %2407 = vmatpush1.msra.mxu0 0.0
      %2408 = vmatprep.subr.mxu0 0.0
      %2409 = vmatpush1.msra.mxu0 0.0
      %2410 = vmatprep.subr.mxu0 0.0
      %2411 = vmatpush1.msra.mxu0 0.0
      %2412 = vmatprep.subr.mxu0 0.0
      %2413 = vmatpush1.msra.mxu0 0.0
      %2414 = vmatprep.subr.mxu0 0.0
      %2415 = vmatpush1.msra.mxu0 0.0
      %2416 = vmatprep.subr.mxu0 0.0
      %2417 = vmatpush1.msra.mxu0 0.0
      %2418 = vmatprep.subr.mxu0 0.0
      %2419 = vmatpush1.msra.mxu0 0.0
      %2420 = vmatprep.subr.mxu0 0.0
      %2421 = vmatpush1.msra.mxu0 0.0
      %2422 = vmatprep.subr.mxu0 0.0
      %2423 = vmatpush1.msra.mxu0 0.0
      %2424 = vmatprep.subr.mxu0 0.0
      %2425 = vmatpush1.msra.mxu0 0.0
      %2426 = vmatprep.subr.mxu0 0.0
      %2427 = vmatpush1.msra.mxu0 0.0
      %2428 = vmatprep.subr.mxu0 0.0
      %2429 = vmatpush1.msra.mxu0 0.0
      %2430 = vmatprep.subr.mxu0 0.0
      %2431 = vmatpush1.msra.mxu0 0.0
      %2432 = vmatprep.subr.mxu0 0.0
      %2433 = vmatpush1.msra.mxu0 0.0
      %2434 = vmatprep.subr.mxu0 0.0
      %2435 = vmatpush1.msra.mxu0 0.0
      %2436 = vmatprep.mubr.f32.mxu0 0.0
      %2437 = vmatmul.mubr.f32.gmra.mrb[0].mxu0 %v2325
      %v2438 = vpop.f32.mrb[0].mxu0
      %v2439 = vadd.f32 0.0, %v2438
      %v2440 = vpop.f32.mrb[0].mxu0
      %2441 = vmatprep.mubr.f32.mxu0 0.0
      %2442 = vmatmul.mubr.f32.gmra.mrb[0].mxu0 %v2328
      %v2443 = vpop.f32.mrb[0].mxu0
      %v2444 = vadd.f32 0.0, %v2443
      %v2445 = vpop.f32.mrb[0].mxu0
      %2446 = vmatprep.mubr.f32.mxu0 0.0
      %2447 = vmatmul.mubr.f32.gmra.mrb[0].mxu0 %v2331
      %v2448 = vpop.f32.mrb[0].mxu0
      %v2449 = vadd.f32 0.0, %v2448
      %v2450 = vpop.f32.mrb[0].mxu0
      %2451 = vmatprep.mubr.f32.mxu0 0.0
      %2452 = vmatmul.mubr.f32.gmra.mrb[0].mxu0 %v2334
      %v2453 = vpop.f32.mrb[0].mxu0
      %v2454 = vadd.f32 0.0, %v2453
      %v2455 = vpop.f32.mrb[0].mxu0
      %2456 = vmatprep.mubr.f32.mxu0 0.0
      %2457 = vmatmul.mubr.f32.gmra.mrb[0].mxu0 %v2337
      %v2458 = vpop.f32.mrb[0].mxu0
      %v2459 = vadd.f32 0.0, %v2458
      %v2460 = vpop.f32.mrb[0].mxu0
      %2461 = vmatprep.mubr.f32.mxu0 0.0
      %2462 = vmatmul.mubr.f32.gmra.mrb[0].mxu0 %v2340
      %v2463 = vpop.f32.mrb[0].mxu0
      %v2464 = vadd.f32 0.0, %v2463
      %v2465 = vpop.f32.mrb[0].mxu0
      %2466 = vmatprep.mubr.f32.mxu0 0.0
      %2467 = vmatmul.mubr.f32.gmra.mrb[0].mxu0 %v2343
      %v2468 = vpop.f32.mrb[0].mxu0
      %v2469 = vadd.f32 0.0, %v2468
      %v2470 = vpop.f32.mrb[0].mxu0
      %2471 = vmatprep.mubr.f32.mxu0 0.0
      %2472 = vmatmul.mubr.f32.gmra.mrb[0].mxu0 %v2346
      %v2473 = vpop.f32.mrb[0].mxu0
      %v2474 = vadd.f32 0.0, %v2473
      %v2475 = vpop.f32.mrb[0].mxu0
      %2476 = vmatprep.mubr.f32.mxu0 0.0
      %2477 = vmatmul.mubr.f32.gmra.mrb[0].mxu0 %v2349
      %v2478 = vpop.f32.mrb[0].mxu0
      %v2479 = vadd.f32 0.0, %v2478
      %v2480 = vpop.f32.mrb[0].mxu0
      %2481 = vmatprep.mubr.f32.mxu0 0.0
      %2482 = vmatmul.mubr.f32.gmra.mrb[0].mxu0 %v2352
      %v2483 = vpop.f32.mrb[0].mxu0
      %v2484 = vadd.f32 0.0, %v2483
      %v2485 = vpop.f32.mrb[0].mxu0
      %2486 = vmatprep.mubr.f32.mxu0 0.0
      %2487 = vmatmul.mubr.f32.gmra.mrb[0].mxu0 %v2355
      %v2488 = vpop.f32.mrb[0].mxu0
      %v2489 = vadd.f32 0.0, %v2488
      %v2490 = vpop.f32.mrb[0].mxu0
      %2491 = vmatprep.mubr.f32.mxu0 0.0
      %2492 = vmatmul.mubr.f32.gmra.mrb[0].mxu0 %v2358
      %v2493 = vpop.f32.mrb[0].mxu0
      %v2494 = vadd.f32 0.0, %v2493
      %v2495 = vpop.f32.mrb[0].mxu0
      %2496 = vmatprep.mubr.f32.mxu0 0.0
      %2497 = vmatmul.mubr.f32.gmra.mrb[0].mxu0 %v2361
      %v2498 = vpop.f32.mrb[0].mxu0
      %v2499 = vadd.f32 0.0, %v2498
      %v2500 = vpop.f32.mrb[0].mxu0
      %2501 = vmatprep.mubr.f32.mxu0 0.0
      %2502 = vmatmul.mubr.f32.gmra.mrb[0].mxu0 %v2364
      %v2503 = vpop.f32.mrb[0].mxu0
      %v2504 = vadd.f32 0.0, %v2503
      %v2505 = vpop.f32.mrb[0].mxu0
      %2506 = vmatprep.mubr.f32.mxu0 0.0
      %2507 = vmatmul.mubr.f32.gmra.mrb[0].mxu0 %v2367
      %v2508 = vpop.f32.mrb[0].mxu0
      %v2509 = vadd.f32 0.0, %v2508
      %v2510 = vpop.f32.mrb[0].mxu0
      %2511 = vmatprep.mubr.f32.mxu0 0.0
      %2512 = vmatmul.mubr.f32.gmra.mrb[0].mxu0 %v2370
      %v2513 = vpop.f32.mrb[0].mxu0
      %v2514 = vadd.f32 0.0, %v2513
      %v2515 = vpop.f32.mrb[0].mxu0
      %2516 = vdwg.mxu0
      %v2518 = vsel %vm414, %v2295, 0
      %2520 = vmatprep.subr.mxu0 0.0
      %2521 = vmatpush1.msra.mxu0 %v2315
      %2522 = vmatprep.subr.mxu0 0.0
      %2523 = vmatpush1.msra.mxu0 %v2316
      %2524 = vmatprep.subr.mxu0 0.0
      %2525 = vmatpush1.msra.mxu0 %v2317
      %2526 = vmatprep.subr.mxu0 0.0
      %2527 = vmatpush1.msra.mxu0 %v2318
      %2528 = vmatprep.subr.mxu0 0.0
      %2529 = vmatpush1.msra.mxu0 0.0
      %2530 = vmatprep.subr.mxu0 0.0
      %2531 = vmatpush1.msra.mxu0 0.0
      %2532 = vmatprep.subr.mxu0 0.0
      %2533 = vmatpush1.msra.mxu0 0.0
      %2534 = vmatprep.subr.mxu0 0.0
      %2535 = vmatpush1.msra.mxu0 0.0
      %2536 = vmatprep.subr.mxu0 0.0
      %2537 = vmatpush1.msra.mxu0 0.0
      %2538 = vmatprep.subr.mxu0 0.0
      %2539 = vmatpush1.msra.mxu0 0.0
      %2540 = vmatprep.subr.mxu0 0.0
      %2541 = vmatpush1.msra.mxu0 0.0
      %2542 = vmatprep.subr.mxu0 0.0
      %2543 = vmatpush1.msra.mxu0 0.0
      %2544 = vmatprep.subr.mxu0 0.0
      %2545 = vmatpush1.msra.mxu0 0.0
      %2546 = vmatprep.subr.mxu0 0.0
      %2547 = vmatpush1.msra.mxu0 0.0
      %2548 = vmatprep.subr.mxu0 0.0
      %2549 = vmatpush1.msra.mxu0 0.0
      %2550 = vmatprep.subr.mxu0 0.0
      %2551 = vmatpush1.msra.mxu0 0.0
      %2552 = vmatprep.subr.mxu0 0.0
      %2553 = vmatpush1.msra.mxu0 0.0
      %2554 = vmatprep.subr.mxu0 0.0
      %2555 = vmatpush1.msra.mxu0 0.0
      %2556 = vmatprep.subr.mxu0 0.0
      %2557 = vmatpush1.msra.mxu0 0.0
      %2558 = vmatprep.subr.mxu0 0.0
      %2559 = vmatpush1.msra.mxu0 0.0
      %2560 = vmatprep.subr.mxu0 0.0
      %2561 = vmatpush1.msra.mxu0 0.0
      %2562 = vmatprep.subr.mxu0 0.0
      %2563 = vmatpush1.msra.mxu0 0.0
      %2564 = vmatprep.subr.mxu0 0.0
      %2565 = vmatpush1.msra.mxu0 0.0
      %2566 = vmatprep.subr.mxu0 0.0
      %2567 = vmatpush1.msra.mxu0 0.0
      %2568 = vmatprep.subr.mxu0 0.0
      %2569 = vmatpush1.msra.mxu0 0.0
      %2570 = vmatprep.subr.mxu0 0.0
      %2571 = vmatpush1.msra.mxu0 0.0
      %2572 = vmatprep.subr.mxu0 0.0
      %2573 = vmatpush1.msra.mxu0 0.0
      %2574 = vmatprep.subr.mxu0 0.0
      %2575 = vmatpush1.msra.mxu0 0.0
      %2576 = vmatprep.subr.mxu0 0.0
      %2577 = vmatpush1.msra.mxu0 0.0
      %2578 = vmatprep.subr.mxu0 0.0
      %2579 = vmatpush1.msra.mxu0 0.0
      %2580 = vmatprep.subr.mxu0 0.0
      %2581 = vmatpush1.msra.mxu0 0.0
      %2582 = vmatprep.subr.mxu0 0.0
      %2583 = vmatpush1.msra.mxu0 0.0
      %2584 = vmatprep.mubr.f32.mxu0 0.0
      %2585 = vmatmul.mubr.f32.gmra.mrb[0].mxu0 %v2518
      %v2586 = vpop.f32.mrb[0].mxu0
      %v2587 = vadd.f32 %v2439, %v2586
      %v2588 = vpop.f32.mrb[0].mxu0
      %2589 = vmatprep.mubr.f32.mxu0 0.0
      %2590 = vmatmul.mubr.f32.gmra.mrb[0].mxu0 %v2325
      %v2591 = vpop.f32.mrb[0].mxu0
      %v2592 = vadd.f32 %v2444, %v2591
      %v2593 = vpop.f32.mrb[0].mxu0
      %2594 = vmatprep.mubr.f32.mxu0 0.0
      %2595 = vmatmul.mubr.f32.gmra.mrb[0].mxu0 %v2328
      %v2596 = vpop.f32.mrb[0].mxu0
      %v2597 = vadd.f32 %v2449, %v2596
      %v2598 = vpop.f32.mrb[0].mxu0
      %2599 = vmatprep.mubr.f32.mxu0 0.0
      %2600 = vmatmul.mubr.f32.gmra.mrb[0].mxu0 %v2331
      %v2601 = vpop.f32.mrb[0].mxu0
      %v2602 = vadd.f32 %v2454, %v2601
      %v2603 = vpop.f32.mrb[0].mxu0
      %2604 = vmatprep.mubr.f32.mxu0 0.0
      %2605 = vmatmul.mubr.f32.gmra.mrb[0].mxu0 %v2334
      %v2606 = vpop.f32.mrb[0].mxu0
      %v2607 = vadd.f32 %v2459, %v2606
      %v2608 = vpop.f32.mrb[0].mxu0
      %2609 = vmatprep.mubr.f32.mxu0 0.0
      %2610 = vmatmul.mubr.f32.gmra.mrb[0].mxu0 %v2337
      %v2611 = vpop.f32.mrb[0].mxu0
      %v2612 = vadd.f32 %v2464, %v2611
      %v2613 = vpop.f32.mrb[0].mxu0
      %2614 = vmatprep.mubr.f32.mxu0 0.0
      %2615 = vmatmul.mubr.f32.gmra.mrb[0].mxu0 %v2340
      %v2616 = vpop.f32.mrb[0].mxu0
      %v2617 = vadd.f32 %v2469, %v2616
      %v2618 = vpop.f32.mrb[0].mxu0
      %2619 = vmatprep.mubr.f32.mxu0 0.0
      %2620 = vmatmul.mubr.f32.gmra.mrb[0].mxu0 %v2343
      %v2621 = vpop.f32.mrb[0].mxu0
      %v2622 = vadd.f32 %v2474, %v2621
      %v2623 = vpop.f32.mrb[0].mxu0
      %2624 = vmatprep.mubr.f32.mxu0 0.0
      %2625 = vmatmul.mubr.f32.gmra.mrb[0].mxu0 %v2346
      %v2626 = vpop.f32.mrb[0].mxu0
      %v2627 = vadd.f32 %v2479, %v2626
      %v2628 = vpop.f32.mrb[0].mxu0
      %2629 = vmatprep.mubr.f32.mxu0 0.0
      %2630 = vmatmul.mubr.f32.gmra.mrb[0].mxu0 %v2349
      %v2631 = vpop.f32.mrb[0].mxu0
      %v2632 = vadd.f32 %v2484, %v2631
      %v2633 = vpop.f32.mrb[0].mxu0
      %2634 = vmatprep.mubr.f32.mxu0 0.0
      %2635 = vmatmul.mubr.f32.gmra.mrb[0].mxu0 %v2352
      %v2636 = vpop.f32.mrb[0].mxu0
      %v2637 = vadd.f32 %v2489, %v2636
      %v2638 = vpop.f32.mrb[0].mxu0
      %2639 = vmatprep.mubr.f32.mxu0 0.0
      %2640 = vmatmul.mubr.f32.gmra.mrb[0].mxu0 %v2355
      %v2641 = vpop.f32.mrb[0].mxu0
      %v2642 = vadd.f32 %v2494, %v2641
      %v2643 = vpop.f32.mrb[0].mxu0
      %2644 = vmatprep.mubr.f32.mxu0 0.0
      %2645 = vmatmul.mubr.f32.gmra.mrb[0].mxu0 %v2358
      %v2646 = vpop.f32.mrb[0].mxu0
      %v2647 = vadd.f32 %v2499, %v2646
      %v2648 = vpop.f32.mrb[0].mxu0
      %2649 = vmatprep.mubr.f32.mxu0 0.0
      %2650 = vmatmul.mubr.f32.gmra.mrb[0].mxu0 %v2361
      %v2651 = vpop.f32.mrb[0].mxu0
      %v2652 = vadd.f32 %v2504, %v2651
      %v2653 = vpop.f32.mrb[0].mxu0
      %2654 = vmatprep.mubr.f32.mxu0 0.0
      %2655 = vmatmul.mubr.f32.gmra.mrb[0].mxu0 %v2364
      %v2656 = vpop.f32.mrb[0].mxu0
      %v2657 = vadd.f32 %v2509, %v2656
      %v2658 = vpop.f32.mrb[0].mxu0
      %2659 = vmatprep.mubr.f32.mxu0 0.0
      %2660 = vmatmul.mubr.f32.gmra.mrb[0].mxu0 %v2367
      %v2661 = vpop.f32.mrb[0].mxu0
      %v2662 = vadd.f32 %v2514, %v2661
      %v2663 = vpop.f32.mrb[0].mxu0
      %2664 = vdwg.mxu0
      %s2665 = scalar_lea.vmem %s4, 64
      %v2666 = vld [vmem:[%s2665] sm:$0xff]
      %v2667 = vld [vmem:[%s2665 + $0x8] sm:$0xff]
      %v2668 = vld [vmem:[%s2665 + $0x10] sm:$0xff]
      %v2669 = vld [vmem:[%s2665 + $0x18] sm:$0xff]
      %v2671 = vsel %vm414, %v2312, 0
      %2673 = vmatprep.subr.mxu0 0.0
      %2674 = vmatpush1.msra.mxu0 %v2666
      %2675 = vmatprep.subr.mxu0 0.0
      %2676 = vmatpush1.msra.mxu0 %v2667
      %2677 = vmatprep.subr.mxu0 0.0
      %2678 = vmatpush1.msra.mxu0 %v2668
      %2679 = vmatprep.subr.mxu0 0.0
      %2680 = vmatpush1.msra.mxu0 %v2669
      %2681 = vmatprep.subr.mxu0 0.0
      %2682 = vmatpush1.msra.mxu0 0.0
      %2683 = vmatprep.subr.mxu0 0.0
      %2684 = vmatpush1.msra.mxu0 0.0
      %2685 = vmatprep.subr.mxu0 0.0
      %2686 = vmatpush1.msra.mxu0 0.0
      %2687 = vmatprep.subr.mxu0 0.0
      %2688 = vmatpush1.msra.mxu0 0.0
      %2689 = vmatprep.subr.mxu0 0.0
      %2690 = vmatpush1.msra.mxu0 0.0
      %2691 = vmatprep.subr.mxu0 0.0
      %2692 = vmatpush1.msra.mxu0 0.0
      %2693 = vmatprep.subr.mxu0 0.0
      %2694 = vmatpush1.msra.mxu0 0.0
      %2695 = vmatprep.subr.mxu0 0.0
      %2696 = vmatpush1.msra.mxu0 0.0
      %2697 = vmatprep.subr.mxu0 0.0
      %2698 = vmatpush1.msra.mxu0 0.0
      %2699 = vmatprep.subr.mxu0 0.0
      %2700 = vmatpush1.msra.mxu0 0.0
      %2701 = vmatprep.subr.mxu0 0.0
      %2702 = vmatpush1.msra.mxu0 0.0
      %2703 = vmatprep.subr.mxu0 0.0
      %2704 = vmatpush1.msra.mxu0 0.0
      %2705 = vmatprep.subr.mxu0 0.0
      %2706 = vmatpush1.msra.mxu0 0.0
      %2707 = vmatprep.subr.mxu0 0.0
      %2708 = vmatpush1.msra.mxu0 0.0
      %2709 = vmatprep.subr.mxu0 0.0
      %2710 = vmatpush1.msra.mxu0 0.0
      %2711 = vmatprep.subr.mxu0 0.0
      %2712 = vmatpush1.msra.mxu0 0.0
      %2713 = vmatprep.subr.mxu0 0.0
      %2714 = vmatpush1.msra.mxu0 0.0
      %2715 = vmatprep.subr.mxu0 0.0
      %2716 = vmatpush1.msra.mxu0 0.0
      %2717 = vmatprep.subr.mxu0 0.0
      %2718 = vmatpush1.msra.mxu0 0.0
      %2719 = vmatprep.subr.mxu0 0.0
      %2720 = vmatpush1.msra.mxu0 0.0
      %2721 = vmatprep.subr.mxu0 0.0
      %2722 = vmatpush1.msra.mxu0 0.0
      %2723 = vmatprep.subr.mxu0 0.0
      %2724 = vmatpush1.msra.mxu0 0.0
      %2725 = vmatprep.subr.mxu0 0.0
      %2726 = vmatpush1.msra.mxu0 0.0
      %2727 = vmatprep.subr.mxu0 0.0
      %2728 = vmatpush1.msra.mxu0 0.0
      %2729 = vmatprep.subr.mxu0 0.0
      %2730 = vmatpush1.msra.mxu0 0.0
      %2731 = vmatprep.subr.mxu0 0.0
      %2732 = vmatpush1.msra.mxu0 0.0
      %2733 = vmatprep.subr.mxu0 0.0
      %2734 = vmatpush1.msra.mxu0 0.0
      %2735 = vmatprep.subr.mxu0 0.0
      %2736 = vmatpush1.msra.mxu0 0.0
      %2737 = vmatprep.mubr.f32.mxu0 0.0
      %2738 = vmatmul.mubr.f32.gmra.mrb[0].mxu0 %v2328
      %v2739 = vpop.f32.mrb[0].mxu0
      %v2740 = vadd.f32 0.0, %v2739
      %v2741 = vpop.f32.mrb[0].mxu0
      %2742 = vmatprep.mubr.f32.mxu0 0.0
      %2743 = vmatmul.mubr.f32.gmra.mrb[0].mxu0 %v2331
      %v2744 = vpop.f32.mrb[0].mxu0
      %v2745 = vadd.f32 0.0, %v2744
      %v2746 = vpop.f32.mrb[0].mxu0
      %2747 = vmatprep.mubr.f32.mxu0 0.0
      %2748 = vmatmul.mubr.f32.gmra.mrb[0].mxu0 %v2334
      %v2749 = vpop.f32.mrb[0].mxu0
      %v2750 = vadd.f32 0.0, %v2749
      %v2751 = vpop.f32.mrb[0].mxu0
      %2752 = vmatprep.mubr.f32.mxu0 0.0
      %2753 = vmatmul.mubr.f32.gmra.mrb[0].mxu0 %v2337
      %v2754 = vpop.f32.mrb[0].mxu0
      %v2755 = vadd.f32 0.0, %v2754
      %v2756 = vpop.f32.mrb[0].mxu0
      %2757 = vmatprep.mubr.f32.mxu0 0.0
      %2758 = vmatmul.mubr.f32.gmra.mrb[0].mxu0 %v2340
      %v2759 = vpop.f32.mrb[0].mxu0
      %v2760 = vadd.f32 0.0, %v2759
      %v2761 = vpop.f32.mrb[0].mxu0
      %2762 = vmatprep.mubr.f32.mxu0 0.0
      %2763 = vmatmul.mubr.f32.gmra.mrb[0].mxu0 %v2343
      %v2764 = vpop.f32.mrb[0].mxu0
      %v2765 = vadd.f32 0.0, %v2764
      %v2766 = vpop.f32.mrb[0].mxu0
      %2767 = vmatprep.mubr.f32.mxu0 0.0
      %2768 = vmatmul.mubr.f32.gmra.mrb[0].mxu0 %v2346
      %v2769 = vpop.f32.mrb[0].mxu0
      %v2770 = vadd.f32 0.0, %v2769
      %v2771 = vpop.f32.mrb[0].mxu0
      %2772 = vmatprep.mubr.f32.mxu0 0.0
      %2773 = vmatmul.mubr.f32.gmra.mrb[0].mxu0 %v2349
      %v2774 = vpop.f32.mrb[0].mxu0
      %v2775 = vadd.f32 0.0, %v2774
      %v2776 = vpop.f32.mrb[0].mxu0
      %2777 = vmatprep.mubr.f32.mxu0 0.0
      %2778 = vmatmul.mubr.f32.gmra.mrb[0].mxu0 %v2352
      %v2779 = vpop.f32.mrb[0].mxu0
      %v2780 = vadd.f32 0.0, %v2779
      %v2781 = vpop.f32.mrb[0].mxu0
      %2782 = vmatprep.mubr.f32.mxu0 0.0
      %2783 = vmatmul.mubr.f32.gmra.mrb[0].mxu0 %v2355
      %v2784 = vpop.f32.mrb[0].mxu0
      %v2785 = vadd.f32 0.0, %v2784
      %v2786 = vpop.f32.mrb[0].mxu0
      %2787 = vmatprep.mubr.f32.mxu0 0.0
      %2788 = vmatmul.mubr.f32.gmra.mrb[0].mxu0 %v2358
      %v2789 = vpop.f32.mrb[0].mxu0
      %v2790 = vadd.f32 0.0, %v2789
      %v2791 = vpop.f32.mrb[0].mxu0
      %2792 = vmatprep.mubr.f32.mxu0 0.0
      %2793 = vmatmul.mubr.f32.gmra.mrb[0].mxu0 %v2361
      %v2794 = vpop.f32.mrb[0].mxu0
      %v2795 = vadd.f32 0.0, %v2794
      %v2796 = vpop.f32.mrb[0].mxu0
      %2797 = vmatprep.mubr.f32.mxu0 0.0
      %2798 = vmatmul.mubr.f32.gmra.mrb[0].mxu0 %v2364
      %v2799 = vpop.f32.mrb[0].mxu0
      %v2800 = vadd.f32 0.0, %v2799
      %v2801 = vpop.f32.mrb[0].mxu0
      %2802 = vmatprep.mubr.f32.mxu0 0.0
      %2803 = vmatmul.mubr.f32.gmra.mrb[0].mxu0 %v2367
      %v2804 = vpop.f32.mrb[0].mxu0
      %v2805 = vadd.f32 0.0, %v2804
      %v2806 = vpop.f32.mrb[0].mxu0
      %2807 = vmatprep.mubr.f32.mxu0 0.0
      %2808 = vmatmul.mubr.f32.gmra.mrb[0].mxu0 %v2370
      %v2809 = vpop.f32.mrb[0].mxu0
      %v2810 = vadd.f32 0.0, %v2809
      %v2811 = vpop.f32.mrb[0].mxu0
      %2812 = vmatprep.mubr.f32.mxu0 0.0
      %2813 = vmatmul.mubr.f32.gmra.mrb[0].mxu0 %v2671
      %v2814 = vpop.f32.mrb[0].mxu0
      %v2815 = vadd.f32 0.0, %v2814
      %v2816 = vpop.f32.mrb[0].mxu0
      %2817 = vdwg.mxu0
      %v2818 = vadd.f32 %v2587, %v2740
      %v2819 = vadd.f32 %v2592, %v2745
      %v2820 = vadd.f32 %v2597, %v2750
      %v2821 = vadd.f32 %v2602, %v2755
      %v2822 = vadd.f32 %v2607, %v2760
      %v2823 = vadd.f32 %v2612, %v2765
      %v2824 = vadd.f32 %v2617, %v2770
      %v2825 = vadd.f32 %v2622, %v2775
      %v2826 = vadd.f32 %v2627, %v2780
      %v2827 = vadd.f32 %v2632, %v2785
      %v2828 = vadd.f32 %v2637, %v2790
      %v2829 = vadd.f32 %v2642, %v2795
      %v2830 = vadd.f32 %v2647, %v2800
      %v2831 = vadd.f32 %v2652, %v2805
      %v2832 = vadd.f32 %v2657, %v2810
      %v2833 = vadd.f32 %v2662, %v2815
      %s2834 = scalar_lea.vmem %s4, 96
      %v2835 = vld [vmem:[%s2834] sm:$0xff]
      %v2836 = vld [vmem:[%s2834 + $0x8] sm:$0xff]
      %v2837 = vld [vmem:[%s2834 + $0x10] sm:$0xff]
      %v2838 = vld [vmem:[%s2834 + $0x18] sm:$0xff]
      %v2840 = vsel %vm414, %v2313, 0
      %2842 = vmatprep.subr.mxu0 0.0
      %2843 = vmatpush1.msra.mxu0 %v2835
      %2844 = vmatprep.subr.mxu0 0.0
      %2845 = vmatpush1.msra.mxu0 %v2836
      %2846 = vmatprep.subr.mxu0 0.0
      %2847 = vmatpush1.msra.mxu0 %v2837
      %2848 = vmatprep.subr.mxu0 0.0
      %2849 = vmatpush1.msra.mxu0 %v2838
      %2850 = vmatprep.subr.mxu0 0.0
      %2851 = vmatpush1.msra.mxu0 0.0
      %2852 = vmatprep.subr.mxu0 0.0
      %2853 = vmatpush1.msra.mxu0 0.0
      %2854 = vmatprep.subr.mxu0 0.0
      %2855 = vmatpush1.msra.mxu0 0.0
      %2856 = vmatprep.subr.mxu0 0.0
      %2857 = vmatpush1.msra.mxu0 0.0
      %2858 = vmatprep.subr.mxu0 0.0
      %2859 = vmatpush1.msra.mxu0 0.0
      %2860 = vmatprep.subr.mxu0 0.0
      %2861 = vmatpush1.msra.mxu0 0.0
      %2862 = vmatprep.subr.mxu0 0.0
      %2863 = vmatpush1.msra.mxu0 0.0
      %2864 = vmatprep.subr.mxu0 0.0
      %2865 = vmatpush1.msra.mxu0 0.0
      %2866 = vmatprep.subr.mxu0 0.0
      %2867 = vmatpush1.msra.mxu0 0.0
      %2868 = vmatprep.subr.mxu0 0.0
      %2869 = vmatpush1.msra.mxu0 0.0
      %2870 = vmatprep.subr.mxu0 0.0
      %2871 = vmatpush1.msra.mxu0 0.0
      %2872 = vmatprep.subr.mxu0 0.0
      %2873 = vmatpush1.msra.mxu0 0.0
      %2874 = vmatprep.subr.mxu0 0.0
      %2875 = vmatpush1.msra.mxu0 0.0
      %2876 = vmatprep.subr.mxu0 0.0
      %2877 = vmatpush1.msra.mxu0 0.0
      %2878 = vmatprep.subr.mxu0 0.0
      %2879 = vmatpush1.msra.mxu0 0.0
      %2880 = vmatprep.subr.mxu0 0.0
      %2881 = vmatpush1.msra.mxu0 0.0
      %2882 = vmatprep.subr.mxu0 0.0
      %2883 = vmatpush1.msra.mxu0 0.0
      %2884 = vmatprep.subr.mxu0 0.0
      %2885 = vmatpush1.msra.mxu0 0.0
      %2886 = vmatprep.subr.mxu0 0.0
      %2887 = vmatpush1.msra.mxu0 0.0
      %2888 = vmatprep.subr.mxu0 0.0
      %2889 = vmatpush1.msra.mxu0 0.0
      %2890 = vmatprep.subr.mxu0 0.0
      %2891 = vmatpush1.msra.mxu0 0.0
      %2892 = vmatprep.subr.mxu0 0.0
      %2893 = vmatpush1.msra.mxu0 0.0
      %2894 = vmatprep.subr.mxu0 0.0
      %2895 = vmatpush1.msra.mxu0 0.0
      %2896 = vmatprep.subr.mxu0 0.0
      %2897 = vmatpush1.msra.mxu0 0.0
      %2898 = vmatprep.subr.mxu0 0.0
      %2899 = vmatpush1.msra.mxu0 0.0
      %2900 = vmatprep.subr.mxu0 0.0
      %2901 = vmatpush1.msra.mxu0 0.0
      %2902 = vmatprep.subr.mxu0 0.0
      %2903 = vmatpush1.msra.mxu0 0.0
      %2904 = vmatprep.subr.mxu0 0.0
      %2905 = vmatpush1.msra.mxu0 0.0
      %2906 = vmatprep.mubr.f32.mxu0 0.0
      %2907 = vmatmul.mubr.f32.gmra.mrb[0].mxu0 %v2331
      %v2908 = vpop.f32.mrb[0].mxu0
      %v2909 = vadd.f32 0.0, %v2908
      %v2910 = vpop.f32.mrb[0].mxu0
      %2911 = vmatprep.mubr.f32.mxu0 0.0
      %2912 = vmatmul.mubr.f32.gmra.mrb[0].mxu0 %v2334
      %v2913 = vpop.f32.mrb[0].mxu0
      %v2914 = vadd.f32 0.0, %v2913
      %v2915 = vpop.f32.mrb[0].mxu0
      %2916 = vmatprep.mubr.f32.mxu0 0.0
      %2917 = vmatmul.mubr.f32.gmra.mrb[0].mxu0 %v2337
      %v2918 = vpop.f32.mrb[0].mxu0
      %v2919 = vadd.f32 0.0, %v2918
      %v2920 = vpop.f32.mrb[0].mxu0
      %2921 = vmatprep.mubr.f32.mxu0 0.0
      %2922 = vmatmul.mubr.f32.gmra.mrb[0].mxu0 %v2340
      %v2923 = vpop.f32.mrb[0].mxu0
      %v2924 = vadd.f32 0.0, %v2923
      %v2925 = vpop.f32.mrb[0].mxu0
      %2926 = vmatprep.mubr.f32.mxu0 0.0
      %2927 = vmatmul.mubr.f32.gmra.mrb[0].mxu0 %v2343
      %v2928 = vpop.f32.mrb[0].mxu0
      %v2929 = vadd.f32 0.0, %v2928
      %v2930 = vpop.f32.mrb[0].mxu0
      %2931 = vmatprep.mubr.f32.mxu0 0.0
      %2932 = vmatmul.mubr.f32.gmra.mrb[0].mxu0 %v2346
      %v2933 = vpop.f32.mrb[0].mxu0
      %v2934 = vadd.f32 0.0, %v2933
      %v2935 = vpop.f32.mrb[0].mxu0
      %2936 = vmatprep.mubr.f32.mxu0 0.0
      %2937 = vmatmul.mubr.f32.gmra.mrb[0].mxu0 %v2349
      %v2938 = vpop.f32.mrb[0].mxu0
      %v2939 = vadd.f32 0.0, %v2938
      %v2940 = vpop.f32.mrb[0].mxu0
      %2941 = vmatprep.mubr.f32.mxu0 0.0
      %2942 = vmatmul.mubr.f32.gmra.mrb[0].mxu0 %v2352
      %v2943 = vpop.f32.mrb[0].mxu0
      %v2944 = vadd.f32 0.0, %v2943
      %v2945 = vpop.f32.mrb[0].mxu0
      %2946 = vmatprep.mubr.f32.mxu0 0.0
      %2947 = vmatmul.mubr.f32.gmra.mrb[0].mxu0 %v2355
      %v2948 = vpop.f32.mrb[0].mxu0
      %v2949 = vadd.f32 0.0, %v2948
      %v2950 = vpop.f32.mrb[0].mxu0
      %2951 = vmatprep.mubr.f32.mxu0 0.0
      %2952 = vmatmul.mubr.f32.gmra.mrb[0].mxu0 %v2358
      %v2953 = vpop.f32.mrb[0].mxu0
      %v2954 = vadd.f32 0.0, %v2953
      %v2955 = vpop.f32.mrb[0].mxu0
      %2956 = vmatprep.mubr.f32.mxu0 0.0
      %2957 = vmatmul.mubr.f32.gmra.mrb[0].mxu0 %v2361
      %v2958 = vpop.f32.mrb[0].mxu0
      %v2959 = vadd.f32 0.0, %v2958
      %v2960 = vpop.f32.mrb[0].mxu0
      %2961 = vmatprep.mubr.f32.mxu0 0.0
      %2962 = vmatmul.mubr.f32.gmra.mrb[0].mxu0 %v2364
      %v2963 = vpop.f32.mrb[0].mxu0
      %v2964 = vadd.f32 0.0, %v2963
      %v2965 = vpop.f32.mrb[0].mxu0
      %2966 = vmatprep.mubr.f32.mxu0 0.0
      %2967 = vmatmul.mubr.f32.gmra.mrb[0].mxu0 %v2367
      %v2968 = vpop.f32.mrb[0].mxu0
      %v2969 = vadd.f32 0.0, %v2968
      %v2970 = vpop.f32.mrb[0].mxu0
      %2971 = vmatprep.mubr.f32.mxu0 0.0
      %2972 = vmatmul.mubr.f32.gmra.mrb[0].mxu0 %v2370
      %v2973 = vpop.f32.mrb[0].mxu0
      %v2974 = vadd.f32 0.0, %v2973
      %v2975 = vpop.f32.mrb[0].mxu0
      %2976 = vmatprep.mubr.f32.mxu0 0.0
      %2977 = vmatmul.mubr.f32.gmra.mrb[0].mxu0 %v2671
      %v2978 = vpop.f32.mrb[0].mxu0
      %v2979 = vadd.f32 0.0, %v2978
      %v2980 = vpop.f32.mrb[0].mxu0
      %2981 = vmatprep.mubr.f32.mxu0 0.0
      %2982 = vmatmul.mubr.f32.gmra.mrb[0].mxu0 %v2840
      %v2983 = vpop.f32.mrb[0].mxu0
      %v2984 = vadd.f32 0.0, %v2983
      %v2985 = vpop.f32.mrb[0].mxu0
      %2986 = vdwg.mxu0
      %v2987 = vadd.f32 %v2818, %v2909
      %v2988 = vadd.f32 %v2819, %v2914
      %v2989 = vadd.f32 %v2820, %v2919
      %v2990 = vadd.f32 %v2821, %v2924
      %v2991 = vadd.f32 %v2822, %v2929
      %v2992 = vadd.f32 %v2823, %v2934
      %v2993 = vadd.f32 %v2824, %v2939
      %v2994 = vadd.f32 %v2825, %v2944
      %v2995 = vadd.f32 %v2826, %v2949
      %v2996 = vadd.f32 %v2827, %v2954
      %v2997 = vadd.f32 %v2828, %v2959
      %v2998 = vadd.f32 %v2829, %v2964
      %v2999 = vadd.f32 %v2830, %v2969
      %v3000 = vadd.f32 %v2831, %v2974
      %v3001 = vadd.f32 %v2832, %v2979
      %v3002 = vadd.f32 %v2833, %v2984
      %s3003 = scalar_lea.vmem %s4, 128
      %v3004 = vld [vmem:[%s3003] sm:$0xff]
      %v3005 = vld [vmem:[%s3003 + $0x8] sm:$0xff]
      %v3006 = vld [vmem:[%s3003 + $0x10] sm:$0xff]
      %v3007 = vld [vmem:[%s3003 + $0x18] sm:$0xff]
      %v3009 = vsel %vm414, %v2314, 0
      %3011 = vmatprep.subr.mxu0 0.0
      %3012 = vmatpush1.msra.mxu0 %v3004
      %3013 = vmatprep.subr.mxu0 0.0
      %3014 = vmatpush1.msra.mxu0 %v3005
      %3015 = vmatprep.subr.mxu0 0.0
      %3016 = vmatpush1.msra.mxu0 %v3006
      %3017 = vmatprep.subr.mxu0 0.0
      %3018 = vmatpush1.msra.mxu0 %v3007
      %3019 = vmatprep.subr.mxu0 0.0
      %3020 = vmatpush1.msra.mxu0 0.0
      %3021 = vmatprep.subr.mxu0 0.0
      %3022 = vmatpush1.msra.mxu0 0.0
      %3023 = vmatprep.subr.mxu0 0.0
      %3024 = vmatpush1.msra.mxu0 0.0
      %3025 = vmatprep.subr.mxu0 0.0
      %3026 = vmatpush1.msra.mxu0 0.0
      %3027 = vmatprep.subr.mxu0 0.0
      %3028 = vmatpush1.msra.mxu0 0.0
      %3029 = vmatprep.subr.mxu0 0.0
      %3030 = vmatpush1.msra.mxu0 0.0
      %3031 = vmatprep.subr.mxu0 0.0
      %3032 = vmatpush1.msra.mxu0 0.0
      %3033 = vmatprep.subr.mxu0 0.0
      %3034 = vmatpush1.msra.mxu0 0.0
      %3035 = vmatprep.subr.mxu0 0.0
      %3036 = vmatpush1.msra.mxu0 0.0
      %3037 = vmatprep.subr.mxu0 0.0
      %3038 = vmatpush1.msra.mxu0 0.0
      %3039 = vmatprep.subr.mxu0 0.0
      %3040 = vmatpush1.msra.mxu0 0.0
      %3041 = vmatprep.subr.mxu0 0.0
      %3042 = vmatpush1.msra.mxu0 0.0
      %3043 = vmatprep.subr.mxu0 0.0
      %3044 = vmatpush1.msra.mxu0 0.0
      %3045 = vmatprep.subr.mxu0 0.0
      %3046 = vmatpush1.msra.mxu0 0.0
      %3047 = vmatprep.subr.mxu0 0.0
      %3048 = vmatpush1.msra.mxu0 0.0
      %3049 = vmatprep.subr.mxu0 0.0
      %3050 = vmatpush1.msra.mxu0 0.0
      %3051 = vmatprep.subr.mxu0 0.0
      %3052 = vmatpush1.msra.mxu0 0.0
      %3053 = vmatprep.subr.mxu0 0.0
      %3054 = vmatpush1.msra.mxu0 0.0
      %3055 = vmatprep.subr.mxu0 0.0
      %3056 = vmatpush1.msra.mxu0 0.0
      %3057 = vmatprep.subr.mxu0 0.0
      %3058 = vmatpush1.msra.mxu0 0.0
      %3059 = vmatprep.subr.mxu0 0.0
      %3060 = vmatpush1.msra.mxu0 0.0
      %3061 = vmatprep.subr.mxu0 0.0
      %3062 = vmatpush1.msra.mxu0 0.0
      %3063 = vmatprep.subr.mxu0 0.0
      %3064 = vmatpush1.msra.mxu0 0.0
      %3065 = vmatprep.subr.mxu0 0.0
      %3066 = vmatpush1.msra.mxu0 0.0
      %3067 = vmatprep.subr.mxu0 0.0
      %3068 = vmatpush1.msra.mxu0 0.0
      %3069 = vmatprep.subr.mxu0 0.0
      %3070 = vmatpush1.msra.mxu0 0.0
      %3071 = vmatprep.subr.mxu0 0.0
      %3072 = vmatpush1.msra.mxu0 0.0
      %3073 = vmatprep.subr.mxu0 0.0
      %3074 = vmatpush1.msra.mxu0 0.0
      %3075 = vmatprep.mubr.f32.mxu0 0.0
      %3076 = vmatmul.mubr.f32.gmra.mrb[0].mxu0 %v2334
      %v3077 = vpop.f32.mrb[0].mxu0
      %v3078 = vadd.f32 0.0, %v3077
      %v3079 = vpop.f32.mrb[0].mxu0
      %3080 = vmatprep.mubr.f32.mxu0 0.0
      %3081 = vmatmul.mubr.f32.gmra.mrb[0].mxu0 %v2337
      %v3082 = vpop.f32.mrb[0].mxu0
      %v3083 = vadd.f32 0.0, %v3082
      %v3084 = vpop.f32.mrb[0].mxu0
      %3085 = vmatprep.mubr.f32.mxu0 0.0
      %3086 = vmatmul.mubr.f32.gmra.mrb[0].mxu0 %v2340
      %v3087 = vpop.f32.mrb[0].mxu0
      %v3088 = vadd.f32 0.0, %v3087
      %v3089 = vpop.f32.mrb[0].mxu0
      %3090 = vmatprep.mubr.f32.mxu0 0.0
      %3091 = vmatmul.mubr.f32.gmra.mrb[0].mxu0 %v2343
      %v3092 = vpop.f32.mrb[0].mxu0
      %v3093 = vadd.f32 0.0, %v3092
      %v3094 = vpop.f32.mrb[0].mxu0
      %3095 = vmatprep.mubr.f32.mxu0 0.0
      %3096 = vmatmul.mubr.f32.gmra.mrb[0].mxu0 %v2346
      %v3097 = vpop.f32.mrb[0].mxu0
      %v3098 = vadd.f32 0.0, %v3097
      %v3099 = vpop.f32.mrb[0].mxu0
      %3100 = vmatprep.mubr.f32.mxu0 0.0
      %3101 = vmatmul.mubr.f32.gmra.mrb[0].mxu0 %v2349
      %v3102 = vpop.f32.mrb[0].mxu0
      %v3103 = vadd.f32 0.0, %v3102
      %v3104 = vpop.f32.mrb[0].mxu0
      %3105 = vmatprep.mubr.f32.mxu0 0.0
      %3106 = vmatmul.mubr.f32.gmra.mrb[0].mxu0 %v2352
      %v3107 = vpop.f32.mrb[0].mxu0
      %v3108 = vadd.f32 0.0, %v3107
      %v3109 = vpop.f32.mrb[0].mxu0
      %3110 = vmatprep.mubr.f32.mxu0 0.0
      %3111 = vmatmul.mubr.f32.gmra.mrb[0].mxu0 %v2355
      %v3112 = vpop.f32.mrb[0].mxu0
      %v3113 = vadd.f32 0.0, %v3112
      %v3114 = vpop.f32.mrb[0].mxu0
      %3115 = vmatprep.mubr.f32.mxu0 0.0
      %3116 = vmatmul.mubr.f32.gmra.mrb[0].mxu0 %v2358
      %v3117 = vpop.f32.mrb[0].mxu0
      %v3118 = vadd.f32 0.0, %v3117
      %v3119 = vpop.f32.mrb[0].mxu0
      %3120 = vmatprep.mubr.f32.mxu0 0.0
      %3121 = vmatmul.mubr.f32.gmra.mrb[0].mxu0 %v2361
      %v3122 = vpop.f32.mrb[0].mxu0
      %v3123 = vadd.f32 0.0, %v3122
      %v3124 = vpop.f32.mrb[0].mxu0
      %3125 = vmatprep.mubr.f32.mxu0 0.0
      %3126 = vmatmul.mubr.f32.gmra.mrb[0].mxu0 %v2364
      %v3127 = vpop.f32.mrb[0].mxu0
      %v3128 = vadd.f32 0.0, %v3127
      %v3129 = vpop.f32.mrb[0].mxu0
      %3130 = vmatprep.mubr.f32.mxu0 0.0
      %3131 = vmatmul.mubr.f32.gmra.mrb[0].mxu0 %v2367
      %v3132 = vpop.f32.mrb[0].mxu0
      %v3133 = vadd.f32 0.0, %v3132
      %v3134 = vpop.f32.mrb[0].mxu0
      %3135 = vmatprep.mubr.f32.mxu0 0.0
      %3136 = vmatmul.mubr.f32.gmra.mrb[0].mxu0 %v2370
      %v3137 = vpop.f32.mrb[0].mxu0
      %v3138 = vadd.f32 0.0, %v3137
      %v3139 = vpop.f32.mrb[0].mxu0
      %3140 = vmatprep.mubr.f32.mxu0 0.0
      %3141 = vmatmul.mubr.f32.gmra.mrb[0].mxu0 %v2671
      %v3142 = vpop.f32.mrb[0].mxu0
      %v3143 = vadd.f32 0.0, %v3142
      %v3144 = vpop.f32.mrb[0].mxu0
      %3145 = vmatprep.mubr.f32.mxu0 0.0
      %3146 = vmatmul.mubr.f32.gmra.mrb[0].mxu0 %v2840
      %v3147 = vpop.f32.mrb[0].mxu0
      %v3148 = vadd.f32 0.0, %v3147
      %v3149 = vpop.f32.mrb[0].mxu0
      %3150 = vmatprep.mubr.f32.mxu0 0.0
      %3151 = vmatmul.mubr.f32.gmra.mrb[0].mxu0 %v3009
      %v3152 = vpop.f32.mrb[0].mxu0
      %v3153 = vadd.f32 0.0, %v3152
      %v3154 = vpop.f32.mrb[0].mxu0
      %3155 = vdwg.mxu0
      %v3156 = vadd.f32 %v2987, %v3078
      %v3157 = vadd.f32 %v2988, %v3083
      %v3158 = vadd.f32 %v2989, %v3088
      %v3159 = vadd.f32 %v2990, %v3093
      %v3160 = vadd.f32 %v2991, %v3098
      %v3161 = vadd.f32 %v2992, %v3103
      %v3162 = vadd.f32 %v2993, %v3108
      %v3163 = vadd.f32 %v2994, %v3113
      %v3164 = vadd.f32 %v2995, %v3118
      %v3165 = vadd.f32 %v2996, %v3123
      %v3166 = vadd.f32 %v2997, %v3128
      %v3167 = vadd.f32 %v2998, %v3133
      %v3168 = vadd.f32 %v2999, %v3138
      %v3169 = vadd.f32 %v3000, %v3143
      %v3170 = vadd.f32 %v3001, %v3148
      %v3171 = vadd.f32 %v3002, %v3153
      %3188 = vrot.lane.b32.xlu0 %v3156, 64
      %v3189 = vpop.permute.xlu0 %3188
      %3190 = vrot.lane.b32.xlu0 %v3157, 64
      %v3191 = vpop.permute.xlu0 %3190
      %3192 = vrot.lane.b32.xlu0 %v3158, 64
      %v3193 = vpop.permute.xlu0 %3192
      %3194 = vrot.lane.b32.xlu0 %v3159, 64
      %v3195 = vpop.permute.xlu0 %3194
      %3196 = vrot.lane.b32.xlu0 %v3160, 64
      %v3197 = vpop.permute.xlu0 %3196
      %3198 = vrot.lane.b32.xlu0 %v3161, 64
      %v3199 = vpop.permute.xlu0 %3198
      %3200 = vrot.lane.b32.xlu0 %v3162, 64
      %v3201 = vpop.permute.xlu0 %3200
      %3202 = vrot.lane.b32.xlu0 %v3163, 64
      %v3203 = vpop.permute.xlu0 %3202
      %3204 = vrot.lane.b32.xlu0 %v3164, 64
      %v3205 = vpop.permute.xlu0 %3204
      %3206 = vrot.lane.b32.xlu0 %v3165, 64
      %v3207 = vpop.permute.xlu0 %3206
      %3208 = vrot.lane.b32.xlu0 %v3166, 64
      %v3209 = vpop.permute.xlu0 %3208
      %3210 = vrot.lane.b32.xlu0 %v3167, 64
      %v3211 = vpop.permute.xlu0 %3210
      %3212 = vrot.lane.b32.xlu0 %v3168, 64
      %v3213 = vpop.permute.xlu0 %3212
      %3214 = vrot.lane.b32.xlu0 %v3169, 64
      %v3215 = vpop.permute.xlu0 %3214
      %3216 = vrot.lane.b32.xlu0 %v3170, 64
      %v3217 = vpop.permute.xlu0 %3216
      %3218 = vrot.lane.b32.xlu0 %v3171, 64
      %v3219 = vpop.permute.xlu0 %3218
      %v3236 = vadd.f32 %v1108, %v3189
      %v3237 = vadd.f32 %v1109, %v3191
      %v3238 = vadd.f32 %v1110, %v3193
      %v3239 = vadd.f32 %v1111, %v3195
      %v3240 = vadd.f32 %v1112, %v3197
      %v3241 = vadd.f32 %v1113, %v3199
      %v3242 = vadd.f32 %v1114, %v3201
      %v3243 = vadd.f32 %v1115, %v3203
      %v3244 = vadd.f32 %v1116, %v3205
      %v3245 = vadd.f32 %v1117, %v3207
      %v3246 = vadd.f32 %v1118, %v3209
      %v3247 = vadd.f32 %v1119, %v3211
      %v3248 = vadd.f32 %v1120, %v3213
      %v3249 = vadd.f32 %v1121, %v3215
      %v3250 = vadd.f32 %v1122, %v3217
      %v3251 = vadd.f32 %v1123, %v3219
      %v3252 = vtanh.pop %v3236
      %v3253 = vtanh.pop %v3237
      %v3254 = vtanh.pop %v3238
      %v3255 = vtanh.pop %v3239
      %v3256 = vtanh.pop %v3240
      %v3257 = vtanh.pop %v3241
      %v3258 = vtanh.pop %v3242
      %v3259 = vtanh.pop %v3243
      %v3260 = vtanh.pop %v3244
      %v3261 = vtanh.pop %v3245
      %v3262 = vtanh.pop %v3246
      %v3263 = vtanh.pop %v3247
      %v3264 = vtanh.pop %v3248
      %v3265 = vtanh.pop %v3249
      %v3266 = vtanh.pop %v3250
      %v3267 = vtanh.pop %v3251
      %v3268 = vsub.f32 1.0, %v2104
      %v3269 = vsub.f32 1.0, %v2106
      %v3270 = vsub.f32 1.0, %v2108
      %v3271 = vsub.f32 1.0, %v2110
      %v3272 = vsub.f32 1.0, %v2112
      %v3273 = vsub.f32 1.0, %v2114
      %v3274 = vsub.f32 1.0, %v2116
      %v3275 = vsub.f32 1.0, %v2118
      %v3276 = vsub.f32 1.0, %v2120
      %v3277 = vsub.f32 1.0, %v2122
      %v3278 = vsub.f32 1.0, %v2124
      %v3279 = vsub.f32 1.0, %v2126
      %v3280 = vsub.f32 1.0, %v2128
      %v3281 = vsub.f32 1.0, %v2130
      %v3282 = vsub.f32 1.0, %v2132
      %v3283 = vsub.f32 1.0, %v2134
      %v3284 = vmul.f32 %v3268, %v315
      %v3285 = vmul.f32 %v3269, %v316
      %v3286 = vmul.f32 %v3270, %v317
      %v3287 = vmul.f32 %v3271, %v318
      %v3288 = vmul.f32 %v3272, %v319
      %v3289 = vmul.f32 %v3273, %v320
      %v3290 = vmul.f32 %v3274, %v321
      %v3291 = vmul.f32 %v3275, %v322
      %v3292 = vmul.f32 %v3276, %v323
      %v3293 = vmul.f32 %v3277, %v324
      %v3294 = vmul.f32 %v3278, %v325
      %v3295 = vmul.f32 %v3279, %v326
      %v3296 = vmul.f32 %v3280, %v327
      %v3297 = vmul.f32 %v3281, %v328
      %v3298 = vmul.f32 %v3282, %v329
      %v3299 = vmul.f32 %v3283, %v330
      %3316 = vrot.lane.b32.xlu0 %v3252, 64
      %v3317 = vpop.permute.xlu0 %3316
      %3318 = vrot.lane.b32.xlu0 %v3253, 64
      %v3319 = vpop.permute.xlu0 %3318
      %3320 = vrot.lane.b32.xlu0 %v3254, 64
      %v3321 = vpop.permute.xlu0 %3320
      %3322 = vrot.lane.b32.xlu0 %v3255, 64
      %v3323 = vpop.permute.xlu0 %3322
      %3324 = vrot.lane.b32.xlu0 %v3256, 64
      %v3325 = vpop.permute.xlu0 %3324
      %3326 = vrot.lane.b32.xlu0 %v3257, 64
      %v3327 = vpop.permute.xlu0 %3326
      %3328 = vrot.lane.b32.xlu0 %v3258, 64
      %v3329 = vpop.permute.xlu0 %3328
      %3330 = vrot.lane.b32.xlu0 %v3259, 64
      %v3331 = vpop.permute.xlu0 %3330
      %3332 = vrot.lane.b32.xlu0 %v3260, 64
      %v3333 = vpop.permute.xlu0 %3332
      %3334 = vrot.lane.b32.xlu0 %v3261, 64
      %v3335 = vpop.permute.xlu0 %3334
      %3336 = vrot.lane.b32.xlu0 %v3262, 64
      %v3337 = vpop.permute.xlu0 %3336
      %3338 = vrot.lane.b32.xlu0 %v3263, 64
      %v3339 = vpop.permute.xlu0 %3338
      %3340 = vrot.lane.b32.xlu0 %v3264, 64
      %v3341 = vpop.permute.xlu0 %3340
      %3342 = vrot.lane.b32.xlu0 %v3265, 64
      %v3343 = vpop.permute.xlu0 %3342
      %3344 = vrot.lane.b32.xlu0 %v3266, 64
      %v3345 = vpop.permute.xlu0 %3344
      %3346 = vrot.lane.b32.xlu0 %v3267, 64
      %v3347 = vpop.permute.xlu0 %3346
      %v3364 = vmul.f32 %v2104, %v3317
      %v3365 = vmul.f32 %v2106, %v3319
      %v3366 = vmul.f32 %v2108, %v3321
      %v3367 = vmul.f32 %v2110, %v3323
      %v3368 = vmul.f32 %v2112, %v3325
      %v3369 = vmul.f32 %v2114, %v3327
      %v3370 = vmul.f32 %v2116, %v3329
      %v3371 = vmul.f32 %v2118, %v3331
      %v3372 = vmul.f32 %v2120, %v3333
      %v3373 = vmul.f32 %v2122, %v3335
      %v3374 = vmul.f32 %v2124, %v3337
      %v3375 = vmul.f32 %v2126, %v3339
      %v3376 = vmul.f32 %v2128, %v3341
      %v3377 = vmul.f32 %v2130, %v3343
      %v3378 = vmul.f32 %v2132, %v3345
      %v3379 = vmul.f32 %v2134, %v3347
      %v3380 = vadd.f32 %v3284, %v3364
      %v3381 = vadd.f32 %v3285, %v3365
      %v3382 = vadd.f32 %v3286, %v3366
      %v3383 = vadd.f32 %v3287, %v3367
      %v3384 = vadd.f32 %v3288, %v3368
      %v3385 = vadd.f32 %v3289, %v3369
      %v3386 = vadd.f32 %v3290, %v3370
      %v3387 = vadd.f32 %v3291, %v3371
      %v3388 = vadd.f32 %v3292, %v3372
      %v3389 = vadd.f32 %v3293, %v3373
      %v3390 = vadd.f32 %v3294, %v3374
      %v3391 = vadd.f32 %v3295, %v3375
      %v3392 = vadd.f32 %v3296, %v3376
      %v3393 = vadd.f32 %v3297, %v3377
      %v3394 = vadd.f32 %v3298, %v3378
      %v3395 = vadd.f32 %v3299, %v3379
      %3396 = vst.msk [vmem:[%s313] sm:$0xff] %vm414, %v3380
      %3397 = vst.msk [vmem:[%s313 + $0x8] sm:$0xff] %vm414, %v3381
      %3398 = vst.msk [vmem:[%s313 + $0x10] sm:$0xff] %vm414, %v3382
      %3399 = vst.msk [vmem:[%s313 + $0x18] sm:$0xff] %vm414, %v3383
      %3400 = vst.msk [vmem:[%s313 + $0x20] sm:$0xff] %vm414, %v3384
      %3401 = vst.msk [vmem:[%s313 + $0x28] sm:$0xff] %vm414, %v3385
      %3402 = vst.msk [vmem:[%s313 + $0x30] sm:$0xff] %vm414, %v3386
      %3403 = vst.msk [vmem:[%s313 + $0x38] sm:$0xff] %vm414, %v3387
      %3404 = vst.msk [vmem:[%s313 + $0x40] sm:$0xff] %vm414, %v3388
      %3405 = vst.msk [vmem:[%s313 + $0x48] sm:$0xff] %vm414, %v3389
      %3406 = vst.msk [vmem:[%s313 + $0x50] sm:$0xff] %vm414, %v3390
      %3407 = vst.msk [vmem:[%s313 + $0x58] sm:$0xff] %vm414, %v3391
      %3408 = vst.msk [vmem:[%s313 + $0x60] sm:$0xff] %vm414, %v3392
      %3409 = vst.msk [vmem:[%s313 + $0x68] sm:$0xff] %vm414, %v3393
      %3410 = vst.msk [vmem:[%s313 + $0x70] sm:$0xff] %vm414, %v3394
      %3411 = vst.msk [vmem:[%s313 + $0x78] sm:$0xff] %vm414, %v3395
      %p3412 = scmp.lt.s32.totalorder %s21, 1
      %s3413 = scalar_select %p3412, %s21, 1
      %p3414 = scmp.lt.s32.totalorder %s22, 0
      %s3415 = scalar_select %p3414, %s22, 0
      %s3416 = smul.addr %s3413, 16
      %s3417 = sadd.s32 %s3415, %s3416
      %s3418 = smul.addr %s3417, 8
      %s3419 = scalar_lea.vmem %s6, %s3418
      // Predicated region
      $region45: #{sep_conv_gru.2} parent=43 // pred_check
        %p3420 = pneg %p189
      $region46: #{sep_conv_gru.2} parent=43 // pred_check_branch
        %3422 = sbr.rel (%p3420) target = $region48
      $region47: #{sep_conv_gru.2} parent=43 // pred_region
        _
      $region48: #{sep_conv_gru.2} parent=43 // pred_fallthru
        _
    $region44: #{sep_conv_gru.2} parent=5 // pred_fallthru
      _
    %p3423 = scmp.le.s32.totalorder 2, %s12
    // Predicated region
    $region49: #{sep_conv_gru.2} parent=5 // pred_check
      %p3424 = pneg %p3423
    $region50: #{sep_conv_gru.2} parent=5 // pred_check_branch
      %3426 = sbr.rel (%p3424) target = $region52
    $region51: #{sep_conv_gru.2} parent=5 // pred_region
      %s3427 = ssub.s32 %s12, 2
      // Predicated region
      $region53: #{sep_conv_gru.2} parent=51 // pred_check
        %p3428 = pneg %p195
      $region54: #{sep_conv_gru.2} parent=51 // pred_check_branch
        %3430 = sbr.rel (%p3428) target = $region56
      $region55: #{sep_conv_gru.2} parent=51 // pred_region
        %p3431 = scmp.lt.s32.totalorder %s23, 1
        %s3432 = scalar_select %p3431, %s23, 1
        %p3433 = scmp.lt.s32.totalorder %s24, 0
        %s3434 = scalar_select %p3433, %s24, 0
        %s3435 = smul.addr %s3432, 16
        %s3436 = sadd.s32 %s3434, %s3435
        %s3437 = smul.addr %s3436, 8
        %s3438 = scalar_lea.vmem %s6, %s3437
      $region56: #{sep_conv_gru.2} parent=51 // pred_fallthru
        _
    $region52: #{sep_conv_gru.2} parent=5 // pred_fallthru
      _
  $region6: #{sep_conv_gru.2} parent=0 // loop_footer
    %s16 = sadd.s32 1, %s12
  $region7: #{sep_conv_gru.2} parent=0 // loop_footer_branch
    %11 = sbr.rel target = $region3
  $region8: #{sep_conv_gru.2} parent=0 // loop_exit
    _

</llo_original>
